<compile_context>
chip_gen: v6e
topology: v6e:2x2x1
jax: 0.10.0
libtpu: 0.0.40
codegen_flags: <defaults>
</compile_context>

<pallas_src>
import functools

import jax
import jax.numpy as jnp
import numpy as np
from jax.experimental import pallas as pl
from jax.experimental.pallas import tpu as pltpu


def _round_up(x, m):
    return -(-x // m) * m


# -----------------------------------------------------------------------------
# Fused kernel: relu -> conv3x3 -> BN -> relu -> conv3x3 -> BN  (both branches)
#               -> shake + residual.       One grid step == one batch element.
# -----------------------------------------------------------------------------
def _shake_shake_kernel(gate_ref,                 # SMEM (N,) f32        (scalar prefetch)
                        x_ref,                    # (1, H, W, Cin) f32   (unpadded input)
                        w1_ref,                   # (9*Cp, 2*Cp) bf16    conv_a1 | conv_b1
                        w2_ref,                   # (2, 9*Cp, Cp) bf16   conv_a2 , conv_b2
                        s1_ref, b1_ref,           # (1, 2*Cp) f32        folded BN1 affine
                        s2_ref, b2_ref,           # (2, 1, Cp) f32       folded BN2 affine
                        o_ref,                    # (1, H, W, Cp) f32    channel-padded out
                        act_ref,                  # VMEM (2, H+2, W+2, Cp) f32 scratch
                        col_ref,                  # VMEM (H*W, 9*Cp) bf16 scratch (im2col)
                        *, H, W, Cin, Cp):
    n = pl.program_id(0)
    g = gate_ref[n]                               # per-sample shake gate (SMEM scalar)

    # Zero the activation scratch every step: its spatial halo (and, when Cin < Cp, its
    # padded channel band) must be zero.  Do NOT gate this on n == 0: the "parallel"
    # batch axis may be split across TensorCores and a core that never runs step 0 would
    # see a garbage halo.  TODO(synk): zero only the halo strips instead of the slab.
    act_ref[...] = jnp.zeros_like(act_ref)

    def build_im2col(slot):
        # dx (the sublane-misaligned width shift) is hoisted to the outer loop:
        # 3 misaligned strip extractions + 3 bf16 casts per conv instead of 9.
        for dx in range(3):
            strip = act_ref[slot, :, dx:dx + W, :].astype(jnp.bfloat16)  # (H+2, W, Cp)
            for dy in range(3):
                k = 3 * dy + dx                   # tap order matches w.reshape(9, ci, co)
                col_ref[:, k * Cp:(k + 1) * Cp] = strip[dy:dy + H].reshape(H * W, Cp)

    # relu(x) into act slot 0 (interior only; halo / padded channels stay zero).
    act_ref[0, 1:H + 1, 1:W + 1, :Cin] = jnp.maximum(x_ref[0], 0.0)

    # conv1 of BOTH branches as one MXU matmul (shared im2col LHS, N = 2*Cp) + BN1 + relu.
    build_im2col(0)
    acc1 = jnp.dot(col_ref[...], w1_ref[...], preferred_element_type=jnp.float32)
    y1 = jnp.maximum(acc1 * s1_ref[0] + b1_ref[0], 0.0)                  # (H*W, 2*Cp) f32
    act_ref[0, 1:H + 1, 1:W + 1, :] = y1[:, :Cp].reshape(H, W, Cp)       # branch a
    act_ref[1, 1:H + 1, 1:W + 1, :] = y1[:, Cp:].reshape(H, W, Cp)       # branch b

    # conv2 + BN2 per branch (im2col scratch reused; fat single-K matmul suits the
    # MRF drain on v5e/v6e).
    build_im2col(0)
    y2a = (jnp.dot(col_ref[...], w2_ref[0], preferred_element_type=jnp.float32)
           * s2_ref[0] + b2_ref[0])                                      # (H*W, Cp) f32
    build_im2col(1)
    y2b = (jnp.dot(col_ref[...], w2_ref[1], preferred_element_type=jnp.float32)
           * s2_ref[1] + b2_ref[1])

    # Shake + residual epilogue (once per sample): out = x + g*a + (1-g)*b.
    y = (g * y2a + (1.0 - g) * y2b).reshape(H, W, Cp)
    if Cin == Cp:                                 # chained, channel-padded input
        o_ref[0] = y + x_ref[0]
    else:                                         # unpadded first-block input
        o_ref[0] = y                              # padded channels are exactly 0
        o_ref[0, :, :, :Cin] = y[:, :, :Cin] + x_ref[0]


# -----------------------------------------------------------------------------
# Parameter packing: pad channels to a lane-dense multiple of 128 (zeros), flatten the
# 3x3 taps into the im2col K axis, fuse conv1 of both branches along the output axis,
# stack conv2 per branch, cast weights to bf16.
# -----------------------------------------------------------------------------
def pack_shake_shake_params(p, *, lane=128):
    cin, cout = p["w_a1"].shape[2], p["w_a1"].shape[3]
    cp = _round_up(max(cin, cout), lane)

    def pad_w(w):                                 # (3,3,ci,co) f32 -> (9, cp, cp) f32
        ci, co = w.shape[2], w.shape[3]
        return jnp.zeros((9, cp, cp), jnp.float32).at[:, :ci, :co].set(
            w.reshape(9, ci, co))

    # conv1 of both branches fused along the output-channel axis: (9*cp, 2*cp) bf16.
    w1 = jnp.concatenate([pad_w(p["w_a1"]), pad_w(p["w_b1"])], axis=-1)
    w1 = w1.reshape(9 * cp, 2 * cp).astype(jnp.bfloat16)
    # conv2 kept per branch: (2, 9*cp, cp) bf16.
    w2 = jnp.stack([pad_w(p["w_a2"]).reshape(9 * cp, cp),
                    pad_w(p["w_b2"]).reshape(9 * cp, cp)]).astype(jnp.bfloat16)

    def pad_v(v):
        return jnp.zeros((cp,), jnp.float32).at[:v.shape[0]].set(v)

    def pair(va, vb):                             # fused BN1 affine: (1, 2*cp) f32
        return jnp.concatenate([pad_v(va), pad_v(vb)])[None, :]

    def stack2(va, vb):                           # per-branch BN2 affine: (2, 1, cp) f32
        return jnp.stack([pad_v(va), pad_v(vb)])[:, None, :]

    return {
        "w1": w1, "w2": w2,
        "s1": pair(p["s_a1"], p["s_b1"]), "b1": pair(p["b_a1"], p["b_b1"]),
        "s2": stack2(p["s_a2"], p["s_b2"]), "b2": stack2(p["b_a2"], p["b_b2"]),
    }


# -----------------------------------------------------------------------------
# Forward wrapper (NHWC end-to-end, channel-padded output).
# -----------------------------------------------------------------------------
@jax.jit
def shake_shake_block_forward(x_nhwc, packed, gate):
    """x_nhwc: (N, H, W, C) f32 (C <= Cp; any channels beyond the module's in-planes must
    be zero).  gate: (N,) f32.  Returns (N, H, W, Cp) f32 whose channels beyond the
    module's out_channels are exactly zero — keep this channel-padded NHWC layout between
    chained blocks (no per-block pad/slice HBM passes); slice once at the network end."""
    N, H, W, C = x_nhwc.shape
    cp = packed["w2"].shape[-1]

    kernel = functools.partial(_shake_shake_kernel, H=H, W=W, Cin=C, Cp=cp)

    # Constant index_maps keep weights / BN affines VMEM-resident (fetched once).
    const2 = lambda n, g: (0, 0)
    const3 = lambda n, g: (0, 0, 0)

    return pl.pallas_call(
        kernel,
        out_shape=jax.ShapeDtypeStruct((N, H, W, cp), jnp.float32),
        grid_spec=pltpu.PrefetchScalarGridSpec(
            num_scalar_prefetch=1,                      # gate -> SMEM
            grid=(N,),                                  # one step per batch element
            in_specs=[
                pl.BlockSpec((1, H, W, C), lambda n, g: (n, 0, 0, 0)),
                pl.BlockSpec((9 * cp, 2 * cp), const2),  # fused conv1 weights
                pl.BlockSpec((2, 9 * cp, cp), const3),   # per-branch conv2 weights
                pl.BlockSpec((1, 2 * cp), const2),       # s1 (a|b)
                pl.BlockSpec((1, 2 * cp), const2),       # b1 (a|b)
                pl.BlockSpec((2, 1, cp), const3),        # s2
                pl.BlockSpec((2, 1, cp), const3),        # b2
            ],
            out_specs=pl.BlockSpec((1, H, W, cp), lambda n, g: (n, 0, 0, 0)),
            scratch_shapes=[
                pltpu.VMEM((2, H + 2, W + 2, cp), jnp.float32),  # zero-halo activations
                pltpu.VMEM((H * W, 9 * cp), jnp.bfloat16),       # im2col patches
            ],
        ),
        # Fully parallel grid: on v7x the two TensorCores each take half the batch.
        compiler_params=pltpu.CompilerParams(dimension_semantics=("parallel",)),
    )(gate, x_nhwc, packed["w1"], packed["w2"],
      packed["s1"], packed["b1"], packed["s2"], packed["b2"])


def shake_shake_block_forward_nchw(x_nchw, packed, gate, out_channels):
    # Drop-in PyTorch-layout interface.  Prefer the NHWC channel-padded entry point for
    # chained blocks: it avoids the relayout and the per-block channel slice in HBM.
    x = jnp.transpose(x_nchw, (0, 2, 3, 1))
    y = shake_shake_block_forward(x, packed, gate)
    return jnp.transpose(y[..., :out_channels], (0, 3, 1, 2))


# -----------------------------------------------------------------------------
# Deterministic synthetic parameters (conv weights + folded eval-mode BN affines).
# -----------------------------------------------------------------------------
def make_shake_shake_params(key, inplanes, planes):
    ks = jax.random.split(key, 8)
    eps = 1e-5

    def conv_w(k, cin, cout):
        std = (2.0 / (cin * 9)) ** 0.5                 # kaiming-normal-ish
        return std * jax.random.normal(k, (3, 3, cin, cout), jnp.float32)

    def bn_folded(k, c):
        kg, kb, km, kv = jax.random.split(k, 4)
        gamma = 1.0 + 0.1 * jax.random.normal(kg, (c,), jnp.float32)
        beta = 0.1 * jax.random.normal(kb, (c,), jnp.float32)
        mean = 0.1 * jax.random.normal(km, (c,), jnp.float32)
        var = 1.0 + 0.1 * jax.random.uniform(kv, (c,), jnp.float32)
        scale = gamma / jnp.sqrt(var + eps)
        bias = beta - mean * scale
        return scale, bias

    p = {}
    p["w_a1"] = conv_w(ks[0], inplanes, planes)
    p["w_a2"] = conv_w(ks[1], planes, planes)
    p["w_b1"] = conv_w(ks[2], inplanes, planes)
    p["w_b2"] = conv_w(ks[3], planes, planes)
    p["s_a1"], p["b_a1"] = bn_folded(ks[4], planes)
    p["s_a2"], p["b_a2"] = bn_folded(ks[5], planes)
    p["s_b1"], p["b_b1"] = bn_folded(ks[6], planes)
    p["s_b2"], p["b_b2"] = bn_folded(ks[7], planes)
    return p


# -----------------------------------------------------------------------------
# Pure-JAX reference.  conv_dtype=bfloat16 mirrors the kernel's MXU numerics exactly
# (bf16 operands, f32 accumulation / BN / residual); float32 is the exact module math.
# -----------------------------------------------------------------------------
def _reference_forward(x_nhwc, p, gate, conv_dtype=jnp.float32):
    g = gate.reshape(-1, 1, 1, 1)

    def conv(z, w):
        return jax.lax.conv_general_dilated(
            z.astype(conv_dtype), w.astype(conv_dtype), (1, 1), "SAME",
            dimension_numbers=("NHWC", "HWIO", "NHWC"),
            preferred_element_type=jnp.float32)

    def branch(w1, s1, b1, w2, s2, b2):
        z = jnp.maximum(x_nhwc, 0.0)
        z = conv(z, w1) * s1 + b1
        z = jnp.maximum(z, 0.0)
        z = conv(z, w2) * s2 + b2
        return z

    a = branch(p["w_a1"], p["s_a1"], p["b_a1"], p["w_a2"], p["s_a2"], p["b_a2"])
    b = branch(p["w_b1"], p["s_b1"], p["b_b1"], p["w_b2"], p["s_b2"], p["b_b2"])
    return x_nhwc + g * a + (1.0 - g) * b


if __name__ == "__main__":
    N, H, W, C = 2, 16, 16, 4            # batch=2, inplanes=planes=4, 16x16, stride=1
    key = jax.random.PRNGKey(0)
    kx, kp = jax.random.split(key)

    x = jax.random.normal(kx, (N, H, W, C), jnp.float32)        # NHWC (channels-last)
    params = make_shake_shake_params(kp, C, C)
    packed = pack_shake_shake_params(params)

    gate = jnp.full((N,), 0.5, jnp.float32)   # eval-mode shake gate (training=False)

    out_padded = jax.block_until_ready(shake_shake_block_forward(x, packed, gate))
    cp = packed["w2"].shape[-1]
    assert out_padded.shape == (N, H, W, cp) and out_padded.dtype == jnp.float32

    out_np = np.asarray(out_padded)
    # Chainability invariant: channels beyond out_channels are exactly zero.
    np.testing.assert_array_equal(out_np[..., C:], 0.0)
    out = out_np[..., :C]                    # test-harness slice (not the hot path)

    # Tight check against a reference with the kernel's exact numerics
    # (bf16 MXU operands, f32 accumulate / BN affine / shake / residual).
    ref_bf16 = jax.block_until_ready(
        _reference_forward(x, params, gate, conv_dtype=jnp.bfloat16))
    np.testing.assert_allclose(out, np.asarray(ref_bf16), atol=1e-3, rtol=1e-3)

    # Sanity check against the pure-f32 module semantics (bf16-level tolerance).
    ref_f32 = jax.block_until_ready(
        _reference_forward(x, params, gate, conv_dtype=jnp.float32))
    np.testing.assert_allclose(out, np.asarray(ref_f32), atol=1e-1, rtol=1e-1)

    print("KERNEL_OK")
</pallas_src>

<mosaic_0001>
module attributes {stable_mosaic.version = 11 : i64} {
  func.func @_shake_shake_kernel(%arg0: i32, %arg1: memref<2xf32, #tpu.memory_space<smem>>, %arg2: memref<1x16x16x4xf32, #tpu.memory_space<vmem>>, %arg3: memref<1152x256xbf16, #tpu.memory_space<vmem>>, %arg4: memref<2x1152x128xbf16, #tpu.memory_space<vmem>>, %arg5: memref<1x256xf32, #tpu.memory_space<vmem>>, %arg6: memref<1x256xf32, #tpu.memory_space<vmem>>, %arg7: memref<2x1x128xf32, #tpu.memory_space<vmem>>, %arg8: memref<2x1x128xf32, #tpu.memory_space<vmem>>, %arg9: memref<1x16x16x128xf32, #tpu.memory_space<vmem>>, %arg10: memref<2x18x18x128xf32, #tpu.memory_space<vmem>>, %arg11: memref<256x1152xbf16, #tpu.memory_space<vmem>>) attributes {dimension_semantics = [#tpu.dimension_semantics<parallel>], iteration_bounds = array<i64: 2>, scalar_prefetch = 1 : i64, scratch_operands = 2 : i64, tpu.core_type = #tpu.core_type<tc>, window_params = [{transform_indices = @transform_0, window_bounds = array<i64: 1, 16, 16, 4>}, {pipeline_mode = #tpu.pipeline_mode<synchronous>, transform_indices = @transform_1, window_bounds = array<i64: 1152, 256>}, {pipeline_mode = #tpu.pipeline_mode<synchronous>, transform_indices = @transform_2, window_bounds = array<i64: 2, 1152, 128>}, {pipeline_mode = #tpu.pipeline_mode<synchronous>, transform_indices = @transform_3, window_bounds = array<i64: 1, 256>}, {pipeline_mode = #tpu.pipeline_mode<synchronous>, transform_indices = @transform_4, window_bounds = array<i64: 1, 256>}, {pipeline_mode = #tpu.pipeline_mode<synchronous>, transform_indices = @transform_5, window_bounds = array<i64: 2, 1, 128>}, {pipeline_mode = #tpu.pipeline_mode<synchronous>, transform_indices = @transform_6, window_bounds = array<i64: 2, 1, 128>}, {transform_indices = @transform_7, window_bounds = array<i64: 1, 16, 16, 128>}]} {
    %0 = arith.index_cast %arg0 : i32 to index
    %1 = memref.load %arg1[%0] : memref<2xf32, #tpu.memory_space<smem>>
    %cst = arith.constant 0.000000e+00 : f32
    %2 = vector.broadcast %cst : f32 to vector<2x18x18x128xf32>
    %c0 = arith.constant 0 : index
    %c0_0 = arith.constant 0 : index
    %c0_1 = arith.constant 0 : index
    %c0_2 = arith.constant 0 : index
    %3 = vector.load %arg10[%c0, %c0_0, %c0_1, %c0_2] : memref<2x18x18x128xf32, #tpu.memory_space<vmem>>, vector<2x18x18x128xf32>
    tpu.vector_store %arg10[%c0, %c0_0, %c0_1, %c0_2], %2 {strides = array<i32>} : memref<2x18x18x128xf32, #tpu.memory_space<vmem>>, vector<2x18x18x128xf32>,
    %c0_3 = arith.constant 0 : index
    %c0_4 = arith.constant 0 : index
    %c0_5 = arith.constant 0 : index
    %c0_6 = arith.constant 0 : index
    %4 = vector.load %arg2[%c0_3, %c0_4, %c0_5, %c0_6] : memref<1x16x16x4xf32, #tpu.memory_space<vmem>>, vector<1x16x16x4xf32>
    %5 = vector.shape_cast %4 : vector<1x16x16x4xf32> to vector<16x16x4xf32>
    %cst_7 = arith.constant 0.000000e+00 : f32
    %6 = vector.broadcast %cst_7 : f32 to vector<16x16x4xf32>
    %7 = arith.maximumf %5, %6 : vector<16x16x4xf32>
    %c0_8 = arith.constant 0 : index
    %c1 = arith.constant 1 : index
    %c1_9 = arith.constant 1 : index
    %c0_10 = arith.constant 0 : index
    %8 = vector.load %arg10[%c0_8, %c1, %c1_9, %c0_10] : memref<2x18x18x128xf32, #tpu.memory_space<vmem>>, vector<1x16x16x4xf32>
    %9 = vector.shape_cast %8 : vector<1x16x16x4xf32> to vector<16x16x4xf32>
    %10 = vector.shape_cast %7 : vector<16x16x4xf32> to vector<1x16x16x4xf32>
    tpu.vector_store %arg10[%c0_8, %c1, %c1_9, %c0_10], %10 {strides = array<i32>} : memref<2x18x18x128xf32, #tpu.memory_space<vmem>>, vector<1x16x16x4xf32>,
    %c0_11 = arith.constant 0 : index
    %c0_12 = arith.constant 0 : index
    %c0_13 = arith.constant 0 : index
    %c0_14 = arith.constant 0 : index
    %11 = vector.load %arg10[%c0_11, %c0_12, %c0_13, %c0_14] : memref<2x18x18x128xf32, #tpu.memory_space<vmem>>, vector<1x18x16x128xf32>
    %12 = vector.shape_cast %11 : vector<1x18x16x128xf32> to vector<18x16x128xf32>
    %13 = arith.truncf %12 : vector<18x16x128xf32> to vector<18x16x128xbf16>
    %14 = vector.extract_strided_slice %13 {offsets = [0, 0, 0], sizes = [16, 16, 128], strides = [1, 1, 1]} : vector<18x16x128xbf16> to vector<16x16x128xbf16>
    %15 = vector.shape_cast %14 : vector<16x16x128xbf16> to vector<256x128xbf16>
    %c0_15 = arith.constant 0 : index
    %c0_16 = arith.constant 0 : index
    %16 = vector.load %arg11[%c0_15, %c0_16] : memref<256x1152xbf16, #tpu.memory_space<vmem>>, vector<256x128xbf16>
    tpu.vector_store %arg11[%c0_15, %c0_16], %15 {strides = array<i32>} : memref<256x1152xbf16, #tpu.memory_space<vmem>>, vector<256x128xbf16>,
    %17 = vector.extract_strided_slice %13 {offsets = [1, 0, 0], sizes = [16, 16, 128], strides = [1, 1, 1]} : vector<18x16x128xbf16> to vector<16x16x128xbf16>
    %18 = vector.shape_cast %17 : vector<16x16x128xbf16> to vector<256x128xbf16>
    %c0_17 = arith.constant 0 : index
    %c384 = arith.constant 384 : index
    %19 = vector.load %arg11[%c0_17, %c384] : memref<256x1152xbf16, #tpu.memory_space<vmem>>, vector<256x128xbf16>
    tpu.vector_store %arg11[%c0_17, %c384], %18 {strides = array<i32>} : memref<256x1152xbf16, #tpu.memory_space<vmem>>, vector<256x128xbf16>,
    %20 = vector.extract_strided_slice %13 {offsets = [2, 0, 0], sizes = [16, 16, 128], strides = [1, 1, 1]} : vector<18x16x128xbf16> to vector<16x16x128xbf16>
    %21 = vector.shape_cast %20 : vector<16x16x128xbf16> to vector<256x128xbf16>
    %c0_18 = arith.constant 0 : index
    %c768 = arith.constant 768 : index
    %22 = vector.load %arg11[%c0_18, %c768] : memref<256x1152xbf16, #tpu.memory_space<vmem>>, vector<256x128xbf16>
    tpu.vector_store %arg11[%c0_18, %c768], %21 {strides = array<i32>} : memref<256x1152xbf16, #tpu.memory_space<vmem>>, vector<256x128xbf16>,
    %c0_19 = arith.constant 0 : index
    %c0_20 = arith.constant 0 : index
    %c1_21 = arith.constant 1 : index
    %c0_22 = arith.constant 0 : index
    %23 = vector.load %arg10[%c0_19, %c0_20, %c1_21, %c0_22] : memref<2x18x18x128xf32, #tpu.memory_space<vmem>>, vector<1x18x16x128xf32>
    %24 = vector.shape_cast %23 : vector<1x18x16x128xf32> to vector<18x16x128xf32>
    %25 = arith.truncf %24 : vector<18x16x128xf32> to vector<18x16x128xbf16>
    %26 = vector.extract_strided_slice %25 {offsets = [0, 0, 0], sizes = [16, 16, 128], strides = [1, 1, 1]} : vector<18x16x128xbf16> to vector<16x16x128xbf16>
    %27 = vector.shape_cast %26 : vector<16x16x128xbf16> to vector<256x128xbf16>
    %c0_23 = arith.constant 0 : index
    %c128 = arith.constant 128 : index
    %28 = vector.load %arg11[%c0_23, %c128] : memref<256x1152xbf16, #tpu.memory_space<vmem>>, vector<256x128xbf16>
    tpu.vector_store %arg11[%c0_23, %c128], %27 {strides = array<i32>} : memref<256x1152xbf16, #tpu.memory_space<vmem>>, vector<256x128xbf16>,
    %29 = vector.extract_strided_slice %25 {offsets = [1, 0, 0], sizes = [16, 16, 128], strides = [1, 1, 1]} : vector<18x16x128xbf16> to vector<16x16x128xbf16>
    %30 = vector.shape_cast %29 : vector<16x16x128xbf16> to vector<256x128xbf16>
    %c0_24 = arith.constant 0 : index
    %c512 = arith.constant 512 : index
    %31 = vector.load %arg11[%c0_24, %c512] : memref<256x1152xbf16, #tpu.memory_space<vmem>>, vector<256x128xbf16>
    tpu.vector_store %arg11[%c0_24, %c512], %30 {strides = array<i32>} : memref<256x1152xbf16, #tpu.memory_space<vmem>>, vector<256x128xbf16>,
    %32 = vector.extract_strided_slice %25 {offsets = [2, 0, 0], sizes = [16, 16, 128], strides = [1, 1, 1]} : vector<18x16x128xbf16> to vector<16x16x128xbf16>
    %33 = vector.shape_cast %32 : vector<16x16x128xbf16> to vector<256x128xbf16>
    %c0_25 = arith.constant 0 : index
    %c896 = arith.constant 896 : index
    %34 = vector.load %arg11[%c0_25, %c896] : memref<256x1152xbf16, #tpu.memory_space<vmem>>, vector<256x128xbf16>
    tpu.vector_store %arg11[%c0_25, %c896], %33 {strides = array<i32>} : memref<256x1152xbf16, #tpu.memory_space<vmem>>, vector<256x128xbf16>,
    %c0_26 = arith.constant 0 : index
    %c0_27 = arith.constant 0 : index
    %c2 = arith.constant 2 : index
    %c0_28 = arith.constant 0 : index
    %35 = vector.load %arg10[%c0_26, %c0_27, %c2, %c0_28] : memref<2x18x18x128xf32, #tpu.memory_space<vmem>>, vector<1x18x16x128xf32>
    %36 = vector.shape_cast %35 : vector<1x18x16x128xf32> to vector<18x16x128xf32>
    %37 = arith.truncf %36 : vector<18x16x128xf32> to vector<18x16x128xbf16>
    %38 = vector.extract_strided_slice %37 {offsets = [0, 0, 0], sizes = [16, 16, 128], strides = [1, 1, 1]} : vector<18x16x128xbf16> to vector<16x16x128xbf16>
    %39 = vector.shape_cast %38 : vector<16x16x128xbf16> to vector<256x128xbf16>
    %c0_29 = arith.constant 0 : index
    %c256 = arith.constant 256 : index
    %40 = vector.load %arg11[%c0_29, %c256] : memref<256x1152xbf16, #tpu.memory_space<vmem>>, vector<256x128xbf16>
    tpu.vector_store %arg11[%c0_29, %c256], %39 {strides = array<i32>} : memref<256x1152xbf16, #tpu.memory_space<vmem>>, vector<256x128xbf16>,
    %41 = vector.extract_strided_slice %37 {offsets = [1, 0, 0], sizes = [16, 16, 128], strides = [1, 1, 1]} : vector<18x16x128xbf16> to vector<16x16x128xbf16>
    %42 = vector.shape_cast %41 : vector<16x16x128xbf16> to vector<256x128xbf16>
    %c0_30 = arith.constant 0 : index
    %c640 = arith.constant 640 : index
    %43 = vector.load %arg11[%c0_30, %c640] : memref<256x1152xbf16, #tpu.memory_space<vmem>>, vector<256x128xbf16>
    tpu.vector_store %arg11[%c0_30, %c640], %42 {strides = array<i32>} : memref<256x1152xbf16, #tpu.memory_space<vmem>>, vector<256x128xbf16>,
    %44 = vector.extract_strided_slice %37 {offsets = [2, 0, 0], sizes = [16, 16, 128], strides = [1, 1, 1]} : vector<18x16x128xbf16> to vector<16x16x128xbf16>
    %45 = vector.shape_cast %44 : vector<16x16x128xbf16> to vector<256x128xbf16>
    %c0_31 = arith.constant 0 : index
    %c1024 = arith.constant 1024 : index
    %46 = vector.load %arg11[%c0_31, %c1024] : memref<256x1152xbf16, #tpu.memory_space<vmem>>, vector<256x128xbf16>
    tpu.vector_store %arg11[%c0_31, %c1024], %45 {strides = array<i32>} : memref<256x1152xbf16, #tpu.memory_space<vmem>>, vector<256x128xbf16>,
    %c0_32 = arith.constant 0 : index
    %c0_33 = arith.constant 0 : index
    %47 = vector.load %arg11[%c0_32, %c0_33] : memref<256x1152xbf16, #tpu.memory_space<vmem>>, vector<256x1152xbf16>
    %c0_34 = arith.constant 0 : index
    %c0_35 = arith.constant 0 : index
    %48 = vector.load %arg3[%c0_34, %c0_35] : memref<1152x256xbf16, #tpu.memory_space<vmem>>, vector<1152x256xbf16>
    %cst_36 = arith.constant dense<0.000000e+00> : vector<256x256xf32>
    %49 = tpu.matmul %47, %48, %cst_36 {dimension_numbers = #tpu.dot_dimension_numbers<[1], [0], [0], [1], [0, 0, 1, 1], [], []>} : vector<256x1152xbf16>, vector<1152x256xbf16>, vector<256x256xf32> -> vector<256x256xf32>
    %c0_37 = arith.constant 0 : index
    %c0_38 = arith.constant 0 : index
    %50 = vector.load %arg5[%c0_37, %c0_38] : memref<1x256xf32, #tpu.memory_space<vmem>>, vector<1x256xf32>
    %51 = vector.shape_cast %50 : vector<1x256xf32> to vector<256xf32>
    %52 = vector.shape_cast %51 : vector<256xf32> to vector<1x256xf32>
    %53 = vector.broadcast %52 : vector<1x256xf32> to vector<256x256xf32>
    %54 = arith.mulf %49, %53 : vector<256x256xf32>
    %c0_39 = arith.constant 0 : index
    %c0_40 = arith.constant 0 : index
    %55 = vector.load %arg6[%c0_39, %c0_40] : memref<1x256xf32, #tpu.memory_space<vmem>>, vector<1x256xf32>
    %56 = vector.shape_cast %55 : vector<1x256xf32> to vector<256xf32>
    %57 = vector.shape_cast %56 : vector<256xf32> to vector<1x256xf32>
    %58 = vector.broadcast %57 : vector<1x256xf32> to vector<256x256xf32>
    %59 = arith.addf %54, %58 : vector<256x256xf32>
    %cst_41 = arith.constant 0.000000e+00 : f32
    %60 = vector.broadcast %cst_41 : f32 to vector<256x256xf32>
    %61 = arith.maximumf %59, %60 : vector<256x256xf32>
    %62 = vector.extract_strided_slice %61 {offsets = [0, 0], sizes = [256, 128], strides = [1, 1]} : vector<256x256xf32> to vector<256x128xf32>
    %63 = vector.shape_cast %62 : vector<256x128xf32> to vector<16x16x128xf32>
    %c0_42 = arith.constant 0 : index
    %c1_43 = arith.constant 1 : index
    %c1_44 = arith.constant 1 : index
    %c0_45 = arith.constant 0 : index
    %64 = vector.load %arg10[%c0_42, %c1_43, %c1_44, %c0_45] : memref<2x18x18x128xf32, #tpu.memory_space<vmem>>, vector<1x16x16x128xf32>
    %65 = vector.shape_cast %64 : vector<1x16x16x128xf32> to vector<16x16x128xf32>
    %66 = vector.shape_cast %63 : vector<16x16x128xf32> to vector<1x16x16x128xf32>
    tpu.vector_store %arg10[%c0_42, %c1_43, %c1_44, %c0_45], %66 {strides = array<i32>} : memref<2x18x18x128xf32, #tpu.memory_space<vmem>>, vector<1x16x16x128xf32>,
    %67 = vector.extract_strided_slice %61 {offsets = [0, 128], sizes = [256, 128], strides = [1, 1]} : vector<256x256xf32> to vector<256x128xf32>
    %68 = vector.shape_cast %67 : vector<256x128xf32> to vector<16x16x128xf32>
    %c1_46 = arith.constant 1 : index
    %c1_47 = arith.constant 1 : index
    %c1_48 = arith.constant 1 : index
    %c0_49 = arith.constant 0 : index
    %69 = vector.load %arg10[%c1_46, %c1_47, %c1_48, %c0_49] : memref<2x18x18x128xf32, #tpu.memory_space<vmem>>, vector<1x16x16x128xf32>
    %70 = vector.shape_cast %69 : vector<1x16x16x128xf32> to vector<16x16x128xf32>
    %71 = vector.shape_cast %68 : vector<16x16x128xf32> to vector<1x16x16x128xf32>
    tpu.vector_store %arg10[%c1_46, %c1_47, %c1_48, %c0_49], %71 {strides = array<i32>} : memref<2x18x18x128xf32, #tpu.memory_space<vmem>>, vector<1x16x16x128xf32>,
    %c0_50 = arith.constant 0 : index
    %c0_51 = arith.constant 0 : index
    %c0_52 = arith.constant 0 : index
    %c0_53 = arith.constant 0 : index
    %72 = vector.load %arg10[%c0_50, %c0_51, %c0_52, %c0_53] : memref<2x18x18x128xf32, #tpu.memory_space<vmem>>, vector<1x18x16x128xf32>
    %73 = vector.shape_cast %72 : vector<1x18x16x128xf32> to vector<18x16x128xf32>
    %74 = arith.truncf %73 : vector<18x16x128xf32> to vector<18x16x128xbf16>
    %75 = vector.extract_strided_slice %74 {offsets = [0, 0, 0], sizes = [16, 16, 128], strides = [1, 1, 1]} : vector<18x16x128xbf16> to vector<16x16x128xbf16>
    %76 = vector.shape_cast %75 : vector<16x16x128xbf16> to vector<256x128xbf16>
    %c0_54 = arith.constant 0 : index
    %c0_55 = arith.constant 0 : index
    %77 = vector.load %arg11[%c0_54, %c0_55] : memref<256x1152xbf16, #tpu.memory_space<vmem>>, vector<256x128xbf16>
    tpu.vector_store %arg11[%c0_54, %c0_55], %76 {strides = array<i32>} : memref<256x1152xbf16, #tpu.memory_space<vmem>>, vector<256x128xbf16>,
    %78 = vector.extract_strided_slice %74 {offsets = [1, 0, 0], sizes = [16, 16, 128], strides = [1, 1, 1]} : vector<18x16x128xbf16> to vector<16x16x128xbf16>
    %79 = vector.shape_cast %78 : vector<16x16x128xbf16> to vector<256x128xbf16>
    %c0_56 = arith.constant 0 : index
    %c384_57 = arith.constant 384 : index
    %80 = vector.load %arg11[%c0_56, %c384_57] : memref<256x1152xbf16, #tpu.memory_space<vmem>>, vector<256x128xbf16>
    tpu.vector_store %arg11[%c0_56, %c384_57], %79 {strides = array<i32>} : memref<256x1152xbf16, #tpu.memory_space<vmem>>, vector<256x128xbf16>,
    %81 = vector.extract_strided_slice %74 {offsets = [2, 0, 0], sizes = [16, 16, 128], strides = [1, 1, 1]} : vector<18x16x128xbf16> to vector<16x16x128xbf16>
    %82 = vector.shape_cast %81 : vector<16x16x128xbf16> to vector<256x128xbf16>
    %c0_58 = arith.constant 0 : index
    %c768_59 = arith.constant 768 : index
    %83 = vector.load %arg11[%c0_58, %c768_59] : memref<256x1152xbf16, #tpu.memory_space<vmem>>, vector<256x128xbf16>
    tpu.vector_store %arg11[%c0_58, %c768_59], %82 {strides = array<i32>} : memref<256x1152xbf16, #tpu.memory_space<vmem>>, vector<256x128xbf16>,
    %c0_60 = arith.constant 0 : index
    %c0_61 = arith.constant 0 : index
    %c1_62 = arith.constant 1 : index
    %c0_63 = arith.constant 0 : index
    %84 = vector.load %arg10[%c0_60, %c0_61, %c1_62, %c0_63] : memref<2x18x18x128xf32, #tpu.memory_space<vmem>>, vector<1x18x16x128xf32>
    %85 = vector.shape_cast %84 : vector<1x18x16x128xf32> to vector<18x16x128xf32>
    %86 = arith.truncf %85 : vector<18x16x128xf32> to vector<18x16x128xbf16>
    %87 = vector.extract_strided_slice %86 {offsets = [0, 0, 0], sizes = [16, 16, 128], strides = [1, 1, 1]} : vector<18x16x128xbf16> to vector<16x16x128xbf16>
    %88 = vector.shape_cast %87 : vector<16x16x128xbf16> to vector<256x128xbf16>
    %c0_64 = arith.constant 0 : index
    %c128_65 = arith.constant 128 : index
    %89 = vector.load %arg11[%c0_64, %c128_65] : memref<256x1152xbf16, #tpu.memory_space<vmem>>, vector<256x128xbf16>
    tpu.vector_store %arg11[%c0_64, %c128_65], %88 {strides = array<i32>} : memref<256x1152xbf16, #tpu.memory_space<vmem>>, vector<256x128xbf16>,
    %90 = vector.extract_strided_slice %86 {offsets = [1, 0, 0], sizes = [16, 16, 128], strides = [1, 1, 1]} : vector<18x16x128xbf16> to vector<16x16x128xbf16>
    %91 = vector.shape_cast %90 : vector<16x16x128xbf16> to vector<256x128xbf16>
    %c0_66 = arith.constant 0 : index
    %c512_67 = arith.constant 512 : index
    %92 = vector.load %arg11[%c0_66, %c512_67] : memref<256x1152xbf16, #tpu.memory_space<vmem>>, vector<256x128xbf16>
    tpu.vector_store %arg11[%c0_66, %c512_67], %91 {strides = array<i32>} : memref<256x1152xbf16, #tpu.memory_space<vmem>>, vector<256x128xbf16>,
    %93 = vector.extract_strided_slice %86 {offsets = [2, 0, 0], sizes = [16, 16, 128], strides = [1, 1, 1]} : vector<18x16x128xbf16> to vector<16x16x128xbf16>
    %94 = vector.shape_cast %93 : vector<16x16x128xbf16> to vector<256x128xbf16>
    %c0_68 = arith.constant 0 : index
    %c896_69 = arith.constant 896 : index
    %95 = vector.load %arg11[%c0_68, %c896_69] : memref<256x1152xbf16, #tpu.memory_space<vmem>>, vector<256x128xbf16>
    tpu.vector_store %arg11[%c0_68, %c896_69], %94 {strides = array<i32>} : memref<256x1152xbf16, #tpu.memory_space<vmem>>, vector<256x128xbf16>,
    %c0_70 = arith.constant 0 : index
    %c0_71 = arith.constant 0 : index
    %c2_72 = arith.constant 2 : index
    %c0_73 = arith.constant 0 : index
    %96 = vector.load %arg10[%c0_70, %c0_71, %c2_72, %c0_73] : memref<2x18x18x128xf32, #tpu.memory_space<vmem>>, vector<1x18x16x128xf32>
    %97 = vector.shape_cast %96 : vector<1x18x16x128xf32> to vector<18x16x128xf32>
    %98 = arith.truncf %97 : vector<18x16x128xf32> to vector<18x16x128xbf16>
    %99 = vector.extract_strided_slice %98 {offsets = [0, 0, 0], sizes = [16, 16, 128], strides = [1, 1, 1]} : vector<18x16x128xbf16> to vector<16x16x128xbf16>
    %100 = vector.shape_cast %99 : vector<16x16x128xbf16> to vector<256x128xbf16>
    %c0_74 = arith.constant 0 : index
    %c256_75 = arith.constant 256 : index
    %101 = vector.load %arg11[%c0_74, %c256_75] : memref<256x1152xbf16, #tpu.memory_space<vmem>>, vector<256x128xbf16>
    tpu.vector_store %arg11[%c0_74, %c256_75], %100 {strides = array<i32>} : memref<256x1152xbf16, #tpu.memory_space<vmem>>, vector<256x128xbf16>,
    %102 = vector.extract_strided_slice %98 {offsets = [1, 0, 0], sizes = [16, 16, 128], strides = [1, 1, 1]} : vector<18x16x128xbf16> to vector<16x16x128xbf16>
    %103 = vector.shape_cast %102 : vector<16x16x128xbf16> to vector<256x128xbf16>
    %c0_76 = arith.constant 0 : index
    %c640_77 = arith.constant 640 : index
    %104 = vector.load %arg11[%c0_76, %c640_77] : memref<256x1152xbf16, #tpu.memory_space<vmem>>, vector<256x128xbf16>
    tpu.vector_store %arg11[%c0_76, %c640_77], %103 {strides = array<i32>} : memref<256x1152xbf16, #tpu.memory_space<vmem>>, vector<256x128xbf16>,
    %105 = vector.extract_strided_slice %98 {offsets = [2, 0, 0], sizes = [16, 16, 128], strides = [1, 1, 1]} : vector<18x16x128xbf16> to vector<16x16x128xbf16>
    %106 = vector.shape_cast %105 : vector<16x16x128xbf16> to vector<256x128xbf16>
    %c0_78 = arith.constant 0 : index
    %c1024_79 = arith.constant 1024 : index
    %107 = vector.load %arg11[%c0_78, %c1024_79] : memref<256x1152xbf16, #tpu.memory_space<vmem>>, vector<256x128xbf16>
    tpu.vector_store %arg11[%c0_78, %c1024_79], %106 {strides = array<i32>} : memref<256x1152xbf16, #tpu.memory_space<vmem>>, vector<256x128xbf16>,
    %c0_80 = arith.constant 0 : index
    %c0_81 = arith.constant 0 : index
    %108 = vector.load %arg11[%c0_80, %c0_81] : memref<256x1152xbf16, #tpu.memory_space<vmem>>, vector<256x1152xbf16>
    %c0_82 = arith.constant 0 : index
    %c0_83 = arith.constant 0 : index
    %c0_84 = arith.constant 0 : index
    %109 = vector.load %arg4[%c0_82, %c0_83, %c0_84] : memref<2x1152x128xbf16, #tpu.memory_space<vmem>>, vector<1x1152x128xbf16>
    %110 = vector.shape_cast %109 : vector<1x1152x128xbf16> to vector<1152x128xbf16>
    %cst_85 = arith.constant dense<0.000000e+00> : vector<256x128xf32>
    %111 = tpu.matmul %108, %110, %cst_85 {dimension_numbers = #tpu.dot_dimension_numbers<[1], [0], [0], [1], [0, 0, 1, 1], [], []>} : vector<256x1152xbf16>, vector<1152x128xbf16>, vector<256x128xf32> -> vector<256x128xf32>
    %c0_86 = arith.constant 0 : index
    %c0_87 = arith.constant 0 : index
    %c0_88 = arith.constant 0 : index
    %112 = vector.load %arg7[%c0_86, %c0_87, %c0_88] : memref<2x1x128xf32, #tpu.memory_space<vmem>>, vector<1x1x128xf32>
    %113 = vector.shape_cast %112 : vector<1x1x128xf32> to vector<1x128xf32>
    %114 = vector.broadcast %113 : vector<1x128xf32> to vector<256x128xf32>
    %115 = arith.mulf %111, %114 : vector<256x128xf32>
    %c0_89 = arith.constant 0 : index
    %c0_90 = arith.constant 0 : index
    %c0_91 = arith.constant 0 : index
    %116 = vector.load %arg8[%c0_89, %c0_90, %c0_91] : memref<2x1x128xf32, #tpu.memory_space<vmem>>, vector<1x1x128xf32>
    %117 = vector.shape_cast %116 : vector<1x1x128xf32> to vector<1x128xf32>
    %118 = vector.broadcast %117 : vector<1x128xf32> to vector<256x128xf32>
    %119 = arith.addf %115, %118 : vector<256x128xf32>
    %c1_92 = arith.constant 1 : index
    %c0_93 = arith.constant 0 : index
    %c0_94 = arith.constant 0 : index
    %c0_95 = arith.constant 0 : index
    %120 = vector.load %arg10[%c1_92, %c0_93, %c0_94, %c0_95] : memref<2x18x18x128xf32, #tpu.memory_space<vmem>>, vector<1x18x16x128xf32>
    %121 = vector.shape_cast %120 : vector<1x18x16x128xf32> to vector<18x16x128xf32>
    %122 = arith.truncf %121 : vector<18x16x128xf32> to vector<18x16x128xbf16>
    %123 = vector.extract_strided_slice %122 {offsets = [0, 0, 0], sizes = [16, 16, 128], strides = [1, 1, 1]} : vector<18x16x128xbf16> to vector<16x16x128xbf16>
    %124 = vector.shape_cast %123 : vector<16x16x128xbf16> to vector<256x128xbf16>
    %c0_96 = arith.constant 0 : index
    %c0_97 = arith.constant 0 : index
    %125 = vector.load %arg11[%c0_96, %c0_97] : memref<256x1152xbf16, #tpu.memory_space<vmem>>, vector<256x128xbf16>
    tpu.vector_store %arg11[%c0_96, %c0_97], %124 {strides = array<i32>} : memref<256x1152xbf16, #tpu.memory_space<vmem>>, vector<256x128xbf16>,
    %126 = vector.extract_strided_slice %122 {offsets = [1, 0, 0], sizes = [16, 16, 128], strides = [1, 1, 1]} : vector<18x16x128xbf16> to vector<16x16x128xbf16>
    %127 = vector.shape_cast %126 : vector<16x16x128xbf16> to vector<256x128xbf16>
    %c0_98 = arith.constant 0 : index
    %c384_99 = arith.constant 384 : index
    %128 = vector.load %arg11[%c0_98, %c384_99] : memref<256x1152xbf16, #tpu.memory_space<vmem>>, vector<256x128xbf16>
    tpu.vector_store %arg11[%c0_98, %c384_99], %127 {strides = array<i32>} : memref<256x1152xbf16, #tpu.memory_space<vmem>>, vector<256x128xbf16>,
    %129 = vector.extract_strided_slice %122 {offsets = [2, 0, 0], sizes = [16, 16, 128], strides = [1, 1, 1]} : vector<18x16x128xbf16> to vector<16x16x128xbf16>
    %130 = vector.shape_cast %129 : vector<16x16x128xbf16> to vector<256x128xbf16>
    %c0_100 = arith.constant 0 : index
    %c768_101 = arith.constant 768 : index
    %131 = vector.load %arg11[%c0_100, %c768_101] : memref<256x1152xbf16, #tpu.memory_space<vmem>>, vector<256x128xbf16>
    tpu.vector_store %arg11[%c0_100, %c768_101], %130 {strides = array<i32>} : memref<256x1152xbf16, #tpu.memory_space<vmem>>, vector<256x128xbf16>,
    %c1_102 = arith.constant 1 : index
    %c0_103 = arith.constant 0 : index
    %c1_104 = arith.constant 1 : index
    %c0_105 = arith.constant 0 : index
    %132 = vector.load %arg10[%c1_102, %c0_103, %c1_104, %c0_105] : memref<2x18x18x128xf32, #tpu.memory_space<vmem>>, vector<1x18x16x128xf32>
    %133 = vector.shape_cast %132 : vector<1x18x16x128xf32> to vector<18x16x128xf32>
    %134 = arith.truncf %133 : vector<18x16x128xf32> to vector<18x16x128xbf16>
    %135 = vector.extract_strided_slice %134 {offsets = [0, 0, 0], sizes = [16, 16, 128], strides = [1, 1, 1]} : vector<18x16x128xbf16> to vector<16x16x128xbf16>
    %136 = vector.shape_cast %135 : vector<16x16x128xbf16> to vector<256x128xbf16>
    %c0_106 = arith.constant 0 : index
    %c128_107 = arith.constant 128 : index
    %137 = vector.load %arg11[%c0_106, %c128_107] : memref<256x1152xbf16, #tpu.memory_space<vmem>>, vector<256x128xbf16>
    tpu.vector_store %arg11[%c0_106, %c128_107], %136 {strides = array<i32>} : memref<256x1152xbf16, #tpu.memory_space<vmem>>, vector<256x128xbf16>,
    %138 = vector.extract_strided_slice %134 {offsets = [1, 0, 0], sizes = [16, 16, 128], strides = [1, 1, 1]} : vector<18x16x128xbf16> to vector<16x16x128xbf16>
    %139 = vector.shape_cast %138 : vector<16x16x128xbf16> to vector<256x128xbf16>
    %c0_108 = arith.constant 0 : index
    %c512_109 = arith.constant 512 : index
    %140 = vector.load %arg11[%c0_108, %c512_109] : memref<256x1152xbf16, #tpu.memory_space<vmem>>, vector<256x128xbf16>
    tpu.vector_store %arg11[%c0_108, %c512_109], %139 {strides = array<i32>} : memref<256x1152xbf16, #tpu.memory_space<vmem>>, vector<256x128xbf16>,
    %141 = vector.extract_strided_slice %134 {offsets = [2, 0, 0], sizes = [16, 16, 128], strides = [1, 1, 1]} : vector<18x16x128xbf16> to vector<16x16x128xbf16>
    %142 = vector.shape_cast %141 : vector<16x16x128xbf16> to vector<256x128xbf16>
    %c0_110 = arith.constant 0 : index
    %c896_111 = arith.constant 896 : index
    %143 = vector.load %arg11[%c0_110, %c896_111] : memref<256x1152xbf16, #tpu.memory_space<vmem>>, vector<256x128xbf16>
    tpu.vector_store %arg11[%c0_110, %c896_111], %142 {strides = array<i32>} : memref<256x1152xbf16, #tpu.memory_space<vmem>>, vector<256x128xbf16>,
    %c1_112 = arith.constant 1 : index
    %c0_113 = arith.constant 0 : index
    %c2_114 = arith.constant 2 : index
    %c0_115 = arith.constant 0 : index
    %144 = vector.load %arg10[%c1_112, %c0_113, %c2_114, %c0_115] : memref<2x18x18x128xf32, #tpu.memory_space<vmem>>, vector<1x18x16x128xf32>
    %145 = vector.shape_cast %144 : vector<1x18x16x128xf32> to vector<18x16x128xf32>
    %146 = arith.truncf %145 : vector<18x16x128xf32> to vector<18x16x128xbf16>
    %147 = vector.extract_strided_slice %146 {offsets = [0, 0, 0], sizes = [16, 16, 128], strides = [1, 1, 1]} : vector<18x16x128xbf16> to vector<16x16x128xbf16>
    %148 = vector.shape_cast %147 : vector<16x16x128xbf16> to vector<256x128xbf16>
    %c0_116 = arith.constant 0 : index
    %c256_117 = arith.constant 256 : index
    %149 = vector.load %arg11[%c0_116, %c256_117] : memref<256x1152xbf16, #tpu.memory_space<vmem>>, vector<256x128xbf16>
    tpu.vector_store %arg11[%c0_116, %c256_117], %148 {strides = array<i32>} : memref<256x1152xbf16, #tpu.memory_space<vmem>>, vector<256x128xbf16>,
    %150 = vector.extract_strided_slice %146 {offsets = [1, 0, 0], sizes = [16, 16, 128], strides = [1, 1, 1]} : vector<18x16x128xbf16> to vector<16x16x128xbf16>
    %151 = vector.shape_cast %150 : vector<16x16x128xbf16> to vector<256x128xbf16>
    %c0_118 = arith.constant 0 : index
    %c640_119 = arith.constant 640 : index
    %152 = vector.load %arg11[%c0_118, %c640_119] : memref<256x1152xbf16, #tpu.memory_space<vmem>>, vector<256x128xbf16>
    tpu.vector_store %arg11[%c0_118, %c640_119], %151 {strides = array<i32>} : memref<256x1152xbf16, #tpu.memory_space<vmem>>, vector<256x128xbf16>,
    %153 = vector.extract_strided_slice %146 {offsets = [2, 0, 0], sizes = [16, 16, 128], strides = [1, 1, 1]} : vector<18x16x128xbf16> to vector<16x16x128xbf16>
    %154 = vector.shape_cast %153 : vector<16x16x128xbf16> to vector<256x128xbf16>
    %c0_120 = arith.constant 0 : index
    %c1024_121 = arith.constant 1024 : index
    %155 = vector.load %arg11[%c0_120, %c1024_121] : memref<256x1152xbf16, #tpu.memory_space<vmem>>, vector<256x128xbf16>
    tpu.vector_store %arg11[%c0_120, %c1024_121], %154 {strides = array<i32>} : memref<256x1152xbf16, #tpu.memory_space<vmem>>, vector<256x128xbf16>,
    %c0_122 = arith.constant 0 : index
    %c0_123 = arith.constant 0 : index
    %156 = vector.load %arg11[%c0_122, %c0_123] : memref<256x1152xbf16, #tpu.memory_space<vmem>>, vector<256x1152xbf16>
    %c1_124 = arith.constant 1 : index
    %c0_125 = arith.constant 0 : index
    %c0_126 = arith.constant 0 : index
    %157 = vector.load %arg4[%c1_124, %c0_125, %c0_126] : memref<2x1152x128xbf16, #tpu.memory_space<vmem>>, vector<1x1152x128xbf16>
    %158 = vector.shape_cast %157 : vector<1x1152x128xbf16> to vector<1152x128xbf16>
    %cst_127 = arith.constant dense<0.000000e+00> : vector<256x128xf32>
    %159 = tpu.matmul %156, %158, %cst_127 {dimension_numbers = #tpu.dot_dimension_numbers<[1], [0], [0], [1], [0, 0, 1, 1], [], []>} : vector<256x1152xbf16>, vector<1152x128xbf16>, vector<256x128xf32> -> vector<256x128xf32>
    %c1_128 = arith.constant 1 : index
    %c0_129 = arith.constant 0 : index
    %c0_130 = arith.constant 0 : index
    %160 = vector.load %arg7[%c1_128, %c0_129, %c0_130] : memref<2x1x128xf32, #tpu.memory_space<vmem>>, vector<1x1x128xf32>
    %161 = vector.shape_cast %160 : vector<1x1x128xf32> to vector<1x128xf32>
    %162 = vector.broadcast %161 : vector<1x128xf32> to vector<256x128xf32>
    %163 = arith.mulf %159, %162 : vector<256x128xf32>
    %c1_131 = arith.constant 1 : index
    %c0_132 = arith.constant 0 : index
    %c0_133 = arith.constant 0 : index
    %164 = vector.load %arg8[%c1_131, %c0_132, %c0_133] : memref<2x1x128xf32, #tpu.memory_space<vmem>>, vector<1x1x128xf32>
    %165 = vector.shape_cast %164 : vector<1x1x128xf32> to vector<1x128xf32>
    %166 = vector.broadcast %165 : vector<1x128xf32> to vector<256x128xf32>
    %167 = arith.addf %163, %166 : vector<256x128xf32>
    %168 = vector.broadcast %1 : f32 to vector<256x128xf32>
    %169 = arith.mulf %168, %119 : vector<256x128xf32>
    %cst_134 = arith.constant 1.000000e+00 : f32
    %170 = arith.subf %cst_134, %1 : f32
    %171 = vector.broadcast %170 : f32 to vector<256x128xf32>
    %172 = arith.mulf %171, %167 : vector<256x128xf32>
    %173 = arith.addf %169, %172 : vector<256x128xf32>
    %174 = vector.shape_cast %173 : vector<256x128xf32> to vector<16x16x128xf32>
    %c0_135 = arith.constant 0 : index
    %c0_136 = arith.constant 0 : index
    %c0_137 = arith.constant 0 : index
    %c0_138 = arith.constant 0 : index
    %175 = vector.load %arg9[%c0_135, %c0_136, %c0_137, %c0_138] : memref<1x16x16x128xf32, #tpu.memory_space<vmem>>, vector<1x16x16x128xf32>
    %176 = vector.shape_cast %175 : vector<1x16x16x128xf32> to vector<16x16x128xf32>
    %177 = vector.shape_cast %174 : vector<16x16x128xf32> to vector<1x16x16x128xf32>
    tpu.vector_store %arg9[%c0_135, %c0_136, %c0_137, %c0_138], %177 {strides = array<i32>} : memref<1x16x16x128xf32, #tpu.memory_space<vmem>>, vector<1x16x16x128xf32>,
    %178 = vector.extract_strided_slice %174 {offsets = [0, 0, 0], sizes = [16, 16, 4], strides = [1, 1, 1]} : vector<16x16x128xf32> to vector<16x16x4xf32>
    %c0_139 = arith.constant 0 : index
    %c0_140 = arith.constant 0 : index
    %c0_141 = arith.constant 0 : index
    %c0_142 = arith.constant 0 : index
    %179 = vector.load %arg2[%c0_139, %c0_140, %c0_141, %c0_142] : memref<1x16x16x4xf32, #tpu.memory_space<vmem>>, vector<1x16x16x4xf32>
    %180 = vector.shape_cast %179 : vector<1x16x16x4xf32> to vector<16x16x4xf32>
    %181 = arith.addf %178, %180 : vector<16x16x4xf32>
    %c0_143 = arith.constant 0 : index
    %c0_144 = arith.constant 0 : index
    %c0_145 = arith.constant 0 : index
    %c0_146 = arith.constant 0 : index
    %182 = vector.load %arg9[%c0_143, %c0_144, %c0_145, %c0_146] : memref<1x16x16x128xf32, #tpu.memory_space<vmem>>, vector<1x16x16x4xf32>
    %183 = vector.shape_cast %182 : vector<1x16x16x4xf32> to vector<16x16x4xf32>
    %184 = vector.shape_cast %181 : vector<16x16x4xf32> to vector<1x16x16x4xf32>
    tpu.vector_store %arg9[%c0_143, %c0_144, %c0_145, %c0_146], %184 {strides = array<i32>} : memref<1x16x16x128xf32, #tpu.memory_space<vmem>>, vector<1x16x16x4xf32>,
    return
  }
  func.func @transform_0(%arg0: i32, %arg1: memref<2xf32, #tpu.memory_space<smem>>) -> (i32, i32, i32, i32) {
    %c0_i32 = arith.constant 0 : i32
    %c0_i32_0 = arith.constant 0 : i32
    %c0_i32_1 = arith.constant 0 : i32
    %c0_i32_2 = arith.constant 0 : i32
    return %arg0, %c0_i32, %c0_i32_0, %c0_i32_1 : i32, i32, i32, i32
  }
  func.func @transform_1(%arg0: i32, %arg1: memref<2xf32, #tpu.memory_space<smem>>) -> (i32, i32) {
    %c0_i32 = arith.constant 0 : i32
    %c0_i32_0 = arith.constant 0 : i32
    %c0_i32_1 = arith.constant 0 : i32
    return %c0_i32, %c0_i32_0 : i32, i32
  }
  func.func @transform_2(%arg0: i32, %arg1: memref<2xf32, #tpu.memory_space<smem>>) -> (i32, i32, i32) {
    %c0_i32 = arith.constant 0 : i32
    %c0_i32_0 = arith.constant 0 : i32
    %c0_i32_1 = arith.constant 0 : i32
    %c0_i32_2 = arith.constant 0 : i32
    return %c0_i32, %c0_i32_0, %c0_i32_1 : i32, i32, i32
  }
  func.func @transform_3(%arg0: i32, %arg1: memref<2xf32, #tpu.memory_space<smem>>) -> (i32, i32) {
    %c0_i32 = arith.constant 0 : i32
    %c0_i32_0 = arith.constant 0 : i32
    %c0_i32_1 = arith.constant 0 : i32
    return %c0_i32, %c0_i32_0 : i32, i32
  }
  func.func @transform_4(%arg0: i32, %arg1: memref<2xf32, #tpu.memory_space<smem>>) -> (i32, i32) {
    %c0_i32 = arith.constant 0 : i32
    %c0_i32_0 = arith.constant 0 : i32
    %c0_i32_1 = arith.constant 0 : i32
    return %c0_i32, %c0_i32_0 : i32, i32
  }
  func.func @transform_5(%arg0: i32, %arg1: memref<2xf32, #tpu.memory_space<smem>>) -> (i32, i32, i32) {
    %c0_i32 = arith.constant 0 : i32
    %c0_i32_0 = arith.constant 0 : i32
    %c0_i32_1 = arith.constant 0 : i32
    %c0_i32_2 = arith.constant 0 : i32
    return %c0_i32, %c0_i32_0, %c0_i32_1 : i32, i32, i32
  }
  func.func @transform_6(%arg0: i32, %arg1: memref<2xf32, #tpu.memory_space<smem>>) -> (i32, i32, i32) {
    %c0_i32 = arith.constant 0 : i32
    %c0_i32_0 = arith.constant 0 : i32
    %c0_i32_1 = arith.constant 0 : i32
    %c0_i32_2 = arith.constant 0 : i32
    return %c0_i32, %c0_i32_0, %c0_i32_1 : i32, i32, i32
  }
  func.func @transform_7(%arg0: i32, %arg1: memref<2xf32, #tpu.memory_space<smem>>) -> (i32, i32, i32, i32) {
    %c0_i32 = arith.constant 0 : i32
    %c0_i32_0 = arith.constant 0 : i32
    %c0_i32_1 = arith.constant 0 : i32
    %c0_i32_2 = arith.constant 0 : i32
    return %arg0, %c0_i32, %c0_i32_0, %c0_i32_1 : i32, i32, i32, i32
  }
}

</mosaic_0001>

<llo_original>
// kernel: shake_shake_block_forward.1
$region0: #{shake_shake_block_forward.1}
  #allocation0 [shape = 'u32[]', space=smem, size = 0x4, offset = 0x4, fixed_abs, tag = 'smem constant byte address 0x4 - core index']
  #allocation1 [shape = 'u32[144,128]{1,0:T(1,128)}', space=vmem, size = 0x12000, scoped, tag = 'internal scratch']
  #allocation2 [shape = 'f32[2,18,18,128]{3,2,1,0:T(8,128)}', space=vmem, size = 0x6c000, scoped, tag = 'scratch operand']
  #allocation3 [shape = 'bf16[256,1152]{1,0:T(8,128)(2,1)}', space=vmem, size = 0x90000, scoped, tag = 'scratch operand']
  #allocation4 [shape = 's32[1]{0}', space=sflag, size = 0x4, scoped, tag = 'scoped memory for shake_shake_block_forward.1']
  #allocation5 [shape = 'u8[512]{0}', space=smem, size = 0x200, scoped, tag = 'prefetched SMEM operand 0']
  %s0 = inlined_call_operand.vmem [shape: f32[2], index: 0, kind: input, shape index: {}]
  %s1 = inlined_call_operand.vmem [shape: f32[2,16,16,4], index: 1, kind: input, shape index: {}]
  %s2 = inlined_call_operand.hbm [shape: bf16[1152,256], index: 2, kind: input, shape index: {}]
  %s3 = inlined_call_operand.hbm [shape: bf16[2,1152,128], index: 3, kind: input, shape index: {}]
  %s4 = inlined_call_operand.vmem [shape: f32[1,256], index: 4, kind: input, shape index: {}]
  %s5 = inlined_call_operand.vmem [shape: f32[1,256], index: 5, kind: input, shape index: {}]
  %s6 = inlined_call_operand.vmem [shape: f32[2,1,128], index: 6, kind: input, shape index: {}]
  %s7 = inlined_call_operand.vmem [shape: f32[2,1,128], index: 7, kind: input, shape index: {}]
  %s8 = inlined_call_operand.hbm [shape: f32[2,16,16,128], index: 8, kind: output, shape index: {}]
  %s9 = sld [smem:[#allocation0]]
  $region69: #{shake_shake_block_forward.1} parent=0
    _
  %s11 = ssub.s32 1, %s9
  %s12 = scalar_select 0, %s11, %s9
  %s13 = sshll.u32 %s0, 4
  %s14 = int_to_ptr.vmem [resolvable:$true] %s13
  %16 = dma.vmem_to_smem %s14, 16, [#allocation5], [#allocation4]
  %17 = dma.done [#allocation4], 16
  %18 = sfence
  $region1: #{shake_shake_block_forward.1} parent=0
    #allocation6 [shape = 'u8[589824]{0}', space=vmem, size = 0x90000, scoped, tag = 'input window, operand 2, single buffered']
    #allocation7 [shape = 's32[2]{0}', space=sflag, size = 0x8, scoped, tag = 'scoped memory for shake_shake_block_forward.1']
    #allocation8 [shape = 's32[2]{0}', space=sflag, size = 0x8, scoped, tag = 'scoped memory for shake_shake_block_forward.1']
    #allocation9 [shape = 'u8[589824]{0}', space=vmem, size = 0x90000, scoped, tag = 'input window, operand 3, single buffered']
    #allocation10 [shape = 's32[1]{0}', space=sflag, size = 0x4, scoped, tag = 'scoped memory for shake_shake_block_forward.1']
    #allocation11 [shape = 'u8[262144]{0}', space=vmem, size = 0x40000, scoped, tag = 'output window, operand 0']
    %19 = vsyncpa [#allocation7], 0
    %20 = vsyncpa [#allocation10], 0
    %21 = vsyncpa [#allocation8], 0
    %s22 = scalar_lea.sflag [#allocation8], 1
    %23 = vsyncpa %s22, 0
    loop: start=0, step=1, limit=4
    $region2: #{shake_shake_block_forward.1} parent=1 // loop_pre_header
      _
    $region3: #{shake_shake_block_forward.1} parent=1 // loop_header
      %s25 = sphi 0, %s29
      %p26 = scmp.ge.s32.totalorder %s25, 4
      %s35 = sphi 0, %s37
      %s38 = sphi 0, %s35
      %s39 = sphi 0, %s38
      %s55 = sphi 0, %s39
      %s59 = sphi 0, %s59
      %s61 = sphi 0, %s59
      %s62 = sphi 0, %s61
      %s76 = sphi 0, %s62
      %s80 = sphi 0, %s80
      %s82 = sphi 0, %s80
      %s83 = sphi 0, %s82
      %s97 = sphi 0, %s83
      %s101 = sphi 0, %s101
      %s103 = sphi 0, %s101
      %s104 = sphi 0, %s103
      %s118 = sphi 0, %s104
      %s122 = sphi 0, %s122
      %s124 = sphi 0, %s122
      %s125 = sphi 0, %s124
      %s139 = sphi 0, %s125
      %s143 = sphi 0, %s143
      %s145 = sphi 0, %s143
      %s146 = sphi 0, %s145
      %s160 = sphi 0, %s146
      %s164 = sphi 0, %s164
      %s166 = sphi 0, %s164
      %s167 = sphi 0, %s166
      %s181 = sphi 0, %s167
      %s187 = sphi 0, %s189
      %s190 = sphi 0, %s187
      %s191 = sphi 0, %s190
      %s207 = sphi 0, %s191
    $region4: #{shake_shake_block_forward.1} parent=1 // loop_header_branch
      %28 = sbr.rel (%p26) target = $region8
    $region5: #{shake_shake_block_forward.1} parent=1 // loop_body
      %s30 = ssub.s32 %s25, 1
      %s31 = ssub.s32 %s25, 2
      %s32 = sadd.s32 %s25, 1
      %s33 = ssub.s32 %s25, %s32
      %p34 = scmp.eq.s32.totalorder %s33, 0
      %s36 = sadd.s32 %s35, 1
      %s37 = scalar_select %p34, %s35, %s36
      %p40 = pneg %p34
      %p41 = scmp.eq.s32.totalorder %s25, 1
      %p42 = por %p40, %p41
      %p43 = scmp.ne.s32.totalorder %s35, %s38
      %p44 = scmp.eq.s32.totalorder %s25, 0
      %p45 = por %p43, %p44
      %p46 = scmp.ne.s32.totalorder %s35, %s38
      %p47 = scmp.eq.s32.totalorder %s30, 1
      %p48 = por %p46, %p47
      %p49 = scmp.ne.s32.totalorder %s38, %s39
      %p50 = scmp.eq.s32.totalorder %s30, 0
      %p51 = por %p49, %p50
      %p52 = scmp.ne.s32.totalorder %s38, %s39
      %p53 = scmp.eq.s32.totalorder %s31, 1
      %p54 = por %p52, %p53
      %p56 = scmp.ne.s32.totalorder %s39, %s55
      %p57 = scmp.eq.s32.totalorder %s31, 0
      %p58 = por %p56, %p57
      %s60 = sadd.s32 %s59, 1
      %p63 = scmp.eq.s32.totalorder %s25, 1
      %p64 = scmp.ne.s32.totalorder %s59, %s61
      %p65 = scmp.eq.s32.totalorder %s25, 0
      %p66 = por %p64, %p65
      %p67 = scmp.ne.s32.totalorder %s59, %s61
      %p68 = scmp.eq.s32.totalorder %s30, 1
      %p69 = por %p67, %p68
      %p70 = scmp.ne.s32.totalorder %s61, %s62
      %p71 = scmp.eq.s32.totalorder %s30, 0
      %p72 = por %p70, %p71
      %p73 = scmp.ne.s32.totalorder %s61, %s62
      %p74 = scmp.eq.s32.totalorder %s31, 1
      %p75 = por %p73, %p74
      %p77 = scmp.ne.s32.totalorder %s62, %s76
      %p78 = scmp.eq.s32.totalorder %s31, 0
      %p79 = por %p77, %p78
      %s81 = sadd.s32 %s80, 1
      %p84 = scmp.eq.s32.totalorder %s25, 1
      %p85 = scmp.ne.s32.totalorder %s80, %s82
      %p86 = scmp.eq.s32.totalorder %s25, 0
      %p87 = por %p85, %p86
      %p88 = scmp.ne.s32.totalorder %s80, %s82
      %p89 = scmp.eq.s32.totalorder %s30, 1
      %p90 = por %p88, %p89
      %p91 = scmp.ne.s32.totalorder %s82, %s83
      %p92 = scmp.eq.s32.totalorder %s30, 0
      %p93 = por %p91, %p92
      %p94 = scmp.ne.s32.totalorder %s82, %s83
      %p95 = scmp.eq.s32.totalorder %s31, 1
      %p96 = por %p94, %p95
      %p98 = scmp.ne.s32.totalorder %s83, %s97
      %p99 = scmp.eq.s32.totalorder %s31, 0
      %p100 = por %p98, %p99
      %s102 = sadd.s32 %s101, 1
      %p105 = scmp.eq.s32.totalorder %s25, 1
      %p106 = scmp.ne.s32.totalorder %s101, %s103
      %p107 = scmp.eq.s32.totalorder %s25, 0
      %p108 = por %p106, %p107
      %p109 = scmp.ne.s32.totalorder %s101, %s103
      %p110 = scmp.eq.s32.totalorder %s30, 1
      %p111 = por %p109, %p110
      %p112 = scmp.ne.s32.totalorder %s103, %s104
      %p113 = scmp.eq.s32.totalorder %s30, 0
      %p114 = por %p112, %p113
      %p115 = scmp.ne.s32.totalorder %s103, %s104
      %p116 = scmp.eq.s32.totalorder %s31, 1
      %p117 = por %p115, %p116
      %p119 = scmp.ne.s32.totalorder %s104, %s118
      %p120 = scmp.eq.s32.totalorder %s31, 0
      %p121 = por %p119, %p120
      %s123 = sadd.s32 %s122, 1
      %p126 = scmp.eq.s32.totalorder %s25, 1
      %p127 = scmp.ne.s32.totalorder %s122, %s124
      %p128 = scmp.eq.s32.totalorder %s25, 0
      %p129 = por %p127, %p128
      %p130 = scmp.ne.s32.totalorder %s122, %s124
      %p131 = scmp.eq.s32.totalorder %s30, 1
      %p132 = por %p130, %p131
      %p133 = scmp.ne.s32.totalorder %s124, %s125
      %p134 = scmp.eq.s32.totalorder %s30, 0
      %p135 = por %p133, %p134
      %p136 = scmp.ne.s32.totalorder %s124, %s125
      %p137 = scmp.eq.s32.totalorder %s31, 1
      %p138 = por %p136, %p137
      %p140 = scmp.ne.s32.totalorder %s125, %s139
      %p141 = scmp.eq.s32.totalorder %s31, 0
      %p142 = por %p140, %p141
      %s144 = sadd.s32 %s143, 1
      %p147 = scmp.eq.s32.totalorder %s25, 1
      %p148 = scmp.ne.s32.totalorder %s143, %s145
      %p149 = scmp.eq.s32.totalorder %s25, 0
      %p150 = por %p148, %p149
      %p151 = scmp.ne.s32.totalorder %s143, %s145
      %p152 = scmp.eq.s32.totalorder %s30, 1
      %p153 = por %p151, %p152
      %p154 = scmp.ne.s32.totalorder %s145, %s146
      %p155 = scmp.eq.s32.totalorder %s30, 0
      %p156 = por %p154, %p155
      %p157 = scmp.ne.s32.totalorder %s145, %s146
      %p158 = scmp.eq.s32.totalorder %s31, 1
      %p159 = por %p157, %p158
      %p161 = scmp.ne.s32.totalorder %s146, %s160
      %p162 = scmp.eq.s32.totalorder %s31, 0
      %p163 = por %p161, %p162
      %s165 = sadd.s32 %s164, 1
      %p168 = scmp.eq.s32.totalorder %s25, 1
      %p169 = scmp.ne.s32.totalorder %s164, %s166
      %p170 = scmp.eq.s32.totalorder %s25, 0
      %p171 = por %p169, %p170
      %p172 = scmp.ne.s32.totalorder %s164, %s166
      %p173 = scmp.eq.s32.totalorder %s30, 1
      %p174 = por %p172, %p173
      %p175 = scmp.ne.s32.totalorder %s166, %s167
      %p176 = scmp.eq.s32.totalorder %s30, 0
      %p177 = por %p175, %p176
      %p178 = scmp.ne.s32.totalorder %s166, %s167
      %p179 = scmp.eq.s32.totalorder %s31, 1
      %p180 = por %p178, %p179
      %p182 = scmp.ne.s32.totalorder %s167, %s181
      %p183 = scmp.eq.s32.totalorder %s31, 0
      %p184 = por %p182, %p183
      %s185 = ssub.s32 %s25, %s32
      %p186 = scmp.eq.s32.totalorder %s185, 0
      %s188 = sadd.s32 %s187, 1
      %s189 = scalar_select %p186, %s187, %s188
      %p192 = pneg %p186
      %p193 = scmp.eq.s32.totalorder %s25, 1
      %p194 = por %p192, %p193
      %p195 = scmp.ne.s32.totalorder %s187, %s190
      %p196 = scmp.eq.s32.totalorder %s25, 0
      %p197 = por %p195, %p196
      %p198 = scmp.ne.s32.totalorder %s187, %s190
      %p199 = scmp.eq.s32.totalorder %s30, 1
      %p200 = por %p198, %p199
      %p201 = scmp.ne.s32.totalorder %s190, %s191
      %p202 = scmp.eq.s32.totalorder %s30, 0
      %p203 = por %p201, %p202
      %p204 = scmp.ne.s32.totalorder %s190, %s191
      %p205 = scmp.eq.s32.totalorder %s31, 1
      %p206 = por %p204, %p205
      %p208 = scmp.ne.s32.totalorder %s191, %s207
      %p209 = scmp.eq.s32.totalorder %s31, 0
      %p210 = por %p208, %p209
      %p211 = scmp.le.s32.totalorder 1, %s25
      %p212 = scmp.lt.s32.totalorder %s25, 3
      %p213 = pnand %p211, %p212
      %p214 = pneg %p213
      // Predicated region
      $region9: #{shake_shake_block_forward.1} parent=5 // pred_check
        _
      $region10: #{shake_shake_block_forward.1} parent=5 // pred_check_branch
        %216 = sbr.rel (%p213) target = $region12
      $region11: #{shake_shake_block_forward.1} parent=5 // pred_region
        %s217 = ssub.s32 %s25, 1
        // Predicated region
        $region13: #{shake_shake_block_forward.1} parent=11 // pred_check
          %p218 = pneg %p72
        $region14: #{shake_shake_block_forward.1} parent=11 // pred_check_branch
          %220 = sbr.rel (%p218) target = $region16
        $region15: #{shake_shake_block_forward.1} parent=11 // pred_region
          %s222 = ssub.s32 18432, 18432
          %223 = vsyncadd [#allocation7], %s222
          %s224 = sshll.u32 [#allocation6], 4
          %s225 = int_to_ptr.vmem [resolvable:$true] %s224
          %230 = dma.hbm_to_vmem [thread:$0]  %s2, 18432, %s225, [#allocation7], 128, 128, 8
        $region16: #{shake_shake_block_forward.1} parent=11 // pred_fallthru
          _
        // Predicated region
        $region17: #{shake_shake_block_forward.1} parent=11 // pred_check
          %p231 = pneg %p93
        $region18: #{shake_shake_block_forward.1} parent=11 // pred_check_branch
          %233 = sbr.rel (%p231) target = $region20
        $region19: #{shake_shake_block_forward.1} parent=11 // pred_region
          %s235 = ssub.s32 18432, 18432
          %236 = vsyncadd [#allocation10], %s235
          %s237 = sshll.u32 [#allocation9], 4
          %s238 = int_to_ptr.vmem [resolvable:$true] %s237
          %243 = dma.hbm_to_vmem [thread:$0]  %s3, 18432, %s238, [#allocation10], 64, 64, 4
        $region20: #{shake_shake_block_forward.1} parent=11 // pred_fallthru
          _
        // Predicated region
        $region21: #{shake_shake_block_forward.1} parent=11 // pred_check
          %p244 = pneg %p114
        $region22: #{shake_shake_block_forward.1} parent=11 // pred_check_branch
          %246 = sbr.rel (%p244) target = $region24
        $region23: #{shake_shake_block_forward.1} parent=11 // pred_region
          _
        $region24: #{shake_shake_block_forward.1} parent=11 // pred_fallthru
          _
        // Predicated region
        $region25: #{shake_shake_block_forward.1} parent=11 // pred_check
          %p247 = pneg %p135
        $region26: #{shake_shake_block_forward.1} parent=11 // pred_check_branch
          %249 = sbr.rel (%p247) target = $region28
        $region27: #{shake_shake_block_forward.1} parent=11 // pred_region
          _
        $region28: #{shake_shake_block_forward.1} parent=11 // pred_fallthru
          _
        // Predicated region
        $region29: #{shake_shake_block_forward.1} parent=11 // pred_check
          %p250 = pneg %p156
        $region30: #{shake_shake_block_forward.1} parent=11 // pred_check_branch
          %252 = sbr.rel (%p250) target = $region32
        $region31: #{shake_shake_block_forward.1} parent=11 // pred_region
          _
        $region32: #{shake_shake_block_forward.1} parent=11 // pred_fallthru
          _
        // Predicated region
        $region33: #{shake_shake_block_forward.1} parent=11 // pred_check
          %p253 = pneg %p177
        $region34: #{shake_shake_block_forward.1} parent=11 // pred_check_branch
          %255 = sbr.rel (%p253) target = $region36
        $region35: #{shake_shake_block_forward.1} parent=11 // pred_region
          _
        $region36: #{shake_shake_block_forward.1} parent=11 // pred_fallthru
          _
      $region12: #{shake_shake_block_forward.1} parent=5 // pred_fallthru
        _
      %p256 = scmp.lt.s32.totalorder %s25, 2
      // Predicated region
      $region37: #{shake_shake_block_forward.1} parent=5 // pred_check
        %p257 = pneg %p256
      $region38: #{shake_shake_block_forward.1} parent=5 // pred_check_branch
        %259 = sbr.rel (%p257) target = $region40
      $region39: #{shake_shake_block_forward.1} parent=5 // pred_region
        // Predicated region
        $region41: #{shake_shake_block_forward.1} parent=39 // pred_check
          %p260 = pneg %p45
        $region42: #{shake_shake_block_forward.1} parent=39 // pred_check_branch
          %262 = sbr.rel (%p260) target = $region44
        $region43: #{shake_shake_block_forward.1} parent=39 // pred_region
          %p263 = scmp.lt.s32.totalorder %s25, 1
          %s264 = scalar_select %p263, %s25, 1
          %s265 = smul.addr %s264, 32
          %s266 = smul.addr %s265, 8
          %s267 = scalar_lea.vmem %s1, %s266
        $region44: #{shake_shake_block_forward.1} parent=39 // pred_fallthru
          _
      $region40: #{shake_shake_block_forward.1} parent=5 // pred_fallthru
        _
      %p268 = scmp.le.s32.totalorder 1, %s25
      %p269 = scmp.lt.s32.totalorder %s25, 3
      %p270 = pnand %p268, %p269
      %p271 = pneg %p270
      // Predicated region
      $region45: #{shake_shake_block_forward.1} parent=5 // pred_check
        _
      $region46: #{shake_shake_block_forward.1} parent=5 // pred_check_branch
        %273 = sbr.rel (%p270) target = $region48
      $region47: #{shake_shake_block_forward.1} parent=5 // pred_region
        %s274 = ssub.s32 %s25, 1
        // Predicated region
        $region49: #{shake_shake_block_forward.1} parent=47 // pred_check
          %p275 = pneg %p72
        $region50: #{shake_shake_block_forward.1} parent=47 // pred_check_branch
          %277 = sbr.rel (%p275) target = $region52
        $region51: #{shake_shake_block_forward.1} parent=47 // pred_region
          %278 = dma.done [#allocation7], 18432
        $region52: #{shake_shake_block_forward.1} parent=47 // pred_fallthru
          _
        // Predicated region
        $region53: #{shake_shake_block_forward.1} parent=47 // pred_check
          %p279 = pneg %p93
        $region54: #{shake_shake_block_forward.1} parent=47 // pred_check_branch
          %281 = sbr.rel (%p279) target = $region56
        $region55: #{shake_shake_block_forward.1} parent=47 // pred_region
          %282 = dma.done [#allocation10], 18432
        $region56: #{shake_shake_block_forward.1} parent=47 // pred_fallthru
          _
        %p283 = scmp.lt.s32.totalorder %s30, 1
        %s284 = scalar_select %p283, %s30, 1
        %s285 = smul.addr %s284, 32
        %s286 = smul.addr %s285, 8
        %s287 = scalar_lea.vmem %s1, %s286
        %p288 = pneg %p51
        %p289 = pneg %p48
        %p290 = pneg %p72
        %p291 = pneg %p69
        %p292 = pneg %p93
        %p293 = pneg %p90
        %p294 = pneg %p114
        %p295 = pneg %p111
        %p296 = pneg %p135
        %p297 = pneg %p132
        %p298 = pneg %p156
        %p299 = pneg %p153
        %p300 = pneg %p177
        %p301 = pneg %p174
        %p302 = pneg %p203
        %p303 = pneg %p200
        %s304 = sand.u32 %s190, 1
        %s305 = scalar_lea.sflag [#allocation8], %s304
        %s306 = sand.u32 %s190, 1
        %s307 = smul.addr %s306, 256
        %s308 = scalar_lea.vmem [#allocation11], %s307
        %p309 = scmp.lt.s32.totalorder %s30, 1
        %s310 = scalar_select %p309, %s30, 1
        %s311 = smul.addr %s310, 32
        %s312 = smul.addr %s311, 8
        %s313 = scalar_lea.vmem %s1, %s312
        %s315 = sld [smem:[#allocation5 + %s30]]
        %316 = vst [vmem:[#allocation2] sm:$0xff] 0.0
        %317 = vst [vmem:[#allocation2 + $0x8] sm:$0xff] 0.0
        %318 = vst [vmem:[#allocation2 + $0x10] sm:$0x3] 0.0
        %319 = vst [vmem:[#allocation2 + $0x18] sm:$0xff] 0.0
        %320 = vst [vmem:[#allocation2 + $0x20] sm:$0xff] 0.0
        %321 = vst [vmem:[#allocation2 + $0x28] sm:$0x3] 0.0
        %322 = vst [vmem:[#allocation2 + $0x30] sm:$0xff] 0.0
        %323 = vst [vmem:[#allocation2 + $0x38] sm:$0xff] 0.0
        %324 = vst [vmem:[#allocation2 + $0x40] sm:$0x3] 0.0
        %325 = vst [vmem:[#allocation2 + $0x48] sm:$0xff] 0.0
        %326 = vst [vmem:[#allocation2 + $0x50] sm:$0xff] 0.0
        %327 = vst [vmem:[#allocation2 + $0x58] sm:$0x3] 0.0
        %328 = vst [vmem:[#allocation2 + $0x60] sm:$0xff] 0.0
        %329 = vst [vmem:[#allocation2 + $0x68] sm:$0xff] 0.0
        %330 = vst [vmem:[#allocation2 + $0x70] sm:$0x3] 0.0
        %331 = vst [vmem:[#allocation2 + $0x78] sm:$0xff] 0.0
        %332 = vst [vmem:[#allocation2 + $0x80] sm:$0xff] 0.0
        %333 = vst [vmem:[#allocation2 + $0x88] sm:$0x3] 0.0
        %334 = vst [vmem:[#allocation2 + $0x90] sm:$0xff] 0.0
        %335 = vst [vmem:[#allocation2 + $0x98] sm:$0xff] 0.0
        %336 = vst [vmem:[#allocation2 + $0xa0] sm:$0x3] 0.0
        %337 = vst [vmem:[#allocation2 + $0xa8] sm:$0xff] 0.0
        %338 = vst [vmem:[#allocation2 + $0xb0] sm:$0xff] 0.0
        %339 = vst [vmem:[#allocation2 + $0xb8] sm:$0x3] 0.0
        %340 = vst [vmem:[#allocation2 + $0xc0] sm:$0xff] 0.0
        %341 = vst [vmem:[#allocation2 + $0xc8] sm:$0xff] 0.0
        %342 = vst [vmem:[#allocation2 + $0xd0] sm:$0x3] 0.0
        %343 = vst [vmem:[#allocation2 + $0xd8] sm:$0xff] 0.0
        %344 = vst [vmem:[#allocation2 + $0xe0] sm:$0xff] 0.0
        %345 = vst [vmem:[#allocation2 + $0xe8] sm:$0x3] 0.0
        %346 = vst [vmem:[#allocation2 + $0xf0] sm:$0xff] 0.0
        %347 = vst [vmem:[#allocation2 + $0xf8] sm:$0xff] 0.0
        %348 = vst [vmem:[#allocation2 + $0x100] sm:$0x3] 0.0
        %349 = vst [vmem:[#allocation2 + $0x108] sm:$0xff] 0.0
        %350 = vst [vmem:[#allocation2 + $0x110] sm:$0xff] 0.0
        %351 = vst [vmem:[#allocation2 + $0x118] sm:$0x3] 0.0
        %352 = vst [vmem:[#allocation2 + $0x120] sm:$0xff] 0.0
        %353 = vst [vmem:[#allocation2 + $0x128] sm:$0xff] 0.0
        %354 = vst [vmem:[#allocation2 + $0x130] sm:$0x3] 0.0
        %355 = vst [vmem:[#allocation2 + $0x138] sm:$0xff] 0.0
        %356 = vst [vmem:[#allocation2 + $0x140] sm:$0xff] 0.0
        %357 = vst [vmem:[#allocation2 + $0x148] sm:$0x3] 0.0
        %358 = vst [vmem:[#allocation2 + $0x150] sm:$0xff] 0.0
        %359 = vst [vmem:[#allocation2 + $0x158] sm:$0xff] 0.0
        %360 = vst [vmem:[#allocation2 + $0x160] sm:$0x3] 0.0
        %361 = vst [vmem:[#allocation2 + $0x168] sm:$0xff] 0.0
        %362 = vst [vmem:[#allocation2 + $0x170] sm:$0xff] 0.0
        %363 = vst [vmem:[#allocation2 + $0x178] sm:$0x3] 0.0
        %364 = vst [vmem:[#allocation2 + $0x180] sm:$0xff] 0.0
        %365 = vst [vmem:[#allocation2 + $0x188] sm:$0xff] 0.0
        %366 = vst [vmem:[#allocation2 + $0x190] sm:$0x3] 0.0
        %367 = vst [vmem:[#allocation2 + $0x198] sm:$0xff] 0.0
        %368 = vst [vmem:[#allocation2 + $0x1a0] sm:$0xff] 0.0
        %369 = vst [vmem:[#allocation2 + $0x1a8] sm:$0x3] 0.0
        %370 = vst [vmem:[#allocation2 + $0x1b0] sm:$0xff] 0.0
        %371 = vst [vmem:[#allocation2 + $0x1b8] sm:$0xff] 0.0
        %372 = vst [vmem:[#allocation2 + $0x1c0] sm:$0x3] 0.0
        %373 = vst [vmem:[#allocation2 + $0x1c8] sm:$0xff] 0.0
        %374 = vst [vmem:[#allocation2 + $0x1d0] sm:$0xff] 0.0
        %375 = vst [vmem:[#allocation2 + $0x1d8] sm:$0x3] 0.0
        %376 = vst [vmem:[#allocation2 + $0x1e0] sm:$0xff] 0.0
        %377 = vst [vmem:[#allocation2 + $0x1e8] sm:$0xff] 0.0
        %378 = vst [vmem:[#allocation2 + $0x1f0] sm:$0x3] 0.0
        %379 = vst [vmem:[#allocation2 + $0x1f8] sm:$0xff] 0.0
        %380 = vst [vmem:[#allocation2 + $0x200] sm:$0xff] 0.0
        %381 = vst [vmem:[#allocation2 + $0x208] sm:$0x3] 0.0
        %382 = vst [vmem:[#allocation2 + $0x210] sm:$0xff] 0.0
        %383 = vst [vmem:[#allocation2 + $0x218] sm:$0xff] 0.0
        %384 = vst [vmem:[#allocation2 + $0x220] sm:$0x3] 0.0
        %385 = vst [vmem:[#allocation2 + $0x228] sm:$0xff] 0.0
        %386 = vst [vmem:[#allocation2 + $0x230] sm:$0xff] 0.0
        %387 = vst [vmem:[#allocation2 + $0x238] sm:$0x3] 0.0
        %388 = vst [vmem:[#allocation2 + $0x240] sm:$0xff] 0.0
        %389 = vst [vmem:[#allocation2 + $0x248] sm:$0xff] 0.0
        %390 = vst [vmem:[#allocation2 + $0x250] sm:$0x3] 0.0
        %391 = vst [vmem:[#allocation2 + $0x258] sm:$0xff] 0.0
        %392 = vst [vmem:[#allocation2 + $0x260] sm:$0xff] 0.0
        %393 = vst [vmem:[#allocation2 + $0x268] sm:$0x3] 0.0
        %394 = vst [vmem:[#allocation2 + $0x270] sm:$0xff] 0.0
        %395 = vst [vmem:[#allocation2 + $0x278] sm:$0xff] 0.0
        %396 = vst [vmem:[#allocation2 + $0x280] sm:$0x3] 0.0
        %397 = vst [vmem:[#allocation2 + $0x288] sm:$0xff] 0.0
        %398 = vst [vmem:[#allocation2 + $0x290] sm:$0xff] 0.0
        %399 = vst [vmem:[#allocation2 + $0x298] sm:$0x3] 0.0
        %400 = vst [vmem:[#allocation2 + $0x2a0] sm:$0xff] 0.0
        %401 = vst [vmem:[#allocation2 + $0x2a8] sm:$0xff] 0.0
        %402 = vst [vmem:[#allocation2 + $0x2b0] sm:$0x3] 0.0
        %403 = vst [vmem:[#allocation2 + $0x2b8] sm:$0xff] 0.0
        %404 = vst [vmem:[#allocation2 + $0x2c0] sm:$0xff] 0.0
        %405 = vst [vmem:[#allocation2 + $0x2c8] sm:$0x3] 0.0
        %406 = vst [vmem:[#allocation2 + $0x2d0] sm:$0xff] 0.0
        %407 = vst [vmem:[#allocation2 + $0x2d8] sm:$0xff] 0.0
        %408 = vst [vmem:[#allocation2 + $0x2e0] sm:$0x3] 0.0
        %409 = vst [vmem:[#allocation2 + $0x2e8] sm:$0xff] 0.0
        %410 = vst [vmem:[#allocation2 + $0x2f0] sm:$0xff] 0.0
        %411 = vst [vmem:[#allocation2 + $0x2f8] sm:$0x3] 0.0
        %412 = vst [vmem:[#allocation2 + $0x300] sm:$0xff] 0.0
        %413 = vst [vmem:[#allocation2 + $0x308] sm:$0xff] 0.0
        %414 = vst [vmem:[#allocation2 + $0x310] sm:$0x3] 0.0
        %415 = vst [vmem:[#allocation2 + $0x318] sm:$0xff] 0.0
        %416 = vst [vmem:[#allocation2 + $0x320] sm:$0xff] 0.0
        %417 = vst [vmem:[#allocation2 + $0x328] sm:$0x3] 0.0
        %418 = vst [vmem:[#allocation2 + $0x330] sm:$0xff] 0.0
        %419 = vst [vmem:[#allocation2 + $0x338] sm:$0xff] 0.0
        %420 = vst [vmem:[#allocation2 + $0x340] sm:$0x3] 0.0
        %421 = vst [vmem:[#allocation2 + $0x348] sm:$0xff] 0.0
        %422 = vst [vmem:[#allocation2 + $0x350] sm:$0xff] 0.0
        %423 = vst [vmem:[#allocation2 + $0x358] sm:$0x3] 0.0
        %v424 = vld [vmem:[%s313] sm:$0xff]
        %v425 = vld [vmem:[%s313 + $0x8] sm:$0xff]
        %v426 = vld [vmem:[%s313 + $0x10] sm:$0xff]
        %v427 = vld [vmem:[%s313 + $0x18] sm:$0xff]
        %v428 = vld [vmem:[%s313 + $0x20] sm:$0xff]
        %v429 = vld [vmem:[%s313 + $0x28] sm:$0xff]
        %v430 = vld [vmem:[%s313 + $0x30] sm:$0xff]
        %v431 = vld [vmem:[%s313 + $0x38] sm:$0xff]
        %v432 = vld [vmem:[%s313 + $0x40] sm:$0xff]
        %v433 = vld [vmem:[%s313 + $0x48] sm:$0xff]
        %v434 = vld [vmem:[%s313 + $0x50] sm:$0xff]
        %v435 = vld [vmem:[%s313 + $0x58] sm:$0xff]
        %v436 = vld [vmem:[%s313 + $0x60] sm:$0xff]
        %v437 = vld [vmem:[%s313 + $0x68] sm:$0xff]
        %v438 = vld [vmem:[%s313 + $0x70] sm:$0xff]
        %v439 = vld [vmem:[%s313 + $0x78] sm:$0xff]
        %v440 = vld [vmem:[%s313 + $0x80] sm:$0xff]
        %v441 = vld [vmem:[%s313 + $0x88] sm:$0xff]
        %v442 = vld [vmem:[%s313 + $0x90] sm:$0xff]
        %v443 = vld [vmem:[%s313 + $0x98] sm:$0xff]
        %v444 = vld [vmem:[%s313 + $0xa0] sm:$0xff]
        %v445 = vld [vmem:[%s313 + $0xa8] sm:$0xff]
        %v446 = vld [vmem:[%s313 + $0xb0] sm:$0xff]
        %v447 = vld [vmem:[%s313 + $0xb8] sm:$0xff]
        %v448 = vld [vmem:[%s313 + $0xc0] sm:$0xff]
        %v449 = vld [vmem:[%s313 + $0xc8] sm:$0xff]
        %v450 = vld [vmem:[%s313 + $0xd0] sm:$0xff]
        %v451 = vld [vmem:[%s313 + $0xd8] sm:$0xff]
        %v452 = vld [vmem:[%s313 + $0xe0] sm:$0xff]
        %v453 = vld [vmem:[%s313 + $0xe8] sm:$0xff]
        %v454 = vld [vmem:[%s313 + $0xf0] sm:$0xff]
        %v455 = vld [vmem:[%s313 + $0xf8] sm:$0xff]
        %v456 = vmax.f32 %v424, 0.0
        %v457 = vmax.f32 %v425, 0.0
        %v458 = vmax.f32 %v426, 0.0
        %v459 = vmax.f32 %v427, 0.0
        %v460 = vmax.f32 %v428, 0.0
        %v461 = vmax.f32 %v429, 0.0
        %v462 = vmax.f32 %v430, 0.0
        %v463 = vmax.f32 %v431, 0.0
        %v464 = vmax.f32 %v432, 0.0
        %v465 = vmax.f32 %v433, 0.0
        %v466 = vmax.f32 %v434, 0.0
        %v467 = vmax.f32 %v435, 0.0
        %v468 = vmax.f32 %v436, 0.0
        %v469 = vmax.f32 %v437, 0.0
        %v470 = vmax.f32 %v438, 0.0
        %v471 = vmax.f32 %v439, 0.0
        %v472 = vmax.f32 %v440, 0.0
        %v473 = vmax.f32 %v441, 0.0
        %v474 = vmax.f32 %v442, 0.0
        %v475 = vmax.f32 %v443, 0.0
        %v476 = vmax.f32 %v444, 0.0
        %v477 = vmax.f32 %v445, 0.0
        %v478 = vmax.f32 %v446, 0.0
        %v479 = vmax.f32 %v447, 0.0
        %v480 = vmax.f32 %v448, 0.0
        %v481 = vmax.f32 %v449, 0.0
        %v482 = vmax.f32 %v450, 0.0
        %v483 = vmax.f32 %v451, 0.0
        %v484 = vmax.f32 %v452, 0.0
        %v485 = vmax.f32 %v453, 0.0
        %v486 = vmax.f32 %v454, 0.0
        %v487 = vmax.f32 %v455, 0.0
        %s488 = scalar_lea.vmem [#allocation2], 24
        %vm489 = vcmask 31744
        %490 = vst.msk [vmem:[%s488 + $0x1] sm:$0xff] %vm489, %v456
        %491 = vst.msk [vmem:[%s488 + $0x9] sm:$0xff] %vm489, %v457
        %492 = vst.msk [vmem:[%s488 + $0x19] sm:$0xff] %vm489, %v458
        %493 = vst.msk [vmem:[%s488 + $0x21] sm:$0xff] %vm489, %v459
        %494 = vst.msk [vmem:[%s488 + $0x31] sm:$0xff] %vm489, %v460
        %495 = vst.msk [vmem:[%s488 + $0x39] sm:$0xff] %vm489, %v461
        %496 = vst.msk [vmem:[%s488 + $0x49] sm:$0xff] %vm489, %v462
        %497 = vst.msk [vmem:[%s488 + $0x51] sm:$0xff] %vm489, %v463
        %498 = vst.msk [vmem:[%s488 + $0x61] sm:$0xff] %vm489, %v464
        %499 = vst.msk [vmem:[%s488 + $0x69] sm:$0xff] %vm489, %v465
        %500 = vst.msk [vmem:[%s488 + $0x79] sm:$0xff] %vm489, %v466
        %501 = vst.msk [vmem:[%s488 + $0x81] sm:$0xff] %vm489, %v467
        %502 = vst.msk [vmem:[%s488 + $0x91] sm:$0xff] %vm489, %v468
        %503 = vst.msk [vmem:[%s488 + $0x99] sm:$0xff] %vm489, %v469
        %504 = vst.msk [vmem:[%s488 + $0xa9] sm:$0xff] %vm489, %v470
        %505 = vst.msk [vmem:[%s488 + $0xb1] sm:$0xff] %vm489, %v471
        %506 = vst.msk [vmem:[%s488 + $0xc1] sm:$0xff] %vm489, %v472
        %507 = vst.msk [vmem:[%s488 + $0xc9] sm:$0xff] %vm489, %v473
        %508 = vst.msk [vmem:[%s488 + $0xd9] sm:$0xff] %vm489, %v474
        %509 = vst.msk [vmem:[%s488 + $0xe1] sm:$0xff] %vm489, %v475
        %510 = vst.msk [vmem:[%s488 + $0xf1] sm:$0xff] %vm489, %v476
        %511 = vst.msk [vmem:[%s488 + $0xf9] sm:$0xff] %vm489, %v477
        %512 = vst.msk [vmem:[%s488 + $0x109] sm:$0xff] %vm489, %v478
        %513 = vst.msk [vmem:[%s488 + $0x111] sm:$0xff] %vm489, %v479
        %514 = vst.msk [vmem:[%s488 + $0x121] sm:$0xff] %vm489, %v480
        %515 = vst.msk [vmem:[%s488 + $0x129] sm:$0xff] %vm489, %v481
        %516 = vst.msk [vmem:[%s488 + $0x139] sm:$0xff] %vm489, %v482
        %517 = vst.msk [vmem:[%s488 + $0x141] sm:$0xff] %vm489, %v483
        %518 = vst.msk [vmem:[%s488 + $0x151] sm:$0xff] %vm489, %v484
        %519 = vst.msk [vmem:[%s488 + $0x159] sm:$0xff] %vm489, %v485
        %520 = vst.msk [vmem:[%s488 + $0x169] sm:$0xff] %vm489, %v486
        %521 = vst.msk [vmem:[%s488 + $0x171] sm:$0xff] %vm489, %v487
        %v522 = vld [vmem:[#allocation2] sm:$0xff]
        %v523 = vld [vmem:[#allocation2 + $0x8] sm:$0xff]
        %v524 = vld [vmem:[#allocation2 + $0x18] sm:$0xff]
        %v525 = vld [vmem:[#allocation2 + $0x20] sm:$0xff]
        %v526 = vld [vmem:[#allocation2 + $0x30] sm:$0xff]
        %v527 = vld [vmem:[#allocation2 + $0x38] sm:$0xff]
        %v528 = vld [vmem:[#allocation2 + $0x48] sm:$0xff]
        %v529 = vld [vmem:[#allocation2 + $0x50] sm:$0xff]
        %v530 = vld [vmem:[#allocation2 + $0x60] sm:$0xff]
        %v531 = vld [vmem:[#allocation2 + $0x68] sm:$0xff]
        %v532 = vld [vmem:[#allocation2 + $0x78] sm:$0xff]
        %v533 = vld [vmem:[#allocation2 + $0x80] sm:$0xff]
        %v534 = vld [vmem:[#allocation2 + $0x90] sm:$0xff]
        %v535 = vld [vmem:[#allocation2 + $0x98] sm:$0xff]
        %v536 = vld [vmem:[#allocation2 + $0xa8] sm:$0xff]
        %v537 = vld [vmem:[#allocation2 + $0xb0] sm:$0xff]
        %v538 = vld [vmem:[#allocation2 + $0xc0] sm:$0xff]
        %v539 = vld [vmem:[#allocation2 + $0xc8] sm:$0xff]
        %v540 = vld [vmem:[#allocation2 + $0xd8] sm:$0xff]
        %v541 = vld [vmem:[#allocation2 + $0xe0] sm:$0xff]
        %v542 = vld [vmem:[#allocation2 + $0xf0] sm:$0xff]
        %v543 = vld [vmem:[#allocation2 + $0xf8] sm:$0xff]
        %v544 = vld [vmem:[#allocation2 + $0x108] sm:$0xff]
        %v545 = vld [vmem:[#allocation2 + $0x110] sm:$0xff]
        %v546 = vld [vmem:[#allocation2 + $0x120] sm:$0xff]
        %v547 = vld [vmem:[#allocation2 + $0x128] sm:$0xff]
        %v548 = vld [vmem:[#allocation2 + $0x138] sm:$0xff]
        %v549 = vld [vmem:[#allocation2 + $0x140] sm:$0xff]
        %v550 = vld [vmem:[#allocation2 + $0x150] sm:$0xff]
        %v551 = vld [vmem:[#allocation2 + $0x158] sm:$0xff]
        %v552 = vld [vmem:[#allocation2 + $0x168] sm:$0xff]
        %v553 = vld [vmem:[#allocation2 + $0x170] sm:$0xff]
        %v554 = vld [vmem:[#allocation2 + $0x180] sm:$0xff]
        %v555 = vld [vmem:[#allocation2 + $0x188] sm:$0xff]
        %v556 = vld [vmem:[#allocation2 + $0x198] sm:$0xff]
        %v557 = vld [vmem:[#allocation2 + $0x1a0] sm:$0xff]
        %v558 = vpack.c.bf16 %v523, %v522
        %v559 = vpack.c.bf16 %v525, %v524
        %v560 = vpack.c.bf16 %v527, %v526
        %v561 = vpack.c.bf16 %v529, %v528
        %v562 = vpack.c.bf16 %v531, %v530
        %v563 = vpack.c.bf16 %v533, %v532
        %v564 = vpack.c.bf16 %v535, %v534
        %v565 = vpack.c.bf16 %v537, %v536
        %v566 = vpack.c.bf16 %v539, %v538
        %v567 = vpack.c.bf16 %v541, %v540
        %v568 = vpack.c.bf16 %v543, %v542
        %v569 = vpack.c.bf16 %v545, %v544
        %v570 = vpack.c.bf16 %v547, %v546
        %v571 = vpack.c.bf16 %v549, %v548
        %v572 = vpack.c.bf16 %v551, %v550
        %v573 = vpack.c.bf16 %v553, %v552
        %v574 = vpack.c.bf16 %v555, %v554
        %v575 = vpack.c.bf16 %v557, %v556
        %v592 = vunpack.c.l.b16 %v558
        %v593 = vunpack.c.h.b16 %v558
        %v594 = vunpack.c.l.b16 %v559
        %v595 = vunpack.c.h.b16 %v559
        %v596 = vunpack.c.l.b16 %v560
        %v597 = vunpack.c.h.b16 %v560
        %v598 = vunpack.c.l.b16 %v561
        %v599 = vunpack.c.h.b16 %v561
        %v600 = vunpack.c.l.b16 %v562
        %v601 = vunpack.c.h.b16 %v562
        %v602 = vunpack.c.l.b16 %v563
        %v603 = vunpack.c.h.b16 %v563
        %v604 = vunpack.c.l.b16 %v564
        %v605 = vunpack.c.h.b16 %v564
        %v606 = vunpack.c.l.b16 %v565
        %v607 = vunpack.c.h.b16 %v565
        %v608 = vunpack.c.l.b16 %v566
        %v609 = vunpack.c.h.b16 %v566
        %v610 = vunpack.c.l.b16 %v567
        %v611 = vunpack.c.h.b16 %v567
        %v612 = vunpack.c.l.b16 %v568
        %v613 = vunpack.c.h.b16 %v568
        %v614 = vunpack.c.l.b16 %v569
        %v615 = vunpack.c.h.b16 %v569
        %v616 = vunpack.c.l.b16 %v570
        %v617 = vunpack.c.h.b16 %v570
        %v618 = vunpack.c.l.b16 %v571
        %v619 = vunpack.c.h.b16 %v571
        %v620 = vunpack.c.l.b16 %v572
        %v621 = vunpack.c.h.b16 %v572
        %v622 = vunpack.c.l.b16 %v573
        %v623 = vunpack.c.h.b16 %v573
        %v624 = vpack.c.b16 %v592, %v592
        %v625 = vpack.c.b16 %v593, %v593
        %v626 = vpack.c.b16 %v594, %v594
        %v627 = vpack.c.b16 %v595, %v595
        %v628 = vpack.c.b16 %v596, %v596
        %v629 = vpack.c.b16 %v597, %v597
        %v630 = vpack.c.b16 %v598, %v598
        %v631 = vpack.c.b16 %v599, %v599
        %v632 = vpack.c.b16 %v600, %v600
        %v633 = vpack.c.b16 %v601, %v601
        %v634 = vpack.c.b16 %v602, %v602
        %v635 = vpack.c.b16 %v603, %v603
        %v636 = vpack.c.b16 %v604, %v604
        %v637 = vpack.c.b16 %v605, %v605
        %v638 = vpack.c.b16 %v606, %v606
        %v639 = vpack.c.b16 %v607, %v607
        %v640 = vpack.c.b16 %v608, %v608
        %v641 = vpack.c.b16 %v609, %v609
        %v642 = vpack.c.b16 %v610, %v610
        %v643 = vpack.c.b16 %v611, %v611
        %v644 = vpack.c.b16 %v612, %v612
        %v645 = vpack.c.b16 %v613, %v613
        %v646 = vpack.c.b16 %v614, %v614
        %v647 = vpack.c.b16 %v615, %v615
        %v648 = vpack.c.b16 %v616, %v616
        %v649 = vpack.c.b16 %v617, %v617
        %v650 = vpack.c.b16 %v618, %v618
        %v651 = vpack.c.b16 %v619, %v619
        %v652 = vpack.c.b16 %v620, %v620
        %v653 = vpack.c.b16 %v621, %v621
        %v654 = vpack.c.b16 %v622, %v622
        %v655 = vpack.c.b16 %v623, %v623
        %688 = vst [vmem:[#allocation3] sm:$0xf] %v624
        %689 = vst [vmem:[#allocation3 + $0x24] sm:$0xf] %v625
        %690 = vst [vmem:[#allocation3 + $0x48] sm:$0xf] %v626
        %691 = vst [vmem:[#allocation3 + $0x6c] sm:$0xf] %v627
        %692 = vst [vmem:[#allocation3 + $0x90] sm:$0xf] %v628
        %693 = vst [vmem:[#allocation3 + $0xb4] sm:$0xf] %v629
        %694 = vst [vmem:[#allocation3 + $0xd8] sm:$0xf] %v630
        %695 = vst [vmem:[#allocation3 + $0xfc] sm:$0xf] %v631
        %696 = vst [vmem:[#allocation3 + $0x120] sm:$0xf] %v632
        %697 = vst [vmem:[#allocation3 + $0x144] sm:$0xf] %v633
        %698 = vst [vmem:[#allocation3 + $0x168] sm:$0xf] %v634
        %699 = vst [vmem:[#allocation3 + $0x18c] sm:$0xf] %v635
        %700 = vst [vmem:[#allocation3 + $0x1b0] sm:$0xf] %v636
        %701 = vst [vmem:[#allocation3 + $0x1d4] sm:$0xf] %v637
        %702 = vst [vmem:[#allocation3 + $0x1f8] sm:$0xf] %v638
        %703 = vst [vmem:[#allocation3 + $0x21c] sm:$0xf] %v639
        %704 = vst [vmem:[#allocation3 + $0x240] sm:$0xf] %v640
        %705 = vst [vmem:[#allocation3 + $0x264] sm:$0xf] %v641
        %706 = vst [vmem:[#allocation3 + $0x288] sm:$0xf] %v642
        %707 = vst [vmem:[#allocation3 + $0x2ac] sm:$0xf] %v643
        %708 = vst [vmem:[#allocation3 + $0x2d0] sm:$0xf] %v644
        %709 = vst [vmem:[#allocation3 + $0x2f4] sm:$0xf] %v645
        %710 = vst [vmem:[#allocation3 + $0x318] sm:$0xf] %v646
        %711 = vst [vmem:[#allocation3 + $0x33c] sm:$0xf] %v647
        %712 = vst [vmem:[#allocation3 + $0x360] sm:$0xf] %v648
        %713 = vst [vmem:[#allocation3 + $0x384] sm:$0xf] %v649
        %714 = vst [vmem:[#allocation3 + $0x3a8] sm:$0xf] %v650
        %715 = vst [vmem:[#allocation3 + $0x3cc] sm:$0xf] %v651
        %716 = vst [vmem:[#allocation3 + $0x3f0] sm:$0xf] %v652
        %717 = vst [vmem:[#allocation3 + $0x414] sm:$0xf] %v653
        %718 = vst [vmem:[#allocation3 + $0x438] sm:$0xf] %v654
        %719 = vst [vmem:[#allocation3 + $0x45c] sm:$0xf] %v655
        %v721 = vunpack.c.l.b16 %v574
        %v722 = vunpack.c.h.b16 %v574
        %v723 = vpack.c.b16 %v721, %v721
        %v724 = vpack.c.b16 %v722, %v722
        %727 = vst [vmem:[#allocation3 + $0xc] sm:$0xf] %v626
        %728 = vst [vmem:[#allocation3 + $0x30] sm:$0xf] %v627
        %729 = vst [vmem:[#allocation3 + $0x54] sm:$0xf] %v628
        %730 = vst [vmem:[#allocation3 + $0x78] sm:$0xf] %v629
        %731 = vst [vmem:[#allocation3 + $0x9c] sm:$0xf] %v630
        %732 = vst [vmem:[#allocation3 + $0xc0] sm:$0xf] %v631
        %733 = vst [vmem:[#allocation3 + $0xe4] sm:$0xf] %v632
        %734 = vst [vmem:[#allocation3 + $0x108] sm:$0xf] %v633
        %735 = vst [vmem:[#allocation3 + $0x12c] sm:$0xf] %v634
        %736 = vst [vmem:[#allocation3 + $0x150] sm:$0xf] %v635
        %737 = vst [vmem:[#allocation3 + $0x174] sm:$0xf] %v636
        %738 = vst [vmem:[#allocation3 + $0x198] sm:$0xf] %v637
        %739 = vst [vmem:[#allocation3 + $0x1bc] sm:$0xf] %v638
        %740 = vst [vmem:[#allocation3 + $0x1e0] sm:$0xf] %v639
        %741 = vst [vmem:[#allocation3 + $0x204] sm:$0xf] %v640
        %742 = vst [vmem:[#allocation3 + $0x228] sm:$0xf] %v641
        %743 = vst [vmem:[#allocation3 + $0x24c] sm:$0xf] %v642
        %744 = vst [vmem:[#allocation3 + $0x270] sm:$0xf] %v643
        %745 = vst [vmem:[#allocation3 + $0x294] sm:$0xf] %v644
        %746 = vst [vmem:[#allocation3 + $0x2b8] sm:$0xf] %v645
        %747 = vst [vmem:[#allocation3 + $0x2dc] sm:$0xf] %v646
        %748 = vst [vmem:[#allocation3 + $0x300] sm:$0xf] %v647
        %749 = vst [vmem:[#allocation3 + $0x324] sm:$0xf] %v648
        %750 = vst [vmem:[#allocation3 + $0x348] sm:$0xf] %v649
        %751 = vst [vmem:[#allocation3 + $0x36c] sm:$0xf] %v650
        %752 = vst [vmem:[#allocation3 + $0x390] sm:$0xf] %v651
        %753 = vst [vmem:[#allocation3 + $0x3b4] sm:$0xf] %v652
        %754 = vst [vmem:[#allocation3 + $0x3d8] sm:$0xf] %v653
        %755 = vst [vmem:[#allocation3 + $0x3fc] sm:$0xf] %v654
        %756 = vst [vmem:[#allocation3 + $0x420] sm:$0xf] %v655
        %757 = vst [vmem:[#allocation3 + $0x444] sm:$0xf] %v723
        %758 = vst [vmem:[#allocation3 + $0x468] sm:$0xf] %v724
        %v760 = vunpack.c.l.b16 %v575
        %v761 = vunpack.c.h.b16 %v575
        %v762 = vpack.c.b16 %v760, %v760
        %v763 = vpack.c.b16 %v761, %v761
        %766 = vst [vmem:[#allocation3 + $0x18] sm:$0xf] %v628
        %767 = vst [vmem:[#allocation3 + $0x3c] sm:$0xf] %v629
        %768 = vst [vmem:[#allocation3 + $0x60] sm:$0xf] %v630
        %769 = vst [vmem:[#allocation3 + $0x84] sm:$0xf] %v631
        %770 = vst [vmem:[#allocation3 + $0xa8] sm:$0xf] %v632
        %771 = vst [vmem:[#allocation3 + $0xcc] sm:$0xf] %v633
        %772 = vst [vmem:[#allocation3 + $0xf0] sm:$0xf] %v634
        %773 = vst [vmem:[#allocation3 + $0x114] sm:$0xf] %v635
        %774 = vst [vmem:[#allocation3 + $0x138] sm:$0xf] %v636
        %775 = vst [vmem:[#allocation3 + $0x15c] sm:$0xf] %v637
        %776 = vst [vmem:[#allocation3 + $0x180] sm:$0xf] %v638
        %777 = vst [vmem:[#allocation3 + $0x1a4] sm:$0xf] %v639
        %778 = vst [vmem:[#allocation3 + $0x1c8] sm:$0xf] %v640
        %779 = vst [vmem:[#allocation3 + $0x1ec] sm:$0xf] %v641
        %780 = vst [vmem:[#allocation3 + $0x210] sm:$0xf] %v642
        %781 = vst [vmem:[#allocation3 + $0x234] sm:$0xf] %v643
        %782 = vst [vmem:[#allocation3 + $0x258] sm:$0xf] %v644
        %783 = vst [vmem:[#allocation3 + $0x27c] sm:$0xf] %v645
        %784 = vst [vmem:[#allocation3 + $0x2a0] sm:$0xf] %v646
        %785 = vst [vmem:[#allocation3 + $0x2c4] sm:$0xf] %v647
        %786 = vst [vmem:[#allocation3 + $0x2e8] sm:$0xf] %v648
        %787 = vst [vmem:[#allocation3 + $0x30c] sm:$0xf] %v649
        %788 = vst [vmem:[#allocation3 + $0x330] sm:$0xf] %v650
        %789 = vst [vmem:[#allocation3 + $0x354] sm:$0xf] %v651
        %790 = vst [vmem:[#allocation3 + $0x378] sm:$0xf] %v652
        %791 = vst [vmem:[#allocation3 + $0x39c] sm:$0xf] %v653
        %792 = vst [vmem:[#allocation3 + $0x3c0] sm:$0xf] %v654
        %793 = vst [vmem:[#allocation3 + $0x3e4] sm:$0xf] %v655
        %794 = vst [vmem:[#allocation3 + $0x408] sm:$0xf] %v723
        %795 = vst [vmem:[#allocation3 + $0x42c] sm:$0xf] %v724
        %796 = vst [vmem:[#allocation3 + $0x450] sm:$0xf] %v762
        %797 = vst [vmem:[#allocation3 + $0x474] sm:$0xf] %v763
        %v798 = vld [vmem:[#allocation2 + $0x1] sm:$0xff]
        %v799 = vld [vmem:[#allocation2 + $0x9] sm:$0xff]
        %v800 = vld [vmem:[#allocation2 + $0x19] sm:$0xff]
        %v801 = vld [vmem:[#allocation2 + $0x21] sm:$0xff]
        %v802 = vld [vmem:[#allocation2 + $0x31] sm:$0xff]
        %v803 = vld [vmem:[#allocation2 + $0x39] sm:$0xff]
        %v804 = vld [vmem:[#allocation2 + $0x49] sm:$0xff]
        %v805 = vld [vmem:[#allocation2 + $0x51] sm:$0xff]
        %v806 = vld [vmem:[#allocation2 + $0x61] sm:$0xff]
        %v807 = vld [vmem:[#allocation2 + $0x69] sm:$0xff]
        %v808 = vld [vmem:[#allocation2 + $0x79] sm:$0xff]
        %v809 = vld [vmem:[#allocation2 + $0x81] sm:$0xff]
        %v810 = vld [vmem:[#allocation2 + $0x91] sm:$0xff]
        %v811 = vld [vmem:[#allocation2 + $0x99] sm:$0xff]
        %v812 = vld [vmem:[#allocation2 + $0xa9] sm:$0xff]
        %v813 = vld [vmem:[#allocation2 + $0xb1] sm:$0xff]
        %v814 = vld [vmem:[#allocation2 + $0xc1] sm:$0xff]
        %v815 = vld [vmem:[#allocation2 + $0xc9] sm:$0xff]
        %v816 = vld [vmem:[#allocation2 + $0xd9] sm:$0xff]
        %v817 = vld [vmem:[#allocation2 + $0xe1] sm:$0xff]
        %v818 = vld [vmem:[#allocation2 + $0xf1] sm:$0xff]
        %v819 = vld [vmem:[#allocation2 + $0xf9] sm:$0xff]
        %v820 = vld [vmem:[#allocation2 + $0x109] sm:$0xff]
        %v821 = vld [vmem:[#allocation2 + $0x111] sm:$0xff]
        %v822 = vld [vmem:[#allocation2 + $0x121] sm:$0xff]
        %v823 = vld [vmem:[#allocation2 + $0x129] sm:$0xff]
        %v824 = vld [vmem:[#allocation2 + $0x139] sm:$0xff]
        %v825 = vld [vmem:[#allocation2 + $0x141] sm:$0xff]
        %v826 = vld [vmem:[#allocation2 + $0x151] sm:$0xff]
        %v827 = vld [vmem:[#allocation2 + $0x159] sm:$0xff]
        %v828 = vld [vmem:[#allocation2 + $0x169] sm:$0xff]
        %v829 = vld [vmem:[#allocation2 + $0x171] sm:$0xff]
        %v830 = vld [vmem:[#allocation2 + $0x181] sm:$0xff]
        %v831 = vld [vmem:[#allocation2 + $0x189] sm:$0xff]
        %v832 = vld [vmem:[#allocation2 + $0x199] sm:$0xff]
        %v833 = vld [vmem:[#allocation2 + $0x1a1] sm:$0xff]
        %v834 = vpack.c.bf16 %v799, %v798
        %v835 = vpack.c.bf16 %v801, %v800
        %v836 = vpack.c.bf16 %v803, %v802
        %v837 = vpack.c.bf16 %v805, %v804
        %v838 = vpack.c.bf16 %v807, %v806
        %v839 = vpack.c.bf16 %v809, %v808
        %v840 = vpack.c.bf16 %v811, %v810
        %v841 = vpack.c.bf16 %v813, %v812
        %v842 = vpack.c.bf16 %v815, %v814
        %v843 = vpack.c.bf16 %v817, %v816
        %v844 = vpack.c.bf16 %v819, %v818
        %v845 = vpack.c.bf16 %v821, %v820
        %v846 = vpack.c.bf16 %v823, %v822
        %v847 = vpack.c.bf16 %v825, %v824
        %v848 = vpack.c.bf16 %v827, %v826
        %v849 = vpack.c.bf16 %v829, %v828
        %v850 = vpack.c.bf16 %v831, %v830
        %v851 = vpack.c.bf16 %v833, %v832
        %v868 = vunpack.c.l.b16 %v834
        %v869 = vunpack.c.h.b16 %v834
        %v870 = vunpack.c.l.b16 %v835
        %v871 = vunpack.c.h.b16 %v835
        %v872 = vunpack.c.l.b16 %v836
        %v873 = vunpack.c.h.b16 %v836
        %v874 = vunpack.c.l.b16 %v837
        %v875 = vunpack.c.h.b16 %v837
        %v876 = vunpack.c.l.b16 %v838
        %v877 = vunpack.c.h.b16 %v838
        %v878 = vunpack.c.l.b16 %v839
        %v879 = vunpack.c.h.b16 %v839
        %v880 = vunpack.c.l.b16 %v840
        %v881 = vunpack.c.h.b16 %v840
        %v882 = vunpack.c.l.b16 %v841
        %v883 = vunpack.c.h.b16 %v841
        %v884 = vunpack.c.l.b16 %v842
        %v885 = vunpack.c.h.b16 %v842
        %v886 = vunpack.c.l.b16 %v843
        %v887 = vunpack.c.h.b16 %v843
        %v888 = vunpack.c.l.b16 %v844
        %v889 = vunpack.c.h.b16 %v844
        %v890 = vunpack.c.l.b16 %v845
        %v891 = vunpack.c.h.b16 %v845
        %v892 = vunpack.c.l.b16 %v846
        %v893 = vunpack.c.h.b16 %v846
        %v894 = vunpack.c.l.b16 %v847
        %v895 = vunpack.c.h.b16 %v847
        %v896 = vunpack.c.l.b16 %v848
        %v897 = vunpack.c.h.b16 %v848
        %v898 = vunpack.c.l.b16 %v849
        %v899 = vunpack.c.h.b16 %v849
        %v900 = vpack.c.b16 %v868, %v868
        %v901 = vpack.c.b16 %v869, %v869
        %v902 = vpack.c.b16 %v870, %v870
        %v903 = vpack.c.b16 %v871, %v871
        %v904 = vpack.c.b16 %v872, %v872
        %v905 = vpack.c.b16 %v873, %v873
        %v906 = vpack.c.b16 %v874, %v874
        %v907 = vpack.c.b16 %v875, %v875
        %v908 = vpack.c.b16 %v876, %v876
        %v909 = vpack.c.b16 %v877, %v877
        %v910 = vpack.c.b16 %v878, %v878
        %v911 = vpack.c.b16 %v879, %v879
        %v912 = vpack.c.b16 %v880, %v880
        %v913 = vpack.c.b16 %v881, %v881
        %v914 = vpack.c.b16 %v882, %v882
        %v915 = vpack.c.b16 %v883, %v883
        %v916 = vpack.c.b16 %v884, %v884
        %v917 = vpack.c.b16 %v885, %v885
        %v918 = vpack.c.b16 %v886, %v886
        %v919 = vpack.c.b16 %v887, %v887
        %v920 = vpack.c.b16 %v888, %v888
        %v921 = vpack.c.b16 %v889, %v889
        %v922 = vpack.c.b16 %v890, %v890
        %v923 = vpack.c.b16 %v891, %v891
        %v924 = vpack.c.b16 %v892, %v892
        %v925 = vpack.c.b16 %v893, %v893
        %v926 = vpack.c.b16 %v894, %v894
        %v927 = vpack.c.b16 %v895, %v895
        %v928 = vpack.c.b16 %v896, %v896
        %v929 = vpack.c.b16 %v897, %v897
        %v930 = vpack.c.b16 %v898, %v898
        %v931 = vpack.c.b16 %v899, %v899
        %964 = vst [vmem:[#allocation3 + $0x4] sm:$0xf] %v900
        %965 = vst [vmem:[#allocation3 + $0x28] sm:$0xf] %v901
        %966 = vst [vmem:[#allocation3 + $0x4c] sm:$0xf] %v902
        %967 = vst [vmem:[#allocation3 + $0x70] sm:$0xf] %v903
        %968 = vst [vmem:[#allocation3 + $0x94] sm:$0xf] %v904
        %969 = vst [vmem:[#allocation3 + $0xb8] sm:$0xf] %v905
        %970 = vst [vmem:[#allocation3 + $0xdc] sm:$0xf] %v906
        %971 = vst [vmem:[#allocation3 + $0x100] sm:$0xf] %v907
        %972 = vst [vmem:[#allocation3 + $0x124] sm:$0xf] %v908
        %973 = vst [vmem:[#allocation3 + $0x148] sm:$0xf] %v909
        %974 = vst [vmem:[#allocation3 + $0x16c] sm:$0xf] %v910
        %975 = vst [vmem:[#allocation3 + $0x190] sm:$0xf] %v911
        %976 = vst [vmem:[#allocation3 + $0x1b4] sm:$0xf] %v912
        %977 = vst [vmem:[#allocation3 + $0x1d8] sm:$0xf] %v913
        %978 = vst [vmem:[#allocation3 + $0x1fc] sm:$0xf] %v914
        %979 = vst [vmem:[#allocation3 + $0x220] sm:$0xf] %v915
        %980 = vst [vmem:[#allocation3 + $0x244] sm:$0xf] %v916
        %981 = vst [vmem:[#allocation3 + $0x268] sm:$0xf] %v917
        %982 = vst [vmem:[#allocation3 + $0x28c] sm:$0xf] %v918
        %983 = vst [vmem:[#allocation3 + $0x2b0] sm:$0xf] %v919
        %984 = vst [vmem:[#allocation3 + $0x2d4] sm:$0xf] %v920
        %985 = vst [vmem:[#allocation3 + $0x2f8] sm:$0xf] %v921
        %986 = vst [vmem:[#allocation3 + $0x31c] sm:$0xf] %v922
        %987 = vst [vmem:[#allocation3 + $0x340] sm:$0xf] %v923
        %988 = vst [vmem:[#allocation3 + $0x364] sm:$0xf] %v924
        %989 = vst [vmem:[#allocation3 + $0x388] sm:$0xf] %v925
        %990 = vst [vmem:[#allocation3 + $0x3ac] sm:$0xf] %v926
        %991 = vst [vmem:[#allocation3 + $0x3d0] sm:$0xf] %v927
        %992 = vst [vmem:[#allocation3 + $0x3f4] sm:$0xf] %v928
        %993 = vst [vmem:[#allocation3 + $0x418] sm:$0xf] %v929
        %994 = vst [vmem:[#allocation3 + $0x43c] sm:$0xf] %v930
        %995 = vst [vmem:[#allocation3 + $0x460] sm:$0xf] %v931
        %v997 = vunpack.c.l.b16 %v850
        %v998 = vunpack.c.h.b16 %v850
        %v999 = vpack.c.b16 %v997, %v997
        %v1000 = vpack.c.b16 %v998, %v998
        %1003 = vst [vmem:[#allocation3 + $0x10] sm:$0xf] %v902
        %1004 = vst [vmem:[#allocation3 + $0x34] sm:$0xf] %v903
        %1005 = vst [vmem:[#allocation3 + $0x58] sm:$0xf] %v904
        %1006 = vst [vmem:[#allocation3 + $0x7c] sm:$0xf] %v905
        %1007 = vst [vmem:[#allocation3 + $0xa0] sm:$0xf] %v906
        %1008 = vst [vmem:[#allocation3 + $0xc4] sm:$0xf] %v907
        %1009 = vst [vmem:[#allocation3 + $0xe8] sm:$0xf] %v908
        %1010 = vst [vmem:[#allocation3 + $0x10c] sm:$0xf] %v909
        %1011 = vst [vmem:[#allocation3 + $0x130] sm:$0xf] %v910
        %1012 = vst [vmem:[#allocation3 + $0x154] sm:$0xf] %v911
        %1013 = vst [vmem:[#allocation3 + $0x178] sm:$0xf] %v912
        %1014 = vst [vmem:[#allocation3 + $0x19c] sm:$0xf] %v913
        %1015 = vst [vmem:[#allocation3 + $0x1c0] sm:$0xf] %v914
        %1016 = vst [vmem:[#allocation3 + $0x1e4] sm:$0xf] %v915
        %1017 = vst [vmem:[#allocation3 + $0x208] sm:$0xf] %v916
        %1018 = vst [vmem:[#allocation3 + $0x22c] sm:$0xf] %v917
        %1019 = vst [vmem:[#allocation3 + $0x250] sm:$0xf] %v918
        %1020 = vst [vmem:[#allocation3 + $0x274] sm:$0xf] %v919
        %1021 = vst [vmem:[#allocation3 + $0x298] sm:$0xf] %v920
        %1022 = vst [vmem:[#allocation3 + $0x2bc] sm:$0xf] %v921
        %1023 = vst [vmem:[#allocation3 + $0x2e0] sm:$0xf] %v922
        %1024 = vst [vmem:[#allocation3 + $0x304] sm:$0xf] %v923
        %1025 = vst [vmem:[#allocation3 + $0x328] sm:$0xf] %v924
        %1026 = vst [vmem:[#allocation3 + $0x34c] sm:$0xf] %v925
        %1027 = vst [vmem:[#allocation3 + $0x370] sm:$0xf] %v926
        %1028 = vst [vmem:[#allocation3 + $0x394] sm:$0xf] %v927
        %1029 = vst [vmem:[#allocation3 + $0x3b8] sm:$0xf] %v928
        %1030 = vst [vmem:[#allocation3 + $0x3dc] sm:$0xf] %v929
        %1031 = vst [vmem:[#allocation3 + $0x400] sm:$0xf] %v930
        %1032 = vst [vmem:[#allocation3 + $0x424] sm:$0xf] %v931
        %1033 = vst [vmem:[#allocation3 + $0x448] sm:$0xf] %v999
        %1034 = vst [vmem:[#allocation3 + $0x46c] sm:$0xf] %v1000
        %v1036 = vunpack.c.l.b16 %v851
        %v1037 = vunpack.c.h.b16 %v851
        %v1038 = vpack.c.b16 %v1036, %v1036
        %v1039 = vpack.c.b16 %v1037, %v1037
        %1042 = vst [vmem:[#allocation3 + $0x1c] sm:$0xf] %v904
        %1043 = vst [vmem:[#allocation3 + $0x40] sm:$0xf] %v905
        %1044 = vst [vmem:[#allocation3 + $0x64] sm:$0xf] %v906
        %1045 = vst [vmem:[#allocation3 + $0x88] sm:$0xf] %v907
        %1046 = vst [vmem:[#allocation3 + $0xac] sm:$0xf] %v908
        %1047 = vst [vmem:[#allocation3 + $0xd0] sm:$0xf] %v909
        %1048 = vst [vmem:[#allocation3 + $0xf4] sm:$0xf] %v910
        %1049 = vst [vmem:[#allocation3 + $0x118] sm:$0xf] %v911
        %1050 = vst [vmem:[#allocation3 + $0x13c] sm:$0xf] %v912
        %1051 = vst [vmem:[#allocation3 + $0x160] sm:$0xf] %v913
        %1052 = vst [vmem:[#allocation3 + $0x184] sm:$0xf] %v914
        %1053 = vst [vmem:[#allocation3 + $0x1a8] sm:$0xf] %v915
        %1054 = vst [vmem:[#allocation3 + $0x1cc] sm:$0xf] %v916
        %1055 = vst [vmem:[#allocation3 + $0x1f0] sm:$0xf] %v917
        %1056 = vst [vmem:[#allocation3 + $0x214] sm:$0xf] %v918
        %1057 = vst [vmem:[#allocation3 + $0x238] sm:$0xf] %v919
        %1058 = vst [vmem:[#allocation3 + $0x25c] sm:$0xf] %v920
        %1059 = vst [vmem:[#allocation3 + $0x280] sm:$0xf] %v921
        %1060 = vst [vmem:[#allocation3 + $0x2a4] sm:$0xf] %v922
        %1061 = vst [vmem:[#allocation3 + $0x2c8] sm:$0xf] %v923
        %1062 = vst [vmem:[#allocation3 + $0x2ec] sm:$0xf] %v924
        %1063 = vst [vmem:[#allocation3 + $0x310] sm:$0xf] %v925
        %1064 = vst [vmem:[#allocation3 + $0x334] sm:$0xf] %v926
        %1065 = vst [vmem:[#allocation3 + $0x358] sm:$0xf] %v927
        %1066 = vst [vmem:[#allocation3 + $0x37c] sm:$0xf] %v928
        %1067 = vst [vmem:[#allocation3 + $0x3a0] sm:$0xf] %v929
        %1068 = vst [vmem:[#allocation3 + $0x3c4] sm:$0xf] %v930
        %1069 = vst [vmem:[#allocation3 + $0x3e8] sm:$0xf] %v931
        %1070 = vst [vmem:[#allocation3 + $0x40c] sm:$0xf] %v999
        %1071 = vst [vmem:[#allocation3 + $0x430] sm:$0xf] %v1000
        %1072 = vst [vmem:[#allocation3 + $0x454] sm:$0xf] %v1038
        %1073 = vst [vmem:[#allocation3 + $0x478] sm:$0xf] %v1039
        %v1074 = vld [vmem:[#allocation2 + $0x2] sm:$0xff]
        %v1075 = vld [vmem:[#allocation2 + $0xa] sm:$0xff]
        %v1076 = vld [vmem:[#allocation2 + $0x1a] sm:$0xff]
        %v1077 = vld [vmem:[#allocation2 + $0x22] sm:$0xff]
        %v1078 = vld [vmem:[#allocation2 + $0x32] sm:$0xff]
        %v1079 = vld [vmem:[#allocation2 + $0x3a] sm:$0xff]
        %v1080 = vld [vmem:[#allocation2 + $0x4a] sm:$0xff]
        %v1081 = vld [vmem:[#allocation2 + $0x52] sm:$0xff]
        %v1082 = vld [vmem:[#allocation2 + $0x62] sm:$0xff]
        %v1083 = vld [vmem:[#allocation2 + $0x6a] sm:$0xff]
        %v1084 = vld [vmem:[#allocation2 + $0x7a] sm:$0xff]
        %v1085 = vld [vmem:[#allocation2 + $0x82] sm:$0xff]
        %v1086 = vld [vmem:[#allocation2 + $0x92] sm:$0xff]
        %v1087 = vld [vmem:[#allocation2 + $0x9a] sm:$0xff]
        %v1088 = vld [vmem:[#allocation2 + $0xaa] sm:$0xff]
        %v1089 = vld [vmem:[#allocation2 + $0xb2] sm:$0xff]
        %v1090 = vld [vmem:[#allocation2 + $0xc2] sm:$0xff]
        %v1091 = vld [vmem:[#allocation2 + $0xca] sm:$0xff]
        %v1092 = vld [vmem:[#allocation2 + $0xda] sm:$0xff]
        %v1093 = vld [vmem:[#allocation2 + $0xe2] sm:$0xff]
        %v1094 = vld [vmem:[#allocation2 + $0xf2] sm:$0xff]
        %v1095 = vld [vmem:[#allocation2 + $0xfa] sm:$0xff]
        %v1096 = vld [vmem:[#allocation2 + $0x10a] sm:$0xff]
        %v1097 = vld [vmem:[#allocation2 + $0x112] sm:$0xff]
        %v1098 = vld [vmem:[#allocation2 + $0x122] sm:$0xff]
        %v1099 = vld [vmem:[#allocation2 + $0x12a] sm:$0xff]
        %v1100 = vld [vmem:[#allocation2 + $0x13a] sm:$0xff]
        %v1101 = vld [vmem:[#allocation2 + $0x142] sm:$0xff]
        %v1102 = vld [vmem:[#allocation2 + $0x152] sm:$0xff]
        %v1103 = vld [vmem:[#allocation2 + $0x15a] sm:$0xff]
        %v1104 = vld [vmem:[#allocation2 + $0x16a] sm:$0xff]
        %v1105 = vld [vmem:[#allocation2 + $0x172] sm:$0xff]
        %v1106 = vld [vmem:[#allocation2 + $0x182] sm:$0xff]
        %v1107 = vld [vmem:[#allocation2 + $0x18a] sm:$0xff]
        %v1108 = vld [vmem:[#allocation2 + $0x19a] sm:$0xff]
        %v1109 = vld [vmem:[#allocation2 + $0x1a2] sm:$0xff]
        %v1110 = vpack.c.bf16 %v1075, %v1074
        %v1111 = vpack.c.bf16 %v1077, %v1076
        %v1112 = vpack.c.bf16 %v1079, %v1078
        %v1113 = vpack.c.bf16 %v1081, %v1080
        %v1114 = vpack.c.bf16 %v1083, %v1082
        %v1115 = vpack.c.bf16 %v1085, %v1084
        %v1116 = vpack.c.bf16 %v1087, %v1086
        %v1117 = vpack.c.bf16 %v1089, %v1088
        %v1118 = vpack.c.bf16 %v1091, %v1090
        %v1119 = vpack.c.bf16 %v1093, %v1092
        %v1120 = vpack.c.bf16 %v1095, %v1094
        %v1121 = vpack.c.bf16 %v1097, %v1096
        %v1122 = vpack.c.bf16 %v1099, %v1098
        %v1123 = vpack.c.bf16 %v1101, %v1100
        %v1124 = vpack.c.bf16 %v1103, %v1102
        %v1125 = vpack.c.bf16 %v1105, %v1104
        %v1126 = vpack.c.bf16 %v1107, %v1106
        %v1127 = vpack.c.bf16 %v1109, %v1108
        %v1144 = vunpack.c.l.b16 %v1110
        %v1145 = vunpack.c.h.b16 %v1110
        %v1146 = vunpack.c.l.b16 %v1111
        %v1147 = vunpack.c.h.b16 %v1111
        %v1148 = vunpack.c.l.b16 %v1112
        %v1149 = vunpack.c.h.b16 %v1112
        %v1150 = vunpack.c.l.b16 %v1113
        %v1151 = vunpack.c.h.b16 %v1113
        %v1152 = vunpack.c.l.b16 %v1114
        %v1153 = vunpack.c.h.b16 %v1114
        %v1154 = vunpack.c.l.b16 %v1115
        %v1155 = vunpack.c.h.b16 %v1115
        %v1156 = vunpack.c.l.b16 %v1116
        %v1157 = vunpack.c.h.b16 %v1116
        %v1158 = vunpack.c.l.b16 %v1117
        %v1159 = vunpack.c.h.b16 %v1117
        %v1160 = vunpack.c.l.b16 %v1118
        %v1161 = vunpack.c.h.b16 %v1118
        %v1162 = vunpack.c.l.b16 %v1119
        %v1163 = vunpack.c.h.b16 %v1119
        %v1164 = vunpack.c.l.b16 %v1120
        %v1165 = vunpack.c.h.b16 %v1120
        %v1166 = vunpack.c.l.b16 %v1121
        %v1167 = vunpack.c.h.b16 %v1121
        %v1168 = vunpack.c.l.b16 %v1122
        %v1169 = vunpack.c.h.b16 %v1122
        %v1170 = vunpack.c.l.b16 %v1123
        %v1171 = vunpack.c.h.b16 %v1123
        %v1172 = vunpack.c.l.b16 %v1124
        %v1173 = vunpack.c.h.b16 %v1124
        %v1174 = vunpack.c.l.b16 %v1125
        %v1175 = vunpack.c.h.b16 %v1125
        %v1176 = vpack.c.b16 %v1144, %v1144
        %v1177 = vpack.c.b16 %v1145, %v1145
        %v1178 = vpack.c.b16 %v1146, %v1146
        %v1179 = vpack.c.b16 %v1147, %v1147
        %v1180 = vpack.c.b16 %v1148, %v1148
        %v1181 = vpack.c.b16 %v1149, %v1149
        %v1182 = vpack.c.b16 %v1150, %v1150
        %v1183 = vpack.c.b16 %v1151, %v1151
        %v1184 = vpack.c.b16 %v1152, %v1152
        %v1185 = vpack.c.b16 %v1153, %v1153
        %v1186 = vpack.c.b16 %v1154, %v1154
        %v1187 = vpack.c.b16 %v1155, %v1155
        %v1188 = vpack.c.b16 %v1156, %v1156
        %v1189 = vpack.c.b16 %v1157, %v1157
        %v1190 = vpack.c.b16 %v1158, %v1158
        %v1191 = vpack.c.b16 %v1159, %v1159
        %v1192 = vpack.c.b16 %v1160, %v1160
        %v1193 = vpack.c.b16 %v1161, %v1161
        %v1194 = vpack.c.b16 %v1162, %v1162
        %v1195 = vpack.c.b16 %v1163, %v1163
        %v1196 = vpack.c.b16 %v1164, %v1164
        %v1197 = vpack.c.b16 %v1165, %v1165
        %v1198 = vpack.c.b16 %v1166, %v1166
        %v1199 = vpack.c.b16 %v1167, %v1167
        %v1200 = vpack.c.b16 %v1168, %v1168
        %v1201 = vpack.c.b16 %v1169, %v1169
        %v1202 = vpack.c.b16 %v1170, %v1170
        %v1203 = vpack.c.b16 %v1171, %v1171
        %v1204 = vpack.c.b16 %v1172, %v1172
        %v1205 = vpack.c.b16 %v1173, %v1173
        %v1206 = vpack.c.b16 %v1174, %v1174
        %v1207 = vpack.c.b16 %v1175, %v1175
        %1240 = vst [vmem:[#allocation3 + $0x8] sm:$0xf] %v1176
        %1241 = vst [vmem:[#allocation3 + $0x2c] sm:$0xf] %v1177
        %1242 = vst [vmem:[#allocation3 + $0x50] sm:$0xf] %v1178
        %1243 = vst [vmem:[#allocation3 + $0x74] sm:$0xf] %v1179
        %1244 = vst [vmem:[#allocation3 + $0x98] sm:$0xf] %v1180
        %1245 = vst [vmem:[#allocation3 + $0xbc] sm:$0xf] %v1181
        %1246 = vst [vmem:[#allocation3 + $0xe0] sm:$0xf] %v1182
        %1247 = vst [vmem:[#allocation3 + $0x104] sm:$0xf] %v1183
        %1248 = vst [vmem:[#allocation3 + $0x128] sm:$0xf] %v1184
        %1249 = vst [vmem:[#allocation3 + $0x14c] sm:$0xf] %v1185
        %1250 = vst [vmem:[#allocation3 + $0x170] sm:$0xf] %v1186
        %1251 = vst [vmem:[#allocation3 + $0x194] sm:$0xf] %v1187
        %1252 = vst [vmem:[#allocation3 + $0x1b8] sm:$0xf] %v1188
        %1253 = vst [vmem:[#allocation3 + $0x1dc] sm:$0xf] %v1189
        %1254 = vst [vmem:[#allocation3 + $0x200] sm:$0xf] %v1190
        %1255 = vst [vmem:[#allocation3 + $0x224] sm:$0xf] %v1191
        %1256 = vst [vmem:[#allocation3 + $0x248] sm:$0xf] %v1192
        %1257 = vst [vmem:[#allocation3 + $0x26c] sm:$0xf] %v1193
        %1258 = vst [vmem:[#allocation3 + $0x290] sm:$0xf] %v1194
        %1259 = vst [vmem:[#allocation3 + $0x2b4] sm:$0xf] %v1195
        %1260 = vst [vmem:[#allocation3 + $0x2d8] sm:$0xf] %v1196
        %1261 = vst [vmem:[#allocation3 + $0x2fc] sm:$0xf] %v1197
        %1262 = vst [vmem:[#allocation3 + $0x320] sm:$0xf] %v1198
        %1263 = vst [vmem:[#allocation3 + $0x344] sm:$0xf] %v1199
        %1264 = vst [vmem:[#allocation3 + $0x368] sm:$0xf] %v1200
        %1265 = vst [vmem:[#allocation3 + $0x38c] sm:$0xf] %v1201
        %1266 = vst [vmem:[#allocation3 + $0x3b0] sm:$0xf] %v1202
        %1267 = vst [vmem:[#allocation3 + $0x3d4] sm:$0xf] %v1203
        %1268 = vst [vmem:[#allocation3 + $0x3f8] sm:$0xf] %v1204
        %1269 = vst [vmem:[#allocation3 + $0x41c] sm:$0xf] %v1205
        %1270 = vst [vmem:[#allocation3 + $0x440] sm:$0xf] %v1206
        %1271 = vst [vmem:[#allocation3 + $0x464] sm:$0xf] %v1207
        %v1273 = vunpack.c.l.b16 %v1126
        %v1274 = vunpack.c.h.b16 %v1126
        %v1275 = vpack.c.b16 %v1273, %v1273
        %v1276 = vpack.c.b16 %v1274, %v1274
        %1279 = vst [vmem:[#allocation3 + $0x14] sm:$0xf] %v1178
        %1280 = vst [vmem:[#allocation3 + $0x38] sm:$0xf] %v1179
        %1281 = vst [vmem:[#allocation3 + $0x5c] sm:$0xf] %v1180
        %1282 = vst [vmem:[#allocation3 + $0x80] sm:$0xf] %v1181
        %1283 = vst [vmem:[#allocation3 + $0xa4] sm:$0xf] %v1182
        %1284 = vst [vmem:[#allocation3 + $0xc8] sm:$0xf] %v1183
        %1285 = vst [vmem:[#allocation3 + $0xec] sm:$0xf] %v1184
        %1286 = vst [vmem:[#allocation3 + $0x110] sm:$0xf] %v1185
        %1287 = vst [vmem:[#allocation3 + $0x134] sm:$0xf] %v1186
        %1288 = vst [vmem:[#allocation3 + $0x158] sm:$0xf] %v1187
        %1289 = vst [vmem:[#allocation3 + $0x17c] sm:$0xf] %v1188
        %1290 = vst [vmem:[#allocation3 + $0x1a0] sm:$0xf] %v1189
        %1291 = vst [vmem:[#allocation3 + $0x1c4] sm:$0xf] %v1190
        %1292 = vst [vmem:[#allocation3 + $0x1e8] sm:$0xf] %v1191
        %1293 = vst [vmem:[#allocation3 + $0x20c] sm:$0xf] %v1192
        %1294 = vst [vmem:[#allocation3 + $0x230] sm:$0xf] %v1193
        %1295 = vst [vmem:[#allocation3 + $0x254] sm:$0xf] %v1194
        %1296 = vst [vmem:[#allocation3 + $0x278] sm:$0xf] %v1195
        %1297 = vst [vmem:[#allocation3 + $0x29c] sm:$0xf] %v1196
        %1298 = vst [vmem:[#allocation3 + $0x2c0] sm:$0xf] %v1197
        %1299 = vst [vmem:[#allocation3 + $0x2e4] sm:$0xf] %v1198
        %1300 = vst [vmem:[#allocation3 + $0x308] sm:$0xf] %v1199
        %1301 = vst [vmem:[#allocation3 + $0x32c] sm:$0xf] %v1200
        %1302 = vst [vmem:[#allocation3 + $0x350] sm:$0xf] %v1201
        %1303 = vst [vmem:[#allocation3 + $0x374] sm:$0xf] %v1202
        %1304 = vst [vmem:[#allocation3 + $0x398] sm:$0xf] %v1203
        %1305 = vst [vmem:[#allocation3 + $0x3bc] sm:$0xf] %v1204
        %1306 = vst [vmem:[#allocation3 + $0x3e0] sm:$0xf] %v1205
        %1307 = vst [vmem:[#allocation3 + $0x404] sm:$0xf] %v1206
        %1308 = vst [vmem:[#allocation3 + $0x428] sm:$0xf] %v1207
        %1309 = vst [vmem:[#allocation3 + $0x44c] sm:$0xf] %v1275
        %1310 = vst [vmem:[#allocation3 + $0x470] sm:$0xf] %v1276
        %v1312 = vunpack.c.l.b16 %v1127
        %v1313 = vunpack.c.h.b16 %v1127
        %v1314 = vpack.c.b16 %v1312, %v1312
        %v1315 = vpack.c.b16 %v1313, %v1313
        %1318 = vst [vmem:[#allocation3 + $0x20] sm:$0xf] %v1180
        %1319 = vst [vmem:[#allocation3 + $0x44] sm:$0xf] %v1181
        %1320 = vst [vmem:[#allocation3 + $0x68] sm:$0xf] %v1182
        %1321 = vst [vmem:[#allocation3 + $0x8c] sm:$0xf] %v1183
        %1322 = vst [vmem:[#allocation3 + $0xb0] sm:$0xf] %v1184
        %1323 = vst [vmem:[#allocation3 + $0xd4] sm:$0xf] %v1185
        %1324 = vst [vmem:[#allocation3 + $0xf8] sm:$0xf] %v1186
        %1325 = vst [vmem:[#allocation3 + $0x11c] sm:$0xf] %v1187
        %1326 = vst [vmem:[#allocation3 + $0x140] sm:$0xf] %v1188
        %1327 = vst [vmem:[#allocation3 + $0x164] sm:$0xf] %v1189
        %1328 = vst [vmem:[#allocation3 + $0x188] sm:$0xf] %v1190
        %1329 = vst [vmem:[#allocation3 + $0x1ac] sm:$0xf] %v1191
        %1330 = vst [vmem:[#allocation3 + $0x1d0] sm:$0xf] %v1192
        %1331 = vst [vmem:[#allocation3 + $0x1f4] sm:$0xf] %v1193
        %1332 = vst [vmem:[#allocation3 + $0x218] sm:$0xf] %v1194
        %1333 = vst [vmem:[#allocation3 + $0x23c] sm:$0xf] %v1195
        %1334 = vst [vmem:[#allocation3 + $0x260] sm:$0xf] %v1196
        %1335 = vst [vmem:[#allocation3 + $0x284] sm:$0xf] %v1197
        %1336 = vst [vmem:[#allocation3 + $0x2a8] sm:$0xf] %v1198
        %1337 = vst [vmem:[#allocation3 + $0x2cc] sm:$0xf] %v1199
        %1338 = vst [vmem:[#allocation3 + $0x2f0] sm:$0xf] %v1200
        %1339 = vst [vmem:[#allocation3 + $0x314] sm:$0xf] %v1201
        %1340 = vst [vmem:[#allocation3 + $0x338] sm:$0xf] %v1202
        %1341 = vst [vmem:[#allocation3 + $0x35c] sm:$0xf] %v1203
        %1342 = vst [vmem:[#allocation3 + $0x380] sm:$0xf] %v1204
        %1343 = vst [vmem:[#allocation3 + $0x3a4] sm:$0xf] %v1205
        %1344 = vst [vmem:[#allocation3 + $0x3c8] sm:$0xf] %v1206
        %1345 = vst [vmem:[#allocation3 + $0x3ec] sm:$0xf] %v1207
        %1346 = vst [vmem:[#allocation3 + $0x410] sm:$0xf] %v1275
        %1347 = vst [vmem:[#allocation3 + $0x434] sm:$0xf] %v1276
        %1348 = vst [vmem:[#allocation3 + $0x458] sm:$0xf] %v1314
        %1349 = vst [vmem:[#allocation3 + $0x47c] sm:$0xf] %v1315
        %v1350 = vld [vmem:[#allocation3] sm:$0xff]
        %v1351 = vld [vmem:[#allocation3 + $0x8] sm:$0xff]
        %v1352 = vld [vmem:[#allocation3 + $0x10] sm:$0xff]
        %v1353 = vld [vmem:[#allocation3 + $0x18] sm:$0xff]
        %v1354 = vld [vmem:[#allocation3 + $0x20] sm:$0xf]
        %v1355 = vld [vmem:[#allocation3 + $0x24] sm:$0xff]
        %v1356 = vld [vmem:[#allocation3 + $0x2c] sm:$0xff]
        %v1357 = vld [vmem:[#allocation3 + $0x34] sm:$0xff]
        %v1358 = vld [vmem:[#allocation3 + $0x3c] sm:$0xff]
        %v1359 = vld [vmem:[#allocation3 + $0x44] sm:$0xf]
        %v1360 = vld [vmem:[#allocation3 + $0x48] sm:$0xff]
        %v1361 = vld [vmem:[#allocation3 + $0x50] sm:$0xff]
        %v1362 = vld [vmem:[#allocation3 + $0x58] sm:$0xff]
        %v1363 = vld [vmem:[#allocation3 + $0x60] sm:$0xff]
        %v1364 = vld [vmem:[#allocation3 + $0x68] sm:$0xf]
        %v1365 = vld [vmem:[#allocation3 + $0x6c] sm:$0xff]
        %v1366 = vld [vmem:[#allocation3 + $0x74] sm:$0xff]
        %v1367 = vld [vmem:[#allocation3 + $0x7c] sm:$0xff]
        %v1368 = vld [vmem:[#allocation3 + $0x84] sm:$0xff]
        %v1369 = vld [vmem:[#allocation3 + $0x8c] sm:$0xf]
        %v1370 = vld [vmem:[#allocation3 + $0x90] sm:$0xff]
        %v1371 = vld [vmem:[#allocation3 + $0x98] sm:$0xff]
        %v1372 = vld [vmem:[#allocation3 + $0xa0] sm:$0xff]
        %v1373 = vld [vmem:[#allocation3 + $0xa8] sm:$0xff]
        %v1374 = vld [vmem:[#allocation3 + $0xb0] sm:$0xf]
        %v1375 = vld [vmem:[#allocation3 + $0xb4] sm:$0xff]
        %v1376 = vld [vmem:[#allocation3 + $0xbc] sm:$0xff]
        %v1377 = vld [vmem:[#allocation3 + $0xc4] sm:$0xff]
        %v1378 = vld [vmem:[#allocation3 + $0xcc] sm:$0xff]
        %v1379 = vld [vmem:[#allocation3 + $0xd4] sm:$0xf]
        %v1380 = vld [vmem:[#allocation3 + $0xd8] sm:$0xff]
        %v1381 = vld [vmem:[#allocation3 + $0xe0] sm:$0xff]
        %v1382 = vld [vmem:[#allocation3 + $0xe8] sm:$0xff]
        %v1383 = vld [vmem:[#allocation3 + $0xf0] sm:$0xff]
        %v1384 = vld [vmem:[#allocation3 + $0xf8] sm:$0xf]
        %v1385 = vld [vmem:[#allocation3 + $0xfc] sm:$0xff]
        %v1386 = vld [vmem:[#allocation3 + $0x104] sm:$0xff]
        %v1387 = vld [vmem:[#allocation3 + $0x10c] sm:$0xff]
        %v1388 = vld [vmem:[#allocation3 + $0x114] sm:$0xff]
        %v1389 = vld [vmem:[#allocation3 + $0x11c] sm:$0xf]
        %v1390 = vld [vmem:[#allocation3 + $0x120] sm:$0xff]
        %v1391 = vld [vmem:[#allocation3 + $0x128] sm:$0xff]
        %v1392 = vld [vmem:[#allocation3 + $0x130] sm:$0xff]
        %v1393 = vld [vmem:[#allocation3 + $0x138] sm:$0xff]
        %v1394 = vld [vmem:[#allocation3 + $0x140] sm:$0xf]
        %v1395 = vld [vmem:[#allocation3 + $0x144] sm:$0xff]
        %v1396 = vld [vmem:[#allocation3 + $0x14c] sm:$0xff]
        %v1397 = vld [vmem:[#allocation3 + $0x154] sm:$0xff]
        %v1398 = vld [vmem:[#allocation3 + $0x15c] sm:$0xff]
        %v1399 = vld [vmem:[#allocation3 + $0x164] sm:$0xf]
        %v1400 = vld [vmem:[#allocation3 + $0x168] sm:$0xff]
        %v1401 = vld [vmem:[#allocation3 + $0x170] sm:$0xff]
        %v1402 = vld [vmem:[#allocation3 + $0x178] sm:$0xff]
        %v1403 = vld [vmem:[#allocation3 + $0x180] sm:$0xff]
        %v1404 = vld [vmem:[#allocation3 + $0x188] sm:$0xf]
        %v1405 = vld [vmem:[#allocation3 + $0x18c] sm:$0xff]
        %v1406 = vld [vmem:[#allocation3 + $0x194] sm:$0xff]
        %v1407 = vld [vmem:[#allocation3 + $0x19c] sm:$0xff]
        %v1408 = vld [vmem:[#allocation3 + $0x1a4] sm:$0xff]
        %v1409 = vld [vmem:[#allocation3 + $0x1ac] sm:$0xf]
        %v1410 = vld [vmem:[#allocation3 + $0x1b0] sm:$0xff]
        %v1411 = vld [vmem:[#allocation3 + $0x1b8] sm:$0xff]
        %v1412 = vld [vmem:[#allocation3 + $0x1c0] sm:$0xff]
        %v1413 = vld [vmem:[#allocation3 + $0x1c8] sm:$0xff]
        %v1414 = vld [vmem:[#allocation3 + $0x1d0] sm:$0xf]
        %v1415 = vld [vmem:[#allocation3 + $0x1d4] sm:$0xff]
        %v1416 = vld [vmem:[#allocation3 + $0x1dc] sm:$0xff]
        %v1417 = vld [vmem:[#allocation3 + $0x1e4] sm:$0xff]
        %v1418 = vld [vmem:[#allocation3 + $0x1ec] sm:$0xff]
        %v1419 = vld [vmem:[#allocation3 + $0x1f4] sm:$0xf]
        %v1420 = vld [vmem:[#allocation3 + $0x1f8] sm:$0xff]
        %v1421 = vld [vmem:[#allocation3 + $0x200] sm:$0xff]
        %v1422 = vld [vmem:[#allocation3 + $0x208] sm:$0xff]
        %v1423 = vld [vmem:[#allocation3 + $0x210] sm:$0xff]
        %v1424 = vld [vmem:[#allocation3 + $0x218] sm:$0xf]
        %v1425 = vld [vmem:[#allocation3 + $0x21c] sm:$0xff]
        %v1426 = vld [vmem:[#allocation3 + $0x224] sm:$0xff]
        %v1427 = vld [vmem:[#allocation3 + $0x22c] sm:$0xff]
        %v1428 = vld [vmem:[#allocation3 + $0x234] sm:$0xff]
        %v1429 = vld [vmem:[#allocation3 + $0x23c] sm:$0xf]
        %v1430 = vld [vmem:[#allocation3 + $0x240] sm:$0xff]
        %v1431 = vld [vmem:[#allocation3 + $0x248] sm:$0xff]
        %v1432 = vld [vmem:[#allocation3 + $0x250] sm:$0xff]
        %v1433 = vld [vmem:[#allocation3 + $0x258] sm:$0xff]
        %v1434 = vld [vmem:[#allocation3 + $0x260] sm:$0xf]
        %v1435 = vld [vmem:[#allocation3 + $0x264] sm:$0xff]
        %v1436 = vld [vmem:[#allocation3 + $0x26c] sm:$0xff]
        %v1437 = vld [vmem:[#allocation3 + $0x274] sm:$0xff]
        %v1438 = vld [vmem:[#allocation3 + $0x27c] sm:$0xff]
        %v1439 = vld [vmem:[#allocation3 + $0x284] sm:$0xf]
        %v1440 = vld [vmem:[#allocation3 + $0x288] sm:$0xff]
        %v1441 = vld [vmem:[#allocation3 + $0x290] sm:$0xff]
        %v1442 = vld [vmem:[#allocation3 + $0x298] sm:$0xff]
        %v1443 = vld [vmem:[#allocation3 + $0x2a0] sm:$0xff]
        %v1444 = vld [vmem:[#allocation3 + $0x2a8] sm:$0xf]
        %v1445 = vld [vmem:[#allocation3 + $0x2ac] sm:$0xff]
        %v1446 = vld [vmem:[#allocation3 + $0x2b4] sm:$0xff]
        %v1447 = vld [vmem:[#allocation3 + $0x2bc] sm:$0xff]
        %v1448 = vld [vmem:[#allocation3 + $0x2c4] sm:$0xff]
        %v1449 = vld [vmem:[#allocation3 + $0x2cc] sm:$0xf]
        %v1450 = vld [vmem:[#allocation3 + $0x2d0] sm:$0xff]
        %v1451 = vld [vmem:[#allocation3 + $0x2d8] sm:$0xff]
        %v1452 = vld [vmem:[#allocation3 + $0x2e0] sm:$0xff]
        %v1453 = vld [vmem:[#allocation3 + $0x2e8] sm:$0xff]
        %v1454 = vld [vmem:[#allocation3 + $0x2f0] sm:$0xf]
        %v1455 = vld [vmem:[#allocation3 + $0x2f4] sm:$0xff]
        %v1456 = vld [vmem:[#allocation3 + $0x2fc] sm:$0xff]
        %v1457 = vld [vmem:[#allocation3 + $0x304] sm:$0xff]
        %v1458 = vld [vmem:[#allocation3 + $0x30c] sm:$0xff]
        %v1459 = vld [vmem:[#allocation3 + $0x314] sm:$0xf]
        %v1460 = vld [vmem:[#allocation3 + $0x318] sm:$0xff]
        %v1461 = vld [vmem:[#allocation3 + $0x320] sm:$0xff]
        %v1462 = vld [vmem:[#allocation3 + $0x328] sm:$0xff]
        %v1463 = vld [vmem:[#allocation3 + $0x330] sm:$0xff]
        %v1464 = vld [vmem:[#allocation3 + $0x338] sm:$0xf]
        %v1465 = vld [vmem:[#allocation3 + $0x33c] sm:$0xff]
        %v1466 = vld [vmem:[#allocation3 + $0x344] sm:$0xff]
        %v1467 = vld [vmem:[#allocation3 + $0x34c] sm:$0xff]
        %v1468 = vld [vmem:[#allocation3 + $0x354] sm:$0xff]
        %v1469 = vld [vmem:[#allocation3 + $0x35c] sm:$0xf]
        %v1470 = vld [vmem:[#allocation3 + $0x360] sm:$0xff]
        %v1471 = vld [vmem:[#allocation3 + $0x368] sm:$0xff]
        %v1472 = vld [vmem:[#allocation3 + $0x370] sm:$0xff]
        %v1473 = vld [vmem:[#allocation3 + $0x378] sm:$0xff]
        %v1474 = vld [vmem:[#allocation3 + $0x380] sm:$0xf]
        %v1475 = vld [vmem:[#allocation3 + $0x384] sm:$0xff]
        %v1476 = vld [vmem:[#allocation3 + $0x38c] sm:$0xff]
        %v1477 = vld [vmem:[#allocation3 + $0x394] sm:$0xff]
        %v1478 = vld [vmem:[#allocation3 + $0x39c] sm:$0xff]
        %v1479 = vld [vmem:[#allocation3 + $0x3a4] sm:$0xf]
        %v1480 = vld [vmem:[#allocation3 + $0x3a8] sm:$0xff]
        %v1481 = vld [vmem:[#allocation3 + $0x3b0] sm:$0xff]
        %v1482 = vld [vmem:[#allocation3 + $0x3b8] sm:$0xff]
        %v1483 = vld [vmem:[#allocation3 + $0x3c0] sm:$0xff]
        %v1484 = vld [vmem:[#allocation3 + $0x3c8] sm:$0xf]
        %v1485 = vld [vmem:[#allocation3 + $0x3cc] sm:$0xff]
        %v1486 = vld [vmem:[#allocation3 + $0x3d4] sm:$0xff]
        %v1487 = vld [vmem:[#allocation3 + $0x3dc] sm:$0xff]
        %v1488 = vld [vmem:[#allocation3 + $0x3e4] sm:$0xff]
        %v1489 = vld [vmem:[#allocation3 + $0x3ec] sm:$0xf]
        %v1490 = vld [vmem:[#allocation3 + $0x3f0] sm:$0xff]
        %v1491 = vld [vmem:[#allocation3 + $0x3f8] sm:$0xff]
        %v1492 = vld [vmem:[#allocation3 + $0x400] sm:$0xff]
        %v1493 = vld [vmem:[#allocation3 + $0x408] sm:$0xff]
        %v1494 = vld [vmem:[#allocation3 + $0x410] sm:$0xf]
        %v1495 = vld [vmem:[#allocation3 + $0x414] sm:$0xff]
        %v1496 = vld [vmem:[#allocation3 + $0x41c] sm:$0xff]
        %v1497 = vld [vmem:[#allocation3 + $0x424] sm:$0xff]
        %v1498 = vld [vmem:[#allocation3 + $0x42c] sm:$0xff]
        %v1499 = vld [vmem:[#allocation3 + $0x434] sm:$0xf]
        %v1500 = vld [vmem:[#allocation3 + $0x438] sm:$0xff]
        %v1501 = vld [vmem:[#allocation3 + $0x440] sm:$0xff]
        %v1502 = vld [vmem:[#allocation3 + $0x448] sm:$0xff]
        %v1503 = vld [vmem:[#allocation3 + $0x450] sm:$0xff]
        %v1504 = vld [vmem:[#allocation3 + $0x458] sm:$0xf]
        %v1505 = vld [vmem:[#allocation3 + $0x45c] sm:$0xff]
        %v1506 = vld [vmem:[#allocation3 + $0x464] sm:$0xff]
        %v1507 = vld [vmem:[#allocation3 + $0x46c] sm:$0xff]
        %v1508 = vld [vmem:[#allocation3 + $0x474] sm:$0xff]
        %v1509 = vld [vmem:[#allocation3 + $0x47c] sm:$0xf]
        %v1510 = vld [vmem:[#allocation6] sm:$0xff]
        %v1511 = vld [vmem:[#allocation6 + $0x8] sm:$0xff]
        %v1512 = vld [vmem:[#allocation6 + $0x10] sm:$0xff]
        %v1513 = vld [vmem:[#allocation6 + $0x18] sm:$0xff]
        %v1514 = vld [vmem:[#allocation6 + $0x20] sm:$0xff]
        %v1515 = vld [vmem:[#allocation6 + $0x28] sm:$0xff]
        %v1516 = vld [vmem:[#allocation6 + $0x30] sm:$0xff]
        %v1517 = vld [vmem:[#allocation6 + $0x38] sm:$0xff]
        %v1518 = vld [vmem:[#allocation6 + $0x40] sm:$0xff]
        %v1519 = vld [vmem:[#allocation6 + $0x48] sm:$0xff]
        %v1520 = vld [vmem:[#allocation6 + $0x50] sm:$0xff]
        %v1521 = vld [vmem:[#allocation6 + $0x58] sm:$0xff]
        %v1522 = vld [vmem:[#allocation6 + $0x60] sm:$0xff]
        %v1523 = vld [vmem:[#allocation6 + $0x68] sm:$0xff]
        %v1524 = vld [vmem:[#allocation6 + $0x70] sm:$0xff]
        %v1525 = vld [vmem:[#allocation6 + $0x78] sm:$0xff]
        %v1526 = vld [vmem:[#allocation6 + $0x80] sm:$0xff]
        %v1527 = vld [vmem:[#allocation6 + $0x88] sm:$0xff]
        %v1528 = vld [vmem:[#allocation6 + $0x90] sm:$0xff]
        %v1529 = vld [vmem:[#allocation6 + $0x98] sm:$0xff]
        %v1530 = vld [vmem:[#allocation6 + $0xa0] sm:$0xff]
        %v1531 = vld [vmem:[#allocation6 + $0xa8] sm:$0xff]
        %v1532 = vld [vmem:[#allocation6 + $0xb0] sm:$0xff]
        %v1533 = vld [vmem:[#allocation6 + $0xb8] sm:$0xff]
        %v1534 = vld [vmem:[#allocation6 + $0xc0] sm:$0xff]
        %v1535 = vld [vmem:[#allocation6 + $0xc8] sm:$0xff]
        %v1536 = vld [vmem:[#allocation6 + $0xd0] sm:$0xff]
        %v1537 = vld [vmem:[#allocation6 + $0xd8] sm:$0xff]
        %v1538 = vld [vmem:[#allocation6 + $0xe0] sm:$0xff]
        %v1539 = vld [vmem:[#allocation6 + $0xe8] sm:$0xff]
        %v1540 = vld [vmem:[#allocation6 + $0xf0] sm:$0xff]
        %v1541 = vld [vmem:[#allocation6 + $0xf8] sm:$0xff]
        %v1542 = vld [vmem:[#allocation6 + $0x100] sm:$0xff]
        %v1543 = vld [vmem:[#allocation6 + $0x108] sm:$0xff]
        %v1544 = vld [vmem:[#allocation6 + $0x110] sm:$0xff]
        %v1545 = vld [vmem:[#allocation6 + $0x118] sm:$0xff]
        %v1546 = vld [vmem:[#allocation6 + $0x120] sm:$0xff]
        %v1547 = vld [vmem:[#allocation6 + $0x128] sm:$0xff]
        %v1548 = vld [vmem:[#allocation6 + $0x130] sm:$0xff]
        %v1549 = vld [vmem:[#allocation6 + $0x138] sm:$0xff]
        %v1550 = vld [vmem:[#allocation6 + $0x140] sm:$0xff]
        %v1551 = vld [vmem:[#allocation6 + $0x148] sm:$0xff]
        %v1552 = vld [vmem:[#allocation6 + $0x150] sm:$0xff]
        %v1553 = vld [vmem:[#allocation6 + $0x158] sm:$0xff]
        %v1554 = vld [vmem:[#allocation6 + $0x160] sm:$0xff]
        %v1555 = vld [vmem:[#allocation6 + $0x168] sm:$0xff]
        %v1556 = vld [vmem:[#allocation6 + $0x170] sm:$0xff]
        %v1557 = vld [vmem:[#allocation6 + $0x178] sm:$0xff]
        %v1558 = vld [vmem:[#allocation6 + $0x180] sm:$0xff]
        %v1559 = vld [vmem:[#allocation6 + $0x188] sm:$0xff]
        %v1560 = vld [vmem:[#allocation6 + $0x190] sm:$0xff]
        %v1561 = vld [vmem:[#allocation6 + $0x198] sm:$0xff]
        %v1562 = vld [vmem:[#allocation6 + $0x1a0] sm:$0xff]
        %v1563 = vld [vmem:[#allocation6 + $0x1a8] sm:$0xff]
        %v1564 = vld [vmem:[#allocation6 + $0x1b0] sm:$0xff]
        %v1565 = vld [vmem:[#allocation6 + $0x1b8] sm:$0xff]
        %v1566 = vld [vmem:[#allocation6 + $0x1c0] sm:$0xff]
        %v1567 = vld [vmem:[#allocation6 + $0x1c8] sm:$0xff]
        %v1568 = vld [vmem:[#allocation6 + $0x1d0] sm:$0xff]
        %v1569 = vld [vmem:[#allocation6 + $0x1d8] sm:$0xff]
        %v1570 = vld [vmem:[#allocation6 + $0x1e0] sm:$0xff]
        %v1571 = vld [vmem:[#allocation6 + $0x1e8] sm:$0xff]
        %v1572 = vld [vmem:[#allocation6 + $0x1f0] sm:$0xff]
        %v1573 = vld [vmem:[#allocation6 + $0x1f8] sm:$0xff]
        %v1574 = vld [vmem:[#allocation6 + $0x200] sm:$0xff]
        %v1575 = vld [vmem:[#allocation6 + $0x208] sm:$0xff]
        %v1576 = vld [vmem:[#allocation6 + $0x210] sm:$0xff]
        %v1577 = vld [vmem:[#allocation6 + $0x218] sm:$0xff]
        %v1578 = vld [vmem:[#allocation6 + $0x220] sm:$0xff]
        %v1579 = vld [vmem:[#allocation6 + $0x228] sm:$0xff]
        %v1580 = vld [vmem:[#allocation6 + $0x230] sm:$0xff]
        %v1581 = vld [vmem:[#allocation6 + $0x238] sm:$0xff]
        %v1582 = vld [vmem:[#allocation6 + $0x240] sm:$0xff]
        %v1583 = vld [vmem:[#allocation6 + $0x248] sm:$0xff]
        %v1584 = vld [vmem:[#allocation6 + $0x250] sm:$0xff]
        %v1585 = vld [vmem:[#allocation6 + $0x258] sm:$0xff]
        %v1586 = vld [vmem:[#allocation6 + $0x260] sm:$0xff]
        %v1587 = vld [vmem:[#allocation6 + $0x268] sm:$0xff]
        %v1588 = vld [vmem:[#allocation6 + $0x270] sm:$0xff]
        %v1589 = vld [vmem:[#allocation6 + $0x278] sm:$0xff]
        %v1590 = vld [vmem:[#allocation6 + $0x280] sm:$0xff]
        %v1591 = vld [vmem:[#allocation6 + $0x288] sm:$0xff]
        %v1592 = vld [vmem:[#allocation6 + $0x290] sm:$0xff]
        %v1593 = vld [vmem:[#allocation6 + $0x298] sm:$0xff]
        %v1594 = vld [vmem:[#allocation6 + $0x2a0] sm:$0xff]
        %v1595 = vld [vmem:[#allocation6 + $0x2a8] sm:$0xff]
        %v1596 = vld [vmem:[#allocation6 + $0x2b0] sm:$0xff]
        %v1597 = vld [vmem:[#allocation6 + $0x2b8] sm:$0xff]
        %v1598 = vld [vmem:[#allocation6 + $0x2c0] sm:$0xff]
        %v1599 = vld [vmem:[#allocation6 + $0x2c8] sm:$0xff]
        %v1600 = vld [vmem:[#allocation6 + $0x2d0] sm:$0xff]
        %v1601 = vld [vmem:[#allocation6 + $0x2d8] sm:$0xff]
        %v1602 = vld [vmem:[#allocation6 + $0x2e0] sm:$0xff]
        %v1603 = vld [vmem:[#allocation6 + $0x2e8] sm:$0xff]
        %v1604 = vld [vmem:[#allocation6 + $0x2f0] sm:$0xff]
        %v1605 = vld [vmem:[#allocation6 + $0x2f8] sm:$0xff]
        %v1606 = vld [vmem:[#allocation6 + $0x300] sm:$0xff]
        %v1607 = vld [vmem:[#allocation6 + $0x308] sm:$0xff]
        %v1608 = vld [vmem:[#allocation6 + $0x310] sm:$0xff]
        %v1609 = vld [vmem:[#allocation6 + $0x318] sm:$0xff]
        %v1610 = vld [vmem:[#allocation6 + $0x320] sm:$0xff]
        %v1611 = vld [vmem:[#allocation6 + $0x328] sm:$0xff]
        %v1612 = vld [vmem:[#allocation6 + $0x330] sm:$0xff]
        %v1613 = vld [vmem:[#allocation6 + $0x338] sm:$0xff]
        %v1614 = vld [vmem:[#allocation6 + $0x340] sm:$0xff]
        %v1615 = vld [vmem:[#allocation6 + $0x348] sm:$0xff]
        %v1616 = vld [vmem:[#allocation6 + $0x350] sm:$0xff]
        %v1617 = vld [vmem:[#allocation6 + $0x358] sm:$0xff]
        %v1618 = vld [vmem:[#allocation6 + $0x360] sm:$0xff]
        %v1619 = vld [vmem:[#allocation6 + $0x368] sm:$0xff]
        %v1620 = vld [vmem:[#allocation6 + $0x370] sm:$0xff]
        %v1621 = vld [vmem:[#allocation6 + $0x378] sm:$0xff]
        %v1622 = vld [vmem:[#allocation6 + $0x380] sm:$0xff]
        %v1623 = vld [vmem:[#allocation6 + $0x388] sm:$0xff]
        %v1624 = vld [vmem:[#allocation6 + $0x390] sm:$0xff]
        %v1625 = vld [vmem:[#allocation6 + $0x398] sm:$0xff]
        %v1626 = vld [vmem:[#allocation6 + $0x3a0] sm:$0xff]
        %v1627 = vld [vmem:[#allocation6 + $0x3a8] sm:$0xff]
        %v1628 = vld [vmem:[#allocation6 + $0x3b0] sm:$0xff]
        %v1629 = vld [vmem:[#allocation6 + $0x3b8] sm:$0xff]
        %v1630 = vld [vmem:[#allocation6 + $0x3c0] sm:$0xff]
        %v1631 = vld [vmem:[#allocation6 + $0x3c8] sm:$0xff]
        %v1632 = vld [vmem:[#allocation6 + $0x3d0] sm:$0xff]
        %v1633 = vld [vmem:[#allocation6 + $0x3d8] sm:$0xff]
        %v1634 = vld [vmem:[#allocation6 + $0x3e0] sm:$0xff]
        %v1635 = vld [vmem:[#allocation6 + $0x3e8] sm:$0xff]
        %v1636 = vld [vmem:[#allocation6 + $0x3f0] sm:$0xff]
        %v1637 = vld [vmem:[#allocation6 + $0x3f8] sm:$0xff]
        %v1638 = vld [vmem:[#allocation6 + $0x400] sm:$0xff]
        %v1639 = vld [vmem:[#allocation6 + $0x408] sm:$0xff]
        %v1640 = vld [vmem:[#allocation6 + $0x410] sm:$0xff]
        %v1641 = vld [vmem:[#allocation6 + $0x418] sm:$0xff]
        %v1642 = vld [vmem:[#allocation6 + $0x420] sm:$0xff]
        %v1643 = vld [vmem:[#allocation6 + $0x428] sm:$0xff]
        %v1644 = vld [vmem:[#allocation6 + $0x430] sm:$0xff]
        %v1645 = vld [vmem:[#allocation6 + $0x438] sm:$0xff]
        %v1646 = vld [vmem:[#allocation6 + $0x440] sm:$0xff]
        %v1647 = vld [vmem:[#allocation6 + $0x448] sm:$0xff]
        %v1648 = vld [vmem:[#allocation6 + $0x450] sm:$0xff]
        %v1649 = vld [vmem:[#allocation6 + $0x458] sm:$0xff]
        %v1650 = vld [vmem:[#allocation6 + $0x460] sm:$0xff]
        %v1651 = vld [vmem:[#allocation6 + $0x468] sm:$0xff]
        %v1652 = vld [vmem:[#allocation6 + $0x470] sm:$0xff]
        %v1653 = vld [vmem:[#allocation6 + $0x478] sm:$0xff]
        %v1814 = vunpack.c.l.b16 %v1350
        %v1815 = vunpack.c.h.b16 %v1350
        %v1816 = vunpack.c.l.b16 %v1351
        %v1817 = vunpack.c.h.b16 %v1351
        %v1818 = vunpack.c.l.b16 %v1352
        %v1819 = vunpack.c.h.b16 %v1352
        %v1820 = vunpack.c.l.b16 %v1353
        %v1821 = vunpack.c.h.b16 %v1353
        %v1822 = vunpack.c.l.b16 %v1354
        %v1823 = vunpack.c.l.b16 %v1355
        %v1824 = vunpack.c.h.b16 %v1355
        %v1825 = vunpack.c.l.b16 %v1356
        %v1826 = vunpack.c.h.b16 %v1356
        %v1827 = vunpack.c.l.b16 %v1357
        %v1828 = vunpack.c.h.b16 %v1357
        %v1829 = vunpack.c.l.b16 %v1358
        %v1830 = vunpack.c.h.b16 %v1358
        %v1831 = vunpack.c.l.b16 %v1359
        %v1832 = vunpack.c.l.b16 %v1360
        %v1833 = vunpack.c.h.b16 %v1360
        %v1834 = vunpack.c.l.b16 %v1361
        %v1835 = vunpack.c.h.b16 %v1361
        %v1836 = vunpack.c.l.b16 %v1362
        %v1837 = vunpack.c.h.b16 %v1362
        %v1838 = vunpack.c.l.b16 %v1363
        %v1839 = vunpack.c.h.b16 %v1363
        %v1840 = vunpack.c.l.b16 %v1364
        %v1841 = vunpack.c.l.b16 %v1365
        %v1842 = vunpack.c.h.b16 %v1365
        %v1843 = vunpack.c.l.b16 %v1366
        %v1844 = vunpack.c.h.b16 %v1366
        %v1845 = vunpack.c.l.b16 %v1367
        %v1846 = vunpack.c.h.b16 %v1367
        %v1847 = vunpack.c.l.b16 %v1368
        %v1848 = vunpack.c.h.b16 %v1368
        %v1849 = vunpack.c.l.b16 %v1369
        %v1850 = vunpack.c.l.b16 %v1370
        %v1851 = vunpack.c.h.b16 %v1370
        %v1852 = vunpack.c.l.b16 %v1371
        %v1853 = vunpack.c.h.b16 %v1371
        %v1854 = vunpack.c.l.b16 %v1372
        %v1855 = vunpack.c.h.b16 %v1372
        %v1856 = vunpack.c.l.b16 %v1373
        %v1857 = vunpack.c.h.b16 %v1373
        %v1858 = vunpack.c.l.b16 %v1374
        %v1859 = vunpack.c.l.b16 %v1375
        %v1860 = vunpack.c.h.b16 %v1375
        %v1861 = vunpack.c.l.b16 %v1376
        %v1862 = vunpack.c.h.b16 %v1376
        %v1863 = vunpack.c.l.b16 %v1377
        %v1864 = vunpack.c.h.b16 %v1377
        %v1865 = vunpack.c.l.b16 %v1378
        %v1866 = vunpack.c.h.b16 %v1378
        %v1867 = vunpack.c.l.b16 %v1379
        %v1868 = vunpack.c.l.b16 %v1380
        %v1869 = vunpack.c.h.b16 %v1380
        %v1870 = vunpack.c.l.b16 %v1381
        %v1871 = vunpack.c.h.b16 %v1381
        %v1872 = vunpack.c.l.b16 %v1382
        %v1873 = vunpack.c.h.b16 %v1382
        %v1874 = vunpack.c.l.b16 %v1383
        %v1875 = vunpack.c.h.b16 %v1383
        %v1876 = vunpack.c.l.b16 %v1384
        %v1877 = vunpack.c.l.b16 %v1385
        %v1878 = vunpack.c.h.b16 %v1385
        %v1879 = vunpack.c.l.b16 %v1386
        %v1880 = vunpack.c.h.b16 %v1386
        %v1881 = vunpack.c.l.b16 %v1387
        %v1882 = vunpack.c.h.b16 %v1387
        %v1883 = vunpack.c.l.b16 %v1388
        %v1884 = vunpack.c.h.b16 %v1388
        %v1885 = vunpack.c.l.b16 %v1389
        %v1886 = vunpack.c.l.b16 %v1390
        %v1887 = vunpack.c.h.b16 %v1390
        %v1888 = vunpack.c.l.b16 %v1391
        %v1889 = vunpack.c.h.b16 %v1391
        %v1890 = vunpack.c.l.b16 %v1392
        %v1891 = vunpack.c.h.b16 %v1392
        %v1892 = vunpack.c.l.b16 %v1393
        %v1893 = vunpack.c.h.b16 %v1393
        %v1894 = vunpack.c.l.b16 %v1394
        %v1895 = vunpack.c.l.b16 %v1395
        %v1896 = vunpack.c.h.b16 %v1395
        %v1897 = vunpack.c.l.b16 %v1396
        %v1898 = vunpack.c.h.b16 %v1396
        %v1899 = vunpack.c.l.b16 %v1397
        %v1900 = vunpack.c.h.b16 %v1397
        %v1901 = vunpack.c.l.b16 %v1398
        %v1902 = vunpack.c.h.b16 %v1398
        %v1903 = vunpack.c.l.b16 %v1399
        %v1904 = vunpack.c.l.b16 %v1400
        %v1905 = vunpack.c.h.b16 %v1400
        %v1906 = vunpack.c.l.b16 %v1401
        %v1907 = vunpack.c.h.b16 %v1401
        %v1908 = vunpack.c.l.b16 %v1402
        %v1909 = vunpack.c.h.b16 %v1402
        %v1910 = vunpack.c.l.b16 %v1403
        %v1911 = vunpack.c.h.b16 %v1403
        %v1912 = vunpack.c.l.b16 %v1404
        %v1913 = vunpack.c.l.b16 %v1405
        %v1914 = vunpack.c.h.b16 %v1405
        %v1915 = vunpack.c.l.b16 %v1406
        %v1916 = vunpack.c.h.b16 %v1406
        %v1917 = vunpack.c.l.b16 %v1407
        %v1918 = vunpack.c.h.b16 %v1407
        %v1919 = vunpack.c.l.b16 %v1408
        %v1920 = vunpack.c.h.b16 %v1408
        %v1921 = vunpack.c.l.b16 %v1409
        %v1922 = vunpack.c.l.b16 %v1410
        %v1923 = vunpack.c.h.b16 %v1410
        %v1924 = vunpack.c.l.b16 %v1411
        %v1925 = vunpack.c.h.b16 %v1411
        %v1926 = vunpack.c.l.b16 %v1412
        %v1927 = vunpack.c.h.b16 %v1412
        %v1928 = vunpack.c.l.b16 %v1413
        %v1929 = vunpack.c.h.b16 %v1413
        %v1930 = vunpack.c.l.b16 %v1414
        %v1931 = vunpack.c.l.b16 %v1415
        %v1932 = vunpack.c.h.b16 %v1415
        %v1933 = vunpack.c.l.b16 %v1416
        %v1934 = vunpack.c.h.b16 %v1416
        %v1935 = vunpack.c.l.b16 %v1417
        %v1936 = vunpack.c.h.b16 %v1417
        %v1937 = vunpack.c.l.b16 %v1418
        %v1938 = vunpack.c.h.b16 %v1418
        %v1939 = vunpack.c.l.b16 %v1419
        %v1940 = vunpack.c.l.b16 %v1420
        %v1941 = vunpack.c.h.b16 %v1420
        %v1942 = vunpack.c.l.b16 %v1421
        %v1943 = vunpack.c.h.b16 %v1421
        %v1944 = vunpack.c.l.b16 %v1422
        %v1945 = vunpack.c.h.b16 %v1422
        %v1946 = vunpack.c.l.b16 %v1423
        %v1947 = vunpack.c.h.b16 %v1423
        %v1948 = vunpack.c.l.b16 %v1424
        %v1949 = vunpack.c.l.b16 %v1425
        %v1950 = vunpack.c.h.b16 %v1425
        %v1951 = vunpack.c.l.b16 %v1426
        %v1952 = vunpack.c.h.b16 %v1426
        %v1953 = vunpack.c.l.b16 %v1427
        %v1954 = vunpack.c.h.b16 %v1427
        %v1955 = vunpack.c.l.b16 %v1428
        %v1956 = vunpack.c.h.b16 %v1428
        %v1957 = vunpack.c.l.b16 %v1429
        %v1958 = vunpack.c.l.b16 %v1430
        %v1959 = vunpack.c.h.b16 %v1430
        %v1960 = vunpack.c.l.b16 %v1431
        %v1961 = vunpack.c.h.b16 %v1431
        %v1962 = vunpack.c.l.b16 %v1432
        %v1963 = vunpack.c.h.b16 %v1432
        %v1964 = vunpack.c.l.b16 %v1433
        %v1965 = vunpack.c.h.b16 %v1433
        %v1966 = vunpack.c.l.b16 %v1434
        %v1967 = vunpack.c.l.b16 %v1435
        %v1968 = vunpack.c.h.b16 %v1435
        %v1969 = vunpack.c.l.b16 %v1436
        %v1970 = vunpack.c.h.b16 %v1436
        %v1971 = vunpack.c.l.b16 %v1437
        %v1972 = vunpack.c.h.b16 %v1437
        %v1973 = vunpack.c.l.b16 %v1438
        %v1974 = vunpack.c.h.b16 %v1438
        %v1975 = vunpack.c.l.b16 %v1439
        %v1976 = vunpack.c.l.b16 %v1440
        %v1977 = vunpack.c.h.b16 %v1440
        %v1978 = vunpack.c.l.b16 %v1441
        %v1979 = vunpack.c.h.b16 %v1441
        %v1980 = vunpack.c.l.b16 %v1442
        %v1981 = vunpack.c.h.b16 %v1442
        %v1982 = vunpack.c.l.b16 %v1443
        %v1983 = vunpack.c.h.b16 %v1443
        %v1984 = vunpack.c.l.b16 %v1444
        %v1985 = vunpack.c.l.b16 %v1445
        %v1986 = vunpack.c.h.b16 %v1445
        %v1987 = vunpack.c.l.b16 %v1446
        %v1988 = vunpack.c.h.b16 %v1446
        %v1989 = vunpack.c.l.b16 %v1447
        %v1990 = vunpack.c.h.b16 %v1447
        %v1991 = vunpack.c.l.b16 %v1448
        %v1992 = vunpack.c.h.b16 %v1448
        %v1993 = vunpack.c.l.b16 %v1449
        %v1994 = vunpack.c.l.b16 %v1450
        %v1995 = vunpack.c.h.b16 %v1450
        %v1996 = vunpack.c.l.b16 %v1451
        %v1997 = vunpack.c.h.b16 %v1451
        %v1998 = vunpack.c.l.b16 %v1452
        %v1999 = vunpack.c.h.b16 %v1452
        %v2000 = vunpack.c.l.b16 %v1453
        %v2001 = vunpack.c.h.b16 %v1453
        %v2002 = vunpack.c.l.b16 %v1454
        %v2003 = vunpack.c.l.b16 %v1455
        %v2004 = vunpack.c.h.b16 %v1455
        %v2005 = vunpack.c.l.b16 %v1456
        %v2006 = vunpack.c.h.b16 %v1456
        %v2007 = vunpack.c.l.b16 %v1457
        %v2008 = vunpack.c.h.b16 %v1457
        %v2009 = vunpack.c.l.b16 %v1458
        %v2010 = vunpack.c.h.b16 %v1458
        %v2011 = vunpack.c.l.b16 %v1459
        %v2012 = vunpack.c.l.b16 %v1460
        %v2013 = vunpack.c.h.b16 %v1460
        %v2014 = vunpack.c.l.b16 %v1461
        %v2015 = vunpack.c.h.b16 %v1461
        %v2016 = vunpack.c.l.b16 %v1462
        %v2017 = vunpack.c.h.b16 %v1462
        %v2018 = vunpack.c.l.b16 %v1463
        %v2019 = vunpack.c.h.b16 %v1463
        %v2020 = vunpack.c.l.b16 %v1464
        %v2021 = vunpack.c.l.b16 %v1465
        %v2022 = vunpack.c.h.b16 %v1465
        %v2023 = vunpack.c.l.b16 %v1466
        %v2024 = vunpack.c.h.b16 %v1466
        %v2025 = vunpack.c.l.b16 %v1467
        %v2026 = vunpack.c.h.b16 %v1467
        %v2027 = vunpack.c.l.b16 %v1468
        %v2028 = vunpack.c.h.b16 %v1468
        %v2029 = vunpack.c.l.b16 %v1469
        %v2030 = vunpack.c.l.b16 %v1470
        %v2031 = vunpack.c.h.b16 %v1470
        %v2032 = vunpack.c.l.b16 %v1471
        %v2033 = vunpack.c.h.b16 %v1471
        %v2034 = vunpack.c.l.b16 %v1472
        %v2035 = vunpack.c.h.b16 %v1472
        %v2036 = vunpack.c.l.b16 %v1473
        %v2037 = vunpack.c.h.b16 %v1473
        %v2038 = vunpack.c.l.b16 %v1474
        %v2039 = vunpack.c.l.b16 %v1475
        %v2040 = vunpack.c.h.b16 %v1475
        %v2041 = vunpack.c.l.b16 %v1476
        %v2042 = vunpack.c.h.b16 %v1476
        %v2043 = vunpack.c.l.b16 %v1477
        %v2044 = vunpack.c.h.b16 %v1477
        %v2045 = vunpack.c.l.b16 %v1478
        %v2046 = vunpack.c.h.b16 %v1478
        %v2047 = vunpack.c.l.b16 %v1479
        %v2048 = vunpack.c.l.b16 %v1480
        %v2049 = vunpack.c.h.b16 %v1480
        %v2050 = vunpack.c.l.b16 %v1481
        %v2051 = vunpack.c.h.b16 %v1481
        %v2052 = vunpack.c.l.b16 %v1482
        %v2053 = vunpack.c.h.b16 %v1482
        %v2054 = vunpack.c.l.b16 %v1483
        %v2055 = vunpack.c.h.b16 %v1483
        %v2056 = vunpack.c.l.b16 %v1484
        %v2057 = vunpack.c.l.b16 %v1485
        %v2058 = vunpack.c.h.b16 %v1485
        %v2059 = vunpack.c.l.b16 %v1486
        %v2060 = vunpack.c.h.b16 %v1486
        %v2061 = vunpack.c.l.b16 %v1487
        %v2062 = vunpack.c.h.b16 %v1487
        %v2063 = vunpack.c.l.b16 %v1488
        %v2064 = vunpack.c.h.b16 %v1488
        %v2065 = vunpack.c.l.b16 %v1489
        %v2066 = vunpack.c.l.b16 %v1490
        %v2067 = vunpack.c.h.b16 %v1490
        %v2068 = vunpack.c.l.b16 %v1491
        %v2069 = vunpack.c.h.b16 %v1491
        %v2070 = vunpack.c.l.b16 %v1492
        %v2071 = vunpack.c.h.b16 %v1492
        %v2072 = vunpack.c.l.b16 %v1493
        %v2073 = vunpack.c.h.b16 %v1493
        %v2074 = vunpack.c.l.b16 %v1494
        %v2075 = vunpack.c.l.b16 %v1495
        %v2076 = vunpack.c.h.b16 %v1495
        %v2077 = vunpack.c.l.b16 %v1496
        %v2078 = vunpack.c.h.b16 %v1496
        %v2079 = vunpack.c.l.b16 %v1497
        %v2080 = vunpack.c.h.b16 %v1497
        %v2081 = vunpack.c.l.b16 %v1498
        %v2082 = vunpack.c.h.b16 %v1498
        %v2083 = vunpack.c.l.b16 %v1499
        %v2084 = vunpack.c.l.b16 %v1500
        %v2085 = vunpack.c.h.b16 %v1500
        %v2086 = vunpack.c.l.b16 %v1501
        %v2087 = vunpack.c.h.b16 %v1501
        %v2088 = vunpack.c.l.b16 %v1502
        %v2089 = vunpack.c.h.b16 %v1502
        %v2090 = vunpack.c.l.b16 %v1503
        %v2091 = vunpack.c.h.b16 %v1503
        %v2092 = vunpack.c.l.b16 %v1504
        %v2093 = vunpack.c.l.b16 %v1505
        %v2094 = vunpack.c.h.b16 %v1505
        %v2095 = vunpack.c.l.b16 %v1506
        %v2096 = vunpack.c.h.b16 %v1506
        %v2097 = vunpack.c.l.b16 %v1507
        %v2098 = vunpack.c.h.b16 %v1507
        %v2099 = vunpack.c.l.b16 %v1508
        %v2100 = vunpack.c.h.b16 %v1508
        %v2101 = vunpack.c.l.b16 %v1509
        %v2102 = vpack.c.b16 %v1823, %v1814
        %v2103 = vpack.c.b16 %v1824, %v1815
        %v2104 = vpack.c.b16 %v1825, %v1816
        %v2105 = vpack.c.b16 %v1826, %v1817
        %v2106 = vpack.c.b16 %v1827, %v1818
        %v2107 = vpack.c.b16 %v1828, %v1819
        %v2108 = vpack.c.b16 %v1829, %v1820
        %v2109 = vpack.c.b16 %v1830, %v1821
        %v2110 = vpack.c.b16 %v1831, %v1822
        %v2111 = vpack.c.b16 %v1841, %v1832
        %v2112 = vpack.c.b16 %v1842, %v1833
        %v2113 = vpack.c.b16 %v1843, %v1834
        %v2114 = vpack.c.b16 %v1844, %v1835
        %v2115 = vpack.c.b16 %v1845, %v1836
        %v2116 = vpack.c.b16 %v1846, %v1837
        %v2117 = vpack.c.b16 %v1847, %v1838
        %v2118 = vpack.c.b16 %v1848, %v1839
        %v2119 = vpack.c.b16 %v1849, %v1840
        %v2120 = vpack.c.b16 %v1859, %v1850
        %v2121 = vpack.c.b16 %v1860, %v1851
        %v2122 = vpack.c.b16 %v1861, %v1852
        %v2123 = vpack.c.b16 %v1862, %v1853
        %v2124 = vpack.c.b16 %v1863, %v1854
        %v2125 = vpack.c.b16 %v1864, %v1855
        %v2126 = vpack.c.b16 %v1865, %v1856
        %v2127 = vpack.c.b16 %v1866, %v1857
        %v2128 = vpack.c.b16 %v1867, %v1858
        %v2129 = vpack.c.b16 %v1877, %v1868
        %v2130 = vpack.c.b16 %v1878, %v1869
        %v2131 = vpack.c.b16 %v1879, %v1870
        %v2132 = vpack.c.b16 %v1880, %v1871
        %v2133 = vpack.c.b16 %v1881, %v1872
        %v2134 = vpack.c.b16 %v1882, %v1873
        %v2135 = vpack.c.b16 %v1883, %v1874
        %v2136 = vpack.c.b16 %v1884, %v1875
        %v2137 = vpack.c.b16 %v1885, %v1876
        %v2138 = vpack.c.b16 %v1895, %v1886
        %v2139 = vpack.c.b16 %v1896, %v1887
        %v2140 = vpack.c.b16 %v1897, %v1888
        %v2141 = vpack.c.b16 %v1898, %v1889
        %v2142 = vpack.c.b16 %v1899, %v1890
        %v2143 = vpack.c.b16 %v1900, %v1891
        %v2144 = vpack.c.b16 %v1901, %v1892
        %v2145 = vpack.c.b16 %v1902, %v1893
        %v2146 = vpack.c.b16 %v1903, %v1894
        %v2147 = vpack.c.b16 %v1913, %v1904
        %v2148 = vpack.c.b16 %v1914, %v1905
        %v2149 = vpack.c.b16 %v1915, %v1906
        %v2150 = vpack.c.b16 %v1916, %v1907
        %v2151 = vpack.c.b16 %v1917, %v1908
        %v2152 = vpack.c.b16 %v1918, %v1909
        %v2153 = vpack.c.b16 %v1919, %v1910
        %v2154 = vpack.c.b16 %v1920, %v1911
        %v2155 = vpack.c.b16 %v1921, %v1912
        %v2156 = vpack.c.b16 %v1931, %v1922
        %v2157 = vpack.c.b16 %v1932, %v1923
        %v2158 = vpack.c.b16 %v1933, %v1924
        %v2159 = vpack.c.b16 %v1934, %v1925
        %v2160 = vpack.c.b16 %v1935, %v1926
        %v2161 = vpack.c.b16 %v1936, %v1927
        %v2162 = vpack.c.b16 %v1937, %v1928
        %v2163 = vpack.c.b16 %v1938, %v1929
        %v2164 = vpack.c.b16 %v1939, %v1930
        %v2165 = vpack.c.b16 %v1949, %v1940
        %v2166 = vpack.c.b16 %v1950, %v1941
        %v2167 = vpack.c.b16 %v1951, %v1942
        %v2168 = vpack.c.b16 %v1952, %v1943
        %v2169 = vpack.c.b16 %v1953, %v1944
        %v2170 = vpack.c.b16 %v1954, %v1945
        %v2171 = vpack.c.b16 %v1955, %v1946
        %v2172 = vpack.c.b16 %v1956, %v1947
        %v2173 = vpack.c.b16 %v1957, %v1948
        %v2174 = vpack.c.b16 %v1967, %v1958
        %v2175 = vpack.c.b16 %v1968, %v1959
        %v2176 = vpack.c.b16 %v1969, %v1960
        %v2177 = vpack.c.b16 %v1970, %v1961
        %v2178 = vpack.c.b16 %v1971, %v1962
        %v2179 = vpack.c.b16 %v1972, %v1963
        %v2180 = vpack.c.b16 %v1973, %v1964
        %v2181 = vpack.c.b16 %v1974, %v1965
        %v2182 = vpack.c.b16 %v1975, %v1966
        %v2183 = vpack.c.b16 %v1985, %v1976
        %v2184 = vpack.c.b16 %v1986, %v1977
        %v2185 = vpack.c.b16 %v1987, %v1978
        %v2186 = vpack.c.b16 %v1988, %v1979
        %v2187 = vpack.c.b16 %v1989, %v1980
        %v2188 = vpack.c.b16 %v1990, %v1981
        %v2189 = vpack.c.b16 %v1991, %v1982
        %v2190 = vpack.c.b16 %v1992, %v1983
        %v2191 = vpack.c.b16 %v1993, %v1984
        %v2192 = vpack.c.b16 %v2003, %v1994
        %v2193 = vpack.c.b16 %v2004, %v1995
        %v2194 = vpack.c.b16 %v2005, %v1996
        %v2195 = vpack.c.b16 %v2006, %v1997
        %v2196 = vpack.c.b16 %v2007, %v1998
        %v2197 = vpack.c.b16 %v2008, %v1999
        %v2198 = vpack.c.b16 %v2009, %v2000
        %v2199 = vpack.c.b16 %v2010, %v2001
        %v2200 = vpack.c.b16 %v2011, %v2002
        %v2201 = vpack.c.b16 %v2021, %v2012
        %v2202 = vpack.c.b16 %v2022, %v2013
        %v2203 = vpack.c.b16 %v2023, %v2014
        %v2204 = vpack.c.b16 %v2024, %v2015
        %v2205 = vpack.c.b16 %v2025, %v2016
        %v2206 = vpack.c.b16 %v2026, %v2017
        %v2207 = vpack.c.b16 %v2027, %v2018
        %v2208 = vpack.c.b16 %v2028, %v2019
        %v2209 = vpack.c.b16 %v2029, %v2020
        %v2210 = vpack.c.b16 %v2039, %v2030
        %v2211 = vpack.c.b16 %v2040, %v2031
        %v2212 = vpack.c.b16 %v2041, %v2032
        %v2213 = vpack.c.b16 %v2042, %v2033
        %v2214 = vpack.c.b16 %v2043, %v2034
        %v2215 = vpack.c.b16 %v2044, %v2035
        %v2216 = vpack.c.b16 %v2045, %v2036
        %v2217 = vpack.c.b16 %v2046, %v2037
        %v2218 = vpack.c.b16 %v2047, %v2038
        %v2219 = vpack.c.b16 %v2057, %v2048
        %v2220 = vpack.c.b16 %v2058, %v2049
        %v2221 = vpack.c.b16 %v2059, %v2050
        %v2222 = vpack.c.b16 %v2060, %v2051
        %v2223 = vpack.c.b16 %v2061, %v2052
        %v2224 = vpack.c.b16 %v2062, %v2053
        %v2225 = vpack.c.b16 %v2063, %v2054
        %v2226 = vpack.c.b16 %v2064, %v2055
        %v2227 = vpack.c.b16 %v2065, %v2056
        %v2228 = vpack.c.b16 %v2075, %v2066
        %v2229 = vpack.c.b16 %v2076, %v2067
        %v2230 = vpack.c.b16 %v2077, %v2068
        %v2231 = vpack.c.b16 %v2078, %v2069
        %v2232 = vpack.c.b16 %v2079, %v2070
        %v2233 = vpack.c.b16 %v2080, %v2071
        %v2234 = vpack.c.b16 %v2081, %v2072
        %v2235 = vpack.c.b16 %v2082, %v2073
        %v2236 = vpack.c.b16 %v2083, %v2074
        %v2237 = vpack.c.b16 %v2093, %v2084
        %v2238 = vpack.c.b16 %v2094, %v2085
        %v2239 = vpack.c.b16 %v2095, %v2086
        %v2240 = vpack.c.b16 %v2096, %v2087
        %v2241 = vpack.c.b16 %v2097, %v2088
        %v2242 = vpack.c.b16 %v2098, %v2089
        %v2243 = vpack.c.b16 %v2099, %v2090
        %v2244 = vpack.c.b16 %v2100, %v2091
        %v2245 = vpack.c.b16 %v2101, %v2092
        %v2534 = vunpack.c.l.b16 %v1510
        %v2535 = vunpack.c.h.b16 %v1510
        %v2536 = vunpack.c.l.b16 %v1511
        %v2537 = vunpack.c.h.b16 %v1511
        %v2538 = vunpack.c.l.b16 %v1512
        %v2539 = vunpack.c.h.b16 %v1512
        %v2540 = vunpack.c.l.b16 %v1513
        %v2541 = vunpack.c.h.b16 %v1513
        %v2542 = vunpack.c.l.b16 %v1514
        %v2543 = vunpack.c.h.b16 %v1514
        %v2544 = vunpack.c.l.b16 %v1515
        %v2545 = vunpack.c.h.b16 %v1515
        %v2546 = vunpack.c.l.b16 %v1516
        %v2547 = vunpack.c.h.b16 %v1516
        %v2548 = vunpack.c.l.b16 %v1517
        %v2549 = vunpack.c.h.b16 %v1517
        %v2550 = vunpack.c.l.b16 %v1518
        %v2551 = vunpack.c.h.b16 %v1518
        %v2552 = vunpack.c.l.b16 %v1519
        %v2553 = vunpack.c.h.b16 %v1519
        %v2554 = vunpack.c.l.b16 %v1520
        %v2555 = vunpack.c.h.b16 %v1520
        %v2556 = vunpack.c.l.b16 %v1521
        %v2557 = vunpack.c.h.b16 %v1521
        %v2558 = vunpack.c.l.b16 %v1522
        %v2559 = vunpack.c.h.b16 %v1522
        %v2560 = vunpack.c.l.b16 %v1523
        %v2561 = vunpack.c.h.b16 %v1523
        %v2562 = vunpack.c.l.b16 %v1524
        %v2563 = vunpack.c.h.b16 %v1524
        %v2564 = vunpack.c.l.b16 %v1525
        %v2565 = vunpack.c.h.b16 %v1525
        %v2566 = vunpack.c.l.b16 %v1526
        %v2567 = vunpack.c.h.b16 %v1526
        %v2568 = vunpack.c.l.b16 %v1527
        %v2569 = vunpack.c.h.b16 %v1527
        %v2570 = vunpack.c.l.b16 %v1528
        %v2571 = vunpack.c.h.b16 %v1528
        %v2572 = vunpack.c.l.b16 %v1529
        %v2573 = vunpack.c.h.b16 %v1529
        %v2574 = vunpack.c.l.b16 %v1530
        %v2575 = vunpack.c.h.b16 %v1530
        %v2576 = vunpack.c.l.b16 %v1531
        %v2577 = vunpack.c.h.b16 %v1531
        %v2578 = vunpack.c.l.b16 %v1532
        %v2579 = vunpack.c.h.b16 %v1532
        %v2580 = vunpack.c.l.b16 %v1533
        %v2581 = vunpack.c.h.b16 %v1533
        %v2582 = vunpack.c.l.b16 %v1534
        %v2583 = vunpack.c.h.b16 %v1534
        %v2584 = vunpack.c.l.b16 %v1535
        %v2585 = vunpack.c.h.b16 %v1535
        %v2586 = vunpack.c.l.b16 %v1536
        %v2587 = vunpack.c.h.b16 %v1536
        %v2588 = vunpack.c.l.b16 %v1537
        %v2589 = vunpack.c.h.b16 %v1537
        %v2590 = vunpack.c.l.b16 %v1538
        %v2591 = vunpack.c.h.b16 %v1538
        %v2592 = vunpack.c.l.b16 %v1539
        %v2593 = vunpack.c.h.b16 %v1539
        %v2594 = vunpack.c.l.b16 %v1540
        %v2595 = vunpack.c.h.b16 %v1540
        %v2596 = vunpack.c.l.b16 %v1541
        %v2597 = vunpack.c.h.b16 %v1541
        %v2598 = vunpack.c.l.b16 %v1542
        %v2599 = vunpack.c.h.b16 %v1542
        %v2600 = vunpack.c.l.b16 %v1543
        %v2601 = vunpack.c.h.b16 %v1543
        %v2602 = vunpack.c.l.b16 %v1544
        %v2603 = vunpack.c.h.b16 %v1544
        %v2604 = vunpack.c.l.b16 %v1545
        %v2605 = vunpack.c.h.b16 %v1545
        %v2606 = vunpack.c.l.b16 %v1546
        %v2607 = vunpack.c.h.b16 %v1546
        %v2608 = vunpack.c.l.b16 %v1547
        %v2609 = vunpack.c.h.b16 %v1547
        %v2610 = vunpack.c.l.b16 %v1548
        %v2611 = vunpack.c.h.b16 %v1548
        %v2612 = vunpack.c.l.b16 %v1549
        %v2613 = vunpack.c.h.b16 %v1549
        %v2614 = vunpack.c.l.b16 %v1550
        %v2615 = vunpack.c.h.b16 %v1550
        %v2616 = vunpack.c.l.b16 %v1551
        %v2617 = vunpack.c.h.b16 %v1551
        %v2618 = vunpack.c.l.b16 %v1552
        %v2619 = vunpack.c.h.b16 %v1552
        %v2620 = vunpack.c.l.b16 %v1553
        %v2621 = vunpack.c.h.b16 %v1553
        %v2622 = vunpack.c.l.b16 %v1554
        %v2623 = vunpack.c.h.b16 %v1554
        %v2624 = vunpack.c.l.b16 %v1555
        %v2625 = vunpack.c.h.b16 %v1555
        %v2626 = vunpack.c.l.b16 %v1556
        %v2627 = vunpack.c.h.b16 %v1556
        %v2628 = vunpack.c.l.b16 %v1557
        %v2629 = vunpack.c.h.b16 %v1557
        %v2630 = vunpack.c.l.b16 %v1558
        %v2631 = vunpack.c.h.b16 %v1558
        %v2632 = vunpack.c.l.b16 %v1559
        %v2633 = vunpack.c.h.b16 %v1559
        %v2634 = vunpack.c.l.b16 %v1560
        %v2635 = vunpack.c.h.b16 %v1560
        %v2636 = vunpack.c.l.b16 %v1561
        %v2637 = vunpack.c.h.b16 %v1561
        %v2638 = vunpack.c.l.b16 %v1562
        %v2639 = vunpack.c.h.b16 %v1562
        %v2640 = vunpack.c.l.b16 %v1563
        %v2641 = vunpack.c.h.b16 %v1563
        %v2642 = vunpack.c.l.b16 %v1564
        %v2643 = vunpack.c.h.b16 %v1564
        %v2644 = vunpack.c.l.b16 %v1565
        %v2645 = vunpack.c.h.b16 %v1565
        %v2646 = vunpack.c.l.b16 %v1566
        %v2647 = vunpack.c.h.b16 %v1566
        %v2648 = vunpack.c.l.b16 %v1567
        %v2649 = vunpack.c.h.b16 %v1567
        %v2650 = vunpack.c.l.b16 %v1568
        %v2651 = vunpack.c.h.b16 %v1568
        %v2652 = vunpack.c.l.b16 %v1569
        %v2653 = vunpack.c.h.b16 %v1569
        %v2654 = vunpack.c.l.b16 %v1570
        %v2655 = vunpack.c.h.b16 %v1570
        %v2656 = vunpack.c.l.b16 %v1571
        %v2657 = vunpack.c.h.b16 %v1571
        %v2658 = vunpack.c.l.b16 %v1572
        %v2659 = vunpack.c.h.b16 %v1572
        %v2660 = vunpack.c.l.b16 %v1573
        %v2661 = vunpack.c.h.b16 %v1573
        %v2662 = vunpack.c.l.b16 %v1574
        %v2663 = vunpack.c.h.b16 %v1574
        %v2664 = vunpack.c.l.b16 %v1575
        %v2665 = vunpack.c.h.b16 %v1575
        %v2666 = vunpack.c.l.b16 %v1576
        %v2667 = vunpack.c.h.b16 %v1576
        %v2668 = vunpack.c.l.b16 %v1577
        %v2669 = vunpack.c.h.b16 %v1577
        %v2670 = vunpack.c.l.b16 %v1578
        %v2671 = vunpack.c.h.b16 %v1578
        %v2672 = vunpack.c.l.b16 %v1579
        %v2673 = vunpack.c.h.b16 %v1579
        %v2674 = vunpack.c.l.b16 %v1580
        %v2675 = vunpack.c.h.b16 %v1580
        %v2676 = vunpack.c.l.b16 %v1581
        %v2677 = vunpack.c.h.b16 %v1581
        %v2678 = vunpack.c.l.b16 %v1582
        %v2679 = vunpack.c.h.b16 %v1582
        %v2680 = vunpack.c.l.b16 %v1583
        %v2681 = vunpack.c.h.b16 %v1583
        %v2682 = vunpack.c.l.b16 %v1584
        %v2683 = vunpack.c.h.b16 %v1584
        %v2684 = vunpack.c.l.b16 %v1585
        %v2685 = vunpack.c.h.b16 %v1585
        %v2686 = vunpack.c.l.b16 %v1586
        %v2687 = vunpack.c.h.b16 %v1586
        %v2688 = vunpack.c.l.b16 %v1587
        %v2689 = vunpack.c.h.b16 %v1587
        %v2690 = vunpack.c.l.b16 %v1588
        %v2691 = vunpack.c.h.b16 %v1588
        %v2692 = vunpack.c.l.b16 %v1589
        %v2693 = vunpack.c.h.b16 %v1589
        %v2694 = vunpack.c.l.b16 %v1590
        %v2695 = vunpack.c.h.b16 %v1590
        %v2696 = vunpack.c.l.b16 %v1591
        %v2697 = vunpack.c.h.b16 %v1591
        %v2698 = vunpack.c.l.b16 %v1592
        %v2699 = vunpack.c.h.b16 %v1592
        %v2700 = vunpack.c.l.b16 %v1593
        %v2701 = vunpack.c.h.b16 %v1593
        %v2702 = vunpack.c.l.b16 %v1594
        %v2703 = vunpack.c.h.b16 %v1594
        %v2704 = vunpack.c.l.b16 %v1595
        %v2705 = vunpack.c.h.b16 %v1595
        %v2706 = vunpack.c.l.b16 %v1596
        %v2707 = vunpack.c.h.b16 %v1596
        %v2708 = vunpack.c.l.b16 %v1597
        %v2709 = vunpack.c.h.b16 %v1597
        %v2710 = vunpack.c.l.b16 %v1598
        %v2711 = vunpack.c.h.b16 %v1598
        %v2712 = vunpack.c.l.b16 %v1599
        %v2713 = vunpack.c.h.b16 %v1599
        %v2714 = vunpack.c.l.b16 %v1600
        %v2715 = vunpack.c.h.b16 %v1600
        %v2716 = vunpack.c.l.b16 %v1601
        %v2717 = vunpack.c.h.b16 %v1601
        %v2718 = vunpack.c.l.b16 %v1602
        %v2719 = vunpack.c.h.b16 %v1602
        %v2720 = vunpack.c.l.b16 %v1603
        %v2721 = vunpack.c.h.b16 %v1603
        %v2722 = vunpack.c.l.b16 %v1604
        %v2723 = vunpack.c.h.b16 %v1604
        %v2724 = vunpack.c.l.b16 %v1605
        %v2725 = vunpack.c.h.b16 %v1605
        %v2726 = vunpack.c.l.b16 %v1606
        %v2727 = vunpack.c.h.b16 %v1606
        %v2728 = vunpack.c.l.b16 %v1607
        %v2729 = vunpack.c.h.b16 %v1607
        %v2730 = vunpack.c.l.b16 %v1608
        %v2731 = vunpack.c.h.b16 %v1608
        %v2732 = vunpack.c.l.b16 %v1609
        %v2733 = vunpack.c.h.b16 %v1609
        %v2734 = vunpack.c.l.b16 %v1610
        %v2735 = vunpack.c.h.b16 %v1610
        %v2736 = vunpack.c.l.b16 %v1611
        %v2737 = vunpack.c.h.b16 %v1611
        %v2738 = vunpack.c.l.b16 %v1612
        %v2739 = vunpack.c.h.b16 %v1612
        %v2740 = vunpack.c.l.b16 %v1613
        %v2741 = vunpack.c.h.b16 %v1613
        %v2742 = vunpack.c.l.b16 %v1614
        %v2743 = vunpack.c.h.b16 %v1614
        %v2744 = vunpack.c.l.b16 %v1615
        %v2745 = vunpack.c.h.b16 %v1615
        %v2746 = vunpack.c.l.b16 %v1616
        %v2747 = vunpack.c.h.b16 %v1616
        %v2748 = vunpack.c.l.b16 %v1617
        %v2749 = vunpack.c.h.b16 %v1617
        %v2750 = vunpack.c.l.b16 %v1618
        %v2751 = vunpack.c.h.b16 %v1618
        %v2752 = vunpack.c.l.b16 %v1619
        %v2753 = vunpack.c.h.b16 %v1619
        %v2754 = vunpack.c.l.b16 %v1620
        %v2755 = vunpack.c.h.b16 %v1620
        %v2756 = vunpack.c.l.b16 %v1621
        %v2757 = vunpack.c.h.b16 %v1621
        %v2758 = vunpack.c.l.b16 %v1622
        %v2759 = vunpack.c.h.b16 %v1622
        %v2760 = vunpack.c.l.b16 %v1623
        %v2761 = vunpack.c.h.b16 %v1623
        %v2762 = vunpack.c.l.b16 %v1624
        %v2763 = vunpack.c.h.b16 %v1624
        %v2764 = vunpack.c.l.b16 %v1625
        %v2765 = vunpack.c.h.b16 %v1625
        %v2766 = vunpack.c.l.b16 %v1626
        %v2767 = vunpack.c.h.b16 %v1626
        %v2768 = vunpack.c.l.b16 %v1627
        %v2769 = vunpack.c.h.b16 %v1627
        %v2770 = vunpack.c.l.b16 %v1628
        %v2771 = vunpack.c.h.b16 %v1628
        %v2772 = vunpack.c.l.b16 %v1629
        %v2773 = vunpack.c.h.b16 %v1629
        %v2774 = vunpack.c.l.b16 %v1630
        %v2775 = vunpack.c.h.b16 %v1630
        %v2776 = vunpack.c.l.b16 %v1631
        %v2777 = vunpack.c.h.b16 %v1631
        %v2778 = vunpack.c.l.b16 %v1632
        %v2779 = vunpack.c.h.b16 %v1632
        %v2780 = vunpack.c.l.b16 %v1633
        %v2781 = vunpack.c.h.b16 %v1633
        %v2782 = vunpack.c.l.b16 %v1634
        %v2783 = vunpack.c.h.b16 %v1634
        %v2784 = vunpack.c.l.b16 %v1635
        %v2785 = vunpack.c.h.b16 %v1635
        %v2786 = vunpack.c.l.b16 %v1636
        %v2787 = vunpack.c.h.b16 %v1636
        %v2788 = vunpack.c.l.b16 %v1637
        %v2789 = vunpack.c.h.b16 %v1637
        %v2790 = vunpack.c.l.b16 %v1638
        %v2791 = vunpack.c.h.b16 %v1638
        %v2792 = vunpack.c.l.b16 %v1639
        %v2793 = vunpack.c.h.b16 %v1639
        %v2794 = vunpack.c.l.b16 %v1640
        %v2795 = vunpack.c.h.b16 %v1640
        %v2796 = vunpack.c.l.b16 %v1641
        %v2797 = vunpack.c.h.b16 %v1641
        %v2798 = vunpack.c.l.b16 %v1642
        %v2799 = vunpack.c.h.b16 %v1642
        %v2800 = vunpack.c.l.b16 %v1643
        %v2801 = vunpack.c.h.b16 %v1643
        %v2802 = vunpack.c.l.b16 %v1644
        %v2803 = vunpack.c.h.b16 %v1644
        %v2804 = vunpack.c.l.b16 %v1645
        %v2805 = vunpack.c.h.b16 %v1645
        %v2806 = vunpack.c.l.b16 %v1646
        %v2807 = vunpack.c.h.b16 %v1646
        %v2808 = vunpack.c.l.b16 %v1647
        %v2809 = vunpack.c.h.b16 %v1647
        %v2810 = vunpack.c.l.b16 %v1648
        %v2811 = vunpack.c.h.b16 %v1648
        %v2812 = vunpack.c.l.b16 %v1649
        %v2813 = vunpack.c.h.b16 %v1649
        %v2814 = vunpack.c.l.b16 %v1650
        %v2815 = vunpack.c.h.b16 %v1650
        %v2816 = vunpack.c.l.b16 %v1651
        %v2817 = vunpack.c.h.b16 %v1651
        %v2818 = vunpack.c.l.b16 %v1652
        %v2819 = vunpack.c.h.b16 %v1652
        %v2820 = vunpack.c.l.b16 %v1653
        %v2821 = vunpack.c.h.b16 %v1653
        %v2822 = vpack.c.b16 %v2536, %v2534
        %v2823 = vpack.c.b16 %v2537, %v2535
        %v2824 = vpack.c.b16 %v2540, %v2538
        %v2825 = vpack.c.b16 %v2541, %v2539
        %v2826 = vpack.c.b16 %v2544, %v2542
        %v2827 = vpack.c.b16 %v2545, %v2543
        %v2828 = vpack.c.b16 %v2548, %v2546
        %v2829 = vpack.c.b16 %v2549, %v2547
        %v2830 = vpack.c.b16 %v2552, %v2550
        %v2831 = vpack.c.b16 %v2553, %v2551
        %v2832 = vpack.c.b16 %v2556, %v2554
        %v2833 = vpack.c.b16 %v2557, %v2555
        %v2834 = vpack.c.b16 %v2560, %v2558
        %v2835 = vpack.c.b16 %v2561, %v2559
        %v2836 = vpack.c.b16 %v2564, %v2562
        %v2837 = vpack.c.b16 %v2565, %v2563
        %v2838 = vpack.c.b16 %v2568, %v2566
        %v2839 = vpack.c.b16 %v2569, %v2567
        %v2840 = vpack.c.b16 %v2572, %v2570
        %v2841 = vpack.c.b16 %v2573, %v2571
        %v2842 = vpack.c.b16 %v2576, %v2574
        %v2843 = vpack.c.b16 %v2577, %v2575
        %v2844 = vpack.c.b16 %v2580, %v2578
        %v2845 = vpack.c.b16 %v2581, %v2579
        %v2846 = vpack.c.b16 %v2584, %v2582
        %v2847 = vpack.c.b16 %v2585, %v2583
        %v2848 = vpack.c.b16 %v2588, %v2586
        %v2849 = vpack.c.b16 %v2589, %v2587
        %v2850 = vpack.c.b16 %v2592, %v2590
        %v2851 = vpack.c.b16 %v2593, %v2591
        %v2852 = vpack.c.b16 %v2596, %v2594
        %v2853 = vpack.c.b16 %v2597, %v2595
        %v2854 = vpack.c.b16 %v2600, %v2598
        %v2855 = vpack.c.b16 %v2601, %v2599
        %v2856 = vpack.c.b16 %v2604, %v2602
        %v2857 = vpack.c.b16 %v2605, %v2603
        %v2858 = vpack.c.b16 %v2608, %v2606
        %v2859 = vpack.c.b16 %v2609, %v2607
        %v2860 = vpack.c.b16 %v2612, %v2610
        %v2861 = vpack.c.b16 %v2613, %v2611
        %v2862 = vpack.c.b16 %v2616, %v2614
        %v2863 = vpack.c.b16 %v2617, %v2615
        %v2864 = vpack.c.b16 %v2620, %v2618
        %v2865 = vpack.c.b16 %v2621, %v2619
        %v2866 = vpack.c.b16 %v2624, %v2622
        %v2867 = vpack.c.b16 %v2625, %v2623
        %v2868 = vpack.c.b16 %v2628, %v2626
        %v2869 = vpack.c.b16 %v2629, %v2627
        %v2870 = vpack.c.b16 %v2632, %v2630
        %v2871 = vpack.c.b16 %v2633, %v2631
        %v2872 = vpack.c.b16 %v2636, %v2634
        %v2873 = vpack.c.b16 %v2637, %v2635
        %v2874 = vpack.c.b16 %v2640, %v2638
        %v2875 = vpack.c.b16 %v2641, %v2639
        %v2876 = vpack.c.b16 %v2644, %v2642
        %v2877 = vpack.c.b16 %v2645, %v2643
        %v2878 = vpack.c.b16 %v2648, %v2646
        %v2879 = vpack.c.b16 %v2649, %v2647
        %v2880 = vpack.c.b16 %v2652, %v2650
        %v2881 = vpack.c.b16 %v2653, %v2651
        %v2882 = vpack.c.b16 %v2656, %v2654
        %v2883 = vpack.c.b16 %v2657, %v2655
        %v2884 = vpack.c.b16 %v2660, %v2658
        %v2885 = vpack.c.b16 %v2661, %v2659
        %v2886 = vpack.c.b16 %v2664, %v2662
        %v2887 = vpack.c.b16 %v2665, %v2663
        %v2888 = vpack.c.b16 %v2668, %v2666
        %v2889 = vpack.c.b16 %v2669, %v2667
        %v2890 = vpack.c.b16 %v2672, %v2670
        %v2891 = vpack.c.b16 %v2673, %v2671
        %v2892 = vpack.c.b16 %v2676, %v2674
        %v2893 = vpack.c.b16 %v2677, %v2675
        %v2894 = vpack.c.b16 %v2680, %v2678
        %v2895 = vpack.c.b16 %v2681, %v2679
        %v2896 = vpack.c.b16 %v2684, %v2682
        %v2897 = vpack.c.b16 %v2685, %v2683
        %v2898 = vpack.c.b16 %v2688, %v2686
        %v2899 = vpack.c.b16 %v2689, %v2687
        %v2900 = vpack.c.b16 %v2692, %v2690
        %v2901 = vpack.c.b16 %v2693, %v2691
        %v2902 = vpack.c.b16 %v2696, %v2694
        %v2903 = vpack.c.b16 %v2697, %v2695
        %v2904 = vpack.c.b16 %v2700, %v2698
        %v2905 = vpack.c.b16 %v2701, %v2699
        %v2906 = vpack.c.b16 %v2704, %v2702
        %v2907 = vpack.c.b16 %v2705, %v2703
        %v2908 = vpack.c.b16 %v2708, %v2706
        %v2909 = vpack.c.b16 %v2709, %v2707
        %v2910 = vpack.c.b16 %v2712, %v2710
        %v2911 = vpack.c.b16 %v2713, %v2711
        %v2912 = vpack.c.b16 %v2716, %v2714
        %v2913 = vpack.c.b16 %v2717, %v2715
        %v2914 = vpack.c.b16 %v2720, %v2718
        %v2915 = vpack.c.b16 %v2721, %v2719
        %v2916 = vpack.c.b16 %v2724, %v2722
        %v2917 = vpack.c.b16 %v2725, %v2723
        %v2918 = vpack.c.b16 %v2728, %v2726
        %v2919 = vpack.c.b16 %v2729, %v2727
        %v2920 = vpack.c.b16 %v2732, %v2730
        %v2921 = vpack.c.b16 %v2733, %v2731
        %v2922 = vpack.c.b16 %v2736, %v2734
        %v2923 = vpack.c.b16 %v2737, %v2735
        %v2924 = vpack.c.b16 %v2740, %v2738
        %v2925 = vpack.c.b16 %v2741, %v2739
        %v2926 = vpack.c.b16 %v2744, %v2742
        %v2927 = vpack.c.b16 %v2745, %v2743
        %v2928 = vpack.c.b16 %v2748, %v2746
        %v2929 = vpack.c.b16 %v2749, %v2747
        %v2930 = vpack.c.b16 %v2752, %v2750
        %v2931 = vpack.c.b16 %v2753, %v2751
        %v2932 = vpack.c.b16 %v2756, %v2754
        %v2933 = vpack.c.b16 %v2757, %v2755
        %v2934 = vpack.c.b16 %v2760, %v2758
        %v2935 = vpack.c.b16 %v2761, %v2759
        %v2936 = vpack.c.b16 %v2764, %v2762
        %v2937 = vpack.c.b16 %v2765, %v2763
        %v2938 = vpack.c.b16 %v2768, %v2766
        %v2939 = vpack.c.b16 %v2769, %v2767
        %v2940 = vpack.c.b16 %v2772, %v2770
        %v2941 = vpack.c.b16 %v2773, %v2771
        %v2942 = vpack.c.b16 %v2776, %v2774
        %v2943 = vpack.c.b16 %v2777, %v2775
        %v2944 = vpack.c.b16 %v2780, %v2778
        %v2945 = vpack.c.b16 %v2781, %v2779
        %v2946 = vpack.c.b16 %v2784, %v2782
        %v2947 = vpack.c.b16 %v2785, %v2783
        %v2948 = vpack.c.b16 %v2788, %v2786
        %v2949 = vpack.c.b16 %v2789, %v2787
        %v2950 = vpack.c.b16 %v2792, %v2790
        %v2951 = vpack.c.b16 %v2793, %v2791
        %v2952 = vpack.c.b16 %v2796, %v2794
        %v2953 = vpack.c.b16 %v2797, %v2795
        %v2954 = vpack.c.b16 %v2800, %v2798
        %v2955 = vpack.c.b16 %v2801, %v2799
        %v2956 = vpack.c.b16 %v2804, %v2802
        %v2957 = vpack.c.b16 %v2805, %v2803
        %v2958 = vpack.c.b16 %v2808, %v2806
        %v2959 = vpack.c.b16 %v2809, %v2807
        %v2960 = vpack.c.b16 %v2812, %v2810
        %v2961 = vpack.c.b16 %v2813, %v2811
        %v2962 = vpack.c.b16 %v2816, %v2814
        %v2963 = vpack.c.b16 %v2817, %v2815
        %v2964 = vpack.c.b16 %v2820, %v2818
        %v2965 = vpack.c.b16 %v2821, %v2819
        %3110 = vmatprep.subr.bf16.mxu0 %v2837
        %3111 = vmatpush1.bf16.msra.mxu0 %v2836
        %3112 = vmatprep.subr.bf16.mxu0 %v2835
        %3113 = vmatpush1.bf16.msra.mxu0 %v2834
        %3114 = vmatprep.subr.bf16.mxu0 %v2833
        %3115 = vmatpush1.bf16.msra.mxu0 %v2832
        %3116 = vmatprep.subr.bf16.mxu0 %v2831
        %3117 = vmatpush1.bf16.msra.mxu0 %v2830
        %3118 = vmatprep.subr.bf16.mxu0 %v2829
        %3119 = vmatpush1.bf16.msra.mxu0 %v2828
        %3120 = vmatprep.subr.bf16.mxu0 %v2827
        %3121 = vmatpush1.bf16.msra.mxu0 %v2826
        %3122 = vmatprep.subr.bf16.mxu0 %v2825
        %3123 = vmatpush1.bf16.msra.mxu0 %v2824
        %3124 = vmatprep.subr.bf16.mxu0 %v2823
        %3125 = vmatpush1.bf16.msra.mxu0 %v2822
        %3126 = vmatprep.subr.bf16.mxu0 %v2853
        %3127 = vmatpush2.bf16.msra.mxu0 %v2852
        %3128 = vmatprep.subr.bf16.mxu0 %v2851
        %3129 = vmatpush2.bf16.msra.mxu0 %v2850
        %3130 = vmatprep.subr.bf16.mxu0 %v2849
        %3131 = vmatpush2.bf16.msra.mxu0 %v2848
        %3132 = vmatprep.subr.bf16.mxu0 %v2847
        %3133 = vmatpush2.bf16.msra.mxu0 %v2846
        %3134 = vmatprep.subr.bf16.mxu0 %v2845
        %3135 = vmatpush2.bf16.msra.mxu0 %v2844
        %3136 = vmatprep.subr.bf16.mxu0 %v2843
        %3137 = vmatpush2.bf16.msra.mxu0 %v2842
        %3138 = vmatprep.subr.bf16.mxu0 %v2841
        %3139 = vmatpush2.bf16.msra.mxu0 %v2840
        %3140 = vmatprep.subr.bf16.mxu0 %v2839
        %3141 = vmatpush2.bf16.msra.mxu0 %v2838
        %3142 = vmatprep.mubr.bf16.mxu0 %v2103
        %3143 = vmatmul.mubr.bf16.gmra.mxu0 %v2102
        %v3144 = vpop.f32.mrf.mxu0
        %v3145 = vadd.f32 0.0, %v3144
        %v3146 = vpop.f32.mrf.mxu0
        %v3147 = vadd.f32 0.0, %v3146
        %v3148 = vpop.f32.mrf.mxu0
        %v3149 = vadd.f32 0.0, %v3148
        %v3150 = vpop.f32.mrf.mxu0
        %v3151 = vadd.f32 0.0, %v3150
        %3152 = vmatprep.mubr.bf16.mxu0 %v2112
        %3153 = vmatmul.mubr.bf16.gmra.mxu0 %v2111
        %v3154 = vpop.f32.mrf.mxu0
        %v3155 = vadd.f32 0.0, %v3154
        %v3156 = vpop.f32.mrf.mxu0
        %v3157 = vadd.f32 0.0, %v3156
        %v3158 = vpop.f32.mrf.mxu0
        %v3159 = vadd.f32 0.0, %v3158
        %v3160 = vpop.f32.mrf.mxu0
        %v3161 = vadd.f32 0.0, %v3160
        %3162 = vmatprep.mubr.bf16.mxu0 %v2121
        %3163 = vmatmul.mubr.bf16.gmra.mxu0 %v2120
        %v3164 = vpop.f32.mrf.mxu0
        %v3165 = vadd.f32 0.0, %v3164
        %v3166 = vpop.f32.mrf.mxu0
        %v3167 = vadd.f32 0.0, %v3166
        %v3168 = vpop.f32.mrf.mxu0
        %v3169 = vadd.f32 0.0, %v3168
        %v3170 = vpop.f32.mrf.mxu0
        %v3171 = vadd.f32 0.0, %v3170
        %3172 = vmatprep.mubr.bf16.mxu0 %v2130
        %3173 = vmatmul.mubr.bf16.gmra.mxu0 %v2129
        %v3174 = vpop.f32.mrf.mxu0
        %v3175 = vadd.f32 0.0, %v3174
        %v3176 = vpop.f32.mrf.mxu0
        %v3177 = vadd.f32 0.0, %v3176
        %v3178 = vpop.f32.mrf.mxu0
        %v3179 = vadd.f32 0.0, %v3178
        %v3180 = vpop.f32.mrf.mxu0
        %v3181 = vadd.f32 0.0, %v3180
        %3182 = vmatprep.mubr.bf16.mxu0 %v2139
        %3183 = vmatmul.mubr.bf16.gmra.mxu0 %v2138
        %v3184 = vpop.f32.mrf.mxu0
        %v3185 = vadd.f32 0.0, %v3184
        %v3186 = vpop.f32.mrf.mxu0
        %v3187 = vadd.f32 0.0, %v3186
        %v3188 = vpop.f32.mrf.mxu0
        %v3189 = vadd.f32 0.0, %v3188
        %v3190 = vpop.f32.mrf.mxu0
        %v3191 = vadd.f32 0.0, %v3190
        %3192 = vmatprep.mubr.bf16.mxu0 %v2148
        %3193 = vmatmul.mubr.bf16.gmra.mxu0 %v2147
        %v3194 = vpop.f32.mrf.mxu0
        %v3195 = vadd.f32 0.0, %v3194
        %v3196 = vpop.f32.mrf.mxu0
        %v3197 = vadd.f32 0.0, %v3196
        %v3198 = vpop.f32.mrf.mxu0
        %v3199 = vadd.f32 0.0, %v3198
        %v3200 = vpop.f32.mrf.mxu0
        %v3201 = vadd.f32 0.0, %v3200
        %3202 = vmatprep.mubr.bf16.mxu0 %v2157
        %3203 = vmatmul.mubr.bf16.gmra.mxu0 %v2156
        %v3204 = vpop.f32.mrf.mxu0
        %v3205 = vadd.f32 0.0, %v3204
        %v3206 = vpop.f32.mrf.mxu0
        %v3207 = vadd.f32 0.0, %v3206
        %v3208 = vpop.f32.mrf.mxu0
        %v3209 = vadd.f32 0.0, %v3208
        %v3210 = vpop.f32.mrf.mxu0
        %v3211 = vadd.f32 0.0, %v3210
        %3212 = vmatprep.mubr.bf16.mxu0 %v2166
        %3213 = vmatmul.mubr.bf16.gmra.mxu0 %v2165
        %v3214 = vpop.f32.mrf.mxu0
        %v3215 = vadd.f32 0.0, %v3214
        %v3216 = vpop.f32.mrf.mxu0
        %v3217 = vadd.f32 0.0, %v3216
        %v3218 = vpop.f32.mrf.mxu0
        %v3219 = vadd.f32 0.0, %v3218
        %v3220 = vpop.f32.mrf.mxu0
        %v3221 = vadd.f32 0.0, %v3220
        %3222 = vmatprep.mubr.bf16.mxu0 %v2175
        %3223 = vmatmul.mubr.bf16.gmra.mxu0 %v2174
        %v3224 = vpop.f32.mrf.mxu0
        %v3225 = vadd.f32 0.0, %v3224
        %v3226 = vpop.f32.mrf.mxu0
        %v3227 = vadd.f32 0.0, %v3226
        %v3228 = vpop.f32.mrf.mxu0
        %v3229 = vadd.f32 0.0, %v3228
        %v3230 = vpop.f32.mrf.mxu0
        %v3231 = vadd.f32 0.0, %v3230
        %3232 = vmatprep.mubr.bf16.mxu0 %v2184
        %3233 = vmatmul.mubr.bf16.gmra.mxu0 %v2183
        %v3234 = vpop.f32.mrf.mxu0
        %v3235 = vadd.f32 0.0, %v3234
        %v3236 = vpop.f32.mrf.mxu0
        %v3237 = vadd.f32 0.0, %v3236
        %v3238 = vpop.f32.mrf.mxu0
        %v3239 = vadd.f32 0.0, %v3238
        %v3240 = vpop.f32.mrf.mxu0
        %v3241 = vadd.f32 0.0, %v3240
        %3242 = vmatprep.mubr.bf16.mxu0 %v2193
        %3243 = vmatmul.mubr.bf16.gmra.mxu0 %v2192
        %v3244 = vpop.f32.mrf.mxu0
        %v3245 = vadd.f32 0.0, %v3244
        %v3246 = vpop.f32.mrf.mxu0
        %v3247 = vadd.f32 0.0, %v3246
        %v3248 = vpop.f32.mrf.mxu0
        %v3249 = vadd.f32 0.0, %v3248
        %v3250 = vpop.f32.mrf.mxu0
        %v3251 = vadd.f32 0.0, %v3250
        %3252 = vmatprep.mubr.bf16.mxu0 %v2202
        %3253 = vmatmul.mubr.bf16.gmra.mxu0 %v2201
        %v3254 = vpop.f32.mrf.mxu0
        %v3255 = vadd.f32 0.0, %v3254
        %v3256 = vpop.f32.mrf.mxu0
        %v3257 = vadd.f32 0.0, %v3256
        %v3258 = vpop.f32.mrf.mxu0
        %v3259 = vadd.f32 0.0, %v3258
        %v3260 = vpop.f32.mrf.mxu0
        %v3261 = vadd.f32 0.0, %v3260
        %3262 = vmatprep.mubr.bf16.mxu0 %v2211
        %3263 = vmatmul.mubr.bf16.gmra.mxu0 %v2210
        %v3264 = vpop.f32.mrf.mxu0
        %v3265 = vadd.f32 0.0, %v3264
        %v3266 = vpop.f32.mrf.mxu0
        %v3267 = vadd.f32 0.0, %v3266
        %v3268 = vpop.f32.mrf.mxu0
        %v3269 = vadd.f32 0.0, %v3268
        %v3270 = vpop.f32.mrf.mxu0
        %v3271 = vadd.f32 0.0, %v3270
        %3272 = vmatprep.mubr.bf16.mxu0 %v2220
        %3273 = vmatmul.mubr.bf16.gmra.mxu0 %v2219
        %v3274 = vpop.f32.mrf.mxu0
        %v3275 = vadd.f32 0.0, %v3274
        %v3276 = vpop.f32.mrf.mxu0
        %v3277 = vadd.f32 0.0, %v3276
        %v3278 = vpop.f32.mrf.mxu0
        %v3279 = vadd.f32 0.0, %v3278
        %v3280 = vpop.f32.mrf.mxu0
        %v3281 = vadd.f32 0.0, %v3280
        %3282 = vmatprep.mubr.bf16.mxu0 %v2229
        %3283 = vmatmul.mubr.bf16.gmra.mxu0 %v2228
        %v3284 = vpop.f32.mrf.mxu0
        %v3285 = vadd.f32 0.0, %v3284
        %v3286 = vpop.f32.mrf.mxu0
        %v3287 = vadd.f32 0.0, %v3286
        %v3288 = vpop.f32.mrf.mxu0
        %v3289 = vadd.f32 0.0, %v3288
        %v3290 = vpop.f32.mrf.mxu0
        %v3291 = vadd.f32 0.0, %v3290
        %3292 = vmatprep.mubr.bf16.mxu0 %v2238
        %3293 = vmatmul.mubr.bf16.gmra.mxu0 %v2237
        %v3294 = vpop.f32.mrf.mxu0
        %v3295 = vadd.f32 0.0, %v3294
        %v3296 = vpop.f32.mrf.mxu0
        %v3297 = vadd.f32 0.0, %v3296
        %v3298 = vpop.f32.mrf.mxu0
        %v3299 = vadd.f32 0.0, %v3298
        %v3300 = vpop.f32.mrf.mxu0
        %v3301 = vadd.f32 0.0, %v3300
        %3302 = vdwg.mxu0
        %3303 = vmatprep.subr.bf16.mxu0 %v2869
        %3304 = vmatpush1.bf16.msra.mxu0 %v2868
        %3305 = vmatprep.subr.bf16.mxu0 %v2867
        %3306 = vmatpush1.bf16.msra.mxu0 %v2866
        %3307 = vmatprep.subr.bf16.mxu0 %v2865
        %3308 = vmatpush1.bf16.msra.mxu0 %v2864
        %3309 = vmatprep.subr.bf16.mxu0 %v2863
        %3310 = vmatpush1.bf16.msra.mxu0 %v2862
        %3311 = vmatprep.subr.bf16.mxu0 %v2861
        %3312 = vmatpush1.bf16.msra.mxu0 %v2860
        %3313 = vmatprep.subr.bf16.mxu0 %v2859
        %3314 = vmatpush1.bf16.msra.mxu0 %v2858
        %3315 = vmatprep.subr.bf16.mxu0 %v2857
        %3316 = vmatpush1.bf16.msra.mxu0 %v2856
        %3317 = vmatprep.subr.bf16.mxu0 %v2855
        %3318 = vmatpush1.bf16.msra.mxu0 %v2854
        %3319 = vmatprep.subr.bf16.mxu0 %v2885
        %3320 = vmatpush2.bf16.msra.mxu0 %v2884
        %3321 = vmatprep.subr.bf16.mxu0 %v2883
        %3322 = vmatpush2.bf16.msra.mxu0 %v2882
        %3323 = vmatprep.subr.bf16.mxu0 %v2881
        %3324 = vmatpush2.bf16.msra.mxu0 %v2880
        %3325 = vmatprep.subr.bf16.mxu0 %v2879
        %3326 = vmatpush2.bf16.msra.mxu0 %v2878
        %3327 = vmatprep.subr.bf16.mxu0 %v2877
        %3328 = vmatpush2.bf16.msra.mxu0 %v2876
        %3329 = vmatprep.subr.bf16.mxu0 %v2875
        %3330 = vmatpush2.bf16.msra.mxu0 %v2874
        %3331 = vmatprep.subr.bf16.mxu0 %v2873
        %3332 = vmatpush2.bf16.msra.mxu0 %v2872
        %3333 = vmatprep.subr.bf16.mxu0 %v2871
        %3334 = vmatpush2.bf16.msra.mxu0 %v2870
        %3335 = vmatprep.mubr.bf16.mxu0 %v2105
        %3336 = vmatmul.mubr.bf16.gmra.mxu0 %v2104
        %v3337 = vpop.f32.mrf.mxu0
        %v3338 = vadd.f32 %v3145, %v3337
        %v3339 = vpop.f32.mrf.mxu0
        %v3340 = vadd.f32 %v3147, %v3339
        %v3341 = vpop.f32.mrf.mxu0
        %v3342 = vadd.f32 %v3149, %v3341
        %v3343 = vpop.f32.mrf.mxu0
        %v3344 = vadd.f32 %v3151, %v3343
        %3345 = vmatprep.mubr.bf16.mxu0 %v2114
        %3346 = vmatmul.mubr.bf16.gmra.mxu0 %v2113
        %v3347 = vpop.f32.mrf.mxu0
        %v3348 = vadd.f32 %v3155, %v3347
        %v3349 = vpop.f32.mrf.mxu0
        %v3350 = vadd.f32 %v3157, %v3349
        %v3351 = vpop.f32.mrf.mxu0
        %v3352 = vadd.f32 %v3159, %v3351
        %v3353 = vpop.f32.mrf.mxu0
        %v3354 = vadd.f32 %v3161, %v3353
        %3355 = vmatprep.mubr.bf16.mxu0 %v2123
        %3356 = vmatmul.mubr.bf16.gmra.mxu0 %v2122
        %v3357 = vpop.f32.mrf.mxu0
        %v3358 = vadd.f32 %v3165, %v3357
        %v3359 = vpop.f32.mrf.mxu0
        %v3360 = vadd.f32 %v3167, %v3359
        %v3361 = vpop.f32.mrf.mxu0
        %v3362 = vadd.f32 %v3169, %v3361
        %v3363 = vpop.f32.mrf.mxu0
        %v3364 = vadd.f32 %v3171, %v3363
        %3365 = vmatprep.mubr.bf16.mxu0 %v2132
        %3366 = vmatmul.mubr.bf16.gmra.mxu0 %v2131
        %v3367 = vpop.f32.mrf.mxu0
        %v3368 = vadd.f32 %v3175, %v3367
        %v3369 = vpop.f32.mrf.mxu0
        %v3370 = vadd.f32 %v3177, %v3369
        %v3371 = vpop.f32.mrf.mxu0
        %v3372 = vadd.f32 %v3179, %v3371
        %v3373 = vpop.f32.mrf.mxu0
        %v3374 = vadd.f32 %v3181, %v3373
        %3375 = vmatprep.mubr.bf16.mxu0 %v2141
        %3376 = vmatmul.mubr.bf16.gmra.mxu0 %v2140
        %v3377 = vpop.f32.mrf.mxu0
        %v3378 = vadd.f32 %v3185, %v3377
        %v3379 = vpop.f32.mrf.mxu0
        %v3380 = vadd.f32 %v3187, %v3379
        %v3381 = vpop.f32.mrf.mxu0
        %v3382 = vadd.f32 %v3189, %v3381
        %v3383 = vpop.f32.mrf.mxu0
        %v3384 = vadd.f32 %v3191, %v3383
        %3385 = vmatprep.mubr.bf16.mxu0 %v2150
        %3386 = vmatmul.mubr.bf16.gmra.mxu0 %v2149
        %v3387 = vpop.f32.mrf.mxu0
        %v3388 = vadd.f32 %v3195, %v3387
        %v3389 = vpop.f32.mrf.mxu0
        %v3390 = vadd.f32 %v3197, %v3389
        %v3391 = vpop.f32.mrf.mxu0
        %v3392 = vadd.f32 %v3199, %v3391
        %v3393 = vpop.f32.mrf.mxu0
        %v3394 = vadd.f32 %v3201, %v3393
        %3395 = vmatprep.mubr.bf16.mxu0 %v2159
        %3396 = vmatmul.mubr.bf16.gmra.mxu0 %v2158
        %v3397 = vpop.f32.mrf.mxu0
        %v3398 = vadd.f32 %v3205, %v3397
        %v3399 = vpop.f32.mrf.mxu0
        %v3400 = vadd.f32 %v3207, %v3399
        %v3401 = vpop.f32.mrf.mxu0
        %v3402 = vadd.f32 %v3209, %v3401
        %v3403 = vpop.f32.mrf.mxu0
        %v3404 = vadd.f32 %v3211, %v3403
        %3405 = vmatprep.mubr.bf16.mxu0 %v2168
        %3406 = vmatmul.mubr.bf16.gmra.mxu0 %v2167
        %v3407 = vpop.f32.mrf.mxu0
        %v3408 = vadd.f32 %v3215, %v3407
        %v3409 = vpop.f32.mrf.mxu0
        %v3410 = vadd.f32 %v3217, %v3409
        %v3411 = vpop.f32.mrf.mxu0
        %v3412 = vadd.f32 %v3219, %v3411
        %v3413 = vpop.f32.mrf.mxu0
        %v3414 = vadd.f32 %v3221, %v3413
        %3415 = vmatprep.mubr.bf16.mxu0 %v2177
        %3416 = vmatmul.mubr.bf16.gmra.mxu0 %v2176
        %v3417 = vpop.f32.mrf.mxu0
        %v3418 = vadd.f32 %v3225, %v3417
        %v3419 = vpop.f32.mrf.mxu0
        %v3420 = vadd.f32 %v3227, %v3419
        %v3421 = vpop.f32.mrf.mxu0
        %v3422 = vadd.f32 %v3229, %v3421
        %v3423 = vpop.f32.mrf.mxu0
        %v3424 = vadd.f32 %v3231, %v3423
        %3425 = vmatprep.mubr.bf16.mxu0 %v2186
        %3426 = vmatmul.mubr.bf16.gmra.mxu0 %v2185
        %v3427 = vpop.f32.mrf.mxu0
        %v3428 = vadd.f32 %v3235, %v3427
        %v3429 = vpop.f32.mrf.mxu0
        %v3430 = vadd.f32 %v3237, %v3429
        %v3431 = vpop.f32.mrf.mxu0
        %v3432 = vadd.f32 %v3239, %v3431
        %v3433 = vpop.f32.mrf.mxu0
        %v3434 = vadd.f32 %v3241, %v3433
        %3435 = vmatprep.mubr.bf16.mxu0 %v2195
        %3436 = vmatmul.mubr.bf16.gmra.mxu0 %v2194
        %v3437 = vpop.f32.mrf.mxu0
        %v3438 = vadd.f32 %v3245, %v3437
        %v3439 = vpop.f32.mrf.mxu0
        %v3440 = vadd.f32 %v3247, %v3439
        %v3441 = vpop.f32.mrf.mxu0
        %v3442 = vadd.f32 %v3249, %v3441
        %v3443 = vpop.f32.mrf.mxu0
        %v3444 = vadd.f32 %v3251, %v3443
        %3445 = vmatprep.mubr.bf16.mxu0 %v2204
        %3446 = vmatmul.mubr.bf16.gmra.mxu0 %v2203
        %v3447 = vpop.f32.mrf.mxu0
        %v3448 = vadd.f32 %v3255, %v3447
        %v3449 = vpop.f32.mrf.mxu0
        %v3450 = vadd.f32 %v3257, %v3449
        %v3451 = vpop.f32.mrf.mxu0
        %v3452 = vadd.f32 %v3259, %v3451
        %v3453 = vpop.f32.mrf.mxu0
        %v3454 = vadd.f32 %v3261, %v3453
        %3455 = vmatprep.mubr.bf16.mxu0 %v2213
        %3456 = vmatmul.mubr.bf16.gmra.mxu0 %v2212
        %v3457 = vpop.f32.mrf.mxu0
        %v3458 = vadd.f32 %v3265, %v3457
        %v3459 = vpop.f32.mrf.mxu0
        %v3460 = vadd.f32 %v3267, %v3459
        %v3461 = vpop.f32.mrf.mxu0
        %v3462 = vadd.f32 %v3269, %v3461
        %v3463 = vpop.f32.mrf.mxu0
        %v3464 = vadd.f32 %v3271, %v3463
        %3465 = vmatprep.mubr.bf16.mxu0 %v2222
        %3466 = vmatmul.mubr.bf16.gmra.mxu0 %v2221
        %v3467 = vpop.f32.mrf.mxu0
        %v3468 = vadd.f32 %v3275, %v3467
        %v3469 = vpop.f32.mrf.mxu0
        %v3470 = vadd.f32 %v3277, %v3469
        %v3471 = vpop.f32.mrf.mxu0
        %v3472 = vadd.f32 %v3279, %v3471
        %v3473 = vpop.f32.mrf.mxu0
        %v3474 = vadd.f32 %v3281, %v3473
        %3475 = vmatprep.mubr.bf16.mxu0 %v2231
        %3476 = vmatmul.mubr.bf16.gmra.mxu0 %v2230
        %v3477 = vpop.f32.mrf.mxu0
        %v3478 = vadd.f32 %v3285, %v3477
        %v3479 = vpop.f32.mrf.mxu0
        %v3480 = vadd.f32 %v3287, %v3479
        %v3481 = vpop.f32.mrf.mxu0
        %v3482 = vadd.f32 %v3289, %v3481
        %v3483 = vpop.f32.mrf.mxu0
        %v3484 = vadd.f32 %v3291, %v3483
        %3485 = vmatprep.mubr.bf16.mxu0 %v2240
        %3486 = vmatmul.mubr.bf16.gmra.mxu0 %v2239
        %v3487 = vpop.f32.mrf.mxu0
        %v3488 = vadd.f32 %v3295, %v3487
        %v3489 = vpop.f32.mrf.mxu0
        %v3490 = vadd.f32 %v3297, %v3489
        %v3491 = vpop.f32.mrf.mxu0
        %v3492 = vadd.f32 %v3299, %v3491
        %v3493 = vpop.f32.mrf.mxu0
        %v3494 = vadd.f32 %v3301, %v3493
        %3495 = vdwg.mxu0
        %3496 = vmatprep.subr.bf16.mxu0 %v2901
        %3497 = vmatpush1.bf16.msra.mxu0 %v2900
        %3498 = vmatprep.subr.bf16.mxu0 %v2899
        %3499 = vmatpush1.bf16.msra.mxu0 %v2898
        %3500 = vmatprep.subr.bf16.mxu0 %v2897
        %3501 = vmatpush1.bf16.msra.mxu0 %v2896
        %3502 = vmatprep.subr.bf16.mxu0 %v2895
        %3503 = vmatpush1.bf16.msra.mxu0 %v2894
        %3504 = vmatprep.subr.bf16.mxu0 %v2893
        %3505 = vmatpush1.bf16.msra.mxu0 %v2892
        %3506 = vmatprep.subr.bf16.mxu0 %v2891
        %3507 = vmatpush1.bf16.msra.mxu0 %v2890
        %3508 = vmatprep.subr.bf16.mxu0 %v2889
        %3509 = vmatpush1.bf16.msra.mxu0 %v2888
        %3510 = vmatprep.subr.bf16.mxu0 %v2887
        %3511 = vmatpush1.bf16.msra.mxu0 %v2886
        %3512 = vmatprep.subr.bf16.mxu0 %v2917
        %3513 = vmatpush2.bf16.msra.mxu0 %v2916
        %3514 = vmatprep.subr.bf16.mxu0 %v2915
        %3515 = vmatpush2.bf16.msra.mxu0 %v2914
        %3516 = vmatprep.subr.bf16.mxu0 %v2913
        %3517 = vmatpush2.bf16.msra.mxu0 %v2912
        %3518 = vmatprep.subr.bf16.mxu0 %v2911
        %3519 = vmatpush2.bf16.msra.mxu0 %v2910
        %3520 = vmatprep.subr.bf16.mxu0 %v2909
        %3521 = vmatpush2.bf16.msra.mxu0 %v2908
        %3522 = vmatprep.subr.bf16.mxu0 %v2907
        %3523 = vmatpush2.bf16.msra.mxu0 %v2906
        %3524 = vmatprep.subr.bf16.mxu0 %v2905
        %3525 = vmatpush2.bf16.msra.mxu0 %v2904
        %3526 = vmatprep.subr.bf16.mxu0 %v2903
        %3527 = vmatpush2.bf16.msra.mxu0 %v2902
        %3528 = vmatprep.mubr.bf16.mxu0 %v2107
        %3529 = vmatmul.mubr.bf16.gmra.mxu0 %v2106
        %v3530 = vpop.f32.mrf.mxu0
        %v3531 = vadd.f32 %v3338, %v3530
        %v3532 = vpop.f32.mrf.mxu0
        %v3533 = vadd.f32 %v3340, %v3532
        %v3534 = vpop.f32.mrf.mxu0
        %v3535 = vadd.f32 %v3342, %v3534
        %v3536 = vpop.f32.mrf.mxu0
        %v3537 = vadd.f32 %v3344, %v3536
        %3538 = vmatprep.mubr.bf16.mxu0 %v2116
        %3539 = vmatmul.mubr.bf16.gmra.mxu0 %v2115
        %v3540 = vpop.f32.mrf.mxu0
        %v3541 = vadd.f32 %v3348, %v3540
        %v3542 = vpop.f32.mrf.mxu0
        %v3543 = vadd.f32 %v3350, %v3542
        %v3544 = vpop.f32.mrf.mxu0
        %v3545 = vadd.f32 %v3352, %v3544
        %v3546 = vpop.f32.mrf.mxu0
        %v3547 = vadd.f32 %v3354, %v3546
        %3548 = vmatprep.mubr.bf16.mxu0 %v2125
        %3549 = vmatmul.mubr.bf16.gmra.mxu0 %v2124
        %v3550 = vpop.f32.mrf.mxu0
        %v3551 = vadd.f32 %v3358, %v3550
        %v3552 = vpop.f32.mrf.mxu0
        %v3553 = vadd.f32 %v3360, %v3552
        %v3554 = vpop.f32.mrf.mxu0
        %v3555 = vadd.f32 %v3362, %v3554
        %v3556 = vpop.f32.mrf.mxu0
        %v3557 = vadd.f32 %v3364, %v3556
        %3558 = vmatprep.mubr.bf16.mxu0 %v2134
        %3559 = vmatmul.mubr.bf16.gmra.mxu0 %v2133
        %v3560 = vpop.f32.mrf.mxu0
        %v3561 = vadd.f32 %v3368, %v3560
        %v3562 = vpop.f32.mrf.mxu0
        %v3563 = vadd.f32 %v3370, %v3562
        %v3564 = vpop.f32.mrf.mxu0
        %v3565 = vadd.f32 %v3372, %v3564
        %v3566 = vpop.f32.mrf.mxu0
        %v3567 = vadd.f32 %v3374, %v3566
        %3568 = vmatprep.mubr.bf16.mxu0 %v2143
        %3569 = vmatmul.mubr.bf16.gmra.mxu0 %v2142
        %v3570 = vpop.f32.mrf.mxu0
        %v3571 = vadd.f32 %v3378, %v3570
        %v3572 = vpop.f32.mrf.mxu0
        %v3573 = vadd.f32 %v3380, %v3572
        %v3574 = vpop.f32.mrf.mxu0
        %v3575 = vadd.f32 %v3382, %v3574
        %v3576 = vpop.f32.mrf.mxu0
        %v3577 = vadd.f32 %v3384, %v3576
        %3578 = vmatprep.mubr.bf16.mxu0 %v2152
        %3579 = vmatmul.mubr.bf16.gmra.mxu0 %v2151
        %v3580 = vpop.f32.mrf.mxu0
        %v3581 = vadd.f32 %v3388, %v3580
        %v3582 = vpop.f32.mrf.mxu0
        %v3583 = vadd.f32 %v3390, %v3582
        %v3584 = vpop.f32.mrf.mxu0
        %v3585 = vadd.f32 %v3392, %v3584
        %v3586 = vpop.f32.mrf.mxu0
        %v3587 = vadd.f32 %v3394, %v3586
        %3588 = vmatprep.mubr.bf16.mxu0 %v2161
        %3589 = vmatmul.mubr.bf16.gmra.mxu0 %v2160
        %v3590 = vpop.f32.mrf.mxu0
        %v3591 = vadd.f32 %v3398, %v3590
        %v3592 = vpop.f32.mrf.mxu0
        %v3593 = vadd.f32 %v3400, %v3592
        %v3594 = vpop.f32.mrf.mxu0
        %v3595 = vadd.f32 %v3402, %v3594
        %v3596 = vpop.f32.mrf.mxu0
        %v3597 = vadd.f32 %v3404, %v3596
        %3598 = vmatprep.mubr.bf16.mxu0 %v2170
        %3599 = vmatmul.mubr.bf16.gmra.mxu0 %v2169
        %v3600 = vpop.f32.mrf.mxu0
        %v3601 = vadd.f32 %v3408, %v3600
        %v3602 = vpop.f32.mrf.mxu0
        %v3603 = vadd.f32 %v3410, %v3602
        %v3604 = vpop.f32.mrf.mxu0
        %v3605 = vadd.f32 %v3412, %v3604
        %v3606 = vpop.f32.mrf.mxu0
        %v3607 = vadd.f32 %v3414, %v3606
        %3608 = vmatprep.mubr.bf16.mxu0 %v2179
        %3609 = vmatmul.mubr.bf16.gmra.mxu0 %v2178
        %v3610 = vpop.f32.mrf.mxu0
        %v3611 = vadd.f32 %v3418, %v3610
        %v3612 = vpop.f32.mrf.mxu0
        %v3613 = vadd.f32 %v3420, %v3612
        %v3614 = vpop.f32.mrf.mxu0
        %v3615 = vadd.f32 %v3422, %v3614
        %v3616 = vpop.f32.mrf.mxu0
        %v3617 = vadd.f32 %v3424, %v3616
        %3618 = vmatprep.mubr.bf16.mxu0 %v2188
        %3619 = vmatmul.mubr.bf16.gmra.mxu0 %v2187
        %v3620 = vpop.f32.mrf.mxu0
        %v3621 = vadd.f32 %v3428, %v3620
        %v3622 = vpop.f32.mrf.mxu0
        %v3623 = vadd.f32 %v3430, %v3622
        %v3624 = vpop.f32.mrf.mxu0
        %v3625 = vadd.f32 %v3432, %v3624
        %v3626 = vpop.f32.mrf.mxu0
        %v3627 = vadd.f32 %v3434, %v3626
        %3628 = vmatprep.mubr.bf16.mxu0 %v2197
        %3629 = vmatmul.mubr.bf16.gmra.mxu0 %v2196
        %v3630 = vpop.f32.mrf.mxu0
        %v3631 = vadd.f32 %v3438, %v3630
        %v3632 = vpop.f32.mrf.mxu0
        %v3633 = vadd.f32 %v3440, %v3632
        %v3634 = vpop.f32.mrf.mxu0
        %v3635 = vadd.f32 %v3442, %v3634
        %v3636 = vpop.f32.mrf.mxu0
        %v3637 = vadd.f32 %v3444, %v3636
        %3638 = vmatprep.mubr.bf16.mxu0 %v2206
        %3639 = vmatmul.mubr.bf16.gmra.mxu0 %v2205
        %v3640 = vpop.f32.mrf.mxu0
        %v3641 = vadd.f32 %v3448, %v3640
        %v3642 = vpop.f32.mrf.mxu0
        %v3643 = vadd.f32 %v3450, %v3642
        %v3644 = vpop.f32.mrf.mxu0
        %v3645 = vadd.f32 %v3452, %v3644
        %v3646 = vpop.f32.mrf.mxu0
        %v3647 = vadd.f32 %v3454, %v3646
        %3648 = vmatprep.mubr.bf16.mxu0 %v2215
        %3649 = vmatmul.mubr.bf16.gmra.mxu0 %v2214
        %v3650 = vpop.f32.mrf.mxu0
        %v3651 = vadd.f32 %v3458, %v3650
        %v3652 = vpop.f32.mrf.mxu0
        %v3653 = vadd.f32 %v3460, %v3652
        %v3654 = vpop.f32.mrf.mxu0
        %v3655 = vadd.f32 %v3462, %v3654
        %v3656 = vpop.f32.mrf.mxu0
        %v3657 = vadd.f32 %v3464, %v3656
        %3658 = vmatprep.mubr.bf16.mxu0 %v2224
        %3659 = vmatmul.mubr.bf16.gmra.mxu0 %v2223
        %v3660 = vpop.f32.mrf.mxu0
        %v3661 = vadd.f32 %v3468, %v3660
        %v3662 = vpop.f32.mrf.mxu0
        %v3663 = vadd.f32 %v3470, %v3662
        %v3664 = vpop.f32.mrf.mxu0
        %v3665 = vadd.f32 %v3472, %v3664
        %v3666 = vpop.f32.mrf.mxu0
        %v3667 = vadd.f32 %v3474, %v3666
        %3668 = vmatprep.mubr.bf16.mxu0 %v2233
        %3669 = vmatmul.mubr.bf16.gmra.mxu0 %v2232
        %v3670 = vpop.f32.mrf.mxu0
        %v3671 = vadd.f32 %v3478, %v3670
        %v3672 = vpop.f32.mrf.mxu0
        %v3673 = vadd.f32 %v3480, %v3672
        %v3674 = vpop.f32.mrf.mxu0
        %v3675 = vadd.f32 %v3482, %v3674
        %v3676 = vpop.f32.mrf.mxu0
        %v3677 = vadd.f32 %v3484, %v3676
        %3678 = vmatprep.mubr.bf16.mxu0 %v2242
        %3679 = vmatmul.mubr.bf16.gmra.mxu0 %v2241
        %v3680 = vpop.f32.mrf.mxu0
        %v3681 = vadd.f32 %v3488, %v3680
        %v3682 = vpop.f32.mrf.mxu0
        %v3683 = vadd.f32 %v3490, %v3682
        %v3684 = vpop.f32.mrf.mxu0
        %v3685 = vadd.f32 %v3492, %v3684
        %v3686 = vpop.f32.mrf.mxu0
        %v3687 = vadd.f32 %v3494, %v3686
        %3688 = vdwg.mxu0
        %3689 = vmatprep.subr.bf16.mxu0 %v2933
        %3690 = vmatpush1.bf16.msra.mxu0 %v2932
        %3691 = vmatprep.subr.bf16.mxu0 %v2931
        %3692 = vmatpush1.bf16.msra.mxu0 %v2930
        %3693 = vmatprep.subr.bf16.mxu0 %v2929
        %3694 = vmatpush1.bf16.msra.mxu0 %v2928
        %3695 = vmatprep.subr.bf16.mxu0 %v2927
        %3696 = vmatpush1.bf16.msra.mxu0 %v2926
        %3697 = vmatprep.subr.bf16.mxu0 %v2925
        %3698 = vmatpush1.bf16.msra.mxu0 %v2924
        %3699 = vmatprep.subr.bf16.mxu0 %v2923
        %3700 = vmatpush1.bf16.msra.mxu0 %v2922
        %3701 = vmatprep.subr.bf16.mxu0 %v2921
        %3702 = vmatpush1.bf16.msra.mxu0 %v2920
        %3703 = vmatprep.subr.bf16.mxu0 %v2919
        %3704 = vmatpush1.bf16.msra.mxu0 %v2918
        %3705 = vmatprep.subr.bf16.mxu0 %v2949
        %3706 = vmatpush2.bf16.msra.mxu0 %v2948
        %3707 = vmatprep.subr.bf16.mxu0 %v2947
        %3708 = vmatpush2.bf16.msra.mxu0 %v2946
        %3709 = vmatprep.subr.bf16.mxu0 %v2945
        %3710 = vmatpush2.bf16.msra.mxu0 %v2944
        %3711 = vmatprep.subr.bf16.mxu0 %v2943
        %3712 = vmatpush2.bf16.msra.mxu0 %v2942
        %3713 = vmatprep.subr.bf16.mxu0 %v2941
        %3714 = vmatpush2.bf16.msra.mxu0 %v2940
        %3715 = vmatprep.subr.bf16.mxu0 %v2939
        %3716 = vmatpush2.bf16.msra.mxu0 %v2938
        %3717 = vmatprep.subr.bf16.mxu0 %v2937
        %3718 = vmatpush2.bf16.msra.mxu0 %v2936
        %3719 = vmatprep.subr.bf16.mxu0 %v2935
        %3720 = vmatpush2.bf16.msra.mxu0 %v2934
        %3721 = vmatprep.mubr.bf16.mxu0 %v2109
        %3722 = vmatmul.mubr.bf16.gmra.mxu0 %v2108
        %v3723 = vpop.f32.mrf.mxu0
        %v3724 = vadd.f32 %v3531, %v3723
        %v3725 = vpop.f32.mrf.mxu0
        %v3726 = vadd.f32 %v3533, %v3725
        %v3727 = vpop.f32.mrf.mxu0
        %v3728 = vadd.f32 %v3535, %v3727
        %v3729 = vpop.f32.mrf.mxu0
        %v3730 = vadd.f32 %v3537, %v3729
        %3731 = vmatprep.mubr.bf16.mxu0 %v2118
        %3732 = vmatmul.mubr.bf16.gmra.mxu0 %v2117
        %v3733 = vpop.f32.mrf.mxu0
        %v3734 = vadd.f32 %v3541, %v3733
        %v3735 = vpop.f32.mrf.mxu0
        %v3736 = vadd.f32 %v3543, %v3735
        %v3737 = vpop.f32.mrf.mxu0
        %v3738 = vadd.f32 %v3545, %v3737
        %v3739 = vpop.f32.mrf.mxu0
        %v3740 = vadd.f32 %v3547, %v3739
        %3741 = vmatprep.mubr.bf16.mxu0 %v2127
        %3742 = vmatmul.mubr.bf16.gmra.mxu0 %v2126
        %v3743 = vpop.f32.mrf.mxu0
        %v3744 = vadd.f32 %v3551, %v3743
        %v3745 = vpop.f32.mrf.mxu0
        %v3746 = vadd.f32 %v3553, %v3745
        %v3747 = vpop.f32.mrf.mxu0
        %v3748 = vadd.f32 %v3555, %v3747
        %v3749 = vpop.f32.mrf.mxu0
        %v3750 = vadd.f32 %v3557, %v3749
        %3751 = vmatprep.mubr.bf16.mxu0 %v2136
        %3752 = vmatmul.mubr.bf16.gmra.mxu0 %v2135
        %v3753 = vpop.f32.mrf.mxu0
        %v3754 = vadd.f32 %v3561, %v3753
        %v3755 = vpop.f32.mrf.mxu0
        %v3756 = vadd.f32 %v3563, %v3755
        %v3757 = vpop.f32.mrf.mxu0
        %v3758 = vadd.f32 %v3565, %v3757
        %v3759 = vpop.f32.mrf.mxu0
        %v3760 = vadd.f32 %v3567, %v3759
        %3761 = vmatprep.mubr.bf16.mxu0 %v2145
        %3762 = vmatmul.mubr.bf16.gmra.mxu0 %v2144
        %v3763 = vpop.f32.mrf.mxu0
        %v3764 = vadd.f32 %v3571, %v3763
        %v3765 = vpop.f32.mrf.mxu0
        %v3766 = vadd.f32 %v3573, %v3765
        %v3767 = vpop.f32.mrf.mxu0
        %v3768 = vadd.f32 %v3575, %v3767
        %v3769 = vpop.f32.mrf.mxu0
        %v3770 = vadd.f32 %v3577, %v3769
        %3771 = vmatprep.mubr.bf16.mxu0 %v2154
        %3772 = vmatmul.mubr.bf16.gmra.mxu0 %v2153
        %v3773 = vpop.f32.mrf.mxu0
        %v3774 = vadd.f32 %v3581, %v3773
        %v3775 = vpop.f32.mrf.mxu0
        %v3776 = vadd.f32 %v3583, %v3775
        %v3777 = vpop.f32.mrf.mxu0
        %v3778 = vadd.f32 %v3585, %v3777
        %v3779 = vpop.f32.mrf.mxu0
        %v3780 = vadd.f32 %v3587, %v3779
        %3781 = vmatprep.mubr.bf16.mxu0 %v2163
        %3782 = vmatmul.mubr.bf16.gmra.mxu0 %v2162
        %v3783 = vpop.f32.mrf.mxu0
        %v3784 = vadd.f32 %v3591, %v3783
        %v3785 = vpop.f32.mrf.mxu0
        %v3786 = vadd.f32 %v3593, %v3785
        %v3787 = vpop.f32.mrf.mxu0
        %v3788 = vadd.f32 %v3595, %v3787
        %v3789 = vpop.f32.mrf.mxu0
        %v3790 = vadd.f32 %v3597, %v3789
        %3791 = vmatprep.mubr.bf16.mxu0 %v2172
        %3792 = vmatmul.mubr.bf16.gmra.mxu0 %v2171
        %v3793 = vpop.f32.mrf.mxu0
        %v3794 = vadd.f32 %v3601, %v3793
        %v3795 = vpop.f32.mrf.mxu0
        %v3796 = vadd.f32 %v3603, %v3795
        %v3797 = vpop.f32.mrf.mxu0
        %v3798 = vadd.f32 %v3605, %v3797
        %v3799 = vpop.f32.mrf.mxu0
        %v3800 = vadd.f32 %v3607, %v3799
        %3801 = vmatprep.mubr.bf16.mxu0 %v2181
        %3802 = vmatmul.mubr.bf16.gmra.mxu0 %v2180
        %v3803 = vpop.f32.mrf.mxu0
        %v3804 = vadd.f32 %v3611, %v3803
        %v3805 = vpop.f32.mrf.mxu0
        %v3806 = vadd.f32 %v3613, %v3805
        %v3807 = vpop.f32.mrf.mxu0
        %v3808 = vadd.f32 %v3615, %v3807
        %v3809 = vpop.f32.mrf.mxu0
        %v3810 = vadd.f32 %v3617, %v3809
        %3811 = vmatprep.mubr.bf16.mxu0 %v2190
        %3812 = vmatmul.mubr.bf16.gmra.mxu0 %v2189
        %v3813 = vpop.f32.mrf.mxu0
        %v3814 = vadd.f32 %v3621, %v3813
        %v3815 = vpop.f32.mrf.mxu0
        %v3816 = vadd.f32 %v3623, %v3815
        %v3817 = vpop.f32.mrf.mxu0
        %v3818 = vadd.f32 %v3625, %v3817
        %v3819 = vpop.f32.mrf.mxu0
        %v3820 = vadd.f32 %v3627, %v3819
        %3821 = vmatprep.mubr.bf16.mxu0 %v2199
        %3822 = vmatmul.mubr.bf16.gmra.mxu0 %v2198
        %v3823 = vpop.f32.mrf.mxu0
        %v3824 = vadd.f32 %v3631, %v3823
        %v3825 = vpop.f32.mrf.mxu0
        %v3826 = vadd.f32 %v3633, %v3825
        %v3827 = vpop.f32.mrf.mxu0
        %v3828 = vadd.f32 %v3635, %v3827
        %v3829 = vpop.f32.mrf.mxu0
        %v3830 = vadd.f32 %v3637, %v3829
        %3831 = vmatprep.mubr.bf16.mxu0 %v2208
        %3832 = vmatmul.mubr.bf16.gmra.mxu0 %v2207
        %v3833 = vpop.f32.mrf.mxu0
        %v3834 = vadd.f32 %v3641, %v3833
        %v3835 = vpop.f32.mrf.mxu0
        %v3836 = vadd.f32 %v3643, %v3835
        %v3837 = vpop.f32.mrf.mxu0
        %v3838 = vadd.f32 %v3645, %v3837
        %v3839 = vpop.f32.mrf.mxu0
        %v3840 = vadd.f32 %v3647, %v3839
        %3841 = vmatprep.mubr.bf16.mxu0 %v2217
        %3842 = vmatmul.mubr.bf16.gmra.mxu0 %v2216
        %v3843 = vpop.f32.mrf.mxu0
        %v3844 = vadd.f32 %v3651, %v3843
        %v3845 = vpop.f32.mrf.mxu0
        %v3846 = vadd.f32 %v3653, %v3845
        %v3847 = vpop.f32.mrf.mxu0
        %v3848 = vadd.f32 %v3655, %v3847
        %v3849 = vpop.f32.mrf.mxu0
        %v3850 = vadd.f32 %v3657, %v3849
        %3851 = vmatprep.mubr.bf16.mxu0 %v2226
        %3852 = vmatmul.mubr.bf16.gmra.mxu0 %v2225
        %v3853 = vpop.f32.mrf.mxu0
        %v3854 = vadd.f32 %v3661, %v3853
        %v3855 = vpop.f32.mrf.mxu0
        %v3856 = vadd.f32 %v3663, %v3855
        %v3857 = vpop.f32.mrf.mxu0
        %v3858 = vadd.f32 %v3665, %v3857
        %v3859 = vpop.f32.mrf.mxu0
        %v3860 = vadd.f32 %v3667, %v3859
        %3861 = vmatprep.mubr.bf16.mxu0 %v2235
        %3862 = vmatmul.mubr.bf16.gmra.mxu0 %v2234
        %v3863 = vpop.f32.mrf.mxu0
        %v3864 = vadd.f32 %v3671, %v3863
        %v3865 = vpop.f32.mrf.mxu0
        %v3866 = vadd.f32 %v3673, %v3865
        %v3867 = vpop.f32.mrf.mxu0
        %v3868 = vadd.f32 %v3675, %v3867
        %v3869 = vpop.f32.mrf.mxu0
        %v3870 = vadd.f32 %v3677, %v3869
        %3871 = vmatprep.mubr.bf16.mxu0 %v2244
        %3872 = vmatmul.mubr.bf16.gmra.mxu0 %v2243
        %v3873 = vpop.f32.mrf.mxu0
        %v3874 = vadd.f32 %v3681, %v3873
        %v3875 = vpop.f32.mrf.mxu0
        %v3876 = vadd.f32 %v3683, %v3875
        %v3877 = vpop.f32.mrf.mxu0
        %v3878 = vadd.f32 %v3685, %v3877
        %v3879 = vpop.f32.mrf.mxu0
        %v3880 = vadd.f32 %v3687, %v3879
        %3881 = vdwg.mxu0
        %3882 = vmatprep.subr.bf16.mxu0 %v2965
        %3883 = vmatpush1.bf16.msra.mxu0 %v2964
        %3884 = vmatprep.subr.bf16.mxu0 %v2963
        %3885 = vmatpush1.bf16.msra.mxu0 %v2962
        %3886 = vmatprep.subr.bf16.mxu0 %v2961
        %3887 = vmatpush1.bf16.msra.mxu0 %v2960
        %3888 = vmatprep.subr.bf16.mxu0 %v2959
        %3889 = vmatpush1.bf16.msra.mxu0 %v2958
        %3890 = vmatprep.subr.bf16.mxu0 %v2957
        %3891 = vmatpush1.bf16.msra.mxu0 %v2956
        %3892 = vmatprep.subr.bf16.mxu0 %v2955
        %3893 = vmatpush1.bf16.msra.mxu0 %v2954
        %3894 = vmatprep.subr.bf16.mxu0 %v2953
        %3895 = vmatpush1.bf16.msra.mxu0 %v2952
        %3896 = vmatprep.subr.bf16.mxu0 %v2951
        %3897 = vmatpush1.bf16.msra.mxu0 %v2950
        %3898 = vmatprep.subr.bf16.mxu0 0
        %3899 = vmatpush2.bf16.msra.mxu0 0
        %3900 = vmatprep.subr.bf16.mxu0 0
        %3901 = vmatpush2.bf16.msra.mxu0 0
        %3902 = vmatprep.subr.bf16.mxu0 0
        %3903 = vmatpush2.bf16.msra.mxu0 0
        %3904 = vmatprep.subr.bf16.mxu0 0
        %3905 = vmatpush2.bf16.msra.mxu0 0
        %3906 = vmatprep.subr.bf16.mxu0 0
        %3907 = vmatpush2.bf16.msra.mxu0 0
        %3908 = vmatprep.subr.bf16.mxu0 0
        %3909 = vmatpush2.bf16.msra.mxu0 0
        %3910 = vmatprep.subr.bf16.mxu0 0
        %3911 = vmatpush2.bf16.msra.mxu0 0
        %3912 = vmatprep.subr.bf16.mxu0 0
        %3913 = vmatpush2.bf16.msra.mxu0 0
        %3914 = vmatprep.mubr.bf16.mxu0 0
        %3915 = vmatmul.mubr.bf16.gmra.mxu0 %v2110
        %v3916 = vpop.f32.mrf.mxu0
        %v3917 = vadd.f32 %v3724, %v3916
        %v3918 = vpop.f32.mrf.mxu0
        %v3919 = vadd.f32 %v3726, %v3918
        %v3920 = vpop.f32.mrf.mxu0
        %v3921 = vadd.f32 %v3728, %v3920
        %v3922 = vpop.f32.mrf.mxu0
        %v3923 = vadd.f32 %v3730, %v3922
        %3924 = vmatprep.mubr.bf16.mxu0 0
        %3925 = vmatmul.mubr.bf16.gmra.mxu0 %v2119
        %v3926 = vpop.f32.mrf.mxu0
        %v3927 = vadd.f32 %v3734, %v3926
        %v3928 = vpop.f32.mrf.mxu0
        %v3929 = vadd.f32 %v3736, %v3928
        %v3930 = vpop.f32.mrf.mxu0
        %v3931 = vadd.f32 %v3738, %v3930
        %v3932 = vpop.f32.mrf.mxu0
        %v3933 = vadd.f32 %v3740, %v3932
        %3934 = vmatprep.mubr.bf16.mxu0 0
        %3935 = vmatmul.mubr.bf16.gmra.mxu0 %v2128
        %v3936 = vpop.f32.mrf.mxu0
        %v3937 = vadd.f32 %v3744, %v3936
        %v3938 = vpop.f32.mrf.mxu0
        %v3939 = vadd.f32 %v3746, %v3938
        %v3940 = vpop.f32.mrf.mxu0
        %v3941 = vadd.f32 %v3748, %v3940
        %v3942 = vpop.f32.mrf.mxu0
        %v3943 = vadd.f32 %v3750, %v3942
        %3944 = vmatprep.mubr.bf16.mxu0 0
        %3945 = vmatmul.mubr.bf16.gmra.mxu0 %v2137
        %v3946 = vpop.f32.mrf.mxu0
        %v3947 = vadd.f32 %v3754, %v3946
        %v3948 = vpop.f32.mrf.mxu0
        %v3949 = vadd.f32 %v3756, %v3948
        %v3950 = vpop.f32.mrf.mxu0
        %v3951 = vadd.f32 %v3758, %v3950
        %v3952 = vpop.f32.mrf.mxu0
        %v3953 = vadd.f32 %v3760, %v3952
        %3954 = vmatprep.mubr.bf16.mxu0 0
        %3955 = vmatmul.mubr.bf16.gmra.mxu0 %v2146
        %v3956 = vpop.f32.mrf.mxu0
        %v3957 = vadd.f32 %v3764, %v3956
        %v3958 = vpop.f32.mrf.mxu0
        %v3959 = vadd.f32 %v3766, %v3958
        %v3960 = vpop.f32.mrf.mxu0
        %v3961 = vadd.f32 %v3768, %v3960
        %v3962 = vpop.f32.mrf.mxu0
        %v3963 = vadd.f32 %v3770, %v3962
        %3964 = vmatprep.mubr.bf16.mxu0 0
        %3965 = vmatmul.mubr.bf16.gmra.mxu0 %v2155
        %v3966 = vpop.f32.mrf.mxu0
        %v3967 = vadd.f32 %v3774, %v3966
        %v3968 = vpop.f32.mrf.mxu0
        %v3969 = vadd.f32 %v3776, %v3968
        %v3970 = vpop.f32.mrf.mxu0
        %v3971 = vadd.f32 %v3778, %v3970
        %v3972 = vpop.f32.mrf.mxu0
        %v3973 = vadd.f32 %v3780, %v3972
        %3974 = vmatprep.mubr.bf16.mxu0 0
        %3975 = vmatmul.mubr.bf16.gmra.mxu0 %v2164
        %v3976 = vpop.f32.mrf.mxu0
        %v3977 = vadd.f32 %v3784, %v3976
        %v3978 = vpop.f32.mrf.mxu0
        %v3979 = vadd.f32 %v3786, %v3978
        %v3980 = vpop.f32.mrf.mxu0
        %v3981 = vadd.f32 %v3788, %v3980
        %v3982 = vpop.f32.mrf.mxu0
        %v3983 = vadd.f32 %v3790, %v3982
        %3984 = vmatprep.mubr.bf16.mxu0 0
        %3985 = vmatmul.mubr.bf16.gmra.mxu0 %v2173
        %v3986 = vpop.f32.mrf.mxu0
        %v3987 = vadd.f32 %v3794, %v3986
        %v3988 = vpop.f32.mrf.mxu0
        %v3989 = vadd.f32 %v3796, %v3988
        %v3990 = vpop.f32.mrf.mxu0
        %v3991 = vadd.f32 %v3798, %v3990
        %v3992 = vpop.f32.mrf.mxu0
        %v3993 = vadd.f32 %v3800, %v3992
        %3994 = vmatprep.mubr.bf16.mxu0 0
        %3995 = vmatmul.mubr.bf16.gmra.mxu0 %v2182
        %v3996 = vpop.f32.mrf.mxu0
        %v3997 = vadd.f32 %v3804, %v3996
        %v3998 = vpop.f32.mrf.mxu0
        %v3999 = vadd.f32 %v3806, %v3998
        %v4000 = vpop.f32.mrf.mxu0
        %v4001 = vadd.f32 %v3808, %v4000
        %v4002 = vpop.f32.mrf.mxu0
        %v4003 = vadd.f32 %v3810, %v4002
        %4004 = vmatprep.mubr.bf16.mxu0 0
        %4005 = vmatmul.mubr.bf16.gmra.mxu0 %v2191
        %v4006 = vpop.f32.mrf.mxu0
        %v4007 = vadd.f32 %v3814, %v4006
        %v4008 = vpop.f32.mrf.mxu0
        %v4009 = vadd.f32 %v3816, %v4008
        %v4010 = vpop.f32.mrf.mxu0
        %v4011 = vadd.f32 %v3818, %v4010
        %v4012 = vpop.f32.mrf.mxu0
        %v4013 = vadd.f32 %v3820, %v4012
        %4014 = vmatprep.mubr.bf16.mxu0 0
        %4015 = vmatmul.mubr.bf16.gmra.mxu0 %v2200
        %v4016 = vpop.f32.mrf.mxu0
        %v4017 = vadd.f32 %v3824, %v4016
        %v4018 = vpop.f32.mrf.mxu0
        %v4019 = vadd.f32 %v3826, %v4018
        %v4020 = vpop.f32.mrf.mxu0
        %v4021 = vadd.f32 %v3828, %v4020
        %v4022 = vpop.f32.mrf.mxu0
        %v4023 = vadd.f32 %v3830, %v4022
        %4024 = vmatprep.mubr.bf16.mxu0 0
        %4025 = vmatmul.mubr.bf16.gmra.mxu0 %v2209
        %v4026 = vpop.f32.mrf.mxu0
        %v4027 = vadd.f32 %v3834, %v4026
        %v4028 = vpop.f32.mrf.mxu0
        %v4029 = vadd.f32 %v3836, %v4028
        %v4030 = vpop.f32.mrf.mxu0
        %v4031 = vadd.f32 %v3838, %v4030
        %v4032 = vpop.f32.mrf.mxu0
        %v4033 = vadd.f32 %v3840, %v4032
        %4034 = vmatprep.mubr.bf16.mxu0 0
        %4035 = vmatmul.mubr.bf16.gmra.mxu0 %v2218
        %v4036 = vpop.f32.mrf.mxu0
        %v4037 = vadd.f32 %v3844, %v4036
        %v4038 = vpop.f32.mrf.mxu0
        %v4039 = vadd.f32 %v3846, %v4038
        %v4040 = vpop.f32.mrf.mxu0
        %v4041 = vadd.f32 %v3848, %v4040
        %v4042 = vpop.f32.mrf.mxu0
        %v4043 = vadd.f32 %v3850, %v4042
        %4044 = vmatprep.mubr.bf16.mxu0 0
        %4045 = vmatmul.mubr.bf16.gmra.mxu0 %v2227
        %v4046 = vpop.f32.mrf.mxu0
        %v4047 = vadd.f32 %v3854, %v4046
        %v4048 = vpop.f32.mrf.mxu0
        %v4049 = vadd.f32 %v3856, %v4048
        %v4050 = vpop.f32.mrf.mxu0
        %v4051 = vadd.f32 %v3858, %v4050
        %v4052 = vpop.f32.mrf.mxu0
        %v4053 = vadd.f32 %v3860, %v4052
        %4054 = vmatprep.mubr.bf16.mxu0 0
        %4055 = vmatmul.mubr.bf16.gmra.mxu0 %v2236
        %v4056 = vpop.f32.mrf.mxu0
        %v4057 = vadd.f32 %v3864, %v4056
        %v4058 = vpop.f32.mrf.mxu0
        %v4059 = vadd.f32 %v3866, %v4058
        %v4060 = vpop.f32.mrf.mxu0
        %v4061 = vadd.f32 %v3868, %v4060
        %v4062 = vpop.f32.mrf.mxu0
        %v4063 = vadd.f32 %v3870, %v4062
        %4064 = vmatprep.mubr.bf16.mxu0 0
        %4065 = vmatmul.mubr.bf16.gmra.mxu0 %v2245
        %v4066 = vpop.f32.mrf.mxu0
        %v4067 = vadd.f32 %v3874, %v4066
        %v4068 = vpop.f32.mrf.mxu0
        %v4069 = vadd.f32 %v3876, %v4068
        %v4070 = vpop.f32.mrf.mxu0
        %v4071 = vadd.f32 %v3878, %v4070
        %v4072 = vpop.f32.mrf.mxu0
        %v4073 = vadd.f32 %v3880, %v4072
        %4074 = vdwg.mxu0
        %v4075 = vld [vmem:[%s4] sm:$0x3]
        %v4077 = vlaneseq
        %v4078 = vshrl.u32 %v4077, 7
        %v4079 = vsub.s32 0, %v4078
        %v4080 = vrot.slane %v4075, %v4079
        %v4081 = vlaneseq
        %v4082 = vshrl.u32 %v4081, 7
        %v4083 = vsub.s32 1, %v4082
        %v4084 = vrot.slane %v4075, %v4083
        %v4087 = vmul.f32 %v3917, %v4080
        %v4088 = vmul.f32 %v3919, %v4084
        %v4089 = vmul.f32 %v3921, %v4080
        %v4090 = vmul.f32 %v3923, %v4084
        %v4091 = vmul.f32 %v3927, %v4080
        %v4092 = vmul.f32 %v3929, %v4084
        %v4093 = vmul.f32 %v3931, %v4080
        %v4094 = vmul.f32 %v3933, %v4084
        %v4095 = vmul.f32 %v3937, %v4080
        %v4096 = vmul.f32 %v3939, %v4084
        %v4097 = vmul.f32 %v3941, %v4080
        %v4098 = vmul.f32 %v3943, %v4084
        %v4099 = vmul.f32 %v3947, %v4080
        %v4100 = vmul.f32 %v3949, %v4084
        %v4101 = vmul.f32 %v3951, %v4080
        %v4102 = vmul.f32 %v3953, %v4084
        %v4103 = vmul.f32 %v3957, %v4080
        %v4104 = vmul.f32 %v3959, %v4084
        %v4105 = vmul.f32 %v3961, %v4080
        %v4106 = vmul.f32 %v3963, %v4084
        %v4107 = vmul.f32 %v3967, %v4080
        %v4108 = vmul.f32 %v3969, %v4084
        %v4109 = vmul.f32 %v3971, %v4080
        %v4110 = vmul.f32 %v3973, %v4084
        %v4111 = vmul.f32 %v3977, %v4080
        %v4112 = vmul.f32 %v3979, %v4084
        %v4113 = vmul.f32 %v3981, %v4080
        %v4114 = vmul.f32 %v3983, %v4084
        %v4115 = vmul.f32 %v3987, %v4080
        %v4116 = vmul.f32 %v3989, %v4084
        %v4117 = vmul.f32 %v3991, %v4080
        %v4118 = vmul.f32 %v3993, %v4084
        %v4119 = vmul.f32 %v3997, %v4080
        %v4120 = vmul.f32 %v3999, %v4084
        %v4121 = vmul.f32 %v4001, %v4080
        %v4122 = vmul.f32 %v4003, %v4084
        %v4123 = vmul.f32 %v4007, %v4080
        %v4124 = vmul.f32 %v4009, %v4084
        %v4125 = vmul.f32 %v4011, %v4080
        %v4126 = vmul.f32 %v4013, %v4084
        %v4127 = vmul.f32 %v4017, %v4080
        %v4128 = vmul.f32 %v4019, %v4084
        %v4129 = vmul.f32 %v4021, %v4080
        %v4130 = vmul.f32 %v4023, %v4084
        %v4131 = vmul.f32 %v4027, %v4080
        %v4132 = vmul.f32 %v4029, %v4084
        %v4133 = vmul.f32 %v4031, %v4080
        %v4134 = vmul.f32 %v4033, %v4084
        %v4135 = vmul.f32 %v4037, %v4080
        %v4136 = vmul.f32 %v4039, %v4084
        %v4137 = vmul.f32 %v4041, %v4080
        %v4138 = vmul.f32 %v4043, %v4084
        %v4139 = vmul.f32 %v4047, %v4080
        %v4140 = vmul.f32 %v4049, %v4084
        %v4141 = vmul.f32 %v4051, %v4080
        %v4142 = vmul.f32 %v4053, %v4084
        %v4143 = vmul.f32 %v4057, %v4080
        %v4144 = vmul.f32 %v4059, %v4084
        %v4145 = vmul.f32 %v4061, %v4080
        %v4146 = vmul.f32 %v4063, %v4084
        %v4147 = vmul.f32 %v4067, %v4080
        %v4148 = vmul.f32 %v4069, %v4084
        %v4149 = vmul.f32 %v4071, %v4080
        %v4150 = vmul.f32 %v4073, %v4084
        %v4151 = vld [vmem:[%s5] sm:$0x3]
        %v4153 = vlaneseq
        %v4154 = vshrl.u32 %v4153, 7
        %v4155 = vsub.s32 0, %v4154
        %v4156 = vrot.slane %v4151, %v4155
        %v4157 = vlaneseq
        %v4158 = vshrl.u32 %v4157, 7
        %v4159 = vsub.s32 1, %v4158
        %v4160 = vrot.slane %v4151, %v4159
        %v4163 = vadd.f32 %v4087, %v4156
        %v4164 = vadd.f32 %v4088, %v4160
        %v4165 = vadd.f32 %v4089, %v4156
        %v4166 = vadd.f32 %v4090, %v4160
        %v4167 = vadd.f32 %v4091, %v4156
        %v4168 = vadd.f32 %v4092, %v4160
        %v4169 = vadd.f32 %v4093, %v4156
        %v4170 = vadd.f32 %v4094, %v4160
        %v4171 = vadd.f32 %v4095, %v4156
        %v4172 = vadd.f32 %v4096, %v4160
        %v4173 = vadd.f32 %v4097, %v4156
        %v4174 = vadd.f32 %v4098, %v4160
        %v4175 = vadd.f32 %v4099, %v4156
        %v4176 = vadd.f32 %v4100, %v4160
        %v4177 = vadd.f32 %v4101, %v4156
        %v4178 = vadd.f32 %v4102, %v4160
        %v4179 = vadd.f32 %v4103, %v4156
        %v4180 = vadd.f32 %v4104, %v4160
        %v4181 = vadd.f32 %v4105, %v4156
        %v4182 = vadd.f32 %v4106, %v4160
        %v4183 = vadd.f32 %v4107, %v4156
        %v4184 = vadd.f32 %v4108, %v4160
        %v4185 = vadd.f32 %v4109, %v4156
        %v4186 = vadd.f32 %v4110, %v4160
        %v4187 = vadd.f32 %v4111, %v4156
        %v4188 = vadd.f32 %v4112, %v4160
        %v4189 = vadd.f32 %v4113, %v4156
        %v4190 = vadd.f32 %v4114, %v4160
        %v4191 = vadd.f32 %v4115, %v4156
        %v4192 = vadd.f32 %v4116, %v4160
        %v4193 = vadd.f32 %v4117, %v4156
        %v4194 = vadd.f32 %v4118, %v4160
        %v4195 = vadd.f32 %v4119, %v4156
        %v4196 = vadd.f32 %v4120, %v4160
        %v4197 = vadd.f32 %v4121, %v4156
        %v4198 = vadd.f32 %v4122, %v4160
        %v4199 = vadd.f32 %v4123, %v4156
        %v4200 = vadd.f32 %v4124, %v4160
        %v4201 = vadd.f32 %v4125, %v4156
        %v4202 = vadd.f32 %v4126, %v4160
        %v4203 = vadd.f32 %v4127, %v4156
        %v4204 = vadd.f32 %v4128, %v4160
        %v4205 = vadd.f32 %v4129, %v4156
        %v4206 = vadd.f32 %v4130, %v4160
        %v4207 = vadd.f32 %v4131, %v4156
        %v4208 = vadd.f32 %v4132, %v4160
        %v4209 = vadd.f32 %v4133, %v4156
        %v4210 = vadd.f32 %v4134, %v4160
        %v4211 = vadd.f32 %v4135, %v4156
        %v4212 = vadd.f32 %v4136, %v4160
        %v4213 = vadd.f32 %v4137, %v4156
        %v4214 = vadd.f32 %v4138, %v4160
        %v4215 = vadd.f32 %v4139, %v4156
        %v4216 = vadd.f32 %v4140, %v4160
        %v4217 = vadd.f32 %v4141, %v4156
        %v4218 = vadd.f32 %v4142, %v4160
        %v4219 = vadd.f32 %v4143, %v4156
        %v4220 = vadd.f32 %v4144, %v4160
        %v4221 = vadd.f32 %v4145, %v4156
        %v4222 = vadd.f32 %v4146, %v4160
        %v4223 = vadd.f32 %v4147, %v4156
        %v4224 = vadd.f32 %v4148, %v4160
        %v4225 = vadd.f32 %v4149, %v4156
        %v4226 = vadd.f32 %v4150, %v4160
        %v4227 = vmax.f32 %v4163, 0.0
        %v4228 = vmax.f32 %v4164, 0.0
        %v4229 = vmax.f32 %v4165, 0.0
        %v4230 = vmax.f32 %v4166, 0.0
        %v4231 = vmax.f32 %v4167, 0.0
        %v4232 = vmax.f32 %v4168, 0.0
        %v4233 = vmax.f32 %v4169, 0.0
        %v4234 = vmax.f32 %v4170, 0.0
        %v4235 = vmax.f32 %v4171, 0.0
        %v4236 = vmax.f32 %v4172, 0.0
        %v4237 = vmax.f32 %v4173, 0.0
        %v4238 = vmax.f32 %v4174, 0.0
        %v4239 = vmax.f32 %v4175, 0.0
        %v4240 = vmax.f32 %v4176, 0.0
        %v4241 = vmax.f32 %v4177, 0.0
        %v4242 = vmax.f32 %v4178, 0.0
        %v4243 = vmax.f32 %v4179, 0.0
        %v4244 = vmax.f32 %v4180, 0.0
        %v4245 = vmax.f32 %v4181, 0.0
        %v4246 = vmax.f32 %v4182, 0.0
        %v4247 = vmax.f32 %v4183, 0.0
        %v4248 = vmax.f32 %v4184, 0.0
        %v4249 = vmax.f32 %v4185, 0.0
        %v4250 = vmax.f32 %v4186, 0.0
        %v4251 = vmax.f32 %v4187, 0.0
        %v4252 = vmax.f32 %v4188, 0.0
        %v4253 = vmax.f32 %v4189, 0.0
        %v4254 = vmax.f32 %v4190, 0.0
        %v4255 = vmax.f32 %v4191, 0.0
        %v4256 = vmax.f32 %v4192, 0.0
        %v4257 = vmax.f32 %v4193, 0.0
        %v4258 = vmax.f32 %v4194, 0.0
        %v4259 = vmax.f32 %v4195, 0.0
        %v4260 = vmax.f32 %v4196, 0.0
        %v4261 = vmax.f32 %v4197, 0.0
        %v4262 = vmax.f32 %v4198, 0.0
        %v4263 = vmax.f32 %v4199, 0.0
        %v4264 = vmax.f32 %v4200, 0.0
        %v4265 = vmax.f32 %v4201, 0.0
        %v4266 = vmax.f32 %v4202, 0.0
        %v4267 = vmax.f32 %v4203, 0.0
        %v4268 = vmax.f32 %v4204, 0.0
        %v4269 = vmax.f32 %v4205, 0.0
        %v4270 = vmax.f32 %v4206, 0.0
        %v4271 = vmax.f32 %v4207, 0.0
        %v4272 = vmax.f32 %v4208, 0.0
        %v4273 = vmax.f32 %v4209, 0.0
        %v4274 = vmax.f32 %v4210, 0.0
        %v4275 = vmax.f32 %v4211, 0.0
        %v4276 = vmax.f32 %v4212, 0.0
        %v4277 = vmax.f32 %v4213, 0.0
        %v4278 = vmax.f32 %v4214, 0.0
        %v4279 = vmax.f32 %v4215, 0.0
        %v4280 = vmax.f32 %v4216, 0.0
        %v4281 = vmax.f32 %v4217, 0.0
        %v4282 = vmax.f32 %v4218, 0.0
        %v4283 = vmax.f32 %v4219, 0.0
        %v4284 = vmax.f32 %v4220, 0.0
        %v4285 = vmax.f32 %v4221, 0.0
        %v4286 = vmax.f32 %v4222, 0.0
        %v4287 = vmax.f32 %v4223, 0.0
        %v4288 = vmax.f32 %v4224, 0.0
        %v4289 = vmax.f32 %v4225, 0.0
        %v4290 = vmax.f32 %v4226, 0.0
        %4291 = vst [vmem:[%s488 + $0x1] sm:$0xff] %v4227
        %4292 = vst [vmem:[%s488 + $0x9] sm:$0xff] %v4229
        %4293 = vst [vmem:[%s488 + $0x19] sm:$0xff] %v4231
        %4294 = vst [vmem:[%s488 + $0x21] sm:$0xff] %v4233
        %4295 = vst [vmem:[%s488 + $0x31] sm:$0xff] %v4235
        %4296 = vst [vmem:[%s488 + $0x39] sm:$0xff] %v4237
        %4297 = vst [vmem:[%s488 + $0x49] sm:$0xff] %v4239
        %4298 = vst [vmem:[%s488 + $0x51] sm:$0xff] %v4241
        %4299 = vst [vmem:[%s488 + $0x61] sm:$0xff] %v4243
        %4300 = vst [vmem:[%s488 + $0x69] sm:$0xff] %v4245
        %4301 = vst [vmem:[%s488 + $0x79] sm:$0xff] %v4247
        %4302 = vst [vmem:[%s488 + $0x81] sm:$0xff] %v4249
        %4303 = vst [vmem:[%s488 + $0x91] sm:$0xff] %v4251
        %4304 = vst [vmem:[%s488 + $0x99] sm:$0xff] %v4253
        %4305 = vst [vmem:[%s488 + $0xa9] sm:$0xff] %v4255
        %4306 = vst [vmem:[%s488 + $0xb1] sm:$0xff] %v4257
        %4307 = vst [vmem:[%s488 + $0xc1] sm:$0xff] %v4259
        %4308 = vst [vmem:[%s488 + $0xc9] sm:$0xff] %v4261
        %4309 = vst [vmem:[%s488 + $0xd9] sm:$0xff] %v4263
        %4310 = vst [vmem:[%s488 + $0xe1] sm:$0xff] %v4265
        %4311 = vst [vmem:[%s488 + $0xf1] sm:$0xff] %v4267
        %4312 = vst [vmem:[%s488 + $0xf9] sm:$0xff] %v4269
        %4313 = vst [vmem:[%s488 + $0x109] sm:$0xff] %v4271
        %4314 = vst [vmem:[%s488 + $0x111] sm:$0xff] %v4273
        %4315 = vst [vmem:[%s488 + $0x121] sm:$0xff] %v4275
        %4316 = vst [vmem:[%s488 + $0x129] sm:$0xff] %v4277
        %4317 = vst [vmem:[%s488 + $0x139] sm:$0xff] %v4279
        %4318 = vst [vmem:[%s488 + $0x141] sm:$0xff] %v4281
        %4319 = vst [vmem:[%s488 + $0x151] sm:$0xff] %v4283
        %4320 = vst [vmem:[%s488 + $0x159] sm:$0xff] %v4285
        %4321 = vst [vmem:[%s488 + $0x169] sm:$0xff] %v4287
        %4322 = vst [vmem:[%s488 + $0x171] sm:$0xff] %v4289
        %s4323 = scalar_lea.vmem [#allocation2], 456
        %4324 = vst [vmem:[%s4323 + $0x1] sm:$0xff] %v4228
        %4325 = vst [vmem:[%s4323 + $0x9] sm:$0xff] %v4230
        %4326 = vst [vmem:[%s4323 + $0x19] sm:$0xff] %v4232
        %4327 = vst [vmem:[%s4323 + $0x21] sm:$0xff] %v4234
        %4328 = vst [vmem:[%s4323 + $0x31] sm:$0xff] %v4236
        %4329 = vst [vmem:[%s4323 + $0x39] sm:$0xff] %v4238
        %4330 = vst [vmem:[%s4323 + $0x49] sm:$0xff] %v4240
        %4331 = vst [vmem:[%s4323 + $0x51] sm:$0xff] %v4242
        %4332 = vst [vmem:[%s4323 + $0x61] sm:$0xff] %v4244
        %4333 = vst [vmem:[%s4323 + $0x69] sm:$0xff] %v4246
        %4334 = vst [vmem:[%s4323 + $0x79] sm:$0xff] %v4248
        %4335 = vst [vmem:[%s4323 + $0x81] sm:$0xff] %v4250
        %4336 = vst [vmem:[%s4323 + $0x91] sm:$0xff] %v4252
        %4337 = vst [vmem:[%s4323 + $0x99] sm:$0xff] %v4254
        %4338 = vst [vmem:[%s4323 + $0xa9] sm:$0xff] %v4256
        %4339 = vst [vmem:[%s4323 + $0xb1] sm:$0xff] %v4258
        %4340 = vst [vmem:[%s4323 + $0xc1] sm:$0xff] %v4260
        %4341 = vst [vmem:[%s4323 + $0xc9] sm:$0xff] %v4262
        %4342 = vst [vmem:[%s4323 + $0xd9] sm:$0xff] %v4264
        %4343 = vst [vmem:[%s4323 + $0xe1] sm:$0xff] %v4266
        %4344 = vst [vmem:[%s4323 + $0xf1] sm:$0xff] %v4268
        %4345 = vst [vmem:[%s4323 + $0xf9] sm:$0xff] %v4270
        %4346 = vst [vmem:[%s4323 + $0x109] sm:$0xff] %v4272
        %4347 = vst [vmem:[%s4323 + $0x111] sm:$0xff] %v4274
        %4348 = vst [vmem:[%s4323 + $0x121] sm:$0xff] %v4276
        %4349 = vst [vmem:[%s4323 + $0x129] sm:$0xff] %v4278
        %4350 = vst [vmem:[%s4323 + $0x139] sm:$0xff] %v4280
        %4351 = vst [vmem:[%s4323 + $0x141] sm:$0xff] %v4282
        %4352 = vst [vmem:[%s4323 + $0x151] sm:$0xff] %v4284
        %4353 = vst [vmem:[%s4323 + $0x159] sm:$0xff] %v4286
        %4354 = vst [vmem:[%s4323 + $0x169] sm:$0xff] %v4288
        %4355 = vst [vmem:[%s4323 + $0x171] sm:$0xff] %v4290
        %v4356 = vld [vmem:[#allocation2] sm:$0xff]
        %v4357 = vld [vmem:[#allocation2 + $0x8] sm:$0xff]
        %v4358 = vld [vmem:[#allocation2 + $0x18] sm:$0xff]
        %v4359 = vld [vmem:[#allocation2 + $0x20] sm:$0xff]
        %v4360 = vld [vmem:[#allocation2 + $0x30] sm:$0xff]
        %v4361 = vld [vmem:[#allocation2 + $0x38] sm:$0xff]
        %v4362 = vld [vmem:[#allocation2 + $0x48] sm:$0xff]
        %v4363 = vld [vmem:[#allocation2 + $0x50] sm:$0xff]
        %v4364 = vld [vmem:[#allocation2 + $0x60] sm:$0xff]
        %v4365 = vld [vmem:[#allocation2 + $0x68] sm:$0xff]
        %v4366 = vld [vmem:[#allocation2 + $0x78] sm:$0xff]
        %v4367 = vld [vmem:[#allocation2 + $0x80] sm:$0xff]
        %v4368 = vld [vmem:[#allocation2 + $0x90] sm:$0xff]
        %v4369 = vld [vmem:[#allocation2 + $0x98] sm:$0xff]
        %v4370 = vld [vmem:[#allocation2 + $0xa8] sm:$0xff]
        %v4371 = vld [vmem:[#allocation2 + $0xb0] sm:$0xff]
        %v4372 = vld [vmem:[#allocation2 + $0xc0] sm:$0xff]
        %v4373 = vld [vmem:[#allocation2 + $0xc8] sm:$0xff]
        %v4374 = vld [vmem:[#allocation2 + $0xd8] sm:$0xff]
        %v4375 = vld [vmem:[#allocation2 + $0xe0] sm:$0xff]
        %v4376 = vld [vmem:[#allocation2 + $0xf0] sm:$0xff]
        %v4377 = vld [vmem:[#allocation2 + $0xf8] sm:$0xff]
        %v4378 = vld [vmem:[#allocation2 + $0x108] sm:$0xff]
        %v4379 = vld [vmem:[#allocation2 + $0x110] sm:$0xff]
        %v4380 = vld [vmem:[#allocation2 + $0x120] sm:$0xff]
        %v4381 = vld [vmem:[#allocation2 + $0x128] sm:$0xff]
        %v4382 = vld [vmem:[#allocation2 + $0x138] sm:$0xff]
        %v4383 = vld [vmem:[#allocation2 + $0x140] sm:$0xff]
        %v4384 = vld [vmem:[#allocation2 + $0x150] sm:$0xff]
        %v4385 = vld [vmem:[#allocation2 + $0x158] sm:$0xff]
        %v4386 = vld [vmem:[#allocation2 + $0x168] sm:$0xff]
        %v4387 = vld [vmem:[#allocation2 + $0x170] sm:$0xff]
        %v4388 = vld [vmem:[#allocation2 + $0x180] sm:$0xff]
        %v4389 = vld [vmem:[#allocation2 + $0x188] sm:$0xff]
        %v4390 = vld [vmem:[#allocation2 + $0x198] sm:$0xff]
        %v4391 = vld [vmem:[#allocation2 + $0x1a0] sm:$0xff]
        %v4392 = vpack.c.bf16 %v4357, %v4356
        %v4393 = vpack.c.bf16 %v4359, %v4358
        %v4394 = vpack.c.bf16 %v4361, %v4360
        %v4395 = vpack.c.bf16 %v4363, %v4362
        %v4396 = vpack.c.bf16 %v4365, %v4364
        %v4397 = vpack.c.bf16 %v4367, %v4366
        %v4398 = vpack.c.bf16 %v4369, %v4368
        %v4399 = vpack.c.bf16 %v4371, %v4370
        %v4400 = vpack.c.bf16 %v4373, %v4372
        %v4401 = vpack.c.bf16 %v4375, %v4374
        %v4402 = vpack.c.bf16 %v4377, %v4376
        %v4403 = vpack.c.bf16 %v4379, %v4378
        %v4404 = vpack.c.bf16 %v4381, %v4380
        %v4405 = vpack.c.bf16 %v4383, %v4382
        %v4406 = vpack.c.bf16 %v4385, %v4384
        %v4407 = vpack.c.bf16 %v4387, %v4386
        %v4408 = vpack.c.bf16 %v4389, %v4388
        %v4409 = vpack.c.bf16 %v4391, %v4390
        %v4426 = vunpack.c.l.b16 %v4392
        %v4427 = vunpack.c.h.b16 %v4392
        %v4428 = vunpack.c.l.b16 %v4393
        %v4429 = vunpack.c.h.b16 %v4393
        %v4430 = vunpack.c.l.b16 %v4394
        %v4431 = vunpack.c.h.b16 %v4394
        %v4432 = vunpack.c.l.b16 %v4395
        %v4433 = vunpack.c.h.b16 %v4395
        %v4434 = vunpack.c.l.b16 %v4396
        %v4435 = vunpack.c.h.b16 %v4396
        %v4436 = vunpack.c.l.b16 %v4397
        %v4437 = vunpack.c.h.b16 %v4397
        %v4438 = vunpack.c.l.b16 %v4398
        %v4439 = vunpack.c.h.b16 %v4398
        %v4440 = vunpack.c.l.b16 %v4399
        %v4441 = vunpack.c.h.b16 %v4399
        %v4442 = vunpack.c.l.b16 %v4400
        %v4443 = vunpack.c.h.b16 %v4400
        %v4444 = vunpack.c.l.b16 %v4401
        %v4445 = vunpack.c.h.b16 %v4401
        %v4446 = vunpack.c.l.b16 %v4402
        %v4447 = vunpack.c.h.b16 %v4402
        %v4448 = vunpack.c.l.b16 %v4403
        %v4449 = vunpack.c.h.b16 %v4403
        %v4450 = vunpack.c.l.b16 %v4404
        %v4451 = vunpack.c.h.b16 %v4404
        %v4452 = vunpack.c.l.b16 %v4405
        %v4453 = vunpack.c.h.b16 %v4405
        %v4454 = vunpack.c.l.b16 %v4406
        %v4455 = vunpack.c.h.b16 %v4406
        %v4456 = vunpack.c.l.b16 %v4407
        %v4457 = vunpack.c.h.b16 %v4407
        %v4458 = vpack.c.b16 %v4426, %v4426
        %v4459 = vpack.c.b16 %v4427, %v4427
        %v4460 = vpack.c.b16 %v4428, %v4428
        %v4461 = vpack.c.b16 %v4429, %v4429
        %v4462 = vpack.c.b16 %v4430, %v4430
        %v4463 = vpack.c.b16 %v4431, %v4431
        %v4464 = vpack.c.b16 %v4432, %v4432
        %v4465 = vpack.c.b16 %v4433, %v4433
        %v4466 = vpack.c.b16 %v4434, %v4434
        %v4467 = vpack.c.b16 %v4435, %v4435
        %v4468 = vpack.c.b16 %v4436, %v4436
        %v4469 = vpack.c.b16 %v4437, %v4437
        %v4470 = vpack.c.b16 %v4438, %v4438
        %v4471 = vpack.c.b16 %v4439, %v4439
        %v4472 = vpack.c.b16 %v4440, %v4440
        %v4473 = vpack.c.b16 %v4441, %v4441
        %v4474 = vpack.c.b16 %v4442, %v4442
        %v4475 = vpack.c.b16 %v4443, %v4443
        %v4476 = vpack.c.b16 %v4444, %v4444
        %v4477 = vpack.c.b16 %v4445, %v4445
        %v4478 = vpack.c.b16 %v4446, %v4446
        %v4479 = vpack.c.b16 %v4447, %v4447
        %v4480 = vpack.c.b16 %v4448, %v4448
        %v4481 = vpack.c.b16 %v4449, %v4449
        %v4482 = vpack.c.b16 %v4450, %v4450
        %v4483 = vpack.c.b16 %v4451, %v4451
        %v4484 = vpack.c.b16 %v4452, %v4452
        %v4485 = vpack.c.b16 %v4453, %v4453
        %v4486 = vpack.c.b16 %v4454, %v4454
        %v4487 = vpack.c.b16 %v4455, %v4455
        %v4488 = vpack.c.b16 %v4456, %v4456
        %v4489 = vpack.c.b16 %v4457, %v4457
        %4522 = vst [vmem:[#allocation3] sm:$0xf] %v4458
        %4523 = vst [vmem:[#allocation3 + $0x24] sm:$0xf] %v4459
        %4524 = vst [vmem:[#allocation3 + $0x48] sm:$0xf] %v4460
        %4525 = vst [vmem:[#allocation3 + $0x6c] sm:$0xf] %v4461
        %4526 = vst [vmem:[#allocation3 + $0x90] sm:$0xf] %v4462
        %4527 = vst [vmem:[#allocation3 + $0xb4] sm:$0xf] %v4463
        %4528 = vst [vmem:[#allocation3 + $0xd8] sm:$0xf] %v4464
        %4529 = vst [vmem:[#allocation3 + $0xfc] sm:$0xf] %v4465
        %4530 = vst [vmem:[#allocation3 + $0x120] sm:$0xf] %v4466
        %4531 = vst [vmem:[#allocation3 + $0x144] sm:$0xf] %v4467
        %4532 = vst [vmem:[#allocation3 + $0x168] sm:$0xf] %v4468
        %4533 = vst [vmem:[#allocation3 + $0x18c] sm:$0xf] %v4469
        %4534 = vst [vmem:[#allocation3 + $0x1b0] sm:$0xf] %v4470
        %4535 = vst [vmem:[#allocation3 + $0x1d4] sm:$0xf] %v4471
        %4536 = vst [vmem:[#allocation3 + $0x1f8] sm:$0xf] %v4472
        %4537 = vst [vmem:[#allocation3 + $0x21c] sm:$0xf] %v4473
        %4538 = vst [vmem:[#allocation3 + $0x240] sm:$0xf] %v4474
        %4539 = vst [vmem:[#allocation3 + $0x264] sm:$0xf] %v4475
        %4540 = vst [vmem:[#allocation3 + $0x288] sm:$0xf] %v4476
        %4541 = vst [vmem:[#allocation3 + $0x2ac] sm:$0xf] %v4477
        %4542 = vst [vmem:[#allocation3 + $0x2d0] sm:$0xf] %v4478
        %4543 = vst [vmem:[#allocation3 + $0x2f4] sm:$0xf] %v4479
        %4544 = vst [vmem:[#allocation3 + $0x318] sm:$0xf] %v4480
        %4545 = vst [vmem:[#allocation3 + $0x33c] sm:$0xf] %v4481
        %4546 = vst [vmem:[#allocation3 + $0x360] sm:$0xf] %v4482
        %4547 = vst [vmem:[#allocation3 + $0x384] sm:$0xf] %v4483
        %4548 = vst [vmem:[#allocation3 + $0x3a8] sm:$0xf] %v4484
        %4549 = vst [vmem:[#allocation3 + $0x3cc] sm:$0xf] %v4485
        %4550 = vst [vmem:[#allocation3 + $0x3f0] sm:$0xf] %v4486
        %4551 = vst [vmem:[#allocation3 + $0x414] sm:$0xf] %v4487
        %4552 = vst [vmem:[#allocation3 + $0x438] sm:$0xf] %v4488
        %4553 = vst [vmem:[#allocation3 + $0x45c] sm:$0xf] %v4489
        %v4555 = vunpack.c.l.b16 %v4408
        %v4556 = vunpack.c.h.b16 %v4408
        %v4557 = vpack.c.b16 %v4555, %v4555
        %v4558 = vpack.c.b16 %v4556, %v4556
        %4561 = vst [vmem:[#allocation3 + $0xc] sm:$0xf] %v4460
        %4562 = vst [vmem:[#allocation3 + $0x30] sm:$0xf] %v4461
        %4563 = vst [vmem:[#allocation3 + $0x54] sm:$0xf] %v4462
        %4564 = vst [vmem:[#allocation3 + $0x78] sm:$0xf] %v4463
        %4565 = vst [vmem:[#allocation3 + $0x9c] sm:$0xf] %v4464
        %4566 = vst [vmem:[#allocation3 + $0xc0] sm:$0xf] %v4465
        %4567 = vst [vmem:[#allocation3 + $0xe4] sm:$0xf] %v4466
        %4568 = vst [vmem:[#allocation3 + $0x108] sm:$0xf] %v4467
        %4569 = vst [vmem:[#allocation3 + $0x12c] sm:$0xf] %v4468
        %4570 = vst [vmem:[#allocation3 + $0x150] sm:$0xf] %v4469
        %4571 = vst [vmem:[#allocation3 + $0x174] sm:$0xf] %v4470
        %4572 = vst [vmem:[#allocation3 + $0x198] sm:$0xf] %v4471
        %4573 = vst [vmem:[#allocation3 + $0x1bc] sm:$0xf] %v4472
        %4574 = vst [vmem:[#allocation3 + $0x1e0] sm:$0xf] %v4473
        %4575 = vst [vmem:[#allocation3 + $0x204] sm:$0xf] %v4474
        %4576 = vst [vmem:[#allocation3 + $0x228] sm:$0xf] %v4475
        %4577 = vst [vmem:[#allocation3 + $0x24c] sm:$0xf] %v4476
        %4578 = vst [vmem:[#allocation3 + $0x270] sm:$0xf] %v4477
        %4579 = vst [vmem:[#allocation3 + $0x294] sm:$0xf] %v4478
        %4580 = vst [vmem:[#allocation3 + $0x2b8] sm:$0xf] %v4479
        %4581 = vst [vmem:[#allocation3 + $0x2dc] sm:$0xf] %v4480
        %4582 = vst [vmem:[#allocation3 + $0x300] sm:$0xf] %v4481
        %4583 = vst [vmem:[#allocation3 + $0x324] sm:$0xf] %v4482
        %4584 = vst [vmem:[#allocation3 + $0x348] sm:$0xf] %v4483
        %4585 = vst [vmem:[#allocation3 + $0x36c] sm:$0xf] %v4484
        %4586 = vst [vmem:[#allocation3 + $0x390] sm:$0xf] %v4485
        %4587 = vst [vmem:[#allocation3 + $0x3b4] sm:$0xf] %v4486
        %4588 = vst [vmem:[#allocation3 + $0x3d8] sm:$0xf] %v4487
        %4589 = vst [vmem:[#allocation3 + $0x3fc] sm:$0xf] %v4488
        %4590 = vst [vmem:[#allocation3 + $0x420] sm:$0xf] %v4489
        %4591 = vst [vmem:[#allocation3 + $0x444] sm:$0xf] %v4557
        %4592 = vst [vmem:[#allocation3 + $0x468] sm:$0xf] %v4558
        %v4594 = vunpack.c.l.b16 %v4409
        %v4595 = vunpack.c.h.b16 %v4409
        %v4596 = vpack.c.b16 %v4594, %v4594
        %v4597 = vpack.c.b16 %v4595, %v4595
        %4600 = vst [vmem:[#allocation3 + $0x18] sm:$0xf] %v4462
        %4601 = vst [vmem:[#allocation3 + $0x3c] sm:$0xf] %v4463
        %4602 = vst [vmem:[#allocation3 + $0x60] sm:$0xf] %v4464
        %4603 = vst [vmem:[#allocation3 + $0x84] sm:$0xf] %v4465
        %4604 = vst [vmem:[#allocation3 + $0xa8] sm:$0xf] %v4466
        %4605 = vst [vmem:[#allocation3 + $0xcc] sm:$0xf] %v4467
        %4606 = vst [vmem:[#allocation3 + $0xf0] sm:$0xf] %v4468
        %4607 = vst [vmem:[#allocation3 + $0x114] sm:$0xf] %v4469
        %4608 = vst [vmem:[#allocation3 + $0x138] sm:$0xf] %v4470
        %4609 = vst [vmem:[#allocation3 + $0x15c] sm:$0xf] %v4471
        %4610 = vst [vmem:[#allocation3 + $0x180] sm:$0xf] %v4472
        %4611 = vst [vmem:[#allocation3 + $0x1a4] sm:$0xf] %v4473
        %4612 = vst [vmem:[#allocation3 + $0x1c8] sm:$0xf] %v4474
        %4613 = vst [vmem:[#allocation3 + $0x1ec] sm:$0xf] %v4475
        %4614 = vst [vmem:[#allocation3 + $0x210] sm:$0xf] %v4476
        %4615 = vst [vmem:[#allocation3 + $0x234] sm:$0xf] %v4477
        %4616 = vst [vmem:[#allocation3 + $0x258] sm:$0xf] %v4478
        %4617 = vst [vmem:[#allocation3 + $0x27c] sm:$0xf] %v4479
        %4618 = vst [vmem:[#allocation3 + $0x2a0] sm:$0xf] %v4480
        %4619 = vst [vmem:[#allocation3 + $0x2c4] sm:$0xf] %v4481
        %4620 = vst [vmem:[#allocation3 + $0x2e8] sm:$0xf] %v4482
        %4621 = vst [vmem:[#allocation3 + $0x30c] sm:$0xf] %v4483
        %4622 = vst [vmem:[#allocation3 + $0x330] sm:$0xf] %v4484
        %4623 = vst [vmem:[#allocation3 + $0x354] sm:$0xf] %v4485
        %4624 = vst [vmem:[#allocation3 + $0x378] sm:$0xf] %v4486
        %4625 = vst [vmem:[#allocation3 + $0x39c] sm:$0xf] %v4487
        %4626 = vst [vmem:[#allocation3 + $0x3c0] sm:$0xf] %v4488
        %4627 = vst [vmem:[#allocation3 + $0x3e4] sm:$0xf] %v4489
        %4628 = vst [vmem:[#allocation3 + $0x408] sm:$0xf] %v4557
        %4629 = vst [vmem:[#allocation3 + $0x42c] sm:$0xf] %v4558
        %4630 = vst [vmem:[#allocation3 + $0x450] sm:$0xf] %v4596
        %4631 = vst [vmem:[#allocation3 + $0x474] sm:$0xf] %v4597
        %v4632 = vld [vmem:[#allocation2 + $0x1] sm:$0xff]
        %v4633 = vld [vmem:[#allocation2 + $0x9] sm:$0xff]
        %v4634 = vld [vmem:[#allocation2 + $0x19] sm:$0xff]
        %v4635 = vld [vmem:[#allocation2 + $0x21] sm:$0xff]
        %v4636 = vld [vmem:[#allocation2 + $0x31] sm:$0xff]
        %v4637 = vld [vmem:[#allocation2 + $0x39] sm:$0xff]
        %v4638 = vld [vmem:[#allocation2 + $0x49] sm:$0xff]
        %v4639 = vld [vmem:[#allocation2 + $0x51] sm:$0xff]
        %v4640 = vld [vmem:[#allocation2 + $0x61] sm:$0xff]
        %v4641 = vld [vmem:[#allocation2 + $0x69] sm:$0xff]
        %v4642 = vld [vmem:[#allocation2 + $0x79] sm:$0xff]
        %v4643 = vld [vmem:[#allocation2 + $0x81] sm:$0xff]
        %v4644 = vld [vmem:[#allocation2 + $0x91] sm:$0xff]
        %v4645 = vld [vmem:[#allocation2 + $0x99] sm:$0xff]
        %v4646 = vld [vmem:[#allocation2 + $0xa9] sm:$0xff]
        %v4647 = vld [vmem:[#allocation2 + $0xb1] sm:$0xff]
        %v4648 = vld [vmem:[#allocation2 + $0xc1] sm:$0xff]
        %v4649 = vld [vmem:[#allocation2 + $0xc9] sm:$0xff]
        %v4650 = vld [vmem:[#allocation2 + $0xd9] sm:$0xff]
        %v4651 = vld [vmem:[#allocation2 + $0xe1] sm:$0xff]
        %v4652 = vld [vmem:[#allocation2 + $0xf1] sm:$0xff]
        %v4653 = vld [vmem:[#allocation2 + $0xf9] sm:$0xff]
        %v4654 = vld [vmem:[#allocation2 + $0x109] sm:$0xff]
        %v4655 = vld [vmem:[#allocation2 + $0x111] sm:$0xff]
        %v4656 = vld [vmem:[#allocation2 + $0x121] sm:$0xff]
        %v4657 = vld [vmem:[#allocation2 + $0x129] sm:$0xff]
        %v4658 = vld [vmem:[#allocation2 + $0x139] sm:$0xff]
        %v4659 = vld [vmem:[#allocation2 + $0x141] sm:$0xff]
        %v4660 = vld [vmem:[#allocation2 + $0x151] sm:$0xff]
        %v4661 = vld [vmem:[#allocation2 + $0x159] sm:$0xff]
        %v4662 = vld [vmem:[#allocation2 + $0x169] sm:$0xff]
        %v4663 = vld [vmem:[#allocation2 + $0x171] sm:$0xff]
        %v4664 = vld [vmem:[#allocation2 + $0x181] sm:$0xff]
        %v4665 = vld [vmem:[#allocation2 + $0x189] sm:$0xff]
        %v4666 = vld [vmem:[#allocation2 + $0x199] sm:$0xff]
        %v4667 = vld [vmem:[#allocation2 + $0x1a1] sm:$0xff]
        %v4668 = vpack.c.bf16 %v4633, %v4632
        %v4669 = vpack.c.bf16 %v4635, %v4634
        %v4670 = vpack.c.bf16 %v4637, %v4636
        %v4671 = vpack.c.bf16 %v4639, %v4638
        %v4672 = vpack.c.bf16 %v4641, %v4640
        %v4673 = vpack.c.bf16 %v4643, %v4642
        %v4674 = vpack.c.bf16 %v4645, %v4644
        %v4675 = vpack.c.bf16 %v4647, %v4646
        %v4676 = vpack.c.bf16 %v4649, %v4648
        %v4677 = vpack.c.bf16 %v4651, %v4650
        %v4678 = vpack.c.bf16 %v4653, %v4652
        %v4679 = vpack.c.bf16 %v4655, %v4654
        %v4680 = vpack.c.bf16 %v4657, %v4656
        %v4681 = vpack.c.bf16 %v4659, %v4658
        %v4682 = vpack.c.bf16 %v4661, %v4660
        %v4683 = vpack.c.bf16 %v4663, %v4662
        %v4684 = vpack.c.bf16 %v4665, %v4664
        %v4685 = vpack.c.bf16 %v4667, %v4666
        %v4702 = vunpack.c.l.b16 %v4668
        %v4703 = vunpack.c.h.b16 %v4668
        %v4704 = vunpack.c.l.b16 %v4669
        %v4705 = vunpack.c.h.b16 %v4669
        %v4706 = vunpack.c.l.b16 %v4670
        %v4707 = vunpack.c.h.b16 %v4670
        %v4708 = vunpack.c.l.b16 %v4671
        %v4709 = vunpack.c.h.b16 %v4671
        %v4710 = vunpack.c.l.b16 %v4672
        %v4711 = vunpack.c.h.b16 %v4672
        %v4712 = vunpack.c.l.b16 %v4673
        %v4713 = vunpack.c.h.b16 %v4673
        %v4714 = vunpack.c.l.b16 %v4674
        %v4715 = vunpack.c.h.b16 %v4674
        %v4716 = vunpack.c.l.b16 %v4675
        %v4717 = vunpack.c.h.b16 %v4675
        %v4718 = vunpack.c.l.b16 %v4676
        %v4719 = vunpack.c.h.b16 %v4676
        %v4720 = vunpack.c.l.b16 %v4677
        %v4721 = vunpack.c.h.b16 %v4677
        %v4722 = vunpack.c.l.b16 %v4678
        %v4723 = vunpack.c.h.b16 %v4678
        %v4724 = vunpack.c.l.b16 %v4679
        %v4725 = vunpack.c.h.b16 %v4679
        %v4726 = vunpack.c.l.b16 %v4680
        %v4727 = vunpack.c.h.b16 %v4680
        %v4728 = vunpack.c.l.b16 %v4681
        %v4729 = vunpack.c.h.b16 %v4681
        %v4730 = vunpack.c.l.b16 %v4682
        %v4731 = vunpack.c.h.b16 %v4682
        %v4732 = vunpack.c.l.b16 %v4683
        %v4733 = vunpack.c.h.b16 %v4683
        %v4734 = vpack.c.b16 %v4702, %v4702
        %v4735 = vpack.c.b16 %v4703, %v4703
        %v4736 = vpack.c.b16 %v4704, %v4704
        %v4737 = vpack.c.b16 %v4705, %v4705
        %v4738 = vpack.c.b16 %v4706, %v4706
        %v4739 = vpack.c.b16 %v4707, %v4707
        %v4740 = vpack.c.b16 %v4708, %v4708
        %v4741 = vpack.c.b16 %v4709, %v4709
        %v4742 = vpack.c.b16 %v4710, %v4710
        %v4743 = vpack.c.b16 %v4711, %v4711
        %v4744 = vpack.c.b16 %v4712, %v4712
        %v4745 = vpack.c.b16 %v4713, %v4713
        %v4746 = vpack.c.b16 %v4714, %v4714
        %v4747 = vpack.c.b16 %v4715, %v4715
        %v4748 = vpack.c.b16 %v4716, %v4716
        %v4749 = vpack.c.b16 %v4717, %v4717
        %v4750 = vpack.c.b16 %v4718, %v4718
        %v4751 = vpack.c.b16 %v4719, %v4719
        %v4752 = vpack.c.b16 %v4720, %v4720
        %v4753 = vpack.c.b16 %v4721, %v4721
        %v4754 = vpack.c.b16 %v4722, %v4722
        %v4755 = vpack.c.b16 %v4723, %v4723
        %v4756 = vpack.c.b16 %v4724, %v4724
        %v4757 = vpack.c.b16 %v4725, %v4725
        %v4758 = vpack.c.b16 %v4726, %v4726
        %v4759 = vpack.c.b16 %v4727, %v4727
        %v4760 = vpack.c.b16 %v4728, %v4728
        %v4761 = vpack.c.b16 %v4729, %v4729
        %v4762 = vpack.c.b16 %v4730, %v4730
        %v4763 = vpack.c.b16 %v4731, %v4731
        %v4764 = vpack.c.b16 %v4732, %v4732
        %v4765 = vpack.c.b16 %v4733, %v4733
        %4798 = vst [vmem:[#allocation3 + $0x4] sm:$0xf] %v4734
        %4799 = vst [vmem:[#allocation3 + $0x28] sm:$0xf] %v4735
        %4800 = vst [vmem:[#allocation3 + $0x4c] sm:$0xf] %v4736
        %4801 = vst [vmem:[#allocation3 + $0x70] sm:$0xf] %v4737
        %4802 = vst [vmem:[#allocation3 + $0x94] sm:$0xf] %v4738
        %4803 = vst [vmem:[#allocation3 + $0xb8] sm:$0xf] %v4739
        %4804 = vst [vmem:[#allocation3 + $0xdc] sm:$0xf] %v4740
        %4805 = vst [vmem:[#allocation3 + $0x100] sm:$0xf] %v4741
        %4806 = vst [vmem:[#allocation3 + $0x124] sm:$0xf] %v4742
        %4807 = vst [vmem:[#allocation3 + $0x148] sm:$0xf] %v4743
        %4808 = vst [vmem:[#allocation3 + $0x16c] sm:$0xf] %v4744
        %4809 = vst [vmem:[#allocation3 + $0x190] sm:$0xf] %v4745
        %4810 = vst [vmem:[#allocation3 + $0x1b4] sm:$0xf] %v4746
        %4811 = vst [vmem:[#allocation3 + $0x1d8] sm:$0xf] %v4747
        %4812 = vst [vmem:[#allocation3 + $0x1fc] sm:$0xf] %v4748
        %4813 = vst [vmem:[#allocation3 + $0x220] sm:$0xf] %v4749
        %4814 = vst [vmem:[#allocation3 + $0x244] sm:$0xf] %v4750
        %4815 = vst [vmem:[#allocation3 + $0x268] sm:$0xf] %v4751
        %4816 = vst [vmem:[#allocation3 + $0x28c] sm:$0xf] %v4752
        %4817 = vst [vmem:[#allocation3 + $0x2b0] sm:$0xf] %v4753
        %4818 = vst [vmem:[#allocation3 + $0x2d4] sm:$0xf] %v4754
        %4819 = vst [vmem:[#allocation3 + $0x2f8] sm:$0xf] %v4755
        %4820 = vst [vmem:[#allocation3 + $0x31c] sm:$0xf] %v4756
        %4821 = vst [vmem:[#allocation3 + $0x340] sm:$0xf] %v4757
        %4822 = vst [vmem:[#allocation3 + $0x364] sm:$0xf] %v4758
        %4823 = vst [vmem:[#allocation3 + $0x388] sm:$0xf] %v4759
        %4824 = vst [vmem:[#allocation3 + $0x3ac] sm:$0xf] %v4760
        %4825 = vst [vmem:[#allocation3 + $0x3d0] sm:$0xf] %v4761
        %4826 = vst [vmem:[#allocation3 + $0x3f4] sm:$0xf] %v4762
        %4827 = vst [vmem:[#allocation3 + $0x418] sm:$0xf] %v4763
        %4828 = vst [vmem:[#allocation3 + $0x43c] sm:$0xf] %v4764
        %4829 = vst [vmem:[#allocation3 + $0x460] sm:$0xf] %v4765
        %v4831 = vunpack.c.l.b16 %v4684
        %v4832 = vunpack.c.h.b16 %v4684
        %v4833 = vpack.c.b16 %v4831, %v4831
        %v4834 = vpack.c.b16 %v4832, %v4832
        %4837 = vst [vmem:[#allocation3 + $0x10] sm:$0xf] %v4736
        %4838 = vst [vmem:[#allocation3 + $0x34] sm:$0xf] %v4737
        %4839 = vst [vmem:[#allocation3 + $0x58] sm:$0xf] %v4738
        %4840 = vst [vmem:[#allocation3 + $0x7c] sm:$0xf] %v4739
        %4841 = vst [vmem:[#allocation3 + $0xa0] sm:$0xf] %v4740
        %4842 = vst [vmem:[#allocation3 + $0xc4] sm:$0xf] %v4741
        %4843 = vst [vmem:[#allocation3 + $0xe8] sm:$0xf] %v4742
        %4844 = vst [vmem:[#allocation3 + $0x10c] sm:$0xf] %v4743
        %4845 = vst [vmem:[#allocation3 + $0x130] sm:$0xf] %v4744
        %4846 = vst [vmem:[#allocation3 + $0x154] sm:$0xf] %v4745
        %4847 = vst [vmem:[#allocation3 + $0x178] sm:$0xf] %v4746
        %4848 = vst [vmem:[#allocation3 + $0x19c] sm:$0xf] %v4747
        %4849 = vst [vmem:[#allocation3 + $0x1c0] sm:$0xf] %v4748
        %4850 = vst [vmem:[#allocation3 + $0x1e4] sm:$0xf] %v4749
        %4851 = vst [vmem:[#allocation3 + $0x208] sm:$0xf] %v4750
        %4852 = vst [vmem:[#allocation3 + $0x22c] sm:$0xf] %v4751
        %4853 = vst [vmem:[#allocation3 + $0x250] sm:$0xf] %v4752
        %4854 = vst [vmem:[#allocation3 + $0x274] sm:$0xf] %v4753
        %4855 = vst [vmem:[#allocation3 + $0x298] sm:$0xf] %v4754
        %4856 = vst [vmem:[#allocation3 + $0x2bc] sm:$0xf] %v4755
        %4857 = vst [vmem:[#allocation3 + $0x2e0] sm:$0xf] %v4756
        %4858 = vst [vmem:[#allocation3 + $0x304] sm:$0xf] %v4757
        %4859 = vst [vmem:[#allocation3 + $0x328] sm:$0xf] %v4758
        %4860 = vst [vmem:[#allocation3 + $0x34c] sm:$0xf] %v4759
        %4861 = vst [vmem:[#allocation3 + $0x370] sm:$0xf] %v4760
        %4862 = vst [vmem:[#allocation3 + $0x394] sm:$0xf] %v4761
        %4863 = vst [vmem:[#allocation3 + $0x3b8] sm:$0xf] %v4762
        %4864 = vst [vmem:[#allocation3 + $0x3dc] sm:$0xf] %v4763
        %4865 = vst [vmem:[#allocation3 + $0x400] sm:$0xf] %v4764
        %4866 = vst [vmem:[#allocation3 + $0x424] sm:$0xf] %v4765
        %4867 = vst [vmem:[#allocation3 + $0x448] sm:$0xf] %v4833
        %4868 = vst [vmem:[#allocation3 + $0x46c] sm:$0xf] %v4834
        %v4870 = vunpack.c.l.b16 %v4685
        %v4871 = vunpack.c.h.b16 %v4685
        %v4872 = vpack.c.b16 %v4870, %v4870
        %v4873 = vpack.c.b16 %v4871, %v4871
        %4876 = vst [vmem:[#allocation3 + $0x1c] sm:$0xf] %v4738
        %4877 = vst [vmem:[#allocation3 + $0x40] sm:$0xf] %v4739
        %4878 = vst [vmem:[#allocation3 + $0x64] sm:$0xf] %v4740
        %4879 = vst [vmem:[#allocation3 + $0x88] sm:$0xf] %v4741
        %4880 = vst [vmem:[#allocation3 + $0xac] sm:$0xf] %v4742
        %4881 = vst [vmem:[#allocation3 + $0xd0] sm:$0xf] %v4743
        %4882 = vst [vmem:[#allocation3 + $0xf4] sm:$0xf] %v4744
        %4883 = vst [vmem:[#allocation3 + $0x118] sm:$0xf] %v4745
        %4884 = vst [vmem:[#allocation3 + $0x13c] sm:$0xf] %v4746
        %4885 = vst [vmem:[#allocation3 + $0x160] sm:$0xf] %v4747
        %4886 = vst [vmem:[#allocation3 + $0x184] sm:$0xf] %v4748
        %4887 = vst [vmem:[#allocation3 + $0x1a8] sm:$0xf] %v4749
        %4888 = vst [vmem:[#allocation3 + $0x1cc] sm:$0xf] %v4750
        %4889 = vst [vmem:[#allocation3 + $0x1f0] sm:$0xf] %v4751
        %4890 = vst [vmem:[#allocation3 + $0x214] sm:$0xf] %v4752
        %4891 = vst [vmem:[#allocation3 + $0x238] sm:$0xf] %v4753
        %4892 = vst [vmem:[#allocation3 + $0x25c] sm:$0xf] %v4754
        %4893 = vst [vmem:[#allocation3 + $0x280] sm:$0xf] %v4755
        %4894 = vst [vmem:[#allocation3 + $0x2a4] sm:$0xf] %v4756
        %4895 = vst [vmem:[#allocation3 + $0x2c8] sm:$0xf] %v4757
        %4896 = vst [vmem:[#allocation3 + $0x2ec] sm:$0xf] %v4758
        %4897 = vst [vmem:[#allocation3 + $0x310] sm:$0xf] %v4759
        %4898 = vst [vmem:[#allocation3 + $0x334] sm:$0xf] %v4760
        %4899 = vst [vmem:[#allocation3 + $0x358] sm:$0xf] %v4761
        %4900 = vst [vmem:[#allocation3 + $0x37c] sm:$0xf] %v4762
        %4901 = vst [vmem:[#allocation3 + $0x3a0] sm:$0xf] %v4763
        %4902 = vst [vmem:[#allocation3 + $0x3c4] sm:$0xf] %v4764
        %4903 = vst [vmem:[#allocation3 + $0x3e8] sm:$0xf] %v4765
        %4904 = vst [vmem:[#allocation3 + $0x40c] sm:$0xf] %v4833
        %4905 = vst [vmem:[#allocation3 + $0x430] sm:$0xf] %v4834
        %4906 = vst [vmem:[#allocation3 + $0x454] sm:$0xf] %v4872
        %4907 = vst [vmem:[#allocation3 + $0x478] sm:$0xf] %v4873
        %v4908 = vld [vmem:[#allocation2 + $0x2] sm:$0xff]
        %v4909 = vld [vmem:[#allocation2 + $0xa] sm:$0xff]
        %v4910 = vld [vmem:[#allocation2 + $0x1a] sm:$0xff]
        %v4911 = vld [vmem:[#allocation2 + $0x22] sm:$0xff]
        %v4912 = vld [vmem:[#allocation2 + $0x32] sm:$0xff]
        %v4913 = vld [vmem:[#allocation2 + $0x3a] sm:$0xff]
        %v4914 = vld [vmem:[#allocation2 + $0x4a] sm:$0xff]
        %v4915 = vld [vmem:[#allocation2 + $0x52] sm:$0xff]
        %v4916 = vld [vmem:[#allocation2 + $0x62] sm:$0xff]
        %v4917 = vld [vmem:[#allocation2 + $0x6a] sm:$0xff]
        %v4918 = vld [vmem:[#allocation2 + $0x7a] sm:$0xff]
        %v4919 = vld [vmem:[#allocation2 + $0x82] sm:$0xff]
        %v4920 = vld [vmem:[#allocation2 + $0x92] sm:$0xff]
        %v4921 = vld [vmem:[#allocation2 + $0x9a] sm:$0xff]
        %v4922 = vld [vmem:[#allocation2 + $0xaa] sm:$0xff]
        %v4923 = vld [vmem:[#allocation2 + $0xb2] sm:$0xff]
        %v4924 = vld [vmem:[#allocation2 + $0xc2] sm:$0xff]
        %v4925 = vld [vmem:[#allocation2 + $0xca] sm:$0xff]
        %v4926 = vld [vmem:[#allocation2 + $0xda] sm:$0xff]
        %v4927 = vld [vmem:[#allocation2 + $0xe2] sm:$0xff]
        %v4928 = vld [vmem:[#allocation2 + $0xf2] sm:$0xff]
        %v4929 = vld [vmem:[#allocation2 + $0xfa] sm:$0xff]
        %v4930 = vld [vmem:[#allocation2 + $0x10a] sm:$0xff]
        %v4931 = vld [vmem:[#allocation2 + $0x112] sm:$0xff]
        %v4932 = vld [vmem:[#allocation2 + $0x122] sm:$0xff]
        %v4933 = vld [vmem:[#allocation2 + $0x12a] sm:$0xff]
        %v4934 = vld [vmem:[#allocation2 + $0x13a] sm:$0xff]
        %v4935 = vld [vmem:[#allocation2 + $0x142] sm:$0xff]
        %v4936 = vld [vmem:[#allocation2 + $0x152] sm:$0xff]
        %v4937 = vld [vmem:[#allocation2 + $0x15a] sm:$0xff]
        %v4938 = vld [vmem:[#allocation2 + $0x16a] sm:$0xff]
        %v4939 = vld [vmem:[#allocation2 + $0x172] sm:$0xff]
        %v4940 = vld [vmem:[#allocation2 + $0x182] sm:$0xff]
        %v4941 = vld [vmem:[#allocation2 + $0x18a] sm:$0xff]
        %v4942 = vld [vmem:[#allocation2 + $0x19a] sm:$0xff]
        %v4943 = vld [vmem:[#allocation2 + $0x1a2] sm:$0xff]
        %v4944 = vpack.c.bf16 %v4909, %v4908
        %v4945 = vpack.c.bf16 %v4911, %v4910
        %v4946 = vpack.c.bf16 %v4913, %v4912
        %v4947 = vpack.c.bf16 %v4915, %v4914
        %v4948 = vpack.c.bf16 %v4917, %v4916
        %v4949 = vpack.c.bf16 %v4919, %v4918
        %v4950 = vpack.c.bf16 %v4921, %v4920
        %v4951 = vpack.c.bf16 %v4923, %v4922
        %v4952 = vpack.c.bf16 %v4925, %v4924
        %v4953 = vpack.c.bf16 %v4927, %v4926
        %v4954 = vpack.c.bf16 %v4929, %v4928
        %v4955 = vpack.c.bf16 %v4931, %v4930
        %v4956 = vpack.c.bf16 %v4933, %v4932
        %v4957 = vpack.c.bf16 %v4935, %v4934
        %v4958 = vpack.c.bf16 %v4937, %v4936
        %v4959 = vpack.c.bf16 %v4939, %v4938
        %v4960 = vpack.c.bf16 %v4941, %v4940
        %v4961 = vpack.c.bf16 %v4943, %v4942
        %v4978 = vunpack.c.l.b16 %v4944
        %v4979 = vunpack.c.h.b16 %v4944
        %v4980 = vunpack.c.l.b16 %v4945
        %v4981 = vunpack.c.h.b16 %v4945
        %v4982 = vunpack.c.l.b16 %v4946
        %v4983 = vunpack.c.h.b16 %v4946
        %v4984 = vunpack.c.l.b16 %v4947
        %v4985 = vunpack.c.h.b16 %v4947
        %v4986 = vunpack.c.l.b16 %v4948
        %v4987 = vunpack.c.h.b16 %v4948
        %v4988 = vunpack.c.l.b16 %v4949
        %v4989 = vunpack.c.h.b16 %v4949
        %v4990 = vunpack.c.l.b16 %v4950
        %v4991 = vunpack.c.h.b16 %v4950
        %v4992 = vunpack.c.l.b16 %v4951
        %v4993 = vunpack.c.h.b16 %v4951
        %v4994 = vunpack.c.l.b16 %v4952
        %v4995 = vunpack.c.h.b16 %v4952
        %v4996 = vunpack.c.l.b16 %v4953
        %v4997 = vunpack.c.h.b16 %v4953
        %v4998 = vunpack.c.l.b16 %v4954
        %v4999 = vunpack.c.h.b16 %v4954
        %v5000 = vunpack.c.l.b16 %v4955
        %v5001 = vunpack.c.h.b16 %v4955
        %v5002 = vunpack.c.l.b16 %v4956
        %v5003 = vunpack.c.h.b16 %v4956
        %v5004 = vunpack.c.l.b16 %v4957
        %v5005 = vunpack.c.h.b16 %v4957
        %v5006 = vunpack.c.l.b16 %v4958
        %v5007 = vunpack.c.h.b16 %v4958
        %v5008 = vunpack.c.l.b16 %v4959
        %v5009 = vunpack.c.h.b16 %v4959
        %v5010 = vpack.c.b16 %v4978, %v4978
        %v5011 = vpack.c.b16 %v4979, %v4979
        %v5012 = vpack.c.b16 %v4980, %v4980
        %v5013 = vpack.c.b16 %v4981, %v4981
        %v5014 = vpack.c.b16 %v4982, %v4982
        %v5015 = vpack.c.b16 %v4983, %v4983
        %v5016 = vpack.c.b16 %v4984, %v4984
        %v5017 = vpack.c.b16 %v4985, %v4985
        %v5018 = vpack.c.b16 %v4986, %v4986
        %v5019 = vpack.c.b16 %v4987, %v4987
        %v5020 = vpack.c.b16 %v4988, %v4988
        %v5021 = vpack.c.b16 %v4989, %v4989
        %v5022 = vpack.c.b16 %v4990, %v4990
        %v5023 = vpack.c.b16 %v4991, %v4991
        %v5024 = vpack.c.b16 %v4992, %v4992
        %v5025 = vpack.c.b16 %v4993, %v4993
        %v5026 = vpack.c.b16 %v4994, %v4994
        %v5027 = vpack.c.b16 %v4995, %v4995
        %v5028 = vpack.c.b16 %v4996, %v4996
        %v5029 = vpack.c.b16 %v4997, %v4997
        %v5030 = vpack.c.b16 %v4998, %v4998
        %v5031 = vpack.c.b16 %v4999, %v4999
        %v5032 = vpack.c.b16 %v5000, %v5000
        %v5033 = vpack.c.b16 %v5001, %v5001
        %v5034 = vpack.c.b16 %v5002, %v5002
        %v5035 = vpack.c.b16 %v5003, %v5003
        %v5036 = vpack.c.b16 %v5004, %v5004
        %v5037 = vpack.c.b16 %v5005, %v5005
        %v5038 = vpack.c.b16 %v5006, %v5006
        %v5039 = vpack.c.b16 %v5007, %v5007
        %v5040 = vpack.c.b16 %v5008, %v5008
        %v5041 = vpack.c.b16 %v5009, %v5009
        %5074 = vst [vmem:[#allocation3 + $0x8] sm:$0xf] %v5010
        %5075 = vst [vmem:[#allocation3 + $0x2c] sm:$0xf] %v5011
        %5076 = vst [vmem:[#allocation3 + $0x50] sm:$0xf] %v5012
        %5077 = vst [vmem:[#allocation3 + $0x74] sm:$0xf] %v5013
        %5078 = vst [vmem:[#allocation3 + $0x98] sm:$0xf] %v5014
        %5079 = vst [vmem:[#allocation3 + $0xbc] sm:$0xf] %v5015
        %5080 = vst [vmem:[#allocation3 + $0xe0] sm:$0xf] %v5016
        %5081 = vst [vmem:[#allocation3 + $0x104] sm:$0xf] %v5017
        %5082 = vst [vmem:[#allocation3 + $0x128] sm:$0xf] %v5018
        %5083 = vst [vmem:[#allocation3 + $0x14c] sm:$0xf] %v5019
        %5084 = vst [vmem:[#allocation3 + $0x170] sm:$0xf] %v5020
        %5085 = vst [vmem:[#allocation3 + $0x194] sm:$0xf] %v5021
        %5086 = vst [vmem:[#allocation3 + $0x1b8] sm:$0xf] %v5022
        %5087 = vst [vmem:[#allocation3 + $0x1dc] sm:$0xf] %v5023
        %5088 = vst [vmem:[#allocation3 + $0x200] sm:$0xf] %v5024
        %5089 = vst [vmem:[#allocation3 + $0x224] sm:$0xf] %v5025
        %5090 = vst [vmem:[#allocation3 + $0x248] sm:$0xf] %v5026
        %5091 = vst [vmem:[#allocation3 + $0x26c] sm:$0xf] %v5027
        %5092 = vst [vmem:[#allocation3 + $0x290] sm:$0xf] %v5028
        %5093 = vst [vmem:[#allocation3 + $0x2b4] sm:$0xf] %v5029
        %5094 = vst [vmem:[#allocation3 + $0x2d8] sm:$0xf] %v5030
        %5095 = vst [vmem:[#allocation3 + $0x2fc] sm:$0xf] %v5031
        %5096 = vst [vmem:[#allocation3 + $0x320] sm:$0xf] %v5032
        %5097 = vst [vmem:[#allocation3 + $0x344] sm:$0xf] %v5033
        %5098 = vst [vmem:[#allocation3 + $0x368] sm:$0xf] %v5034
        %5099 = vst [vmem:[#allocation3 + $0x38c] sm:$0xf] %v5035
        %5100 = vst [vmem:[#allocation3 + $0x3b0] sm:$0xf] %v5036
        %5101 = vst [vmem:[#allocation3 + $0x3d4] sm:$0xf] %v5037
        %5102 = vst [vmem:[#allocation3 + $0x3f8] sm:$0xf] %v5038
        %5103 = vst [vmem:[#allocation3 + $0x41c] sm:$0xf] %v5039
        %5104 = vst [vmem:[#allocation3 + $0x440] sm:$0xf] %v5040
        %5105 = vst [vmem:[#allocation3 + $0x464] sm:$0xf] %v5041
        %v5107 = vunpack.c.l.b16 %v4960
        %v5108 = vunpack.c.h.b16 %v4960
        %v5109 = vpack.c.b16 %v5107, %v5107
        %v5110 = vpack.c.b16 %v5108, %v5108
        %5113 = vst [vmem:[#allocation3 + $0x14] sm:$0xf] %v5012
        %5114 = vst [vmem:[#allocation3 + $0x38] sm:$0xf] %v5013
        %5115 = vst [vmem:[#allocation3 + $0x5c] sm:$0xf] %v5014
        %5116 = vst [vmem:[#allocation3 + $0x80] sm:$0xf] %v5015
        %5117 = vst [vmem:[#allocation3 + $0xa4] sm:$0xf] %v5016
        %5118 = vst [vmem:[#allocation3 + $0xc8] sm:$0xf] %v5017
        %5119 = vst [vmem:[#allocation3 + $0xec] sm:$0xf] %v5018
        %5120 = vst [vmem:[#allocation3 + $0x110] sm:$0xf] %v5019
        %5121 = vst [vmem:[#allocation3 + $0x134] sm:$0xf] %v5020
        %5122 = vst [vmem:[#allocation3 + $0x158] sm:$0xf] %v5021
        %5123 = vst [vmem:[#allocation3 + $0x17c] sm:$0xf] %v5022
        %5124 = vst [vmem:[#allocation3 + $0x1a0] sm:$0xf] %v5023
        %5125 = vst [vmem:[#allocation3 + $0x1c4] sm:$0xf] %v5024
        %5126 = vst [vmem:[#allocation3 + $0x1e8] sm:$0xf] %v5025
        %5127 = vst [vmem:[#allocation3 + $0x20c] sm:$0xf] %v5026
        %5128 = vst [vmem:[#allocation3 + $0x230] sm:$0xf] %v5027
        %5129 = vst [vmem:[#allocation3 + $0x254] sm:$0xf] %v5028
        %5130 = vst [vmem:[#allocation3 + $0x278] sm:$0xf] %v5029
        %5131 = vst [vmem:[#allocation3 + $0x29c] sm:$0xf] %v5030
        %5132 = vst [vmem:[#allocation3 + $0x2c0] sm:$0xf] %v5031
        %5133 = vst [vmem:[#allocation3 + $0x2e4] sm:$0xf] %v5032
        %5134 = vst [vmem:[#allocation3 + $0x308] sm:$0xf] %v5033
        %5135 = vst [vmem:[#allocation3 + $0x32c] sm:$0xf] %v5034
        %5136 = vst [vmem:[#allocation3 + $0x350] sm:$0xf] %v5035
        %5137 = vst [vmem:[#allocation3 + $0x374] sm:$0xf] %v5036
        %5138 = vst [vmem:[#allocation3 + $0x398] sm:$0xf] %v5037
        %5139 = vst [vmem:[#allocation3 + $0x3bc] sm:$0xf] %v5038
        %5140 = vst [vmem:[#allocation3 + $0x3e0] sm:$0xf] %v5039
        %5141 = vst [vmem:[#allocation3 + $0x404] sm:$0xf] %v5040
        %5142 = vst [vmem:[#allocation3 + $0x428] sm:$0xf] %v5041
        %5143 = vst [vmem:[#allocation3 + $0x44c] sm:$0xf] %v5109
        %5144 = vst [vmem:[#allocation3 + $0x470] sm:$0xf] %v5110
        %v5146 = vunpack.c.l.b16 %v4961
        %v5147 = vunpack.c.h.b16 %v4961
        %v5148 = vpack.c.b16 %v5146, %v5146
        %v5149 = vpack.c.b16 %v5147, %v5147
        %5152 = vst [vmem:[#allocation3 + $0x20] sm:$0xf] %v5014
        %5153 = vst [vmem:[#allocation3 + $0x44] sm:$0xf] %v5015
        %5154 = vst [vmem:[#allocation3 + $0x68] sm:$0xf] %v5016
        %5155 = vst [vmem:[#allocation3 + $0x8c] sm:$0xf] %v5017
        %5156 = vst [vmem:[#allocation3 + $0xb0] sm:$0xf] %v5018
        %5157 = vst [vmem:[#allocation3 + $0xd4] sm:$0xf] %v5019
        %5158 = vst [vmem:[#allocation3 + $0xf8] sm:$0xf] %v5020
        %5159 = vst [vmem:[#allocation3 + $0x11c] sm:$0xf] %v5021
        %5160 = vst [vmem:[#allocation3 + $0x140] sm:$0xf] %v5022
        %5161 = vst [vmem:[#allocation3 + $0x164] sm:$0xf] %v5023
        %5162 = vst [vmem:[#allocation3 + $0x188] sm:$0xf] %v5024
        %5163 = vst [vmem:[#allocation3 + $0x1ac] sm:$0xf] %v5025
        %5164 = vst [vmem:[#allocation3 + $0x1d0] sm:$0xf] %v5026
        %5165 = vst [vmem:[#allocation3 + $0x1f4] sm:$0xf] %v5027
        %5166 = vst [vmem:[#allocation3 + $0x218] sm:$0xf] %v5028
        %5167 = vst [vmem:[#allocation3 + $0x23c] sm:$0xf] %v5029
        %5168 = vst [vmem:[#allocation3 + $0x260] sm:$0xf] %v5030
        %5169 = vst [vmem:[#allocation3 + $0x284] sm:$0xf] %v5031
        %5170 = vst [vmem:[#allocation3 + $0x2a8] sm:$0xf] %v5032
        %5171 = vst [vmem:[#allocation3 + $0x2cc] sm:$0xf] %v5033
        %5172 = vst [vmem:[#allocation3 + $0x2f0] sm:$0xf] %v5034
        %5173 = vst [vmem:[#allocation3 + $0x314] sm:$0xf] %v5035
        %5174 = vst [vmem:[#allocation3 + $0x338] sm:$0xf] %v5036
        %5175 = vst [vmem:[#allocation3 + $0x35c] sm:$0xf] %v5037
        %5176 = vst [vmem:[#allocation3 + $0x380] sm:$0xf] %v5038
        %5177 = vst [vmem:[#allocation3 + $0x3a4] sm:$0xf] %v5039
        %5178 = vst [vmem:[#allocation3 + $0x3c8] sm:$0xf] %v5040
        %5179 = vst [vmem:[#allocation3 + $0x3ec] sm:$0xf] %v5041
        %5180 = vst [vmem:[#allocation3 + $0x410] sm:$0xf] %v5109
        %5181 = vst [vmem:[#allocation3 + $0x434] sm:$0xf] %v5110
        %5182 = vst [vmem:[#allocation3 + $0x458] sm:$0xf] %v5148
        %5183 = vst [vmem:[#allocation3 + $0x47c] sm:$0xf] %v5149
        %v5184 = vld [vmem:[#allocation3] sm:$0xff]
        %v5185 = vld [vmem:[#allocation3 + $0x8] sm:$0xff]
        %v5186 = vld [vmem:[#allocation3 + $0x10] sm:$0xff]
        %v5187 = vld [vmem:[#allocation3 + $0x18] sm:$0xff]
        %v5188 = vld [vmem:[#allocation3 + $0x20] sm:$0xf]
        %v5189 = vld [vmem:[#allocation3 + $0x24] sm:$0xff]
        %v5190 = vld [vmem:[#allocation3 + $0x2c] sm:$0xff]
        %v5191 = vld [vmem:[#allocation3 + $0x34] sm:$0xff]
        %v5192 = vld [vmem:[#allocation3 + $0x3c] sm:$0xff]
        %v5193 = vld [vmem:[#allocation3 + $0x44] sm:$0xf]
        %v5194 = vld [vmem:[#allocation3 + $0x48] sm:$0xff]
        %v5195 = vld [vmem:[#allocation3 + $0x50] sm:$0xff]
        %v5196 = vld [vmem:[#allocation3 + $0x58] sm:$0xff]
        %v5197 = vld [vmem:[#allocation3 + $0x60] sm:$0xff]
        %v5198 = vld [vmem:[#allocation3 + $0x68] sm:$0xf]
        %v5199 = vld [vmem:[#allocation3 + $0x6c] sm:$0xff]
        %v5200 = vld [vmem:[#allocation3 + $0x74] sm:$0xff]
        %v5201 = vld [vmem:[#allocation3 + $0x7c] sm:$0xff]
        %v5202 = vld [vmem:[#allocation3 + $0x84] sm:$0xff]
        %v5203 = vld [vmem:[#allocation3 + $0x8c] sm:$0xf]
        %v5204 = vld [vmem:[#allocation3 + $0x90] sm:$0xff]
        %v5205 = vld [vmem:[#allocation3 + $0x98] sm:$0xff]
        %v5206 = vld [vmem:[#allocation3 + $0xa0] sm:$0xff]
        %v5207 = vld [vmem:[#allocation3 + $0xa8] sm:$0xff]
        %v5208 = vld [vmem:[#allocation3 + $0xb0] sm:$0xf]
        %v5209 = vld [vmem:[#allocation3 + $0xb4] sm:$0xff]
        %v5210 = vld [vmem:[#allocation3 + $0xbc] sm:$0xff]
        %v5211 = vld [vmem:[#allocation3 + $0xc4] sm:$0xff]
        %v5212 = vld [vmem:[#allocation3 + $0xcc] sm:$0xff]
        %v5213 = vld [vmem:[#allocation3 + $0xd4] sm:$0xf]
        %v5214 = vld [vmem:[#allocation3 + $0xd8] sm:$0xff]
        %v5215 = vld [vmem:[#allocation3 + $0xe0] sm:$0xff]
        %v5216 = vld [vmem:[#allocation3 + $0xe8] sm:$0xff]
        %v5217 = vld [vmem:[#allocation3 + $0xf0] sm:$0xff]
        %v5218 = vld [vmem:[#allocation3 + $0xf8] sm:$0xf]
        %v5219 = vld [vmem:[#allocation3 + $0xfc] sm:$0xff]
        %v5220 = vld [vmem:[#allocation3 + $0x104] sm:$0xff]
        %v5221 = vld [vmem:[#allocation3 + $0x10c] sm:$0xff]
        %v5222 = vld [vmem:[#allocation3 + $0x114] sm:$0xff]
        %v5223 = vld [vmem:[#allocation3 + $0x11c] sm:$0xf]
        %v5224 = vld [vmem:[#allocation3 + $0x120] sm:$0xff]
        %v5225 = vld [vmem:[#allocation3 + $0x128] sm:$0xff]
        %v5226 = vld [vmem:[#allocation3 + $0x130] sm:$0xff]
        %v5227 = vld [vmem:[#allocation3 + $0x138] sm:$0xff]
        %v5228 = vld [vmem:[#allocation3 + $0x140] sm:$0xf]
        %v5229 = vld [vmem:[#allocation3 + $0x144] sm:$0xff]
        %v5230 = vld [vmem:[#allocation3 + $0x14c] sm:$0xff]
        %v5231 = vld [vmem:[#allocation3 + $0x154] sm:$0xff]
        %v5232 = vld [vmem:[#allocation3 + $0x15c] sm:$0xff]
        %v5233 = vld [vmem:[#allocation3 + $0x164] sm:$0xf]
        %v5234 = vld [vmem:[#allocation3 + $0x168] sm:$0xff]
        %v5235 = vld [vmem:[#allocation3 + $0x170] sm:$0xff]
        %v5236 = vld [vmem:[#allocation3 + $0x178] sm:$0xff]
        %v5237 = vld [vmem:[#allocation3 + $0x180] sm:$0xff]
        %v5238 = vld [vmem:[#allocation3 + $0x188] sm:$0xf]
        %v5239 = vld [vmem:[#allocation3 + $0x18c] sm:$0xff]
        %v5240 = vld [vmem:[#allocation3 + $0x194] sm:$0xff]
        %v5241 = vld [vmem:[#allocation3 + $0x19c] sm:$0xff]
        %v5242 = vld [vmem:[#allocation3 + $0x1a4] sm:$0xff]
        %v5243 = vld [vmem:[#allocation3 + $0x1ac] sm:$0xf]
        %v5244 = vld [vmem:[#allocation3 + $0x1b0] sm:$0xff]
        %v5245 = vld [vmem:[#allocation3 + $0x1b8] sm:$0xff]
        %v5246 = vld [vmem:[#allocation3 + $0x1c0] sm:$0xff]
        %v5247 = vld [vmem:[#allocation3 + $0x1c8] sm:$0xff]
        %v5248 = vld [vmem:[#allocation3 + $0x1d0] sm:$0xf]
        %v5249 = vld [vmem:[#allocation3 + $0x1d4] sm:$0xff]
        %v5250 = vld [vmem:[#allocation3 + $0x1dc] sm:$0xff]
        %v5251 = vld [vmem:[#allocation3 + $0x1e4] sm:$0xff]
        %v5252 = vld [vmem:[#allocation3 + $0x1ec] sm:$0xff]
        %v5253 = vld [vmem:[#allocation3 + $0x1f4] sm:$0xf]
        %v5254 = vld [vmem:[#allocation3 + $0x1f8] sm:$0xff]
        %v5255 = vld [vmem:[#allocation3 + $0x200] sm:$0xff]
        %v5256 = vld [vmem:[#allocation3 + $0x208] sm:$0xff]
        %v5257 = vld [vmem:[#allocation3 + $0x210] sm:$0xff]
        %v5258 = vld [vmem:[#allocation3 + $0x218] sm:$0xf]
        %v5259 = vld [vmem:[#allocation3 + $0x21c] sm:$0xff]
        %v5260 = vld [vmem:[#allocation3 + $0x224] sm:$0xff]
        %v5261 = vld [vmem:[#allocation3 + $0x22c] sm:$0xff]
        %v5262 = vld [vmem:[#allocation3 + $0x234] sm:$0xff]
        %v5263 = vld [vmem:[#allocation3 + $0x23c] sm:$0xf]
        %v5264 = vld [vmem:[#allocation3 + $0x240] sm:$0xff]
        %v5265 = vld [vmem:[#allocation3 + $0x248] sm:$0xff]
        %v5266 = vld [vmem:[#allocation3 + $0x250] sm:$0xff]
        %v5267 = vld [vmem:[#allocation3 + $0x258] sm:$0xff]
        %v5268 = vld [vmem:[#allocation3 + $0x260] sm:$0xf]
        %v5269 = vld [vmem:[#allocation3 + $0x264] sm:$0xff]
        %v5270 = vld [vmem:[#allocation3 + $0x26c] sm:$0xff]
        %v5271 = vld [vmem:[#allocation3 + $0x274] sm:$0xff]
        %v5272 = vld [vmem:[#allocation3 + $0x27c] sm:$0xff]
        %v5273 = vld [vmem:[#allocation3 + $0x284] sm:$0xf]
        %v5274 = vld [vmem:[#allocation3 + $0x288] sm:$0xff]
        %v5275 = vld [vmem:[#allocation3 + $0x290] sm:$0xff]
        %v5276 = vld [vmem:[#allocation3 + $0x298] sm:$0xff]
        %v5277 = vld [vmem:[#allocation3 + $0x2a0] sm:$0xff]
        %v5278 = vld [vmem:[#allocation3 + $0x2a8] sm:$0xf]
        %v5279 = vld [vmem:[#allocation3 + $0x2ac] sm:$0xff]
        %v5280 = vld [vmem:[#allocation3 + $0x2b4] sm:$0xff]
        %v5281 = vld [vmem:[#allocation3 + $0x2bc] sm:$0xff]
        %v5282 = vld [vmem:[#allocation3 + $0x2c4] sm:$0xff]
        %v5283 = vld [vmem:[#allocation3 + $0x2cc] sm:$0xf]
        %v5284 = vld [vmem:[#allocation3 + $0x2d0] sm:$0xff]
        %v5285 = vld [vmem:[#allocation3 + $0x2d8] sm:$0xff]
        %v5286 = vld [vmem:[#allocation3 + $0x2e0] sm:$0xff]
        %v5287 = vld [vmem:[#allocation3 + $0x2e8] sm:$0xff]
        %v5288 = vld [vmem:[#allocation3 + $0x2f0] sm:$0xf]
        %v5289 = vld [vmem:[#allocation3 + $0x2f4] sm:$0xff]
        %v5290 = vld [vmem:[#allocation3 + $0x2fc] sm:$0xff]
        %v5291 = vld [vmem:[#allocation3 + $0x304] sm:$0xff]
        %v5292 = vld [vmem:[#allocation3 + $0x30c] sm:$0xff]
        %v5293 = vld [vmem:[#allocation3 + $0x314] sm:$0xf]
        %v5294 = vld [vmem:[#allocation3 + $0x318] sm:$0xff]
        %v5295 = vld [vmem:[#allocation3 + $0x320] sm:$0xff]
        %v5296 = vld [vmem:[#allocation3 + $0x328] sm:$0xff]
        %v5297 = vld [vmem:[#allocation3 + $0x330] sm:$0xff]
        %v5298 = vld [vmem:[#allocation3 + $0x338] sm:$0xf]
        %v5299 = vld [vmem:[#allocation3 + $0x33c] sm:$0xff]
        %v5300 = vld [vmem:[#allocation3 + $0x344] sm:$0xff]
        %v5301 = vld [vmem:[#allocation3 + $0x34c] sm:$0xff]
        %v5302 = vld [vmem:[#allocation3 + $0x354] sm:$0xff]
        %v5303 = vld [vmem:[#allocation3 + $0x35c] sm:$0xf]
        %v5304 = vld [vmem:[#allocation3 + $0x360] sm:$0xff]
        %v5305 = vld [vmem:[#allocation3 + $0x368] sm:$0xff]
        %v5306 = vld [vmem:[#allocation3 + $0x370] sm:$0xff]
        %v5307 = vld [vmem:[#allocation3 + $0x378] sm:$0xff]
        %v5308 = vld [vmem:[#allocation3 + $0x380] sm:$0xf]
        %v5309 = vld [vmem:[#allocation3 + $0x384] sm:$0xff]
        %v5310 = vld [vmem:[#allocation3 + $0x38c] sm:$0xff]
        %v5311 = vld [vmem:[#allocation3 + $0x394] sm:$0xff]
        %v5312 = vld [vmem:[#allocation3 + $0x39c] sm:$0xff]
        %v5313 = vld [vmem:[#allocation3 + $0x3a4] sm:$0xf]
        %v5314 = vld [vmem:[#allocation3 + $0x3a8] sm:$0xff]
        %v5315 = vld [vmem:[#allocation3 + $0x3b0] sm:$0xff]
        %v5316 = vld [vmem:[#allocation3 + $0x3b8] sm:$0xff]
        %v5317 = vld [vmem:[#allocation3 + $0x3c0] sm:$0xff]
        %v5318 = vld [vmem:[#allocation3 + $0x3c8] sm:$0xf]
        %v5319 = vld [vmem:[#allocation3 + $0x3cc] sm:$0xff]
        %v5320 = vld [vmem:[#allocation3 + $0x3d4] sm:$0xff]
        %v5321 = vld [vmem:[#allocation3 + $0x3dc] sm:$0xff]
        %v5322 = vld [vmem:[#allocation3 + $0x3e4] sm:$0xff]
        %v5323 = vld [vmem:[#allocation3 + $0x3ec] sm:$0xf]
        %v5324 = vld [vmem:[#allocation3 + $0x3f0] sm:$0xff]
        %v5325 = vld [vmem:[#allocation3 + $0x3f8] sm:$0xff]
        %v5326 = vld [vmem:[#allocation3 + $0x400] sm:$0xff]
        %v5327 = vld [vmem:[#allocation3 + $0x408] sm:$0xff]
        %v5328 = vld [vmem:[#allocation3 + $0x410] sm:$0xf]
        %v5329 = vld [vmem:[#allocation3 + $0x414] sm:$0xff]
        %v5330 = vld [vmem:[#allocation3 + $0x41c] sm:$0xff]
        %v5331 = vld [vmem:[#allocation3 + $0x424] sm:$0xff]
        %v5332 = vld [vmem:[#allocation3 + $0x42c] sm:$0xff]
        %v5333 = vld [vmem:[#allocation3 + $0x434] sm:$0xf]
        %v5334 = vld [vmem:[#allocation3 + $0x438] sm:$0xff]
        %v5335 = vld [vmem:[#allocation3 + $0x440] sm:$0xff]
        %v5336 = vld [vmem:[#allocation3 + $0x448] sm:$0xff]
        %v5337 = vld [vmem:[#allocation3 + $0x450] sm:$0xff]
        %v5338 = vld [vmem:[#allocation3 + $0x458] sm:$0xf]
        %v5339 = vld [vmem:[#allocation3 + $0x45c] sm:$0xff]
        %v5340 = vld [vmem:[#allocation3 + $0x464] sm:$0xff]
        %v5341 = vld [vmem:[#allocation3 + $0x46c] sm:$0xff]
        %v5342 = vld [vmem:[#allocation3 + $0x474] sm:$0xff]
        %v5343 = vld [vmem:[#allocation3 + $0x47c] sm:$0xf]
        %v5344 = vld [vmem:[#allocation9] sm:$0xf]
        %v5345 = vld [vmem:[#allocation9 + $0x4] sm:$0xf]
        %v5346 = vld [vmem:[#allocation9 + $0x8] sm:$0xf]
        %v5347 = vld [vmem:[#allocation9 + $0xc] sm:$0xf]
        %v5348 = vld [vmem:[#allocation9 + $0x10] sm:$0xf]
        %v5349 = vld [vmem:[#allocation9 + $0x14] sm:$0xf]
        %v5350 = vld [vmem:[#allocation9 + $0x18] sm:$0xf]
        %v5351 = vld [vmem:[#allocation9 + $0x1c] sm:$0xf]
        %v5352 = vld [vmem:[#allocation9 + $0x20] sm:$0xf]
        %v5353 = vld [vmem:[#allocation9 + $0x24] sm:$0xf]
        %v5354 = vld [vmem:[#allocation9 + $0x28] sm:$0xf]
        %v5355 = vld [vmem:[#allocation9 + $0x2c] sm:$0xf]
        %v5356 = vld [vmem:[#allocation9 + $0x30] sm:$0xf]
        %v5357 = vld [vmem:[#allocation9 + $0x34] sm:$0xf]
        %v5358 = vld [vmem:[#allocation9 + $0x38] sm:$0xf]
        %v5359 = vld [vmem:[#allocation9 + $0x3c] sm:$0xf]
        %v5360 = vld [vmem:[#allocation9 + $0x40] sm:$0xf]
        %v5361 = vld [vmem:[#allocation9 + $0x44] sm:$0xf]
        %v5362 = vld [vmem:[#allocation9 + $0x48] sm:$0xf]
        %v5363 = vld [vmem:[#allocation9 + $0x4c] sm:$0xf]
        %v5364 = vld [vmem:[#allocation9 + $0x50] sm:$0xf]
        %v5365 = vld [vmem:[#allocation9 + $0x54] sm:$0xf]
        %v5366 = vld [vmem:[#allocation9 + $0x58] sm:$0xf]
        %v5367 = vld [vmem:[#allocation9 + $0x5c] sm:$0xf]
        %v5368 = vld [vmem:[#allocation9 + $0x60] sm:$0xf]
        %v5369 = vld [vmem:[#allocation9 + $0x64] sm:$0xf]
        %v5370 = vld [vmem:[#allocation9 + $0x68] sm:$0xf]
        %v5371 = vld [vmem:[#allocation9 + $0x6c] sm:$0xf]
        %v5372 = vld [vmem:[#allocation9 + $0x70] sm:$0xf]
        %v5373 = vld [vmem:[#allocation9 + $0x74] sm:$0xf]
        %v5374 = vld [vmem:[#allocation9 + $0x78] sm:$0xf]
        %v5375 = vld [vmem:[#allocation9 + $0x7c] sm:$0xf]
        %v5376 = vld [vmem:[#allocation9 + $0x80] sm:$0xf]
        %v5377 = vld [vmem:[#allocation9 + $0x84] sm:$0xf]
        %v5378 = vld [vmem:[#allocation9 + $0x88] sm:$0xf]
        %v5379 = vld [vmem:[#allocation9 + $0x8c] sm:$0xf]
        %v5380 = vld [vmem:[#allocation9 + $0x90] sm:$0xf]
        %v5381 = vld [vmem:[#allocation9 + $0x94] sm:$0xf]
        %v5382 = vld [vmem:[#allocation9 + $0x98] sm:$0xf]
        %v5383 = vld [vmem:[#allocation9 + $0x9c] sm:$0xf]
        %v5384 = vld [vmem:[#allocation9 + $0xa0] sm:$0xf]
        %v5385 = vld [vmem:[#allocation9 + $0xa4] sm:$0xf]
        %v5386 = vld [vmem:[#allocation9 + $0xa8] sm:$0xf]
        %v5387 = vld [vmem:[#allocation9 + $0xac] sm:$0xf]
        %v5388 = vld [vmem:[#allocation9 + $0xb0] sm:$0xf]
        %v5389 = vld [vmem:[#allocation9 + $0xb4] sm:$0xf]
        %v5390 = vld [vmem:[#allocation9 + $0xb8] sm:$0xf]
        %v5391 = vld [vmem:[#allocation9 + $0xbc] sm:$0xf]
        %v5392 = vld [vmem:[#allocation9 + $0xc0] sm:$0xf]
        %v5393 = vld [vmem:[#allocation9 + $0xc4] sm:$0xf]
        %v5394 = vld [vmem:[#allocation9 + $0xc8] sm:$0xf]
        %v5395 = vld [vmem:[#allocation9 + $0xcc] sm:$0xf]
        %v5396 = vld [vmem:[#allocation9 + $0xd0] sm:$0xf]
        %v5397 = vld [vmem:[#allocation9 + $0xd4] sm:$0xf]
        %v5398 = vld [vmem:[#allocation9 + $0xd8] sm:$0xf]
        %v5399 = vld [vmem:[#allocation9 + $0xdc] sm:$0xf]
        %v5400 = vld [vmem:[#allocation9 + $0xe0] sm:$0xf]
        %v5401 = vld [vmem:[#allocation9 + $0xe4] sm:$0xf]
        %v5402 = vld [vmem:[#allocation9 + $0xe8] sm:$0xf]
        %v5403 = vld [vmem:[#allocation9 + $0xec] sm:$0xf]
        %v5404 = vld [vmem:[#allocation9 + $0xf0] sm:$0xf]
        %v5405 = vld [vmem:[#allocation9 + $0xf4] sm:$0xf]
        %v5406 = vld [vmem:[#allocation9 + $0xf8] sm:$0xf]
        %v5407 = vld [vmem:[#allocation9 + $0xfc] sm:$0xf]
        %v5408 = vld [vmem:[#allocation9 + $0x100] sm:$0xf]
        %v5409 = vld [vmem:[#allocation9 + $0x104] sm:$0xf]
        %v5410 = vld [vmem:[#allocation9 + $0x108] sm:$0xf]
        %v5411 = vld [vmem:[#allocation9 + $0x10c] sm:$0xf]
        %v5412 = vld [vmem:[#allocation9 + $0x110] sm:$0xf]
        %v5413 = vld [vmem:[#allocation9 + $0x114] sm:$0xf]
        %v5414 = vld [vmem:[#allocation9 + $0x118] sm:$0xf]
        %v5415 = vld [vmem:[#allocation9 + $0x11c] sm:$0xf]
        %v5416 = vld [vmem:[#allocation9 + $0x120] sm:$0xf]
        %v5417 = vld [vmem:[#allocation9 + $0x124] sm:$0xf]
        %v5418 = vld [vmem:[#allocation9 + $0x128] sm:$0xf]
        %v5419 = vld [vmem:[#allocation9 + $0x12c] sm:$0xf]
        %v5420 = vld [vmem:[#allocation9 + $0x130] sm:$0xf]
        %v5421 = vld [vmem:[#allocation9 + $0x134] sm:$0xf]
        %v5422 = vld [vmem:[#allocation9 + $0x138] sm:$0xf]
        %v5423 = vld [vmem:[#allocation9 + $0x13c] sm:$0xf]
        %v5424 = vld [vmem:[#allocation9 + $0x140] sm:$0xf]
        %v5425 = vld [vmem:[#allocation9 + $0x144] sm:$0xf]
        %v5426 = vld [vmem:[#allocation9 + $0x148] sm:$0xf]
        %v5427 = vld [vmem:[#allocation9 + $0x14c] sm:$0xf]
        %v5428 = vld [vmem:[#allocation9 + $0x150] sm:$0xf]
        %v5429 = vld [vmem:[#allocation9 + $0x154] sm:$0xf]
        %v5430 = vld [vmem:[#allocation9 + $0x158] sm:$0xf]
        %v5431 = vld [vmem:[#allocation9 + $0x15c] sm:$0xf]
        %v5432 = vld [vmem:[#allocation9 + $0x160] sm:$0xf]
        %v5433 = vld [vmem:[#allocation9 + $0x164] sm:$0xf]
        %v5434 = vld [vmem:[#allocation9 + $0x168] sm:$0xf]
        %v5435 = vld [vmem:[#allocation9 + $0x16c] sm:$0xf]
        %v5436 = vld [vmem:[#allocation9 + $0x170] sm:$0xf]
        %v5437 = vld [vmem:[#allocation9 + $0x174] sm:$0xf]
        %v5438 = vld [vmem:[#allocation9 + $0x178] sm:$0xf]
        %v5439 = vld [vmem:[#allocation9 + $0x17c] sm:$0xf]
        %v5440 = vld [vmem:[#allocation9 + $0x180] sm:$0xf]
        %v5441 = vld [vmem:[#allocation9 + $0x184] sm:$0xf]
        %v5442 = vld [vmem:[#allocation9 + $0x188] sm:$0xf]
        %v5443 = vld [vmem:[#allocation9 + $0x18c] sm:$0xf]
        %v5444 = vld [vmem:[#allocation9 + $0x190] sm:$0xf]
        %v5445 = vld [vmem:[#allocation9 + $0x194] sm:$0xf]
        %v5446 = vld [vmem:[#allocation9 + $0x198] sm:$0xf]
        %v5447 = vld [vmem:[#allocation9 + $0x19c] sm:$0xf]
        %v5448 = vld [vmem:[#allocation9 + $0x1a0] sm:$0xf]
        %v5449 = vld [vmem:[#allocation9 + $0x1a4] sm:$0xf]
        %v5450 = vld [vmem:[#allocation9 + $0x1a8] sm:$0xf]
        %v5451 = vld [vmem:[#allocation9 + $0x1ac] sm:$0xf]
        %v5452 = vld [vmem:[#allocation9 + $0x1b0] sm:$0xf]
        %v5453 = vld [vmem:[#allocation9 + $0x1b4] sm:$0xf]
        %v5454 = vld [vmem:[#allocation9 + $0x1b8] sm:$0xf]
        %v5455 = vld [vmem:[#allocation9 + $0x1bc] sm:$0xf]
        %v5456 = vld [vmem:[#allocation9 + $0x1c0] sm:$0xf]
        %v5457 = vld [vmem:[#allocation9 + $0x1c4] sm:$0xf]
        %v5458 = vld [vmem:[#allocation9 + $0x1c8] sm:$0xf]
        %v5459 = vld [vmem:[#allocation9 + $0x1cc] sm:$0xf]
        %v5460 = vld [vmem:[#allocation9 + $0x1d0] sm:$0xf]
        %v5461 = vld [vmem:[#allocation9 + $0x1d4] sm:$0xf]
        %v5462 = vld [vmem:[#allocation9 + $0x1d8] sm:$0xf]
        %v5463 = vld [vmem:[#allocation9 + $0x1dc] sm:$0xf]
        %v5464 = vld [vmem:[#allocation9 + $0x1e0] sm:$0xf]
        %v5465 = vld [vmem:[#allocation9 + $0x1e4] sm:$0xf]
        %v5466 = vld [vmem:[#allocation9 + $0x1e8] sm:$0xf]
        %v5467 = vld [vmem:[#allocation9 + $0x1ec] sm:$0xf]
        %v5468 = vld [vmem:[#allocation9 + $0x1f0] sm:$0xf]
        %v5469 = vld [vmem:[#allocation9 + $0x1f4] sm:$0xf]
        %v5470 = vld [vmem:[#allocation9 + $0x1f8] sm:$0xf]
        %v5471 = vld [vmem:[#allocation9 + $0x1fc] sm:$0xf]
        %v5472 = vld [vmem:[#allocation9 + $0x200] sm:$0xf]
        %v5473 = vld [vmem:[#allocation9 + $0x204] sm:$0xf]
        %v5474 = vld [vmem:[#allocation9 + $0x208] sm:$0xf]
        %v5475 = vld [vmem:[#allocation9 + $0x20c] sm:$0xf]
        %v5476 = vld [vmem:[#allocation9 + $0x210] sm:$0xf]
        %v5477 = vld [vmem:[#allocation9 + $0x214] sm:$0xf]
        %v5478 = vld [vmem:[#allocation9 + $0x218] sm:$0xf]
        %v5479 = vld [vmem:[#allocation9 + $0x21c] sm:$0xf]
        %v5480 = vld [vmem:[#allocation9 + $0x220] sm:$0xf]
        %v5481 = vld [vmem:[#allocation9 + $0x224] sm:$0xf]
        %v5482 = vld [vmem:[#allocation9 + $0x228] sm:$0xf]
        %v5483 = vld [vmem:[#allocation9 + $0x22c] sm:$0xf]
        %v5484 = vld [vmem:[#allocation9 + $0x230] sm:$0xf]
        %v5485 = vld [vmem:[#allocation9 + $0x234] sm:$0xf]
        %v5486 = vld [vmem:[#allocation9 + $0x238] sm:$0xf]
        %v5487 = vld [vmem:[#allocation9 + $0x23c] sm:$0xf]
        %v5648 = vunpack.c.l.b16 %v5184
        %v5649 = vunpack.c.h.b16 %v5184
        %v5650 = vunpack.c.l.b16 %v5185
        %v5651 = vunpack.c.h.b16 %v5185
        %v5652 = vunpack.c.l.b16 %v5186
        %v5653 = vunpack.c.h.b16 %v5186
        %v5654 = vunpack.c.l.b16 %v5187
        %v5655 = vunpack.c.h.b16 %v5187
        %v5656 = vunpack.c.l.b16 %v5188
        %v5657 = vunpack.c.l.b16 %v5189
        %v5658 = vunpack.c.h.b16 %v5189
        %v5659 = vunpack.c.l.b16 %v5190
        %v5660 = vunpack.c.h.b16 %v5190
        %v5661 = vunpack.c.l.b16 %v5191
        %v5662 = vunpack.c.h.b16 %v5191
        %v5663 = vunpack.c.l.b16 %v5192
        %v5664 = vunpack.c.h.b16 %v5192
        %v5665 = vunpack.c.l.b16 %v5193
        %v5666 = vunpack.c.l.b16 %v5194
        %v5667 = vunpack.c.h.b16 %v5194
        %v5668 = vunpack.c.l.b16 %v5195
        %v5669 = vunpack.c.h.b16 %v5195
        %v5670 = vunpack.c.l.b16 %v5196
        %v5671 = vunpack.c.h.b16 %v5196
        %v5672 = vunpack.c.l.b16 %v5197
        %v5673 = vunpack.c.h.b16 %v5197
        %v5674 = vunpack.c.l.b16 %v5198
        %v5675 = vunpack.c.l.b16 %v5199
        %v5676 = vunpack.c.h.b16 %v5199
        %v5677 = vunpack.c.l.b16 %v5200
        %v5678 = vunpack.c.h.b16 %v5200
        %v5679 = vunpack.c.l.b16 %v5201
        %v5680 = vunpack.c.h.b16 %v5201
        %v5681 = vunpack.c.l.b16 %v5202
        %v5682 = vunpack.c.h.b16 %v5202
        %v5683 = vunpack.c.l.b16 %v5203
        %v5684 = vunpack.c.l.b16 %v5204
        %v5685 = vunpack.c.h.b16 %v5204
        %v5686 = vunpack.c.l.b16 %v5205
        %v5687 = vunpack.c.h.b16 %v5205
        %v5688 = vunpack.c.l.b16 %v5206
        %v5689 = vunpack.c.h.b16 %v5206
        %v5690 = vunpack.c.l.b16 %v5207
        %v5691 = vunpack.c.h.b16 %v5207
        %v5692 = vunpack.c.l.b16 %v5208
        %v5693 = vunpack.c.l.b16 %v5209
        %v5694 = vunpack.c.h.b16 %v5209
        %v5695 = vunpack.c.l.b16 %v5210
        %v5696 = vunpack.c.h.b16 %v5210
        %v5697 = vunpack.c.l.b16 %v5211
        %v5698 = vunpack.c.h.b16 %v5211
        %v5699 = vunpack.c.l.b16 %v5212
        %v5700 = vunpack.c.h.b16 %v5212
        %v5701 = vunpack.c.l.b16 %v5213
        %v5702 = vunpack.c.l.b16 %v5214
        %v5703 = vunpack.c.h.b16 %v5214
        %v5704 = vunpack.c.l.b16 %v5215
        %v5705 = vunpack.c.h.b16 %v5215
        %v5706 = vunpack.c.l.b16 %v5216
        %v5707 = vunpack.c.h.b16 %v5216
        %v5708 = vunpack.c.l.b16 %v5217
        %v5709 = vunpack.c.h.b16 %v5217
        %v5710 = vunpack.c.l.b16 %v5218
        %v5711 = vunpack.c.l.b16 %v5219
        %v5712 = vunpack.c.h.b16 %v5219
        %v5713 = vunpack.c.l.b16 %v5220
        %v5714 = vunpack.c.h.b16 %v5220
        %v5715 = vunpack.c.l.b16 %v5221
        %v5716 = vunpack.c.h.b16 %v5221
        %v5717 = vunpack.c.l.b16 %v5222
        %v5718 = vunpack.c.h.b16 %v5222
        %v5719 = vunpack.c.l.b16 %v5223
        %v5720 = vunpack.c.l.b16 %v5224
        %v5721 = vunpack.c.h.b16 %v5224
        %v5722 = vunpack.c.l.b16 %v5225
        %v5723 = vunpack.c.h.b16 %v5225
        %v5724 = vunpack.c.l.b16 %v5226
        %v5725 = vunpack.c.h.b16 %v5226
        %v5726 = vunpack.c.l.b16 %v5227
        %v5727 = vunpack.c.h.b16 %v5227
        %v5728 = vunpack.c.l.b16 %v5228
        %v5729 = vunpack.c.l.b16 %v5229
        %v5730 = vunpack.c.h.b16 %v5229
        %v5731 = vunpack.c.l.b16 %v5230
        %v5732 = vunpack.c.h.b16 %v5230
        %v5733 = vunpack.c.l.b16 %v5231
        %v5734 = vunpack.c.h.b16 %v5231
        %v5735 = vunpack.c.l.b16 %v5232
        %v5736 = vunpack.c.h.b16 %v5232
        %v5737 = vunpack.c.l.b16 %v5233
        %v5738 = vunpack.c.l.b16 %v5234
        %v5739 = vunpack.c.h.b16 %v5234
        %v5740 = vunpack.c.l.b16 %v5235
        %v5741 = vunpack.c.h.b16 %v5235
        %v5742 = vunpack.c.l.b16 %v5236
        %v5743 = vunpack.c.h.b16 %v5236
        %v5744 = vunpack.c.l.b16 %v5237
        %v5745 = vunpack.c.h.b16 %v5237
        %v5746 = vunpack.c.l.b16 %v5238
        %v5747 = vunpack.c.l.b16 %v5239
        %v5748 = vunpack.c.h.b16 %v5239
        %v5749 = vunpack.c.l.b16 %v5240
        %v5750 = vunpack.c.h.b16 %v5240
        %v5751 = vunpack.c.l.b16 %v5241
        %v5752 = vunpack.c.h.b16 %v5241
        %v5753 = vunpack.c.l.b16 %v5242
        %v5754 = vunpack.c.h.b16 %v5242
        %v5755 = vunpack.c.l.b16 %v5243
        %v5756 = vunpack.c.l.b16 %v5244
        %v5757 = vunpack.c.h.b16 %v5244
        %v5758 = vunpack.c.l.b16 %v5245
        %v5759 = vunpack.c.h.b16 %v5245
        %v5760 = vunpack.c.l.b16 %v5246
        %v5761 = vunpack.c.h.b16 %v5246
        %v5762 = vunpack.c.l.b16 %v5247
        %v5763 = vunpack.c.h.b16 %v5247
        %v5764 = vunpack.c.l.b16 %v5248
        %v5765 = vunpack.c.l.b16 %v5249
        %v5766 = vunpack.c.h.b16 %v5249
        %v5767 = vunpack.c.l.b16 %v5250
        %v5768 = vunpack.c.h.b16 %v5250
        %v5769 = vunpack.c.l.b16 %v5251
        %v5770 = vunpack.c.h.b16 %v5251
        %v5771 = vunpack.c.l.b16 %v5252
        %v5772 = vunpack.c.h.b16 %v5252
        %v5773 = vunpack.c.l.b16 %v5253
        %v5774 = vunpack.c.l.b16 %v5254
        %v5775 = vunpack.c.h.b16 %v5254
        %v5776 = vunpack.c.l.b16 %v5255
        %v5777 = vunpack.c.h.b16 %v5255
        %v5778 = vunpack.c.l.b16 %v5256
        %v5779 = vunpack.c.h.b16 %v5256
        %v5780 = vunpack.c.l.b16 %v5257
        %v5781 = vunpack.c.h.b16 %v5257
        %v5782 = vunpack.c.l.b16 %v5258
        %v5783 = vunpack.c.l.b16 %v5259
        %v5784 = vunpack.c.h.b16 %v5259
        %v5785 = vunpack.c.l.b16 %v5260
        %v5786 = vunpack.c.h.b16 %v5260
        %v5787 = vunpack.c.l.b16 %v5261
        %v5788 = vunpack.c.h.b16 %v5261
        %v5789 = vunpack.c.l.b16 %v5262
        %v5790 = vunpack.c.h.b16 %v5262
        %v5791 = vunpack.c.l.b16 %v5263
        %v5792 = vunpack.c.l.b16 %v5264
        %v5793 = vunpack.c.h.b16 %v5264
        %v5794 = vunpack.c.l.b16 %v5265
        %v5795 = vunpack.c.h.b16 %v5265
        %v5796 = vunpack.c.l.b16 %v5266
        %v5797 = vunpack.c.h.b16 %v5266
        %v5798 = vunpack.c.l.b16 %v5267
        %v5799 = vunpack.c.h.b16 %v5267
        %v5800 = vunpack.c.l.b16 %v5268
        %v5801 = vunpack.c.l.b16 %v5269
        %v5802 = vunpack.c.h.b16 %v5269
        %v5803 = vunpack.c.l.b16 %v5270
        %v5804 = vunpack.c.h.b16 %v5270
        %v5805 = vunpack.c.l.b16 %v5271
        %v5806 = vunpack.c.h.b16 %v5271
        %v5807 = vunpack.c.l.b16 %v5272
        %v5808 = vunpack.c.h.b16 %v5272
        %v5809 = vunpack.c.l.b16 %v5273
        %v5810 = vunpack.c.l.b16 %v5274
        %v5811 = vunpack.c.h.b16 %v5274
        %v5812 = vunpack.c.l.b16 %v5275
        %v5813 = vunpack.c.h.b16 %v5275
        %v5814 = vunpack.c.l.b16 %v5276
        %v5815 = vunpack.c.h.b16 %v5276
        %v5816 = vunpack.c.l.b16 %v5277
        %v5817 = vunpack.c.h.b16 %v5277
        %v5818 = vunpack.c.l.b16 %v5278
        %v5819 = vunpack.c.l.b16 %v5279
        %v5820 = vunpack.c.h.b16 %v5279
        %v5821 = vunpack.c.l.b16 %v5280
        %v5822 = vunpack.c.h.b16 %v5280
        %v5823 = vunpack.c.l.b16 %v5281
        %v5824 = vunpack.c.h.b16 %v5281
        %v5825 = vunpack.c.l.b16 %v5282
        %v5826 = vunpack.c.h.b16 %v5282
        %v5827 = vunpack.c.l.b16 %v5283
        %v5828 = vunpack.c.l.b16 %v5284
        %v5829 = vunpack.c.h.b16 %v5284
        %v5830 = vunpack.c.l.b16 %v5285
        %v5831 = vunpack.c.h.b16 %v5285
        %v5832 = vunpack.c.l.b16 %v5286
        %v5833 = vunpack.c.h.b16 %v5286
        %v5834 = vunpack.c.l.b16 %v5287
        %v5835 = vunpack.c.h.b16 %v5287
        %v5836 = vunpack.c.l.b16 %v5288
        %v5837 = vunpack.c.l.b16 %v5289
        %v5838 = vunpack.c.h.b16 %v5289
        %v5839 = vunpack.c.l.b16 %v5290
        %v5840 = vunpack.c.h.b16 %v5290
        %v5841 = vunpack.c.l.b16 %v5291
        %v5842 = vunpack.c.h.b16 %v5291
        %v5843 = vunpack.c.l.b16 %v5292
        %v5844 = vunpack.c.h.b16 %v5292
        %v5845 = vunpack.c.l.b16 %v5293
        %v5846 = vunpack.c.l.b16 %v5294
        %v5847 = vunpack.c.h.b16 %v5294
        %v5848 = vunpack.c.l.b16 %v5295
        %v5849 = vunpack.c.h.b16 %v5295
        %v5850 = vunpack.c.l.b16 %v5296
        %v5851 = vunpack.c.h.b16 %v5296
        %v5852 = vunpack.c.l.b16 %v5297
        %v5853 = vunpack.c.h.b16 %v5297
        %v5854 = vunpack.c.l.b16 %v5298
        %v5855 = vunpack.c.l.b16 %v5299
        %v5856 = vunpack.c.h.b16 %v5299
        %v5857 = vunpack.c.l.b16 %v5300
        %v5858 = vunpack.c.h.b16 %v5300
        %v5859 = vunpack.c.l.b16 %v5301
        %v5860 = vunpack.c.h.b16 %v5301
        %v5861 = vunpack.c.l.b16 %v5302
        %v5862 = vunpack.c.h.b16 %v5302
        %v5863 = vunpack.c.l.b16 %v5303
        %v5864 = vunpack.c.l.b16 %v5304
        %v5865 = vunpack.c.h.b16 %v5304
        %v5866 = vunpack.c.l.b16 %v5305
        %v5867 = vunpack.c.h.b16 %v5305
        %v5868 = vunpack.c.l.b16 %v5306
        %v5869 = vunpack.c.h.b16 %v5306
        %v5870 = vunpack.c.l.b16 %v5307
        %v5871 = vunpack.c.h.b16 %v5307
        %v5872 = vunpack.c.l.b16 %v5308
        %v5873 = vunpack.c.l.b16 %v5309
        %v5874 = vunpack.c.h.b16 %v5309
        %v5875 = vunpack.c.l.b16 %v5310
        %v5876 = vunpack.c.h.b16 %v5310
        %v5877 = vunpack.c.l.b16 %v5311
        %v5878 = vunpack.c.h.b16 %v5311
        %v5879 = vunpack.c.l.b16 %v5312
        %v5880 = vunpack.c.h.b16 %v5312
        %v5881 = vunpack.c.l.b16 %v5313
        %v5882 = vunpack.c.l.b16 %v5314
        %v5883 = vunpack.c.h.b16 %v5314
        %v5884 = vunpack.c.l.b16 %v5315
        %v5885 = vunpack.c.h.b16 %v5315
        %v5886 = vunpack.c.l.b16 %v5316
        %v5887 = vunpack.c.h.b16 %v5316
        %v5888 = vunpack.c.l.b16 %v5317
        %v5889 = vunpack.c.h.b16 %v5317
        %v5890 = vunpack.c.l.b16 %v5318
        %v5891 = vunpack.c.l.b16 %v5319
        %v5892 = vunpack.c.h.b16 %v5319
        %v5893 = vunpack.c.l.b16 %v5320
        %v5894 = vunpack.c.h.b16 %v5320
        %v5895 = vunpack.c.l.b16 %v5321
        %v5896 = vunpack.c.h.b16 %v5321
        %v5897 = vunpack.c.l.b16 %v5322
        %v5898 = vunpack.c.h.b16 %v5322
        %v5899 = vunpack.c.l.b16 %v5323
        %v5900 = vunpack.c.l.b16 %v5324
        %v5901 = vunpack.c.h.b16 %v5324
        %v5902 = vunpack.c.l.b16 %v5325
        %v5903 = vunpack.c.h.b16 %v5325
        %v5904 = vunpack.c.l.b16 %v5326
        %v5905 = vunpack.c.h.b16 %v5326
        %v5906 = vunpack.c.l.b16 %v5327
        %v5907 = vunpack.c.h.b16 %v5327
        %v5908 = vunpack.c.l.b16 %v5328
        %v5909 = vunpack.c.l.b16 %v5329
        %v5910 = vunpack.c.h.b16 %v5329
        %v5911 = vunpack.c.l.b16 %v5330
        %v5912 = vunpack.c.h.b16 %v5330
        %v5913 = vunpack.c.l.b16 %v5331
        %v5914 = vunpack.c.h.b16 %v5331
        %v5915 = vunpack.c.l.b16 %v5332
        %v5916 = vunpack.c.h.b16 %v5332
        %v5917 = vunpack.c.l.b16 %v5333
        %v5918 = vunpack.c.l.b16 %v5334
        %v5919 = vunpack.c.h.b16 %v5334
        %v5920 = vunpack.c.l.b16 %v5335
        %v5921 = vunpack.c.h.b16 %v5335
        %v5922 = vunpack.c.l.b16 %v5336
        %v5923 = vunpack.c.h.b16 %v5336
        %v5924 = vunpack.c.l.b16 %v5337
        %v5925 = vunpack.c.h.b16 %v5337
        %v5926 = vunpack.c.l.b16 %v5338
        %v5927 = vunpack.c.l.b16 %v5339
        %v5928 = vunpack.c.h.b16 %v5339
        %v5929 = vunpack.c.l.b16 %v5340
        %v5930 = vunpack.c.h.b16 %v5340
        %v5931 = vunpack.c.l.b16 %v5341
        %v5932 = vunpack.c.h.b16 %v5341
        %v5933 = vunpack.c.l.b16 %v5342
        %v5934 = vunpack.c.h.b16 %v5342
        %v5935 = vunpack.c.l.b16 %v5343
        %v5936 = vpack.c.b16 %v5657, %v5648
        %v5937 = vpack.c.b16 %v5658, %v5649
        %v5938 = vpack.c.b16 %v5659, %v5650
        %v5939 = vpack.c.b16 %v5660, %v5651
        %v5940 = vpack.c.b16 %v5661, %v5652
        %v5941 = vpack.c.b16 %v5662, %v5653
        %v5942 = vpack.c.b16 %v5663, %v5654
        %v5943 = vpack.c.b16 %v5664, %v5655
        %v5944 = vpack.c.b16 %v5665, %v5656
        %v5945 = vpack.c.b16 %v5675, %v5666
        %v5946 = vpack.c.b16 %v5676, %v5667
        %v5947 = vpack.c.b16 %v5677, %v5668
        %v5948 = vpack.c.b16 %v5678, %v5669
        %v5949 = vpack.c.b16 %v5679, %v5670
        %v5950 = vpack.c.b16 %v5680, %v5671
        %v5951 = vpack.c.b16 %v5681, %v5672
        %v5952 = vpack.c.b16 %v5682, %v5673
        %v5953 = vpack.c.b16 %v5683, %v5674
        %v5954 = vpack.c.b16 %v5693, %v5684
        %v5955 = vpack.c.b16 %v5694, %v5685
        %v5956 = vpack.c.b16 %v5695, %v5686
        %v5957 = vpack.c.b16 %v5696, %v5687
        %v5958 = vpack.c.b16 %v5697, %v5688
        %v5959 = vpack.c.b16 %v5698, %v5689
        %v5960 = vpack.c.b16 %v5699, %v5690
        %v5961 = vpack.c.b16 %v5700, %v5691
        %v5962 = vpack.c.b16 %v5701, %v5692
        %v5963 = vpack.c.b16 %v5711, %v5702
        %v5964 = vpack.c.b16 %v5712, %v5703
        %v5965 = vpack.c.b16 %v5713, %v5704
        %v5966 = vpack.c.b16 %v5714, %v5705
        %v5967 = vpack.c.b16 %v5715, %v5706
        %v5968 = vpack.c.b16 %v5716, %v5707
        %v5969 = vpack.c.b16 %v5717, %v5708
        %v5970 = vpack.c.b16 %v5718, %v5709
        %v5971 = vpack.c.b16 %v5719, %v5710
        %v5972 = vpack.c.b16 %v5729, %v5720
        %v5973 = vpack.c.b16 %v5730, %v5721
        %v5974 = vpack.c.b16 %v5731, %v5722
        %v5975 = vpack.c.b16 %v5732, %v5723
        %v5976 = vpack.c.b16 %v5733, %v5724
        %v5977 = vpack.c.b16 %v5734, %v5725
        %v5978 = vpack.c.b16 %v5735, %v5726
        %v5979 = vpack.c.b16 %v5736, %v5727
        %v5980 = vpack.c.b16 %v5737, %v5728
        %v5981 = vpack.c.b16 %v5747, %v5738
        %v5982 = vpack.c.b16 %v5748, %v5739
        %v5983 = vpack.c.b16 %v5749, %v5740
        %v5984 = vpack.c.b16 %v5750, %v5741
        %v5985 = vpack.c.b16 %v5751, %v5742
        %v5986 = vpack.c.b16 %v5752, %v5743
        %v5987 = vpack.c.b16 %v5753, %v5744
        %v5988 = vpack.c.b16 %v5754, %v5745
        %v5989 = vpack.c.b16 %v5755, %v5746
        %v5990 = vpack.c.b16 %v5765, %v5756
        %v5991 = vpack.c.b16 %v5766, %v5757
        %v5992 = vpack.c.b16 %v5767, %v5758
        %v5993 = vpack.c.b16 %v5768, %v5759
        %v5994 = vpack.c.b16 %v5769, %v5760
        %v5995 = vpack.c.b16 %v5770, %v5761
        %v5996 = vpack.c.b16 %v5771, %v5762
        %v5997 = vpack.c.b16 %v5772, %v5763
        %v5998 = vpack.c.b16 %v5773, %v5764
        %v5999 = vpack.c.b16 %v5783, %v5774
        %v6000 = vpack.c.b16 %v5784, %v5775
        %v6001 = vpack.c.b16 %v5785, %v5776
        %v6002 = vpack.c.b16 %v5786, %v5777
        %v6003 = vpack.c.b16 %v5787, %v5778
        %v6004 = vpack.c.b16 %v5788, %v5779
        %v6005 = vpack.c.b16 %v5789, %v5780
        %v6006 = vpack.c.b16 %v5790, %v5781
        %v6007 = vpack.c.b16 %v5791, %v5782
        %v6008 = vpack.c.b16 %v5801, %v5792
        %v6009 = vpack.c.b16 %v5802, %v5793
        %v6010 = vpack.c.b16 %v5803, %v5794
        %v6011 = vpack.c.b16 %v5804, %v5795
        %v6012 = vpack.c.b16 %v5805, %v5796
        %v6013 = vpack.c.b16 %v5806, %v5797
        %v6014 = vpack.c.b16 %v5807, %v5798
        %v6015 = vpack.c.b16 %v5808, %v5799
        %v6016 = vpack.c.b16 %v5809, %v5800
        %v6017 = vpack.c.b16 %v5819, %v5810
        %v6018 = vpack.c.b16 %v5820, %v5811
        %v6019 = vpack.c.b16 %v5821, %v5812
        %v6020 = vpack.c.b16 %v5822, %v5813
        %v6021 = vpack.c.b16 %v5823, %v5814
        %v6022 = vpack.c.b16 %v5824, %v5815
        %v6023 = vpack.c.b16 %v5825, %v5816
        %v6024 = vpack.c.b16 %v5826, %v5817
        %v6025 = vpack.c.b16 %v5827, %v5818
        %v6026 = vpack.c.b16 %v5837, %v5828
        %v6027 = vpack.c.b16 %v5838, %v5829
        %v6028 = vpack.c.b16 %v5839, %v5830
        %v6029 = vpack.c.b16 %v5840, %v5831
        %v6030 = vpack.c.b16 %v5841, %v5832
        %v6031 = vpack.c.b16 %v5842, %v5833
        %v6032 = vpack.c.b16 %v5843, %v5834
        %v6033 = vpack.c.b16 %v5844, %v5835
        %v6034 = vpack.c.b16 %v5845, %v5836
        %v6035 = vpack.c.b16 %v5855, %v5846
        %v6036 = vpack.c.b16 %v5856, %v5847
        %v6037 = vpack.c.b16 %v5857, %v5848
        %v6038 = vpack.c.b16 %v5858, %v5849
        %v6039 = vpack.c.b16 %v5859, %v5850
        %v6040 = vpack.c.b16 %v5860, %v5851
        %v6041 = vpack.c.b16 %v5861, %v5852
        %v6042 = vpack.c.b16 %v5862, %v5853
        %v6043 = vpack.c.b16 %v5863, %v5854
        %v6044 = vpack.c.b16 %v5873, %v5864
        %v6045 = vpack.c.b16 %v5874, %v5865
        %v6046 = vpack.c.b16 %v5875, %v5866
        %v6047 = vpack.c.b16 %v5876, %v5867
        %v6048 = vpack.c.b16 %v5877, %v5868
        %v6049 = vpack.c.b16 %v5878, %v5869
        %v6050 = vpack.c.b16 %v5879, %v5870
        %v6051 = vpack.c.b16 %v5880, %v5871
        %v6052 = vpack.c.b16 %v5881, %v5872
        %v6053 = vpack.c.b16 %v5891, %v5882
        %v6054 = vpack.c.b16 %v5892, %v5883
        %v6055 = vpack.c.b16 %v5893, %v5884
        %v6056 = vpack.c.b16 %v5894, %v5885
        %v6057 = vpack.c.b16 %v5895, %v5886
        %v6058 = vpack.c.b16 %v5896, %v5887
        %v6059 = vpack.c.b16 %v5897, %v5888
        %v6060 = vpack.c.b16 %v5898, %v5889
        %v6061 = vpack.c.b16 %v5899, %v5890
        %v6062 = vpack.c.b16 %v5909, %v5900
        %v6063 = vpack.c.b16 %v5910, %v5901
        %v6064 = vpack.c.b16 %v5911, %v5902
        %v6065 = vpack.c.b16 %v5912, %v5903
        %v6066 = vpack.c.b16 %v5913, %v5904
        %v6067 = vpack.c.b16 %v5914, %v5905
        %v6068 = vpack.c.b16 %v5915, %v5906
        %v6069 = vpack.c.b16 %v5916, %v5907
        %v6070 = vpack.c.b16 %v5917, %v5908
        %v6071 = vpack.c.b16 %v5927, %v5918
        %v6072 = vpack.c.b16 %v5928, %v5919
        %v6073 = vpack.c.b16 %v5929, %v5920
        %v6074 = vpack.c.b16 %v5930, %v5921
        %v6075 = vpack.c.b16 %v5931, %v5922
        %v6076 = vpack.c.b16 %v5932, %v5923
        %v6077 = vpack.c.b16 %v5933, %v5924
        %v6078 = vpack.c.b16 %v5934, %v5925
        %v6079 = vpack.c.b16 %v5935, %v5926
        %v6368 = vunpack.c.l.b16 %v5344
        %v6369 = vunpack.c.l.b16 %v5345
        %v6370 = vunpack.c.l.b16 %v5346
        %v6371 = vunpack.c.l.b16 %v5347
        %v6372 = vunpack.c.l.b16 %v5348
        %v6373 = vunpack.c.l.b16 %v5349
        %v6374 = vunpack.c.l.b16 %v5350
        %v6375 = vunpack.c.l.b16 %v5351
        %v6376 = vunpack.c.l.b16 %v5352
        %v6377 = vunpack.c.l.b16 %v5353
        %v6378 = vunpack.c.l.b16 %v5354
        %v6379 = vunpack.c.l.b16 %v5355
        %v6380 = vunpack.c.l.b16 %v5356
        %v6381 = vunpack.c.l.b16 %v5357
        %v6382 = vunpack.c.l.b16 %v5358
        %v6383 = vunpack.c.l.b16 %v5359
        %v6384 = vunpack.c.l.b16 %v5360
        %v6385 = vunpack.c.l.b16 %v5361
        %v6386 = vunpack.c.l.b16 %v5362
        %v6387 = vunpack.c.l.b16 %v5363
        %v6388 = vunpack.c.l.b16 %v5364
        %v6389 = vunpack.c.l.b16 %v5365
        %v6390 = vunpack.c.l.b16 %v5366
        %v6391 = vunpack.c.l.b16 %v5367
        %v6392 = vunpack.c.l.b16 %v5368
        %v6393 = vunpack.c.l.b16 %v5369
        %v6394 = vunpack.c.l.b16 %v5370
        %v6395 = vunpack.c.l.b16 %v5371
        %v6396 = vunpack.c.l.b16 %v5372
        %v6397 = vunpack.c.l.b16 %v5373
        %v6398 = vunpack.c.l.b16 %v5374
        %v6399 = vunpack.c.l.b16 %v5375
        %v6400 = vunpack.c.l.b16 %v5376
        %v6401 = vunpack.c.l.b16 %v5377
        %v6402 = vunpack.c.l.b16 %v5378
        %v6403 = vunpack.c.l.b16 %v5379
        %v6404 = vunpack.c.l.b16 %v5380
        %v6405 = vunpack.c.l.b16 %v5381
        %v6406 = vunpack.c.l.b16 %v5382
        %v6407 = vunpack.c.l.b16 %v5383
        %v6408 = vunpack.c.l.b16 %v5384
        %v6409 = vunpack.c.l.b16 %v5385
        %v6410 = vunpack.c.l.b16 %v5386
        %v6411 = vunpack.c.l.b16 %v5387
        %v6412 = vunpack.c.l.b16 %v5388
        %v6413 = vunpack.c.l.b16 %v5389
        %v6414 = vunpack.c.l.b16 %v5390
        %v6415 = vunpack.c.l.b16 %v5391
        %v6416 = vunpack.c.l.b16 %v5392
        %v6417 = vunpack.c.l.b16 %v5393
        %v6418 = vunpack.c.l.b16 %v5394
        %v6419 = vunpack.c.l.b16 %v5395
        %v6420 = vunpack.c.l.b16 %v5396
        %v6421 = vunpack.c.l.b16 %v5397
        %v6422 = vunpack.c.l.b16 %v5398
        %v6423 = vunpack.c.l.b16 %v5399
        %v6424 = vunpack.c.l.b16 %v5400
        %v6425 = vunpack.c.l.b16 %v5401
        %v6426 = vunpack.c.l.b16 %v5402
        %v6427 = vunpack.c.l.b16 %v5403
        %v6428 = vunpack.c.l.b16 %v5404
        %v6429 = vunpack.c.l.b16 %v5405
        %v6430 = vunpack.c.l.b16 %v5406
        %v6431 = vunpack.c.l.b16 %v5407
        %v6432 = vunpack.c.l.b16 %v5408
        %v6433 = vunpack.c.l.b16 %v5409
        %v6434 = vunpack.c.l.b16 %v5410
        %v6435 = vunpack.c.l.b16 %v5411
        %v6436 = vunpack.c.l.b16 %v5412
        %v6437 = vunpack.c.l.b16 %v5413
        %v6438 = vunpack.c.l.b16 %v5414
        %v6439 = vunpack.c.l.b16 %v5415
        %v6440 = vunpack.c.l.b16 %v5416
        %v6441 = vunpack.c.l.b16 %v5417
        %v6442 = vunpack.c.l.b16 %v5418
        %v6443 = vunpack.c.l.b16 %v5419
        %v6444 = vunpack.c.l.b16 %v5420
        %v6445 = vunpack.c.l.b16 %v5421
        %v6446 = vunpack.c.l.b16 %v5422
        %v6447 = vunpack.c.l.b16 %v5423
        %v6448 = vunpack.c.l.b16 %v5424
        %v6449 = vunpack.c.l.b16 %v5425
        %v6450 = vunpack.c.l.b16 %v5426
        %v6451 = vunpack.c.l.b16 %v5427
        %v6452 = vunpack.c.l.b16 %v5428
        %v6453 = vunpack.c.l.b16 %v5429
        %v6454 = vunpack.c.l.b16 %v5430
        %v6455 = vunpack.c.l.b16 %v5431
        %v6456 = vunpack.c.l.b16 %v5432
        %v6457 = vunpack.c.l.b16 %v5433
        %v6458 = vunpack.c.l.b16 %v5434
        %v6459 = vunpack.c.l.b16 %v5435
        %v6460 = vunpack.c.l.b16 %v5436
        %v6461 = vunpack.c.l.b16 %v5437
        %v6462 = vunpack.c.l.b16 %v5438
        %v6463 = vunpack.c.l.b16 %v5439
        %v6464 = vunpack.c.l.b16 %v5440
        %v6465 = vunpack.c.l.b16 %v5441
        %v6466 = vunpack.c.l.b16 %v5442
        %v6467 = vunpack.c.l.b16 %v5443
        %v6468 = vunpack.c.l.b16 %v5444
        %v6469 = vunpack.c.l.b16 %v5445
        %v6470 = vunpack.c.l.b16 %v5446
        %v6471 = vunpack.c.l.b16 %v5447
        %v6472 = vunpack.c.l.b16 %v5448
        %v6473 = vunpack.c.l.b16 %v5449
        %v6474 = vunpack.c.l.b16 %v5450
        %v6475 = vunpack.c.l.b16 %v5451
        %v6476 = vunpack.c.l.b16 %v5452
        %v6477 = vunpack.c.l.b16 %v5453
        %v6478 = vunpack.c.l.b16 %v5454
        %v6479 = vunpack.c.l.b16 %v5455
        %v6480 = vunpack.c.l.b16 %v5456
        %v6481 = vunpack.c.l.b16 %v5457
        %v6482 = vunpack.c.l.b16 %v5458
        %v6483 = vunpack.c.l.b16 %v5459
        %v6484 = vunpack.c.l.b16 %v5460
        %v6485 = vunpack.c.l.b16 %v5461
        %v6486 = vunpack.c.l.b16 %v5462
        %v6487 = vunpack.c.l.b16 %v5463
        %v6488 = vunpack.c.l.b16 %v5464
        %v6489 = vunpack.c.l.b16 %v5465
        %v6490 = vunpack.c.l.b16 %v5466
        %v6491 = vunpack.c.l.b16 %v5467
        %v6492 = vunpack.c.l.b16 %v5468
        %v6493 = vunpack.c.l.b16 %v5469
        %v6494 = vunpack.c.l.b16 %v5470
        %v6495 = vunpack.c.l.b16 %v5471
        %v6496 = vunpack.c.l.b16 %v5472
        %v6497 = vunpack.c.l.b16 %v5473
        %v6498 = vunpack.c.l.b16 %v5474
        %v6499 = vunpack.c.l.b16 %v5475
        %v6500 = vunpack.c.l.b16 %v5476
        %v6501 = vunpack.c.l.b16 %v5477
        %v6502 = vunpack.c.l.b16 %v5478
        %v6503 = vunpack.c.l.b16 %v5479
        %v6504 = vunpack.c.l.b16 %v5480
        %v6505 = vunpack.c.l.b16 %v5481
        %v6506 = vunpack.c.l.b16 %v5482
        %v6507 = vunpack.c.l.b16 %v5483
        %v6508 = vunpack.c.l.b16 %v5484
        %v6509 = vunpack.c.l.b16 %v5485
        %v6510 = vunpack.c.l.b16 %v5486
        %v6511 = vunpack.c.l.b16 %v5487
        %v6512 = vpack.c.b16 %v6369, %v6368
        %v6513 = vpack.c.b16 %v6371, %v6370
        %v6514 = vpack.c.b16 %v6373, %v6372
        %v6515 = vpack.c.b16 %v6375, %v6374
        %v6516 = vpack.c.b16 %v6377, %v6376
        %v6517 = vpack.c.b16 %v6379, %v6378
        %v6518 = vpack.c.b16 %v6381, %v6380
        %v6519 = vpack.c.b16 %v6383, %v6382
        %v6520 = vpack.c.b16 %v6385, %v6384
        %v6521 = vpack.c.b16 %v6387, %v6386
        %v6522 = vpack.c.b16 %v6389, %v6388
        %v6523 = vpack.c.b16 %v6391, %v6390
        %v6524 = vpack.c.b16 %v6393, %v6392
        %v6525 = vpack.c.b16 %v6395, %v6394
        %v6526 = vpack.c.b16 %v6397, %v6396
        %v6527 = vpack.c.b16 %v6399, %v6398
        %v6528 = vpack.c.b16 %v6401, %v6400
        %v6529 = vpack.c.b16 %v6403, %v6402
        %v6530 = vpack.c.b16 %v6405, %v6404
        %v6531 = vpack.c.b16 %v6407, %v6406
        %v6532 = vpack.c.b16 %v6409, %v6408
        %v6533 = vpack.c.b16 %v6411, %v6410
        %v6534 = vpack.c.b16 %v6413, %v6412
        %v6535 = vpack.c.b16 %v6415, %v6414
        %v6536 = vpack.c.b16 %v6417, %v6416
        %v6537 = vpack.c.b16 %v6419, %v6418
        %v6538 = vpack.c.b16 %v6421, %v6420
        %v6539 = vpack.c.b16 %v6423, %v6422
        %v6540 = vpack.c.b16 %v6425, %v6424
        %v6541 = vpack.c.b16 %v6427, %v6426
        %v6542 = vpack.c.b16 %v6429, %v6428
        %v6543 = vpack.c.b16 %v6431, %v6430
        %v6544 = vpack.c.b16 %v6433, %v6432
        %v6545 = vpack.c.b16 %v6435, %v6434
        %v6546 = vpack.c.b16 %v6437, %v6436
        %v6547 = vpack.c.b16 %v6439, %v6438
        %v6548 = vpack.c.b16 %v6441, %v6440
        %v6549 = vpack.c.b16 %v6443, %v6442
        %v6550 = vpack.c.b16 %v6445, %v6444
        %v6551 = vpack.c.b16 %v6447, %v6446
        %v6552 = vpack.c.b16 %v6449, %v6448
        %v6553 = vpack.c.b16 %v6451, %v6450
        %v6554 = vpack.c.b16 %v6453, %v6452
        %v6555 = vpack.c.b16 %v6455, %v6454
        %v6556 = vpack.c.b16 %v6457, %v6456
        %v6557 = vpack.c.b16 %v6459, %v6458
        %v6558 = vpack.c.b16 %v6461, %v6460
        %v6559 = vpack.c.b16 %v6463, %v6462
        %v6560 = vpack.c.b16 %v6465, %v6464
        %v6561 = vpack.c.b16 %v6467, %v6466
        %v6562 = vpack.c.b16 %v6469, %v6468
        %v6563 = vpack.c.b16 %v6471, %v6470
        %v6564 = vpack.c.b16 %v6473, %v6472
        %v6565 = vpack.c.b16 %v6475, %v6474
        %v6566 = vpack.c.b16 %v6477, %v6476
        %v6567 = vpack.c.b16 %v6479, %v6478
        %v6568 = vpack.c.b16 %v6481, %v6480
        %v6569 = vpack.c.b16 %v6483, %v6482
        %v6570 = vpack.c.b16 %v6485, %v6484
        %v6571 = vpack.c.b16 %v6487, %v6486
        %v6572 = vpack.c.b16 %v6489, %v6488
        %v6573 = vpack.c.b16 %v6491, %v6490
        %v6574 = vpack.c.b16 %v6493, %v6492
        %v6575 = vpack.c.b16 %v6495, %v6494
        %v6576 = vpack.c.b16 %v6497, %v6496
        %v6577 = vpack.c.b16 %v6499, %v6498
        %v6578 = vpack.c.b16 %v6501, %v6500
        %v6579 = vpack.c.b16 %v6503, %v6502
        %v6580 = vpack.c.b16 %v6505, %v6504
        %v6581 = vpack.c.b16 %v6507, %v6506
        %v6582 = vpack.c.b16 %v6509, %v6508
        %v6583 = vpack.c.b16 %v6511, %v6510
        %6656 = vmatprep.subr.bf16.mxu0 0
        %6657 = vmatpush1.bf16.msra.mxu0 %v6519
        %6658 = vmatprep.subr.bf16.mxu0 0
        %6659 = vmatpush1.bf16.msra.mxu0 %v6518
        %6660 = vmatprep.subr.bf16.mxu0 0
        %6661 = vmatpush1.bf16.msra.mxu0 %v6517
        %6662 = vmatprep.subr.bf16.mxu0 0
        %6663 = vmatpush1.bf16.msra.mxu0 %v6516
        %6664 = vmatprep.subr.bf16.mxu0 0
        %6665 = vmatpush1.bf16.msra.mxu0 %v6515
        %6666 = vmatprep.subr.bf16.mxu0 0
        %6667 = vmatpush1.bf16.msra.mxu0 %v6514
        %6668 = vmatprep.subr.bf16.mxu0 0
        %6669 = vmatpush1.bf16.msra.mxu0 %v6513
        %6670 = vmatprep.subr.bf16.mxu0 0
        %6671 = vmatpush1.bf16.msra.mxu0 %v6512
        %6672 = vmatprep.subr.bf16.mxu0 0
        %6673 = vmatpush2.bf16.msra.mxu0 %v6527
        %6674 = vmatprep.subr.bf16.mxu0 0
        %6675 = vmatpush2.bf16.msra.mxu0 %v6526
        %6676 = vmatprep.subr.bf16.mxu0 0
        %6677 = vmatpush2.bf16.msra.mxu0 %v6525
        %6678 = vmatprep.subr.bf16.mxu0 0
        %6679 = vmatpush2.bf16.msra.mxu0 %v6524
        %6680 = vmatprep.subr.bf16.mxu0 0
        %6681 = vmatpush2.bf16.msra.mxu0 %v6523
        %6682 = vmatprep.subr.bf16.mxu0 0
        %6683 = vmatpush2.bf16.msra.mxu0 %v6522
        %6684 = vmatprep.subr.bf16.mxu0 0
        %6685 = vmatpush2.bf16.msra.mxu0 %v6521
        %6686 = vmatprep.subr.bf16.mxu0 0
        %6687 = vmatpush2.bf16.msra.mxu0 %v6520
        %6688 = vmatprep.mubr.bf16.mxu0 %v5937
        %6689 = vmatmul.mubr.bf16.gmra.mxu0 %v5936
        %v6690 = vpop.f32.mrf.mxu0
        %v6691 = vadd.f32 0.0, %v6690
        %v6692 = vpop.f32.mrf.mxu0
        %v6693 = vpop.f32.mrf.mxu0
        %v6694 = vadd.f32 0.0, %v6693
        %v6695 = vpop.f32.mrf.mxu0
        %6696 = vmatprep.mubr.bf16.mxu0 %v5946
        %6697 = vmatmul.mubr.bf16.gmra.mxu0 %v5945
        %v6698 = vpop.f32.mrf.mxu0
        %v6699 = vadd.f32 0.0, %v6698
        %v6700 = vpop.f32.mrf.mxu0
        %v6701 = vpop.f32.mrf.mxu0
        %v6702 = vadd.f32 0.0, %v6701
        %v6703 = vpop.f32.mrf.mxu0
        %6704 = vmatprep.mubr.bf16.mxu0 %v5955
        %6705 = vmatmul.mubr.bf16.gmra.mxu0 %v5954
        %v6706 = vpop.f32.mrf.mxu0
        %v6707 = vadd.f32 0.0, %v6706
        %v6708 = vpop.f32.mrf.mxu0
        %v6709 = vpop.f32.mrf.mxu0
        %v6710 = vadd.f32 0.0, %v6709
        %v6711 = vpop.f32.mrf.mxu0
        %6712 = vmatprep.mubr.bf16.mxu0 %v5964
        %6713 = vmatmul.mubr.bf16.gmra.mxu0 %v5963
        %v6714 = vpop.f32.mrf.mxu0
        %v6715 = vadd.f32 0.0, %v6714
        %v6716 = vpop.f32.mrf.mxu0
        %v6717 = vpop.f32.mrf.mxu0
        %v6718 = vadd.f32 0.0, %v6717
        %v6719 = vpop.f32.mrf.mxu0
        %6720 = vmatprep.mubr.bf16.mxu0 %v5973
        %6721 = vmatmul.mubr.bf16.gmra.mxu0 %v5972
        %v6722 = vpop.f32.mrf.mxu0
        %v6723 = vadd.f32 0.0, %v6722
        %v6724 = vpop.f32.mrf.mxu0
        %v6725 = vpop.f32.mrf.mxu0
        %v6726 = vadd.f32 0.0, %v6725
        %v6727 = vpop.f32.mrf.mxu0
        %6728 = vmatprep.mubr.bf16.mxu0 %v5982
        %6729 = vmatmul.mubr.bf16.gmra.mxu0 %v5981
        %v6730 = vpop.f32.mrf.mxu0
        %v6731 = vadd.f32 0.0, %v6730
        %v6732 = vpop.f32.mrf.mxu0
        %v6733 = vpop.f32.mrf.mxu0
        %v6734 = vadd.f32 0.0, %v6733
        %v6735 = vpop.f32.mrf.mxu0
        %6736 = vmatprep.mubr.bf16.mxu0 %v5991
        %6737 = vmatmul.mubr.bf16.gmra.mxu0 %v5990
        %v6738 = vpop.f32.mrf.mxu0
        %v6739 = vadd.f32 0.0, %v6738
        %v6740 = vpop.f32.mrf.mxu0
        %v6741 = vpop.f32.mrf.mxu0
        %v6742 = vadd.f32 0.0, %v6741
        %v6743 = vpop.f32.mrf.mxu0
        %6744 = vmatprep.mubr.bf16.mxu0 %v6000
        %6745 = vmatmul.mubr.bf16.gmra.mxu0 %v5999
        %v6746 = vpop.f32.mrf.mxu0
        %v6747 = vadd.f32 0.0, %v6746
        %v6748 = vpop.f32.mrf.mxu0
        %v6749 = vpop.f32.mrf.mxu0
        %v6750 = vadd.f32 0.0, %v6749
        %v6751 = vpop.f32.mrf.mxu0
        %6752 = vmatprep.mubr.bf16.mxu0 %v6009
        %6753 = vmatmul.mubr.bf16.gmra.mxu0 %v6008
        %v6754 = vpop.f32.mrf.mxu0
        %v6755 = vadd.f32 0.0, %v6754
        %v6756 = vpop.f32.mrf.mxu0
        %v6757 = vpop.f32.mrf.mxu0
        %v6758 = vadd.f32 0.0, %v6757
        %v6759 = vpop.f32.mrf.mxu0
        %6760 = vmatprep.mubr.bf16.mxu0 %v6018
        %6761 = vmatmul.mubr.bf16.gmra.mxu0 %v6017
        %v6762 = vpop.f32.mrf.mxu0
        %v6763 = vadd.f32 0.0, %v6762
        %v6764 = vpop.f32.mrf.mxu0
        %v6765 = vpop.f32.mrf.mxu0
        %v6766 = vadd.f32 0.0, %v6765
        %v6767 = vpop.f32.mrf.mxu0
        %6768 = vmatprep.mubr.bf16.mxu0 %v6027
        %6769 = vmatmul.mubr.bf16.gmra.mxu0 %v6026
        %v6770 = vpop.f32.mrf.mxu0
        %v6771 = vadd.f32 0.0, %v6770
        %v6772 = vpop.f32.mrf.mxu0
        %v6773 = vpop.f32.mrf.mxu0
        %v6774 = vadd.f32 0.0, %v6773
        %v6775 = vpop.f32.mrf.mxu0
        %6776 = vmatprep.mubr.bf16.mxu0 %v6036
        %6777 = vmatmul.mubr.bf16.gmra.mxu0 %v6035
        %v6778 = vpop.f32.mrf.mxu0
        %v6779 = vadd.f32 0.0, %v6778
        %v6780 = vpop.f32.mrf.mxu0
        %v6781 = vpop.f32.mrf.mxu0
        %v6782 = vadd.f32 0.0, %v6781
        %v6783 = vpop.f32.mrf.mxu0
        %6784 = vmatprep.mubr.bf16.mxu0 %v6045
        %6785 = vmatmul.mubr.bf16.gmra.mxu0 %v6044
        %v6786 = vpop.f32.mrf.mxu0
        %v6787 = vadd.f32 0.0, %v6786
        %v6788 = vpop.f32.mrf.mxu0
        %v6789 = vpop.f32.mrf.mxu0
        %v6790 = vadd.f32 0.0, %v6789
        %v6791 = vpop.f32.mrf.mxu0
        %6792 = vmatprep.mubr.bf16.mxu0 %v6054
        %6793 = vmatmul.mubr.bf16.gmra.mxu0 %v6053
        %v6794 = vpop.f32.mrf.mxu0
        %v6795 = vadd.f32 0.0, %v6794
        %v6796 = vpop.f32.mrf.mxu0
        %v6797 = vpop.f32.mrf.mxu0
        %v6798 = vadd.f32 0.0, %v6797
        %v6799 = vpop.f32.mrf.mxu0
        %6800 = vmatprep.mubr.bf16.mxu0 %v6063
        %6801 = vmatmul.mubr.bf16.gmra.mxu0 %v6062
        %v6802 = vpop.f32.mrf.mxu0
        %v6803 = vadd.f32 0.0, %v6802
        %v6804 = vpop.f32.mrf.mxu0
        %v6805 = vpop.f32.mrf.mxu0
        %v6806 = vadd.f32 0.0, %v6805
        %v6807 = vpop.f32.mrf.mxu0
        %6808 = vmatprep.mubr.bf16.mxu0 %v6072
        %6809 = vmatmul.mubr.bf16.gmra.mxu0 %v6071
        %v6810 = vpop.f32.mrf.mxu0
        %v6811 = vadd.f32 0.0, %v6810
        %v6812 = vpop.f32.mrf.mxu0
        %v6813 = vpop.f32.mrf.mxu0
        %v6814 = vadd.f32 0.0, %v6813
        %v6815 = vpop.f32.mrf.mxu0
        %6816 = vdwg.mxu0
        %6817 = vmatprep.subr.bf16.mxu0 0
        %6818 = vmatpush1.bf16.msra.mxu0 %v6535
        %6819 = vmatprep.subr.bf16.mxu0 0
        %6820 = vmatpush1.bf16.msra.mxu0 %v6534
        %6821 = vmatprep.subr.bf16.mxu0 0
        %6822 = vmatpush1.bf16.msra.mxu0 %v6533
        %6823 = vmatprep.subr.bf16.mxu0 0
        %6824 = vmatpush1.bf16.msra.mxu0 %v6532
        %6825 = vmatprep.subr.bf16.mxu0 0
        %6826 = vmatpush1.bf16.msra.mxu0 %v6531
        %6827 = vmatprep.subr.bf16.mxu0 0
        %6828 = vmatpush1.bf16.msra.mxu0 %v6530
        %6829 = vmatprep.subr.bf16.mxu0 0
        %6830 = vmatpush1.bf16.msra.mxu0 %v6529
        %6831 = vmatprep.subr.bf16.mxu0 0
        %6832 = vmatpush1.bf16.msra.mxu0 %v6528
        %6833 = vmatprep.subr.bf16.mxu0 0
        %6834 = vmatpush2.bf16.msra.mxu0 %v6543
        %6835 = vmatprep.subr.bf16.mxu0 0
        %6836 = vmatpush2.bf16.msra.mxu0 %v6542
        %6837 = vmatprep.subr.bf16.mxu0 0
        %6838 = vmatpush2.bf16.msra.mxu0 %v6541
        %6839 = vmatprep.subr.bf16.mxu0 0
        %6840 = vmatpush2.bf16.msra.mxu0 %v6540
        %6841 = vmatprep.subr.bf16.mxu0 0
        %6842 = vmatpush2.bf16.msra.mxu0 %v6539
        %6843 = vmatprep.subr.bf16.mxu0 0
        %6844 = vmatpush2.bf16.msra.mxu0 %v6538
        %6845 = vmatprep.subr.bf16.mxu0 0
        %6846 = vmatpush2.bf16.msra.mxu0 %v6537
        %6847 = vmatprep.subr.bf16.mxu0 0
        %6848 = vmatpush2.bf16.msra.mxu0 %v6536
        %6849 = vmatprep.mubr.bf16.mxu0 %v5939
        %6850 = vmatmul.mubr.bf16.gmra.mxu0 %v5938
        %v6851 = vpop.f32.mrf.mxu0
        %v6852 = vadd.f32 %v6691, %v6851
        %v6853 = vpop.f32.mrf.mxu0
        %v6854 = vpop.f32.mrf.mxu0
        %v6855 = vadd.f32 %v6694, %v6854
        %v6856 = vpop.f32.mrf.mxu0
        %6857 = vmatprep.mubr.bf16.mxu0 %v5948
        %6858 = vmatmul.mubr.bf16.gmra.mxu0 %v5947
        %v6859 = vpop.f32.mrf.mxu0
        %v6860 = vadd.f32 %v6699, %v6859
        %v6861 = vpop.f32.mrf.mxu0
        %v6862 = vpop.f32.mrf.mxu0
        %v6863 = vadd.f32 %v6702, %v6862
        %v6864 = vpop.f32.mrf.mxu0
        %6865 = vmatprep.mubr.bf16.mxu0 %v5957
        %6866 = vmatmul.mubr.bf16.gmra.mxu0 %v5956
        %v6867 = vpop.f32.mrf.mxu0
        %v6868 = vadd.f32 %v6707, %v6867
        %v6869 = vpop.f32.mrf.mxu0
        %v6870 = vpop.f32.mrf.mxu0
        %v6871 = vadd.f32 %v6710, %v6870
        %v6872 = vpop.f32.mrf.mxu0
        %6873 = vmatprep.mubr.bf16.mxu0 %v5966
        %6874 = vmatmul.mubr.bf16.gmra.mxu0 %v5965
        %v6875 = vpop.f32.mrf.mxu0
        %v6876 = vadd.f32 %v6715, %v6875
        %v6877 = vpop.f32.mrf.mxu0
        %v6878 = vpop.f32.mrf.mxu0
        %v6879 = vadd.f32 %v6718, %v6878
        %v6880 = vpop.f32.mrf.mxu0
        %6881 = vmatprep.mubr.bf16.mxu0 %v5975
        %6882 = vmatmul.mubr.bf16.gmra.mxu0 %v5974
        %v6883 = vpop.f32.mrf.mxu0
        %v6884 = vadd.f32 %v6723, %v6883
        %v6885 = vpop.f32.mrf.mxu0
        %v6886 = vpop.f32.mrf.mxu0
        %v6887 = vadd.f32 %v6726, %v6886
        %v6888 = vpop.f32.mrf.mxu0
        %6889 = vmatprep.mubr.bf16.mxu0 %v5984
        %6890 = vmatmul.mubr.bf16.gmra.mxu0 %v5983
        %v6891 = vpop.f32.mrf.mxu0
        %v6892 = vadd.f32 %v6731, %v6891
        %v6893 = vpop.f32.mrf.mxu0
        %v6894 = vpop.f32.mrf.mxu0
        %v6895 = vadd.f32 %v6734, %v6894
        %v6896 = vpop.f32.mrf.mxu0
        %6897 = vmatprep.mubr.bf16.mxu0 %v5993
        %6898 = vmatmul.mubr.bf16.gmra.mxu0 %v5992
        %v6899 = vpop.f32.mrf.mxu0
        %v6900 = vadd.f32 %v6739, %v6899
        %v6901 = vpop.f32.mrf.mxu0
        %v6902 = vpop.f32.mrf.mxu0
        %v6903 = vadd.f32 %v6742, %v6902
        %v6904 = vpop.f32.mrf.mxu0
        %6905 = vmatprep.mubr.bf16.mxu0 %v6002
        %6906 = vmatmul.mubr.bf16.gmra.mxu0 %v6001
        %v6907 = vpop.f32.mrf.mxu0
        %v6908 = vadd.f32 %v6747, %v6907
        %v6909 = vpop.f32.mrf.mxu0
        %v6910 = vpop.f32.mrf.mxu0
        %v6911 = vadd.f32 %v6750, %v6910
        %v6912 = vpop.f32.mrf.mxu0
        %6913 = vmatprep.mubr.bf16.mxu0 %v6011
        %6914 = vmatmul.mubr.bf16.gmra.mxu0 %v6010
        %v6915 = vpop.f32.mrf.mxu0
        %v6916 = vadd.f32 %v6755, %v6915
        %v6917 = vpop.f32.mrf.mxu0
        %v6918 = vpop.f32.mrf.mxu0
        %v6919 = vadd.f32 %v6758, %v6918
        %v6920 = vpop.f32.mrf.mxu0
        %6921 = vmatprep.mubr.bf16.mxu0 %v6020
        %6922 = vmatmul.mubr.bf16.gmra.mxu0 %v6019
        %v6923 = vpop.f32.mrf.mxu0
        %v6924 = vadd.f32 %v6763, %v6923
        %v6925 = vpop.f32.mrf.mxu0
        %v6926 = vpop.f32.mrf.mxu0
        %v6927 = vadd.f32 %v6766, %v6926
        %v6928 = vpop.f32.mrf.mxu0
        %6929 = vmatprep.mubr.bf16.mxu0 %v6029
        %6930 = vmatmul.mubr.bf16.gmra.mxu0 %v6028
        %v6931 = vpop.f32.mrf.mxu0
        %v6932 = vadd.f32 %v6771, %v6931
        %v6933 = vpop.f32.mrf.mxu0
        %v6934 = vpop.f32.mrf.mxu0
        %v6935 = vadd.f32 %v6774, %v6934
        %v6936 = vpop.f32.mrf.mxu0
        %6937 = vmatprep.mubr.bf16.mxu0 %v6038
        %6938 = vmatmul.mubr.bf16.gmra.mxu0 %v6037
        %v6939 = vpop.f32.mrf.mxu0
        %v6940 = vadd.f32 %v6779, %v6939
        %v6941 = vpop.f32.mrf.mxu0
        %v6942 = vpop.f32.mrf.mxu0
        %v6943 = vadd.f32 %v6782, %v6942
        %v6944 = vpop.f32.mrf.mxu0
        %6945 = vmatprep.mubr.bf16.mxu0 %v6047
        %6946 = vmatmul.mubr.bf16.gmra.mxu0 %v6046
        %v6947 = vpop.f32.mrf.mxu0
        %v6948 = vadd.f32 %v6787, %v6947
        %v6949 = vpop.f32.mrf.mxu0
        %v6950 = vpop.f32.mrf.mxu0
        %v6951 = vadd.f32 %v6790, %v6950
        %v6952 = vpop.f32.mrf.mxu0
        %6953 = vmatprep.mubr.bf16.mxu0 %v6056
        %6954 = vmatmul.mubr.bf16.gmra.mxu0 %v6055
        %v6955 = vpop.f32.mrf.mxu0
        %v6956 = vadd.f32 %v6795, %v6955
        %v6957 = vpop.f32.mrf.mxu0
        %v6958 = vpop.f32.mrf.mxu0
        %v6959 = vadd.f32 %v6798, %v6958
        %v6960 = vpop.f32.mrf.mxu0
        %6961 = vmatprep.mubr.bf16.mxu0 %v6065
        %6962 = vmatmul.mubr.bf16.gmra.mxu0 %v6064
        %v6963 = vpop.f32.mrf.mxu0
        %v6964 = vadd.f32 %v6803, %v6963
        %v6965 = vpop.f32.mrf.mxu0
        %v6966 = vpop.f32.mrf.mxu0
        %v6967 = vadd.f32 %v6806, %v6966
        %v6968 = vpop.f32.mrf.mxu0
        %6969 = vmatprep.mubr.bf16.mxu0 %v6074
        %6970 = vmatmul.mubr.bf16.gmra.mxu0 %v6073
        %v6971 = vpop.f32.mrf.mxu0
        %v6972 = vadd.f32 %v6811, %v6971
        %v6973 = vpop.f32.mrf.mxu0
        %v6974 = vpop.f32.mrf.mxu0
        %v6975 = vadd.f32 %v6814, %v6974
        %v6976 = vpop.f32.mrf.mxu0
        %6977 = vdwg.mxu0
        %6978 = vmatprep.subr.bf16.mxu0 0
        %6979 = vmatpush1.bf16.msra.mxu0 %v6551
        %6980 = vmatprep.subr.bf16.mxu0 0
        %6981 = vmatpush1.bf16.msra.mxu0 %v6550
        %6982 = vmatprep.subr.bf16.mxu0 0
        %6983 = vmatpush1.bf16.msra.mxu0 %v6549
        %6984 = vmatprep.subr.bf16.mxu0 0
        %6985 = vmatpush1.bf16.msra.mxu0 %v6548
        %6986 = vmatprep.subr.bf16.mxu0 0
        %6987 = vmatpush1.bf16.msra.mxu0 %v6547
        %6988 = vmatprep.subr.bf16.mxu0 0
        %6989 = vmatpush1.bf16.msra.mxu0 %v6546
        %6990 = vmatprep.subr.bf16.mxu0 0
        %6991 = vmatpush1.bf16.msra.mxu0 %v6545
        %6992 = vmatprep.subr.bf16.mxu0 0
        %6993 = vmatpush1.bf16.msra.mxu0 %v6544
        %6994 = vmatprep.subr.bf16.mxu0 0
        %6995 = vmatpush2.bf16.msra.mxu0 %v6559
        %6996 = vmatprep.subr.bf16.mxu0 0
        %6997 = vmatpush2.bf16.msra.mxu0 %v6558
        %6998 = vmatprep.subr.bf16.mxu0 0
        %6999 = vmatpush2.bf16.msra.mxu0 %v6557
        %7000 = vmatprep.subr.bf16.mxu0 0
        %7001 = vmatpush2.bf16.msra.mxu0 %v6556
        %7002 = vmatprep.subr.bf16.mxu0 0
        %7003 = vmatpush2.bf16.msra.mxu0 %v6555
        %7004 = vmatprep.subr.bf16.mxu0 0
        %7005 = vmatpush2.bf16.msra.mxu0 %v6554
        %7006 = vmatprep.subr.bf16.mxu0 0
        %7007 = vmatpush2.bf16.msra.mxu0 %v6553
        %7008 = vmatprep.subr.bf16.mxu0 0
        %7009 = vmatpush2.bf16.msra.mxu0 %v6552
        %7010 = vmatprep.mubr.bf16.mxu0 %v5941
        %7011 = vmatmul.mubr.bf16.gmra.mxu0 %v5940
        %v7012 = vpop.f32.mrf.mxu0
        %v7013 = vadd.f32 %v6852, %v7012
        %v7014 = vpop.f32.mrf.mxu0
        %v7015 = vpop.f32.mrf.mxu0
        %v7016 = vadd.f32 %v6855, %v7015
        %v7017 = vpop.f32.mrf.mxu0
        %7018 = vmatprep.mubr.bf16.mxu0 %v5950
        %7019 = vmatmul.mubr.bf16.gmra.mxu0 %v5949
        %v7020 = vpop.f32.mrf.mxu0
        %v7021 = vadd.f32 %v6860, %v7020
        %v7022 = vpop.f32.mrf.mxu0
        %v7023 = vpop.f32.mrf.mxu0
        %v7024 = vadd.f32 %v6863, %v7023
        %v7025 = vpop.f32.mrf.mxu0
        %7026 = vmatprep.mubr.bf16.mxu0 %v5959
        %7027 = vmatmul.mubr.bf16.gmra.mxu0 %v5958
        %v7028 = vpop.f32.mrf.mxu0
        %v7029 = vadd.f32 %v6868, %v7028
        %v7030 = vpop.f32.mrf.mxu0
        %v7031 = vpop.f32.mrf.mxu0
        %v7032 = vadd.f32 %v6871, %v7031
        %v7033 = vpop.f32.mrf.mxu0
        %7034 = vmatprep.mubr.bf16.mxu0 %v5968
        %7035 = vmatmul.mubr.bf16.gmra.mxu0 %v5967
        %v7036 = vpop.f32.mrf.mxu0
        %v7037 = vadd.f32 %v6876, %v7036
        %v7038 = vpop.f32.mrf.mxu0
        %v7039 = vpop.f32.mrf.mxu0
        %v7040 = vadd.f32 %v6879, %v7039
        %v7041 = vpop.f32.mrf.mxu0
        %7042 = vmatprep.mubr.bf16.mxu0 %v5977
        %7043 = vmatmul.mubr.bf16.gmra.mxu0 %v5976
        %v7044 = vpop.f32.mrf.mxu0
        %v7045 = vadd.f32 %v6884, %v7044
        %v7046 = vpop.f32.mrf.mxu0
        %v7047 = vpop.f32.mrf.mxu0
        %v7048 = vadd.f32 %v6887, %v7047
        %v7049 = vpop.f32.mrf.mxu0
        %7050 = vmatprep.mubr.bf16.mxu0 %v5986
        %7051 = vmatmul.mubr.bf16.gmra.mxu0 %v5985
        %v7052 = vpop.f32.mrf.mxu0
        %v7053 = vadd.f32 %v6892, %v7052
        %v7054 = vpop.f32.mrf.mxu0
        %v7055 = vpop.f32.mrf.mxu0
        %v7056 = vadd.f32 %v6895, %v7055
        %v7057 = vpop.f32.mrf.mxu0
        %7058 = vmatprep.mubr.bf16.mxu0 %v5995
        %7059 = vmatmul.mubr.bf16.gmra.mxu0 %v5994
        %v7060 = vpop.f32.mrf.mxu0
        %v7061 = vadd.f32 %v6900, %v7060
        %v7062 = vpop.f32.mrf.mxu0
        %v7063 = vpop.f32.mrf.mxu0
        %v7064 = vadd.f32 %v6903, %v7063
        %v7065 = vpop.f32.mrf.mxu0
        %7066 = vmatprep.mubr.bf16.mxu0 %v6004
        %7067 = vmatmul.mubr.bf16.gmra.mxu0 %v6003
        %v7068 = vpop.f32.mrf.mxu0
        %v7069 = vadd.f32 %v6908, %v7068
        %v7070 = vpop.f32.mrf.mxu0
        %v7071 = vpop.f32.mrf.mxu0
        %v7072 = vadd.f32 %v6911, %v7071
        %v7073 = vpop.f32.mrf.mxu0
        %7074 = vmatprep.mubr.bf16.mxu0 %v6013
        %7075 = vmatmul.mubr.bf16.gmra.mxu0 %v6012
        %v7076 = vpop.f32.mrf.mxu0
        %v7077 = vadd.f32 %v6916, %v7076
        %v7078 = vpop.f32.mrf.mxu0
        %v7079 = vpop.f32.mrf.mxu0
        %v7080 = vadd.f32 %v6919, %v7079
        %v7081 = vpop.f32.mrf.mxu0
        %7082 = vmatprep.mubr.bf16.mxu0 %v6022
        %7083 = vmatmul.mubr.bf16.gmra.mxu0 %v6021
        %v7084 = vpop.f32.mrf.mxu0
        %v7085 = vadd.f32 %v6924, %v7084
        %v7086 = vpop.f32.mrf.mxu0
        %v7087 = vpop.f32.mrf.mxu0
        %v7088 = vadd.f32 %v6927, %v7087
        %v7089 = vpop.f32.mrf.mxu0
        %7090 = vmatprep.mubr.bf16.mxu0 %v6031
        %7091 = vmatmul.mubr.bf16.gmra.mxu0 %v6030
        %v7092 = vpop.f32.mrf.mxu0
        %v7093 = vadd.f32 %v6932, %v7092
        %v7094 = vpop.f32.mrf.mxu0
        %v7095 = vpop.f32.mrf.mxu0
        %v7096 = vadd.f32 %v6935, %v7095
        %v7097 = vpop.f32.mrf.mxu0
        %7098 = vmatprep.mubr.bf16.mxu0 %v6040
        %7099 = vmatmul.mubr.bf16.gmra.mxu0 %v6039
        %v7100 = vpop.f32.mrf.mxu0
        %v7101 = vadd.f32 %v6940, %v7100
        %v7102 = vpop.f32.mrf.mxu0
        %v7103 = vpop.f32.mrf.mxu0
        %v7104 = vadd.f32 %v6943, %v7103
        %v7105 = vpop.f32.mrf.mxu0
        %7106 = vmatprep.mubr.bf16.mxu0 %v6049
        %7107 = vmatmul.mubr.bf16.gmra.mxu0 %v6048
        %v7108 = vpop.f32.mrf.mxu0
        %v7109 = vadd.f32 %v6948, %v7108
        %v7110 = vpop.f32.mrf.mxu0
        %v7111 = vpop.f32.mrf.mxu0
        %v7112 = vadd.f32 %v6951, %v7111
        %v7113 = vpop.f32.mrf.mxu0
        %7114 = vmatprep.mubr.bf16.mxu0 %v6058
        %7115 = vmatmul.mubr.bf16.gmra.mxu0 %v6057
        %v7116 = vpop.f32.mrf.mxu0
        %v7117 = vadd.f32 %v6956, %v7116
        %v7118 = vpop.f32.mrf.mxu0
        %v7119 = vpop.f32.mrf.mxu0
        %v7120 = vadd.f32 %v6959, %v7119
        %v7121 = vpop.f32.mrf.mxu0
        %7122 = vmatprep.mubr.bf16.mxu0 %v6067
        %7123 = vmatmul.mubr.bf16.gmra.mxu0 %v6066
        %v7124 = vpop.f32.mrf.mxu0
        %v7125 = vadd.f32 %v6964, %v7124
        %v7126 = vpop.f32.mrf.mxu0
        %v7127 = vpop.f32.mrf.mxu0
        %v7128 = vadd.f32 %v6967, %v7127
        %v7129 = vpop.f32.mrf.mxu0
        %7130 = vmatprep.mubr.bf16.mxu0 %v6076
        %7131 = vmatmul.mubr.bf16.gmra.mxu0 %v6075
        %v7132 = vpop.f32.mrf.mxu0
        %v7133 = vadd.f32 %v6972, %v7132
        %v7134 = vpop.f32.mrf.mxu0
        %v7135 = vpop.f32.mrf.mxu0
        %v7136 = vadd.f32 %v6975, %v7135
        %v7137 = vpop.f32.mrf.mxu0
        %7138 = vdwg.mxu0
        %7139 = vmatprep.subr.bf16.mxu0 0
        %7140 = vmatpush1.bf16.msra.mxu0 %v6567
        %7141 = vmatprep.subr.bf16.mxu0 0
        %7142 = vmatpush1.bf16.msra.mxu0 %v6566
        %7143 = vmatprep.subr.bf16.mxu0 0
        %7144 = vmatpush1.bf16.msra.mxu0 %v6565
        %7145 = vmatprep.subr.bf16.mxu0 0
        %7146 = vmatpush1.bf16.msra.mxu0 %v6564
        %7147 = vmatprep.subr.bf16.mxu0 0
        %7148 = vmatpush1.bf16.msra.mxu0 %v6563
        %7149 = vmatprep.subr.bf16.mxu0 0
        %7150 = vmatpush1.bf16.msra.mxu0 %v6562
        %7151 = vmatprep.subr.bf16.mxu0 0
        %7152 = vmatpush1.bf16.msra.mxu0 %v6561
        %7153 = vmatprep.subr.bf16.mxu0 0
        %7154 = vmatpush1.bf16.msra.mxu0 %v6560
        %7155 = vmatprep.subr.bf16.mxu0 0
        %7156 = vmatpush2.bf16.msra.mxu0 %v6575
        %7157 = vmatprep.subr.bf16.mxu0 0
        %7158 = vmatpush2.bf16.msra.mxu0 %v6574
        %7159 = vmatprep.subr.bf16.mxu0 0
        %7160 = vmatpush2.bf16.msra.mxu0 %v6573
        %7161 = vmatprep.subr.bf16.mxu0 0
        %7162 = vmatpush2.bf16.msra.mxu0 %v6572
        %7163 = vmatprep.subr.bf16.mxu0 0
        %7164 = vmatpush2.bf16.msra.mxu0 %v6571
        %7165 = vmatprep.subr.bf16.mxu0 0
        %7166 = vmatpush2.bf16.msra.mxu0 %v6570
        %7167 = vmatprep.subr.bf16.mxu0 0
        %7168 = vmatpush2.bf16.msra.mxu0 %v6569
        %7169 = vmatprep.subr.bf16.mxu0 0
        %7170 = vmatpush2.bf16.msra.mxu0 %v6568
        %7171 = vmatprep.mubr.bf16.mxu0 %v5943
        %7172 = vmatmul.mubr.bf16.gmra.mxu0 %v5942
        %v7173 = vpop.f32.mrf.mxu0
        %v7174 = vadd.f32 %v7013, %v7173
        %v7175 = vpop.f32.mrf.mxu0
        %v7176 = vpop.f32.mrf.mxu0
        %v7177 = vadd.f32 %v7016, %v7176
        %v7178 = vpop.f32.mrf.mxu0
        %7179 = vmatprep.mubr.bf16.mxu0 %v5952
        %7180 = vmatmul.mubr.bf16.gmra.mxu0 %v5951
        %v7181 = vpop.f32.mrf.mxu0
        %v7182 = vadd.f32 %v7021, %v7181
        %v7183 = vpop.f32.mrf.mxu0
        %v7184 = vpop.f32.mrf.mxu0
        %v7185 = vadd.f32 %v7024, %v7184
        %v7186 = vpop.f32.mrf.mxu0
        %7187 = vmatprep.mubr.bf16.mxu0 %v5961
        %7188 = vmatmul.mubr.bf16.gmra.mxu0 %v5960
        %v7189 = vpop.f32.mrf.mxu0
        %v7190 = vadd.f32 %v7029, %v7189
        %v7191 = vpop.f32.mrf.mxu0
        %v7192 = vpop.f32.mrf.mxu0
        %v7193 = vadd.f32 %v7032, %v7192
        %v7194 = vpop.f32.mrf.mxu0
        %7195 = vmatprep.mubr.bf16.mxu0 %v5970
        %7196 = vmatmul.mubr.bf16.gmra.mxu0 %v5969
        %v7197 = vpop.f32.mrf.mxu0
        %v7198 = vadd.f32 %v7037, %v7197
        %v7199 = vpop.f32.mrf.mxu0
        %v7200 = vpop.f32.mrf.mxu0
        %v7201 = vadd.f32 %v7040, %v7200
        %v7202 = vpop.f32.mrf.mxu0
        %7203 = vmatprep.mubr.bf16.mxu0 %v5979
        %7204 = vmatmul.mubr.bf16.gmra.mxu0 %v5978
        %v7205 = vpop.f32.mrf.mxu0
        %v7206 = vadd.f32 %v7045, %v7205
        %v7207 = vpop.f32.mrf.mxu0
        %v7208 = vpop.f32.mrf.mxu0
        %v7209 = vadd.f32 %v7048, %v7208
        %v7210 = vpop.f32.mrf.mxu0
        %7211 = vmatprep.mubr.bf16.mxu0 %v5988
        %7212 = vmatmul.mubr.bf16.gmra.mxu0 %v5987
        %v7213 = vpop.f32.mrf.mxu0
        %v7214 = vadd.f32 %v7053, %v7213
        %v7215 = vpop.f32.mrf.mxu0
        %v7216 = vpop.f32.mrf.mxu0
        %v7217 = vadd.f32 %v7056, %v7216
        %v7218 = vpop.f32.mrf.mxu0
        %7219 = vmatprep.mubr.bf16.mxu0 %v5997
        %7220 = vmatmul.mubr.bf16.gmra.mxu0 %v5996
        %v7221 = vpop.f32.mrf.mxu0
        %v7222 = vadd.f32 %v7061, %v7221
        %v7223 = vpop.f32.mrf.mxu0
        %v7224 = vpop.f32.mrf.mxu0
        %v7225 = vadd.f32 %v7064, %v7224
        %v7226 = vpop.f32.mrf.mxu0
        %7227 = vmatprep.mubr.bf16.mxu0 %v6006
        %7228 = vmatmul.mubr.bf16.gmra.mxu0 %v6005
        %v7229 = vpop.f32.mrf.mxu0
        %v7230 = vadd.f32 %v7069, %v7229
        %v7231 = vpop.f32.mrf.mxu0
        %v7232 = vpop.f32.mrf.mxu0
        %v7233 = vadd.f32 %v7072, %v7232
        %v7234 = vpop.f32.mrf.mxu0
        %7235 = vmatprep.mubr.bf16.mxu0 %v6015
        %7236 = vmatmul.mubr.bf16.gmra.mxu0 %v6014
        %v7237 = vpop.f32.mrf.mxu0
        %v7238 = vadd.f32 %v7077, %v7237
        %v7239 = vpop.f32.mrf.mxu0
        %v7240 = vpop.f32.mrf.mxu0
        %v7241 = vadd.f32 %v7080, %v7240
        %v7242 = vpop.f32.mrf.mxu0
        %7243 = vmatprep.mubr.bf16.mxu0 %v6024
        %7244 = vmatmul.mubr.bf16.gmra.mxu0 %v6023
        %v7245 = vpop.f32.mrf.mxu0
        %v7246 = vadd.f32 %v7085, %v7245
        %v7247 = vpop.f32.mrf.mxu0
        %v7248 = vpop.f32.mrf.mxu0
        %v7249 = vadd.f32 %v7088, %v7248
        %v7250 = vpop.f32.mrf.mxu0
        %7251 = vmatprep.mubr.bf16.mxu0 %v6033
        %7252 = vmatmul.mubr.bf16.gmra.mxu0 %v6032
        %v7253 = vpop.f32.mrf.mxu0
        %v7254 = vadd.f32 %v7093, %v7253
        %v7255 = vpop.f32.mrf.mxu0
        %v7256 = vpop.f32.mrf.mxu0
        %v7257 = vadd.f32 %v7096, %v7256
        %v7258 = vpop.f32.mrf.mxu0
        %7259 = vmatprep.mubr.bf16.mxu0 %v6042
        %7260 = vmatmul.mubr.bf16.gmra.mxu0 %v6041
        %v7261 = vpop.f32.mrf.mxu0
        %v7262 = vadd.f32 %v7101, %v7261
        %v7263 = vpop.f32.mrf.mxu0
        %v7264 = vpop.f32.mrf.mxu0
        %v7265 = vadd.f32 %v7104, %v7264
        %v7266 = vpop.f32.mrf.mxu0
        %7267 = vmatprep.mubr.bf16.mxu0 %v6051
        %7268 = vmatmul.mubr.bf16.gmra.mxu0 %v6050
        %v7269 = vpop.f32.mrf.mxu0
        %v7270 = vadd.f32 %v7109, %v7269
        %v7271 = vpop.f32.mrf.mxu0
        %v7272 = vpop.f32.mrf.mxu0
        %v7273 = vadd.f32 %v7112, %v7272
        %v7274 = vpop.f32.mrf.mxu0
        %7275 = vmatprep.mubr.bf16.mxu0 %v6060
        %7276 = vmatmul.mubr.bf16.gmra.mxu0 %v6059
        %v7277 = vpop.f32.mrf.mxu0
        %v7278 = vadd.f32 %v7117, %v7277
        %v7279 = vpop.f32.mrf.mxu0
        %v7280 = vpop.f32.mrf.mxu0
        %v7281 = vadd.f32 %v7120, %v7280
        %v7282 = vpop.f32.mrf.mxu0
        %7283 = vmatprep.mubr.bf16.mxu0 %v6069
        %7284 = vmatmul.mubr.bf16.gmra.mxu0 %v6068
        %v7285 = vpop.f32.mrf.mxu0
        %v7286 = vadd.f32 %v7125, %v7285
        %v7287 = vpop.f32.mrf.mxu0
        %v7288 = vpop.f32.mrf.mxu0
        %v7289 = vadd.f32 %v7128, %v7288
        %v7290 = vpop.f32.mrf.mxu0
        %7291 = vmatprep.mubr.bf16.mxu0 %v6078
        %7292 = vmatmul.mubr.bf16.gmra.mxu0 %v6077
        %v7293 = vpop.f32.mrf.mxu0
        %v7294 = vadd.f32 %v7133, %v7293
        %v7295 = vpop.f32.mrf.mxu0
        %v7296 = vpop.f32.mrf.mxu0
        %v7297 = vadd.f32 %v7136, %v7296
        %v7298 = vpop.f32.mrf.mxu0
        %7299 = vdwg.mxu0
        %7300 = vmatprep.subr.bf16.mxu0 0
        %7301 = vmatpush1.bf16.msra.mxu0 %v6583
        %7302 = vmatprep.subr.bf16.mxu0 0
        %7303 = vmatpush1.bf16.msra.mxu0 %v6582
        %7304 = vmatprep.subr.bf16.mxu0 0
        %7305 = vmatpush1.bf16.msra.mxu0 %v6581
        %7306 = vmatprep.subr.bf16.mxu0 0
        %7307 = vmatpush1.bf16.msra.mxu0 %v6580
        %7308 = vmatprep.subr.bf16.mxu0 0
        %7309 = vmatpush1.bf16.msra.mxu0 %v6579
        %7310 = vmatprep.subr.bf16.mxu0 0
        %7311 = vmatpush1.bf16.msra.mxu0 %v6578
        %7312 = vmatprep.subr.bf16.mxu0 0
        %7313 = vmatpush1.bf16.msra.mxu0 %v6577
        %7314 = vmatprep.subr.bf16.mxu0 0
        %7315 = vmatpush1.bf16.msra.mxu0 %v6576
        %7316 = vmatprep.subr.bf16.mxu0 0
        %7317 = vmatpush2.bf16.msra.mxu0 0
        %7318 = vmatprep.subr.bf16.mxu0 0
        %7319 = vmatpush2.bf16.msra.mxu0 0
        %7320 = vmatprep.subr.bf16.mxu0 0
        %7321 = vmatpush2.bf16.msra.mxu0 0
        %7322 = vmatprep.subr.bf16.mxu0 0
        %7323 = vmatpush2.bf16.msra.mxu0 0
        %7324 = vmatprep.subr.bf16.mxu0 0
        %7325 = vmatpush2.bf16.msra.mxu0 0
        %7326 = vmatprep.subr.bf16.mxu0 0
        %7327 = vmatpush2.bf16.msra.mxu0 0
        %7328 = vmatprep.subr.bf16.mxu0 0
        %7329 = vmatpush2.bf16.msra.mxu0 0
        %7330 = vmatprep.subr.bf16.mxu0 0
        %7331 = vmatpush2.bf16.msra.mxu0 0
        %7332 = vmatprep.mubr.bf16.mxu0 0
        %7333 = vmatmul.mubr.bf16.gmra.mxu0 %v5944
        %v7334 = vpop.f32.mrf.mxu0
        %v7335 = vadd.f32 %v7174, %v7334
        %v7336 = vpop.f32.mrf.mxu0
        %v7337 = vpop.f32.mrf.mxu0
        %v7338 = vadd.f32 %v7177, %v7337
        %v7339 = vpop.f32.mrf.mxu0
        %7340 = vmatprep.mubr.bf16.mxu0 0
        %7341 = vmatmul.mubr.bf16.gmra.mxu0 %v5953
        %v7342 = vpop.f32.mrf.mxu0
        %v7343 = vadd.f32 %v7182, %v7342
        %v7344 = vpop.f32.mrf.mxu0
        %v7345 = vpop.f32.mrf.mxu0
        %v7346 = vadd.f32 %v7185, %v7345
        %v7347 = vpop.f32.mrf.mxu0
        %7348 = vmatprep.mubr.bf16.mxu0 0
        %7349 = vmatmul.mubr.bf16.gmra.mxu0 %v5962
        %v7350 = vpop.f32.mrf.mxu0
        %v7351 = vadd.f32 %v7190, %v7350
        %v7352 = vpop.f32.mrf.mxu0
        %v7353 = vpop.f32.mrf.mxu0
        %v7354 = vadd.f32 %v7193, %v7353
        %v7355 = vpop.f32.mrf.mxu0
        %7356 = vmatprep.mubr.bf16.mxu0 0
        %7357 = vmatmul.mubr.bf16.gmra.mxu0 %v5971
        %v7358 = vpop.f32.mrf.mxu0
        %v7359 = vadd.f32 %v7198, %v7358
        %v7360 = vpop.f32.mrf.mxu0
        %v7361 = vpop.f32.mrf.mxu0
        %v7362 = vadd.f32 %v7201, %v7361
        %v7363 = vpop.f32.mrf.mxu0
        %7364 = vmatprep.mubr.bf16.mxu0 0
        %7365 = vmatmul.mubr.bf16.gmra.mxu0 %v5980
        %v7366 = vpop.f32.mrf.mxu0
        %v7367 = vadd.f32 %v7206, %v7366
        %v7368 = vpop.f32.mrf.mxu0
        %v7369 = vpop.f32.mrf.mxu0
        %v7370 = vadd.f32 %v7209, %v7369
        %v7371 = vpop.f32.mrf.mxu0
        %7372 = vmatprep.mubr.bf16.mxu0 0
        %7373 = vmatmul.mubr.bf16.gmra.mxu0 %v5989
        %v7374 = vpop.f32.mrf.mxu0
        %v7375 = vadd.f32 %v7214, %v7374
        %v7376 = vpop.f32.mrf.mxu0
        %v7377 = vpop.f32.mrf.mxu0
        %v7378 = vadd.f32 %v7217, %v7377
        %v7379 = vpop.f32.mrf.mxu0
        %7380 = vmatprep.mubr.bf16.mxu0 0
        %7381 = vmatmul.mubr.bf16.gmra.mxu0 %v5998
        %v7382 = vpop.f32.mrf.mxu0
        %v7383 = vadd.f32 %v7222, %v7382
        %v7384 = vpop.f32.mrf.mxu0
        %v7385 = vpop.f32.mrf.mxu0
        %v7386 = vadd.f32 %v7225, %v7385
        %v7387 = vpop.f32.mrf.mxu0
        %7388 = vmatprep.mubr.bf16.mxu0 0
        %7389 = vmatmul.mubr.bf16.gmra.mxu0 %v6007
        %v7390 = vpop.f32.mrf.mxu0
        %v7391 = vadd.f32 %v7230, %v7390
        %v7392 = vpop.f32.mrf.mxu0
        %v7393 = vpop.f32.mrf.mxu0
        %v7394 = vadd.f32 %v7233, %v7393
        %v7395 = vpop.f32.mrf.mxu0
        %7396 = vmatprep.mubr.bf16.mxu0 0
        %7397 = vmatmul.mubr.bf16.gmra.mxu0 %v6016
        %v7398 = vpop.f32.mrf.mxu0
        %v7399 = vadd.f32 %v7238, %v7398
        %v7400 = vpop.f32.mrf.mxu0
        %v7401 = vpop.f32.mrf.mxu0
        %v7402 = vadd.f32 %v7241, %v7401
        %v7403 = vpop.f32.mrf.mxu0
        %7404 = vmatprep.mubr.bf16.mxu0 0
        %7405 = vmatmul.mubr.bf16.gmra.mxu0 %v6025
        %v7406 = vpop.f32.mrf.mxu0
        %v7407 = vadd.f32 %v7246, %v7406
        %v7408 = vpop.f32.mrf.mxu0
        %v7409 = vpop.f32.mrf.mxu0
        %v7410 = vadd.f32 %v7249, %v7409
        %v7411 = vpop.f32.mrf.mxu0
        %7412 = vmatprep.mubr.bf16.mxu0 0
        %7413 = vmatmul.mubr.bf16.gmra.mxu0 %v6034
        %v7414 = vpop.f32.mrf.mxu0
        %v7415 = vadd.f32 %v7254, %v7414
        %v7416 = vpop.f32.mrf.mxu0
        %v7417 = vpop.f32.mrf.mxu0
        %v7418 = vadd.f32 %v7257, %v7417
        %v7419 = vpop.f32.mrf.mxu0
        %7420 = vmatprep.mubr.bf16.mxu0 0
        %7421 = vmatmul.mubr.bf16.gmra.mxu0 %v6043
        %v7422 = vpop.f32.mrf.mxu0
        %v7423 = vadd.f32 %v7262, %v7422
        %v7424 = vpop.f32.mrf.mxu0
        %v7425 = vpop.f32.mrf.mxu0
        %v7426 = vadd.f32 %v7265, %v7425
        %v7427 = vpop.f32.mrf.mxu0
        %7428 = vmatprep.mubr.bf16.mxu0 0
        %7429 = vmatmul.mubr.bf16.gmra.mxu0 %v6052
        %v7430 = vpop.f32.mrf.mxu0
        %v7431 = vadd.f32 %v7270, %v7430
        %v7432 = vpop.f32.mrf.mxu0
        %v7433 = vpop.f32.mrf.mxu0
        %v7434 = vadd.f32 %v7273, %v7433
        %v7435 = vpop.f32.mrf.mxu0
        %7436 = vmatprep.mubr.bf16.mxu0 0
        %7437 = vmatmul.mubr.bf16.gmra.mxu0 %v6061
        %v7438 = vpop.f32.mrf.mxu0
        %v7439 = vadd.f32 %v7278, %v7438
        %v7440 = vpop.f32.mrf.mxu0
        %v7441 = vpop.f32.mrf.mxu0
        %v7442 = vadd.f32 %v7281, %v7441
        %v7443 = vpop.f32.mrf.mxu0
        %7444 = vmatprep.mubr.bf16.mxu0 0
        %7445 = vmatmul.mubr.bf16.gmra.mxu0 %v6070
        %v7446 = vpop.f32.mrf.mxu0
        %v7447 = vadd.f32 %v7286, %v7446
        %v7448 = vpop.f32.mrf.mxu0
        %v7449 = vpop.f32.mrf.mxu0
        %v7450 = vadd.f32 %v7289, %v7449
        %v7451 = vpop.f32.mrf.mxu0
        %7452 = vmatprep.mubr.bf16.mxu0 0
        %7453 = vmatmul.mubr.bf16.gmra.mxu0 %v6079
        %v7454 = vpop.f32.mrf.mxu0
        %v7455 = vadd.f32 %v7294, %v7454
        %v7456 = vpop.f32.mrf.mxu0
        %v7457 = vpop.f32.mrf.mxu0
        %v7458 = vadd.f32 %v7297, %v7457
        %v7459 = vpop.f32.mrf.mxu0
        %7460 = vdwg.mxu0
        %v7461 = vld [vmem:[%s6] sm:$0x1]
        %v7463 = vlaneseq
        %v7464 = vshrl.u32 %v7463, 7
        %v7465 = vsub.s32 0, %v7464
        %v7466 = vrot.slane %v7461, %v7465
        %v7468 = vmul.f32 %v7335, %v7466
        %v7469 = vmul.f32 %v7338, %v7466
        %v7470 = vmul.f32 %v7343, %v7466
        %v7471 = vmul.f32 %v7346, %v7466
        %v7472 = vmul.f32 %v7351, %v7466
        %v7473 = vmul.f32 %v7354, %v7466
        %v7474 = vmul.f32 %v7359, %v7466
        %v7475 = vmul.f32 %v7362, %v7466
        %v7476 = vmul.f32 %v7367, %v7466
        %v7477 = vmul.f32 %v7370, %v7466
        %v7478 = vmul.f32 %v7375, %v7466
        %v7479 = vmul.f32 %v7378, %v7466
        %v7480 = vmul.f32 %v7383, %v7466
        %v7481 = vmul.f32 %v7386, %v7466
        %v7482 = vmul.f32 %v7391, %v7466
        %v7483 = vmul.f32 %v7394, %v7466
        %v7484 = vmul.f32 %v7399, %v7466
        %v7485 = vmul.f32 %v7402, %v7466
        %v7486 = vmul.f32 %v7407, %v7466
        %v7487 = vmul.f32 %v7410, %v7466
        %v7488 = vmul.f32 %v7415, %v7466
        %v7489 = vmul.f32 %v7418, %v7466
        %v7490 = vmul.f32 %v7423, %v7466
        %v7491 = vmul.f32 %v7426, %v7466
        %v7492 = vmul.f32 %v7431, %v7466
        %v7493 = vmul.f32 %v7434, %v7466
        %v7494 = vmul.f32 %v7439, %v7466
        %v7495 = vmul.f32 %v7442, %v7466
        %v7496 = vmul.f32 %v7447, %v7466
        %v7497 = vmul.f32 %v7450, %v7466
        %v7498 = vmul.f32 %v7455, %v7466
        %v7499 = vmul.f32 %v7458, %v7466
        %v7500 = vld [vmem:[%s7] sm:$0x1]
        %v7502 = vlaneseq
        %v7503 = vshrl.u32 %v7502, 7
        %v7504 = vsub.s32 0, %v7503
        %v7505 = vrot.slane %v7500, %v7504
        %v7507 = vadd.f32 %v7468, %v7505
        %v7508 = vadd.f32 %v7469, %v7505
        %v7509 = vadd.f32 %v7470, %v7505
        %v7510 = vadd.f32 %v7471, %v7505
        %v7511 = vadd.f32 %v7472, %v7505
        %v7512 = vadd.f32 %v7473, %v7505
        %v7513 = vadd.f32 %v7474, %v7505
        %v7514 = vadd.f32 %v7475, %v7505
        %v7515 = vadd.f32 %v7476, %v7505
        %v7516 = vadd.f32 %v7477, %v7505
        %v7517 = vadd.f32 %v7478, %v7505
        %v7518 = vadd.f32 %v7479, %v7505
        %v7519 = vadd.f32 %v7480, %v7505
        %v7520 = vadd.f32 %v7481, %v7505
        %v7521 = vadd.f32 %v7482, %v7505
        %v7522 = vadd.f32 %v7483, %v7505
        %v7523 = vadd.f32 %v7484, %v7505
        %v7524 = vadd.f32 %v7485, %v7505
        %v7525 = vadd.f32 %v7486, %v7505
        %v7526 = vadd.f32 %v7487, %v7505
        %v7527 = vadd.f32 %v7488, %v7505
        %v7528 = vadd.f32 %v7489, %v7505
        %v7529 = vadd.f32 %v7490, %v7505
        %v7530 = vadd.f32 %v7491, %v7505
        %v7531 = vadd.f32 %v7492, %v7505
        %v7532 = vadd.f32 %v7493, %v7505
        %v7533 = vadd.f32 %v7494, %v7505
        %v7534 = vadd.f32 %v7495, %v7505
        %v7535 = vadd.f32 %v7496, %v7505
        %v7536 = vadd.f32 %v7497, %v7505
        %v7537 = vadd.f32 %v7498, %v7505
        %v7538 = vadd.f32 %v7499, %v7505
        %s7539 = scalar_lea.vmem [#allocation2], 432
        %v7540 = vld [vmem:[%s7539] sm:$0xff]
        %v7541 = vld [vmem:[%s7539 + $0x8] sm:$0xff]
        %v7542 = vld [vmem:[%s7539 + $0x18] sm:$0xff]
        %v7543 = vld [vmem:[%s7539 + $0x20] sm:$0xff]
        %v7544 = vld [vmem:[%s7539 + $0x30] sm:$0xff]
        %v7545 = vld [vmem:[%s7539 + $0x38] sm:$0xff]
        %v7546 = vld [vmem:[%s7539 + $0x48] sm:$0xff]
        %v7547 = vld [vmem:[%s7539 + $0x50] sm:$0xff]
        %v7548 = vld [vmem:[%s7539 + $0x60] sm:$0xff]
        %v7549 = vld [vmem:[%s7539 + $0x68] sm:$0xff]
        %v7550 = vld [vmem:[%s7539 + $0x78] sm:$0xff]
        %v7551 = vld [vmem:[%s7539 + $0x80] sm:$0xff]
        %v7552 = vld [vmem:[%s7539 + $0x90] sm:$0xff]
        %v7553 = vld [vmem:[%s7539 + $0x98] sm:$0xff]
        %v7554 = vld [vmem:[%s7539 + $0xa8] sm:$0xff]
        %v7555 = vld [vmem:[%s7539 + $0xb0] sm:$0xff]
        %v7556 = vld [vmem:[%s7539 + $0xc0] sm:$0xff]
        %v7557 = vld [vmem:[%s7539 + $0xc8] sm:$0xff]
        %v7558 = vld [vmem:[%s7539 + $0xd8] sm:$0xff]
        %v7559 = vld [vmem:[%s7539 + $0xe0] sm:$0xff]
        %v7560 = vld [vmem:[%s7539 + $0xf0] sm:$0xff]
        %v7561 = vld [vmem:[%s7539 + $0xf8] sm:$0xff]
        %v7562 = vld [vmem:[%s7539 + $0x108] sm:$0xff]
        %v7563 = vld [vmem:[%s7539 + $0x110] sm:$0xff]
        %v7564 = vld [vmem:[%s7539 + $0x120] sm:$0xff]
        %v7565 = vld [vmem:[%s7539 + $0x128] sm:$0xff]
        %v7566 = vld [vmem:[%s7539 + $0x138] sm:$0xff]
        %v7567 = vld [vmem:[%s7539 + $0x140] sm:$0xff]
        %v7568 = vld [vmem:[%s7539 + $0x150] sm:$0xff]
        %v7569 = vld [vmem:[%s7539 + $0x158] sm:$0xff]
        %v7570 = vld [vmem:[%s7539 + $0x168] sm:$0xff]
        %v7571 = vld [vmem:[%s7539 + $0x170] sm:$0xff]
        %v7572 = vld [vmem:[%s7539 + $0x180] sm:$0xff]
        %v7573 = vld [vmem:[%s7539 + $0x188] sm:$0xff]
        %v7574 = vld [vmem:[%s7539 + $0x198] sm:$0xff]
        %v7575 = vld [vmem:[%s7539 + $0x1a0] sm:$0xff]
        %v7576 = vpack.c.bf16 %v7541, %v7540
        %v7577 = vpack.c.bf16 %v7543, %v7542
        %v7578 = vpack.c.bf16 %v7545, %v7544
        %v7579 = vpack.c.bf16 %v7547, %v7546
        %v7580 = vpack.c.bf16 %v7549, %v7548
        %v7581 = vpack.c.bf16 %v7551, %v7550
        %v7582 = vpack.c.bf16 %v7553, %v7552
        %v7583 = vpack.c.bf16 %v7555, %v7554
        %v7584 = vpack.c.bf16 %v7557, %v7556
        %v7585 = vpack.c.bf16 %v7559, %v7558
        %v7586 = vpack.c.bf16 %v7561, %v7560
        %v7587 = vpack.c.bf16 %v7563, %v7562
        %v7588 = vpack.c.bf16 %v7565, %v7564
        %v7589 = vpack.c.bf16 %v7567, %v7566
        %v7590 = vpack.c.bf16 %v7569, %v7568
        %v7591 = vpack.c.bf16 %v7571, %v7570
        %v7592 = vpack.c.bf16 %v7573, %v7572
        %v7593 = vpack.c.bf16 %v7575, %v7574
        %v7610 = vunpack.c.l.b16 %v7576
        %v7611 = vunpack.c.h.b16 %v7576
        %v7612 = vunpack.c.l.b16 %v7577
        %v7613 = vunpack.c.h.b16 %v7577
        %v7614 = vunpack.c.l.b16 %v7578
        %v7615 = vunpack.c.h.b16 %v7578
        %v7616 = vunpack.c.l.b16 %v7579
        %v7617 = vunpack.c.h.b16 %v7579
        %v7618 = vunpack.c.l.b16 %v7580
        %v7619 = vunpack.c.h.b16 %v7580
        %v7620 = vunpack.c.l.b16 %v7581
        %v7621 = vunpack.c.h.b16 %v7581
        %v7622 = vunpack.c.l.b16 %v7582
        %v7623 = vunpack.c.h.b16 %v7582
        %v7624 = vunpack.c.l.b16 %v7583
        %v7625 = vunpack.c.h.b16 %v7583
        %v7626 = vunpack.c.l.b16 %v7584
        %v7627 = vunpack.c.h.b16 %v7584
        %v7628 = vunpack.c.l.b16 %v7585
        %v7629 = vunpack.c.h.b16 %v7585
        %v7630 = vunpack.c.l.b16 %v7586
        %v7631 = vunpack.c.h.b16 %v7586
        %v7632 = vunpack.c.l.b16 %v7587
        %v7633 = vunpack.c.h.b16 %v7587
        %v7634 = vunpack.c.l.b16 %v7588
        %v7635 = vunpack.c.h.b16 %v7588
        %v7636 = vunpack.c.l.b16 %v7589
        %v7637 = vunpack.c.h.b16 %v7589
        %v7638 = vunpack.c.l.b16 %v7590
        %v7639 = vunpack.c.h.b16 %v7590
        %v7640 = vunpack.c.l.b16 %v7591
        %v7641 = vunpack.c.h.b16 %v7591
        %v7642 = vpack.c.b16 %v7610, %v7610
        %v7643 = vpack.c.b16 %v7611, %v7611
        %v7644 = vpack.c.b16 %v7612, %v7612
        %v7645 = vpack.c.b16 %v7613, %v7613
        %v7646 = vpack.c.b16 %v7614, %v7614
        %v7647 = vpack.c.b16 %v7615, %v7615
        %v7648 = vpack.c.b16 %v7616, %v7616
        %v7649 = vpack.c.b16 %v7617, %v7617
        %v7650 = vpack.c.b16 %v7618, %v7618
        %v7651 = vpack.c.b16 %v7619, %v7619
        %v7652 = vpack.c.b16 %v7620, %v7620
        %v7653 = vpack.c.b16 %v7621, %v7621
        %v7654 = vpack.c.b16 %v7622, %v7622
        %v7655 = vpack.c.b16 %v7623, %v7623
        %v7656 = vpack.c.b16 %v7624, %v7624
        %v7657 = vpack.c.b16 %v7625, %v7625
        %v7658 = vpack.c.b16 %v7626, %v7626
        %v7659 = vpack.c.b16 %v7627, %v7627
        %v7660 = vpack.c.b16 %v7628, %v7628
        %v7661 = vpack.c.b16 %v7629, %v7629
        %v7662 = vpack.c.b16 %v7630, %v7630
        %v7663 = vpack.c.b16 %v7631, %v7631
        %v7664 = vpack.c.b16 %v7632, %v7632
        %v7665 = vpack.c.b16 %v7633, %v7633
        %v7666 = vpack.c.b16 %v7634, %v7634
        %v7667 = vpack.c.b16 %v7635, %v7635
        %v7668 = vpack.c.b16 %v7636, %v7636
        %v7669 = vpack.c.b16 %v7637, %v7637
        %v7670 = vpack.c.b16 %v7638, %v7638
        %v7671 = vpack.c.b16 %v7639, %v7639
        %v7672 = vpack.c.b16 %v7640, %v7640
        %v7673 = vpack.c.b16 %v7641, %v7641
        %7706 = vst [vmem:[#allocation3] sm:$0xf] %v7642
        %7707 = vst [vmem:[#allocation3 + $0x24] sm:$0xf] %v7643
        %7708 = vst [vmem:[#allocation3 + $0x48] sm:$0xf] %v7644
        %7709 = vst [vmem:[#allocation3 + $0x6c] sm:$0xf] %v7645
        %7710 = vst [vmem:[#allocation3 + $0x90] sm:$0xf] %v7646
        %7711 = vst [vmem:[#allocation3 + $0xb4] sm:$0xf] %v7647
        %7712 = vst [vmem:[#allocation3 + $0xd8] sm:$0xf] %v7648
        %7713 = vst [vmem:[#allocation3 + $0xfc] sm:$0xf] %v7649
        %7714 = vst [vmem:[#allocation3 + $0x120] sm:$0xf] %v7650
        %7715 = vst [vmem:[#allocation3 + $0x144] sm:$0xf] %v7651
        %7716 = vst [vmem:[#allocation3 + $0x168] sm:$0xf] %v7652
        %7717 = vst [vmem:[#allocation3 + $0x18c] sm:$0xf] %v7653
        %7718 = vst [vmem:[#allocation3 + $0x1b0] sm:$0xf] %v7654
        %7719 = vst [vmem:[#allocation3 + $0x1d4] sm:$0xf] %v7655
        %7720 = vst [vmem:[#allocation3 + $0x1f8] sm:$0xf] %v7656
        %7721 = vst [vmem:[#allocation3 + $0x21c] sm:$0xf] %v7657
        %7722 = vst [vmem:[#allocation3 + $0x240] sm:$0xf] %v7658
        %7723 = vst [vmem:[#allocation3 + $0x264] sm:$0xf] %v7659
        %7724 = vst [vmem:[#allocation3 + $0x288] sm:$0xf] %v7660
        %7725 = vst [vmem:[#allocation3 + $0x2ac] sm:$0xf] %v7661
        %7726 = vst [vmem:[#allocation3 + $0x2d0] sm:$0xf] %v7662
        %7727 = vst [vmem:[#allocation3 + $0x2f4] sm:$0xf] %v7663
        %7728 = vst [vmem:[#allocation3 + $0x318] sm:$0xf] %v7664
        %7729 = vst [vmem:[#allocation3 + $0x33c] sm:$0xf] %v7665
        %7730 = vst [vmem:[#allocation3 + $0x360] sm:$0xf] %v7666
        %7731 = vst [vmem:[#allocation3 + $0x384] sm:$0xf] %v7667
        %7732 = vst [vmem:[#allocation3 + $0x3a8] sm:$0xf] %v7668
        %7733 = vst [vmem:[#allocation3 + $0x3cc] sm:$0xf] %v7669
        %7734 = vst [vmem:[#allocation3 + $0x3f0] sm:$0xf] %v7670
        %7735 = vst [vmem:[#allocation3 + $0x414] sm:$0xf] %v7671
        %7736 = vst [vmem:[#allocation3 + $0x438] sm:$0xf] %v7672
        %7737 = vst [vmem:[#allocation3 + $0x45c] sm:$0xf] %v7673
        %v7739 = vunpack.c.l.b16 %v7592
        %v7740 = vunpack.c.h.b16 %v7592
        %v7741 = vpack.c.b16 %v7739, %v7739
        %v7742 = vpack.c.b16 %v7740, %v7740
        %7745 = vst [vmem:[#allocation3 + $0xc] sm:$0xf] %v7644
        %7746 = vst [vmem:[#allocation3 + $0x30] sm:$0xf] %v7645
        %7747 = vst [vmem:[#allocation3 + $0x54] sm:$0xf] %v7646
        %7748 = vst [vmem:[#allocation3 + $0x78] sm:$0xf] %v7647
        %7749 = vst [vmem:[#allocation3 + $0x9c] sm:$0xf] %v7648
        %7750 = vst [vmem:[#allocation3 + $0xc0] sm:$0xf] %v7649
        %7751 = vst [vmem:[#allocation3 + $0xe4] sm:$0xf] %v7650
        %7752 = vst [vmem:[#allocation3 + $0x108] sm:$0xf] %v7651
        %7753 = vst [vmem:[#allocation3 + $0x12c] sm:$0xf] %v7652
        %7754 = vst [vmem:[#allocation3 + $0x150] sm:$0xf] %v7653
        %7755 = vst [vmem:[#allocation3 + $0x174] sm:$0xf] %v7654
        %7756 = vst [vmem:[#allocation3 + $0x198] sm:$0xf] %v7655
        %7757 = vst [vmem:[#allocation3 + $0x1bc] sm:$0xf] %v7656
        %7758 = vst [vmem:[#allocation3 + $0x1e0] sm:$0xf] %v7657
        %7759 = vst [vmem:[#allocation3 + $0x204] sm:$0xf] %v7658
        %7760 = vst [vmem:[#allocation3 + $0x228] sm:$0xf] %v7659
        %7761 = vst [vmem:[#allocation3 + $0x24c] sm:$0xf] %v7660
        %7762 = vst [vmem:[#allocation3 + $0x270] sm:$0xf] %v7661
        %7763 = vst [vmem:[#allocation3 + $0x294] sm:$0xf] %v7662
        %7764 = vst [vmem:[#allocation3 + $0x2b8] sm:$0xf] %v7663
        %7765 = vst [vmem:[#allocation3 + $0x2dc] sm:$0xf] %v7664
        %7766 = vst [vmem:[#allocation3 + $0x300] sm:$0xf] %v7665
        %7767 = vst [vmem:[#allocation3 + $0x324] sm:$0xf] %v7666
        %7768 = vst [vmem:[#allocation3 + $0x348] sm:$0xf] %v7667
        %7769 = vst [vmem:[#allocation3 + $0x36c] sm:$0xf] %v7668
        %7770 = vst [vmem:[#allocation3 + $0x390] sm:$0xf] %v7669
        %7771 = vst [vmem:[#allocation3 + $0x3b4] sm:$0xf] %v7670
        %7772 = vst [vmem:[#allocation3 + $0x3d8] sm:$0xf] %v7671
        %7773 = vst [vmem:[#allocation3 + $0x3fc] sm:$0xf] %v7672
        %7774 = vst [vmem:[#allocation3 + $0x420] sm:$0xf] %v7673
        %7775 = vst [vmem:[#allocation3 + $0x444] sm:$0xf] %v7741
        %7776 = vst [vmem:[#allocation3 + $0x468] sm:$0xf] %v7742
        %v7778 = vunpack.c.l.b16 %v7593
        %v7779 = vunpack.c.h.b16 %v7593
        %v7780 = vpack.c.b16 %v7778, %v7778
        %v7781 = vpack.c.b16 %v7779, %v7779
        %7784 = vst [vmem:[#allocation3 + $0x18] sm:$0xf] %v7646
        %7785 = vst [vmem:[#allocation3 + $0x3c] sm:$0xf] %v7647
        %7786 = vst [vmem:[#allocation3 + $0x60] sm:$0xf] %v7648
        %7787 = vst [vmem:[#allocation3 + $0x84] sm:$0xf] %v7649
        %7788 = vst [vmem:[#allocation3 + $0xa8] sm:$0xf] %v7650
        %7789 = vst [vmem:[#allocation3 + $0xcc] sm:$0xf] %v7651
        %7790 = vst [vmem:[#allocation3 + $0xf0] sm:$0xf] %v7652
        %7791 = vst [vmem:[#allocation3 + $0x114] sm:$0xf] %v7653
        %7792 = vst [vmem:[#allocation3 + $0x138] sm:$0xf] %v7654
        %7793 = vst [vmem:[#allocation3 + $0x15c] sm:$0xf] %v7655
        %7794 = vst [vmem:[#allocation3 + $0x180] sm:$0xf] %v7656
        %7795 = vst [vmem:[#allocation3 + $0x1a4] sm:$0xf] %v7657
        %7796 = vst [vmem:[#allocation3 + $0x1c8] sm:$0xf] %v7658
        %7797 = vst [vmem:[#allocation3 + $0x1ec] sm:$0xf] %v7659
        %7798 = vst [vmem:[#allocation3 + $0x210] sm:$0xf] %v7660
        %7799 = vst [vmem:[#allocation3 + $0x234] sm:$0xf] %v7661
        %7800 = vst [vmem:[#allocation3 + $0x258] sm:$0xf] %v7662
        %7801 = vst [vmem:[#allocation3 + $0x27c] sm:$0xf] %v7663
        %7802 = vst [vmem:[#allocation3 + $0x2a0] sm:$0xf] %v7664
        %7803 = vst [vmem:[#allocation3 + $0x2c4] sm:$0xf] %v7665
        %7804 = vst [vmem:[#allocation3 + $0x2e8] sm:$0xf] %v7666
        %7805 = vst [vmem:[#allocation3 + $0x30c] sm:$0xf] %v7667
        %7806 = vst [vmem:[#allocation3 + $0x330] sm:$0xf] %v7668
        %7807 = vst [vmem:[#allocation3 + $0x354] sm:$0xf] %v7669
        %7808 = vst [vmem:[#allocation3 + $0x378] sm:$0xf] %v7670
        %7809 = vst [vmem:[#allocation3 + $0x39c] sm:$0xf] %v7671
        %7810 = vst [vmem:[#allocation3 + $0x3c0] sm:$0xf] %v7672
        %7811 = vst [vmem:[#allocation3 + $0x3e4] sm:$0xf] %v7673
        %7812 = vst [vmem:[#allocation3 + $0x408] sm:$0xf] %v7741
        %7813 = vst [vmem:[#allocation3 + $0x42c] sm:$0xf] %v7742
        %7814 = vst [vmem:[#allocation3 + $0x450] sm:$0xf] %v7780
        %7815 = vst [vmem:[#allocation3 + $0x474] sm:$0xf] %v7781
        %v7816 = vld [vmem:[%s7539 + $0x1] sm:$0xff]
        %v7817 = vld [vmem:[%s7539 + $0x9] sm:$0xff]
        %v7818 = vld [vmem:[%s7539 + $0x19] sm:$0xff]
        %v7819 = vld [vmem:[%s7539 + $0x21] sm:$0xff]
        %v7820 = vld [vmem:[%s7539 + $0x31] sm:$0xff]
        %v7821 = vld [vmem:[%s7539 + $0x39] sm:$0xff]
        %v7822 = vld [vmem:[%s7539 + $0x49] sm:$0xff]
        %v7823 = vld [vmem:[%s7539 + $0x51] sm:$0xff]
        %v7824 = vld [vmem:[%s7539 + $0x61] sm:$0xff]
        %v7825 = vld [vmem:[%s7539 + $0x69] sm:$0xff]
        %v7826 = vld [vmem:[%s7539 + $0x79] sm:$0xff]
        %v7827 = vld [vmem:[%s7539 + $0x81] sm:$0xff]
        %v7828 = vld [vmem:[%s7539 + $0x91] sm:$0xff]
        %v7829 = vld [vmem:[%s7539 + $0x99] sm:$0xff]
        %v7830 = vld [vmem:[%s7539 + $0xa9] sm:$0xff]
        %v7831 = vld [vmem:[%s7539 + $0xb1] sm:$0xff]
        %v7832 = vld [vmem:[%s7539 + $0xc1] sm:$0xff]
        %v7833 = vld [vmem:[%s7539 + $0xc9] sm:$0xff]
        %v7834 = vld [vmem:[%s7539 + $0xd9] sm:$0xff]
        %v7835 = vld [vmem:[%s7539 + $0xe1] sm:$0xff]
        %v7836 = vld [vmem:[%s7539 + $0xf1] sm:$0xff]
        %v7837 = vld [vmem:[%s7539 + $0xf9] sm:$0xff]
        %v7838 = vld [vmem:[%s7539 + $0x109] sm:$0xff]
        %v7839 = vld [vmem:[%s7539 + $0x111] sm:$0xff]
        %v7840 = vld [vmem:[%s7539 + $0x121] sm:$0xff]
        %v7841 = vld [vmem:[%s7539 + $0x129] sm:$0xff]
        %v7842 = vld [vmem:[%s7539 + $0x139] sm:$0xff]
        %v7843 = vld [vmem:[%s7539 + $0x141] sm:$0xff]
        %v7844 = vld [vmem:[%s7539 + $0x151] sm:$0xff]
        %v7845 = vld [vmem:[%s7539 + $0x159] sm:$0xff]
        %v7846 = vld [vmem:[%s7539 + $0x169] sm:$0xff]
        %v7847 = vld [vmem:[%s7539 + $0x171] sm:$0xff]
        %v7848 = vld [vmem:[%s7539 + $0x181] sm:$0xff]
        %v7849 = vld [vmem:[%s7539 + $0x189] sm:$0xff]
        %v7850 = vld [vmem:[%s7539 + $0x199] sm:$0xff]
        %v7851 = vld [vmem:[%s7539 + $0x1a1] sm:$0xff]
        %v7852 = vpack.c.bf16 %v7817, %v7816
        %v7853 = vpack.c.bf16 %v7819, %v7818
        %v7854 = vpack.c.bf16 %v7821, %v7820
        %v7855 = vpack.c.bf16 %v7823, %v7822
        %v7856 = vpack.c.bf16 %v7825, %v7824
        %v7857 = vpack.c.bf16 %v7827, %v7826
        %v7858 = vpack.c.bf16 %v7829, %v7828
        %v7859 = vpack.c.bf16 %v7831, %v7830
        %v7860 = vpack.c.bf16 %v7833, %v7832
        %v7861 = vpack.c.bf16 %v7835, %v7834
        %v7862 = vpack.c.bf16 %v7837, %v7836
        %v7863 = vpack.c.bf16 %v7839, %v7838
        %v7864 = vpack.c.bf16 %v7841, %v7840
        %v7865 = vpack.c.bf16 %v7843, %v7842
        %v7866 = vpack.c.bf16 %v7845, %v7844
        %v7867 = vpack.c.bf16 %v7847, %v7846
        %v7868 = vpack.c.bf16 %v7849, %v7848
        %v7869 = vpack.c.bf16 %v7851, %v7850
        %v7886 = vunpack.c.l.b16 %v7852
        %v7887 = vunpack.c.h.b16 %v7852
        %v7888 = vunpack.c.l.b16 %v7853
        %v7889 = vunpack.c.h.b16 %v7853
        %v7890 = vunpack.c.l.b16 %v7854
        %v7891 = vunpack.c.h.b16 %v7854
        %v7892 = vunpack.c.l.b16 %v7855
        %v7893 = vunpack.c.h.b16 %v7855
        %v7894 = vunpack.c.l.b16 %v7856
        %v7895 = vunpack.c.h.b16 %v7856
        %v7896 = vunpack.c.l.b16 %v7857
        %v7897 = vunpack.c.h.b16 %v7857
        %v7898 = vunpack.c.l.b16 %v7858
        %v7899 = vunpack.c.h.b16 %v7858
        %v7900 = vunpack.c.l.b16 %v7859
        %v7901 = vunpack.c.h.b16 %v7859
        %v7902 = vunpack.c.l.b16 %v7860
        %v7903 = vunpack.c.h.b16 %v7860
        %v7904 = vunpack.c.l.b16 %v7861
        %v7905 = vunpack.c.h.b16 %v7861
        %v7906 = vunpack.c.l.b16 %v7862
        %v7907 = vunpack.c.h.b16 %v7862
        %v7908 = vunpack.c.l.b16 %v7863
        %v7909 = vunpack.c.h.b16 %v7863
        %v7910 = vunpack.c.l.b16 %v7864
        %v7911 = vunpack.c.h.b16 %v7864
        %v7912 = vunpack.c.l.b16 %v7865
        %v7913 = vunpack.c.h.b16 %v7865
        %v7914 = vunpack.c.l.b16 %v7866
        %v7915 = vunpack.c.h.b16 %v7866
        %v7916 = vunpack.c.l.b16 %v7867
        %v7917 = vunpack.c.h.b16 %v7867
        %v7918 = vpack.c.b16 %v7886, %v7886
        %v7919 = vpack.c.b16 %v7887, %v7887
        %v7920 = vpack.c.b16 %v7888, %v7888
        %v7921 = vpack.c.b16 %v7889, %v7889
        %v7922 = vpack.c.b16 %v7890, %v7890
        %v7923 = vpack.c.b16 %v7891, %v7891
        %v7924 = vpack.c.b16 %v7892, %v7892
        %v7925 = vpack.c.b16 %v7893, %v7893
        %v7926 = vpack.c.b16 %v7894, %v7894
        %v7927 = vpack.c.b16 %v7895, %v7895
        %v7928 = vpack.c.b16 %v7896, %v7896
        %v7929 = vpack.c.b16 %v7897, %v7897
        %v7930 = vpack.c.b16 %v7898, %v7898
        %v7931 = vpack.c.b16 %v7899, %v7899
        %v7932 = vpack.c.b16 %v7900, %v7900
        %v7933 = vpack.c.b16 %v7901, %v7901
        %v7934 = vpack.c.b16 %v7902, %v7902
        %v7935 = vpack.c.b16 %v7903, %v7903
        %v7936 = vpack.c.b16 %v7904, %v7904
        %v7937 = vpack.c.b16 %v7905, %v7905
        %v7938 = vpack.c.b16 %v7906, %v7906
        %v7939 = vpack.c.b16 %v7907, %v7907
        %v7940 = vpack.c.b16 %v7908, %v7908
        %v7941 = vpack.c.b16 %v7909, %v7909
        %v7942 = vpack.c.b16 %v7910, %v7910
        %v7943 = vpack.c.b16 %v7911, %v7911
        %v7944 = vpack.c.b16 %v7912, %v7912
        %v7945 = vpack.c.b16 %v7913, %v7913
        %v7946 = vpack.c.b16 %v7914, %v7914
        %v7947 = vpack.c.b16 %v7915, %v7915
        %v7948 = vpack.c.b16 %v7916, %v7916
        %v7949 = vpack.c.b16 %v7917, %v7917
        %7982 = vst [vmem:[#allocation3 + $0x4] sm:$0xf] %v7918
        %7983 = vst [vmem:[#allocation3 + $0x28] sm:$0xf] %v7919
        %7984 = vst [vmem:[#allocation3 + $0x4c] sm:$0xf] %v7920
        %7985 = vst [vmem:[#allocation3 + $0x70] sm:$0xf] %v7921
        %7986 = vst [vmem:[#allocation3 + $0x94] sm:$0xf] %v7922
        %7987 = vst [vmem:[#allocation3 + $0xb8] sm:$0xf] %v7923
        %7988 = vst [vmem:[#allocation3 + $0xdc] sm:$0xf] %v7924
        %7989 = vst [vmem:[#allocation3 + $0x100] sm:$0xf] %v7925
        %7990 = vst [vmem:[#allocation3 + $0x124] sm:$0xf] %v7926
        %7991 = vst [vmem:[#allocation3 + $0x148] sm:$0xf] %v7927
        %7992 = vst [vmem:[#allocation3 + $0x16c] sm:$0xf] %v7928
        %7993 = vst [vmem:[#allocation3 + $0x190] sm:$0xf] %v7929
        %7994 = vst [vmem:[#allocation3 + $0x1b4] sm:$0xf] %v7930
        %7995 = vst [vmem:[#allocation3 + $0x1d8] sm:$0xf] %v7931
        %7996 = vst [vmem:[#allocation3 + $0x1fc] sm:$0xf] %v7932
        %7997 = vst [vmem:[#allocation3 + $0x220] sm:$0xf] %v7933
        %7998 = vst [vmem:[#allocation3 + $0x244] sm:$0xf] %v7934
        %7999 = vst [vmem:[#allocation3 + $0x268] sm:$0xf] %v7935
        %8000 = vst [vmem:[#allocation3 + $0x28c] sm:$0xf] %v7936
        %8001 = vst [vmem:[#allocation3 + $0x2b0] sm:$0xf] %v7937
        %8002 = vst [vmem:[#allocation3 + $0x2d4] sm:$0xf] %v7938
        %8003 = vst [vmem:[#allocation3 + $0x2f8] sm:$0xf] %v7939
        %8004 = vst [vmem:[#allocation3 + $0x31c] sm:$0xf] %v7940
        %8005 = vst [vmem:[#allocation3 + $0x340] sm:$0xf] %v7941
        %8006 = vst [vmem:[#allocation3 + $0x364] sm:$0xf] %v7942
        %8007 = vst [vmem:[#allocation3 + $0x388] sm:$0xf] %v7943
        %8008 = vst [vmem:[#allocation3 + $0x3ac] sm:$0xf] %v7944
        %8009 = vst [vmem:[#allocation3 + $0x3d0] sm:$0xf] %v7945
        %8010 = vst [vmem:[#allocation3 + $0x3f4] sm:$0xf] %v7946
        %8011 = vst [vmem:[#allocation3 + $0x418] sm:$0xf] %v7947
        %8012 = vst [vmem:[#allocation3 + $0x43c] sm:$0xf] %v7948
        %8013 = vst [vmem:[#allocation3 + $0x460] sm:$0xf] %v7949
        %v8015 = vunpack.c.l.b16 %v7868
        %v8016 = vunpack.c.h.b16 %v7868
        %v8017 = vpack.c.b16 %v8015, %v8015
        %v8018 = vpack.c.b16 %v8016, %v8016
        %8021 = vst [vmem:[#allocation3 + $0x10] sm:$0xf] %v7920
        %8022 = vst [vmem:[#allocation3 + $0x34] sm:$0xf] %v7921
        %8023 = vst [vmem:[#allocation3 + $0x58] sm:$0xf] %v7922
        %8024 = vst [vmem:[#allocation3 + $0x7c] sm:$0xf] %v7923
        %8025 = vst [vmem:[#allocation3 + $0xa0] sm:$0xf] %v7924
        %8026 = vst [vmem:[#allocation3 + $0xc4] sm:$0xf] %v7925
        %8027 = vst [vmem:[#allocation3 + $0xe8] sm:$0xf] %v7926
        %8028 = vst [vmem:[#allocation3 + $0x10c] sm:$0xf] %v7927
        %8029 = vst [vmem:[#allocation3 + $0x130] sm:$0xf] %v7928
        %8030 = vst [vmem:[#allocation3 + $0x154] sm:$0xf] %v7929
        %8031 = vst [vmem:[#allocation3 + $0x178] sm:$0xf] %v7930
        %8032 = vst [vmem:[#allocation3 + $0x19c] sm:$0xf] %v7931
        %8033 = vst [vmem:[#allocation3 + $0x1c0] sm:$0xf] %v7932
        %8034 = vst [vmem:[#allocation3 + $0x1e4] sm:$0xf] %v7933
        %8035 = vst [vmem:[#allocation3 + $0x208] sm:$0xf] %v7934
        %8036 = vst [vmem:[#allocation3 + $0x22c] sm:$0xf] %v7935
        %8037 = vst [vmem:[#allocation3 + $0x250] sm:$0xf] %v7936
        %8038 = vst [vmem:[#allocation3 + $0x274] sm:$0xf] %v7937
        %8039 = vst [vmem:[#allocation3 + $0x298] sm:$0xf] %v7938
        %8040 = vst [vmem:[#allocation3 + $0x2bc] sm:$0xf] %v7939
        %8041 = vst [vmem:[#allocation3 + $0x2e0] sm:$0xf] %v7940
        %8042 = vst [vmem:[#allocation3 + $0x304] sm:$0xf] %v7941
        %8043 = vst [vmem:[#allocation3 + $0x328] sm:$0xf] %v7942
        %8044 = vst [vmem:[#allocation3 + $0x34c] sm:$0xf] %v7943
        %8045 = vst [vmem:[#allocation3 + $0x370] sm:$0xf] %v7944
        %8046 = vst [vmem:[#allocation3 + $0x394] sm:$0xf] %v7945
        %8047 = vst [vmem:[#allocation3 + $0x3b8] sm:$0xf] %v7946
        %8048 = vst [vmem:[#allocation3 + $0x3dc] sm:$0xf] %v7947
        %8049 = vst [vmem:[#allocation3 + $0x400] sm:$0xf] %v7948
        %8050 = vst [vmem:[#allocation3 + $0x424] sm:$0xf] %v7949
        %8051 = vst [vmem:[#allocation3 + $0x448] sm:$0xf] %v8017
        %8052 = vst [vmem:[#allocation3 + $0x46c] sm:$0xf] %v8018
        %v8054 = vunpack.c.l.b16 %v7869
        %v8055 = vunpack.c.h.b16 %v7869
        %v8056 = vpack.c.b16 %v8054, %v8054
        %v8057 = vpack.c.b16 %v8055, %v8055
        %8060 = vst [vmem:[#allocation3 + $0x1c] sm:$0xf] %v7922
        %8061 = vst [vmem:[#allocation3 + $0x40] sm:$0xf] %v7923
        %8062 = vst [vmem:[#allocation3 + $0x64] sm:$0xf] %v7924
        %8063 = vst [vmem:[#allocation3 + $0x88] sm:$0xf] %v7925
        %8064 = vst [vmem:[#allocation3 + $0xac] sm:$0xf] %v7926
        %8065 = vst [vmem:[#allocation3 + $0xd0] sm:$0xf] %v7927
        %8066 = vst [vmem:[#allocation3 + $0xf4] sm:$0xf] %v7928
        %8067 = vst [vmem:[#allocation3 + $0x118] sm:$0xf] %v7929
        %8068 = vst [vmem:[#allocation3 + $0x13c] sm:$0xf] %v7930
        %8069 = vst [vmem:[#allocation3 + $0x160] sm:$0xf] %v7931
        %8070 = vst [vmem:[#allocation3 + $0x184] sm:$0xf] %v7932
        %8071 = vst [vmem:[#allocation3 + $0x1a8] sm:$0xf] %v7933
        %8072 = vst [vmem:[#allocation3 + $0x1cc] sm:$0xf] %v7934
        %8073 = vst [vmem:[#allocation3 + $0x1f0] sm:$0xf] %v7935
        %8074 = vst [vmem:[#allocation3 + $0x214] sm:$0xf] %v7936
        %8075 = vst [vmem:[#allocation3 + $0x238] sm:$0xf] %v7937
        %8076 = vst [vmem:[#allocation3 + $0x25c] sm:$0xf] %v7938
        %8077 = vst [vmem:[#allocation3 + $0x280] sm:$0xf] %v7939
        %8078 = vst [vmem:[#allocation3 + $0x2a4] sm:$0xf] %v7940
        %8079 = vst [vmem:[#allocation3 + $0x2c8] sm:$0xf] %v7941
        %8080 = vst [vmem:[#allocation3 + $0x2ec] sm:$0xf] %v7942
        %8081 = vst [vmem:[#allocation3 + $0x310] sm:$0xf] %v7943
        %8082 = vst [vmem:[#allocation3 + $0x334] sm:$0xf] %v7944
        %8083 = vst [vmem:[#allocation3 + $0x358] sm:$0xf] %v7945
        %8084 = vst [vmem:[#allocation3 + $0x37c] sm:$0xf] %v7946
        %8085 = vst [vmem:[#allocation3 + $0x3a0] sm:$0xf] %v7947
        %8086 = vst [vmem:[#allocation3 + $0x3c4] sm:$0xf] %v7948
        %8087 = vst [vmem:[#allocation3 + $0x3e8] sm:$0xf] %v7949
        %8088 = vst [vmem:[#allocation3 + $0x40c] sm:$0xf] %v8017
        %8089 = vst [vmem:[#allocation3 + $0x430] sm:$0xf] %v8018
        %8090 = vst [vmem:[#allocation3 + $0x454] sm:$0xf] %v8056
        %8091 = vst [vmem:[#allocation3 + $0x478] sm:$0xf] %v8057
        %v8092 = vld [vmem:[%s7539 + $0x2] sm:$0xff]
        %v8093 = vld [vmem:[%s7539 + $0xa] sm:$0xff]
        %v8094 = vld [vmem:[%s7539 + $0x1a] sm:$0xff]
        %v8095 = vld [vmem:[%s7539 + $0x22] sm:$0xff]
        %v8096 = vld [vmem:[%s7539 + $0x32] sm:$0xff]
        %v8097 = vld [vmem:[%s7539 + $0x3a] sm:$0xff]
        %v8098 = vld [vmem:[%s7539 + $0x4a] sm:$0xff]
        %v8099 = vld [vmem:[%s7539 + $0x52] sm:$0xff]
        %v8100 = vld [vmem:[%s7539 + $0x62] sm:$0xff]
        %v8101 = vld [vmem:[%s7539 + $0x6a] sm:$0xff]
        %v8102 = vld [vmem:[%s7539 + $0x7a] sm:$0xff]
        %v8103 = vld [vmem:[%s7539 + $0x82] sm:$0xff]
        %v8104 = vld [vmem:[%s7539 + $0x92] sm:$0xff]
        %v8105 = vld [vmem:[%s7539 + $0x9a] sm:$0xff]
        %v8106 = vld [vmem:[%s7539 + $0xaa] sm:$0xff]
        %v8107 = vld [vmem:[%s7539 + $0xb2] sm:$0xff]
        %v8108 = vld [vmem:[%s7539 + $0xc2] sm:$0xff]
        %v8109 = vld [vmem:[%s7539 + $0xca] sm:$0xff]
        %v8110 = vld [vmem:[%s7539 + $0xda] sm:$0xff]
        %v8111 = vld [vmem:[%s7539 + $0xe2] sm:$0xff]
        %v8112 = vld [vmem:[%s7539 + $0xf2] sm:$0xff]
        %v8113 = vld [vmem:[%s7539 + $0xfa] sm:$0xff]
        %v8114 = vld [vmem:[%s7539 + $0x10a] sm:$0xff]
        %v8115 = vld [vmem:[%s7539 + $0x112] sm:$0xff]
        %v8116 = vld [vmem:[%s7539 + $0x122] sm:$0xff]
        %v8117 = vld [vmem:[%s7539 + $0x12a] sm:$0xff]
        %v8118 = vld [vmem:[%s7539 + $0x13a] sm:$0xff]
        %v8119 = vld [vmem:[%s7539 + $0x142] sm:$0xff]
        %v8120 = vld [vmem:[%s7539 + $0x152] sm:$0xff]
        %v8121 = vld [vmem:[%s7539 + $0x15a] sm:$0xff]
        %v8122 = vld [vmem:[%s7539 + $0x16a] sm:$0xff]
        %v8123 = vld [vmem:[%s7539 + $0x172] sm:$0xff]
        %v8124 = vld [vmem:[%s7539 + $0x182] sm:$0xff]
        %v8125 = vld [vmem:[%s7539 + $0x18a] sm:$0xff]
        %v8126 = vld [vmem:[%s7539 + $0x19a] sm:$0xff]
        %v8127 = vld [vmem:[%s7539 + $0x1a2] sm:$0xff]
        %v8128 = vpack.c.bf16 %v8093, %v8092
        %v8129 = vpack.c.bf16 %v8095, %v8094
        %v8130 = vpack.c.bf16 %v8097, %v8096
        %v8131 = vpack.c.bf16 %v8099, %v8098
        %v8132 = vpack.c.bf16 %v8101, %v8100
        %v8133 = vpack.c.bf16 %v8103, %v8102
        %v8134 = vpack.c.bf16 %v8105, %v8104
        %v8135 = vpack.c.bf16 %v8107, %v8106
        %v8136 = vpack.c.bf16 %v8109, %v8108
        %v8137 = vpack.c.bf16 %v8111, %v8110
        %v8138 = vpack.c.bf16 %v8113, %v8112
        %v8139 = vpack.c.bf16 %v8115, %v8114
        %v8140 = vpack.c.bf16 %v8117, %v8116
        %v8141 = vpack.c.bf16 %v8119, %v8118
        %v8142 = vpack.c.bf16 %v8121, %v8120
        %v8143 = vpack.c.bf16 %v8123, %v8122
        %v8144 = vpack.c.bf16 %v8125, %v8124
        %v8145 = vpack.c.bf16 %v8127, %v8126
        %v8162 = vunpack.c.l.b16 %v8128
        %v8163 = vunpack.c.h.b16 %v8128
        %v8164 = vunpack.c.l.b16 %v8129
        %v8165 = vunpack.c.h.b16 %v8129
        %v8166 = vunpack.c.l.b16 %v8130
        %v8167 = vunpack.c.h.b16 %v8130
        %v8168 = vunpack.c.l.b16 %v8131
        %v8169 = vunpack.c.h.b16 %v8131
        %v8170 = vunpack.c.l.b16 %v8132
        %v8171 = vunpack.c.h.b16 %v8132
        %v8172 = vunpack.c.l.b16 %v8133
        %v8173 = vunpack.c.h.b16 %v8133
        %v8174 = vunpack.c.l.b16 %v8134
        %v8175 = vunpack.c.h.b16 %v8134
        %v8176 = vunpack.c.l.b16 %v8135
        %v8177 = vunpack.c.h.b16 %v8135
        %v8178 = vunpack.c.l.b16 %v8136
        %v8179 = vunpack.c.h.b16 %v8136
        %v8180 = vunpack.c.l.b16 %v8137
        %v8181 = vunpack.c.h.b16 %v8137
        %v8182 = vunpack.c.l.b16 %v8138
        %v8183 = vunpack.c.h.b16 %v8138
        %v8184 = vunpack.c.l.b16 %v8139
        %v8185 = vunpack.c.h.b16 %v8139
        %v8186 = vunpack.c.l.b16 %v8140
        %v8187 = vunpack.c.h.b16 %v8140
        %v8188 = vunpack.c.l.b16 %v8141
        %v8189 = vunpack.c.h.b16 %v8141
        %v8190 = vunpack.c.l.b16 %v8142
        %v8191 = vunpack.c.h.b16 %v8142
        %v8192 = vunpack.c.l.b16 %v8143
        %v8193 = vunpack.c.h.b16 %v8143
        %v8194 = vpack.c.b16 %v8162, %v8162
        %v8195 = vpack.c.b16 %v8163, %v8163
        %v8196 = vpack.c.b16 %v8164, %v8164
        %v8197 = vpack.c.b16 %v8165, %v8165
        %v8198 = vpack.c.b16 %v8166, %v8166
        %v8199 = vpack.c.b16 %v8167, %v8167
        %v8200 = vpack.c.b16 %v8168, %v8168
        %v8201 = vpack.c.b16 %v8169, %v8169
        %v8202 = vpack.c.b16 %v8170, %v8170
        %v8203 = vpack.c.b16 %v8171, %v8171
        %v8204 = vpack.c.b16 %v8172, %v8172
        %v8205 = vpack.c.b16 %v8173, %v8173
        %v8206 = vpack.c.b16 %v8174, %v8174
        %v8207 = vpack.c.b16 %v8175, %v8175
        %v8208 = vpack.c.b16 %v8176, %v8176
        %v8209 = vpack.c.b16 %v8177, %v8177
        %v8210 = vpack.c.b16 %v8178, %v8178
        %v8211 = vpack.c.b16 %v8179, %v8179
        %v8212 = vpack.c.b16 %v8180, %v8180
        %v8213 = vpack.c.b16 %v8181, %v8181
        %v8214 = vpack.c.b16 %v8182, %v8182
        %v8215 = vpack.c.b16 %v8183, %v8183
        %v8216 = vpack.c.b16 %v8184, %v8184
        %v8217 = vpack.c.b16 %v8185, %v8185
        %v8218 = vpack.c.b16 %v8186, %v8186
        %v8219 = vpack.c.b16 %v8187, %v8187
        %v8220 = vpack.c.b16 %v8188, %v8188
        %v8221 = vpack.c.b16 %v8189, %v8189
        %v8222 = vpack.c.b16 %v8190, %v8190
        %v8223 = vpack.c.b16 %v8191, %v8191
        %v8224 = vpack.c.b16 %v8192, %v8192
        %v8225 = vpack.c.b16 %v8193, %v8193
        %8258 = vst [vmem:[#allocation3 + $0x8] sm:$0xf] %v8194
        %8259 = vst [vmem:[#allocation3 + $0x2c] sm:$0xf] %v8195
        %8260 = vst [vmem:[#allocation3 + $0x50] sm:$0xf] %v8196
        %8261 = vst [vmem:[#allocation3 + $0x74] sm:$0xf] %v8197
        %8262 = vst [vmem:[#allocation3 + $0x98] sm:$0xf] %v8198
        %8263 = vst [vmem:[#allocation3 + $0xbc] sm:$0xf] %v8199
        %8264 = vst [vmem:[#allocation3 + $0xe0] sm:$0xf] %v8200
        %8265 = vst [vmem:[#allocation3 + $0x104] sm:$0xf] %v8201
        %8266 = vst [vmem:[#allocation3 + $0x128] sm:$0xf] %v8202
        %8267 = vst [vmem:[#allocation3 + $0x14c] sm:$0xf] %v8203
        %8268 = vst [vmem:[#allocation3 + $0x170] sm:$0xf] %v8204
        %8269 = vst [vmem:[#allocation3 + $0x194] sm:$0xf] %v8205
        %8270 = vst [vmem:[#allocation3 + $0x1b8] sm:$0xf] %v8206
        %8271 = vst [vmem:[#allocation3 + $0x1dc] sm:$0xf] %v8207
        %8272 = vst [vmem:[#allocation3 + $0x200] sm:$0xf] %v8208
        %8273 = vst [vmem:[#allocation3 + $0x224] sm:$0xf] %v8209
        %8274 = vst [vmem:[#allocation3 + $0x248] sm:$0xf] %v8210
        %8275 = vst [vmem:[#allocation3 + $0x26c] sm:$0xf] %v8211
        %8276 = vst [vmem:[#allocation3 + $0x290] sm:$0xf] %v8212
        %8277 = vst [vmem:[#allocation3 + $0x2b4] sm:$0xf] %v8213
        %8278 = vst [vmem:[#allocation3 + $0x2d8] sm:$0xf] %v8214
        %8279 = vst [vmem:[#allocation3 + $0x2fc] sm:$0xf] %v8215
        %8280 = vst [vmem:[#allocation3 + $0x320] sm:$0xf] %v8216
        %8281 = vst [vmem:[#allocation3 + $0x344] sm:$0xf] %v8217
        %8282 = vst [vmem:[#allocation3 + $0x368] sm:$0xf] %v8218
        %8283 = vst [vmem:[#allocation3 + $0x38c] sm:$0xf] %v8219
        %8284 = vst [vmem:[#allocation3 + $0x3b0] sm:$0xf] %v8220
        %8285 = vst [vmem:[#allocation3 + $0x3d4] sm:$0xf] %v8221
        %8286 = vst [vmem:[#allocation3 + $0x3f8] sm:$0xf] %v8222
        %8287 = vst [vmem:[#allocation3 + $0x41c] sm:$0xf] %v8223
        %8288 = vst [vmem:[#allocation3 + $0x440] sm:$0xf] %v8224
        %8289 = vst [vmem:[#allocation3 + $0x464] sm:$0xf] %v8225
        %v8291 = vunpack.c.l.b16 %v8144
        %v8292 = vunpack.c.h.b16 %v8144
        %v8293 = vpack.c.b16 %v8291, %v8291
        %v8294 = vpack.c.b16 %v8292, %v8292
        %8297 = vst [vmem:[#allocation3 + $0x14] sm:$0xf] %v8196
        %8298 = vst [vmem:[#allocation3 + $0x38] sm:$0xf] %v8197
        %8299 = vst [vmem:[#allocation3 + $0x5c] sm:$0xf] %v8198
        %8300 = vst [vmem:[#allocation3 + $0x80] sm:$0xf] %v8199
        %8301 = vst [vmem:[#allocation3 + $0xa4] sm:$0xf] %v8200
        %8302 = vst [vmem:[#allocation3 + $0xc8] sm:$0xf] %v8201
        %8303 = vst [vmem:[#allocation3 + $0xec] sm:$0xf] %v8202
        %8304 = vst [vmem:[#allocation3 + $0x110] sm:$0xf] %v8203
        %8305 = vst [vmem:[#allocation3 + $0x134] sm:$0xf] %v8204
        %8306 = vst [vmem:[#allocation3 + $0x158] sm:$0xf] %v8205
        %8307 = vst [vmem:[#allocation3 + $0x17c] sm:$0xf] %v8206
        %8308 = vst [vmem:[#allocation3 + $0x1a0] sm:$0xf] %v8207
        %8309 = vst [vmem:[#allocation3 + $0x1c4] sm:$0xf] %v8208
        %8310 = vst [vmem:[#allocation3 + $0x1e8] sm:$0xf] %v8209
        %8311 = vst [vmem:[#allocation3 + $0x20c] sm:$0xf] %v8210
        %8312 = vst [vmem:[#allocation3 + $0x230] sm:$0xf] %v8211
        %8313 = vst [vmem:[#allocation3 + $0x254] sm:$0xf] %v8212
        %8314 = vst [vmem:[#allocation3 + $0x278] sm:$0xf] %v8213
        %8315 = vst [vmem:[#allocation3 + $0x29c] sm:$0xf] %v8214
        %8316 = vst [vmem:[#allocation3 + $0x2c0] sm:$0xf] %v8215
        %8317 = vst [vmem:[#allocation3 + $0x2e4] sm:$0xf] %v8216
        %8318 = vst [vmem:[#allocation3 + $0x308] sm:$0xf] %v8217
        %8319 = vst [vmem:[#allocation3 + $0x32c] sm:$0xf] %v8218
        %8320 = vst [vmem:[#allocation3 + $0x350] sm:$0xf] %v8219
        %8321 = vst [vmem:[#allocation3 + $0x374] sm:$0xf] %v8220
        %8322 = vst [vmem:[#allocation3 + $0x398] sm:$0xf] %v8221
        %8323 = vst [vmem:[#allocation3 + $0x3bc] sm:$0xf] %v8222
        %8324 = vst [vmem:[#allocation3 + $0x3e0] sm:$0xf] %v8223
        %8325 = vst [vmem:[#allocation3 + $0x404] sm:$0xf] %v8224
        %8326 = vst [vmem:[#allocation3 + $0x428] sm:$0xf] %v8225
        %8327 = vst [vmem:[#allocation3 + $0x44c] sm:$0xf] %v8293
        %8328 = vst [vmem:[#allocation3 + $0x470] sm:$0xf] %v8294
        %v8330 = vunpack.c.l.b16 %v8145
        %v8331 = vunpack.c.h.b16 %v8145
        %v8332 = vpack.c.b16 %v8330, %v8330
        %v8333 = vpack.c.b16 %v8331, %v8331
        %8336 = vst [vmem:[#allocation3 + $0x20] sm:$0xf] %v8198
        %8337 = vst [vmem:[#allocation3 + $0x44] sm:$0xf] %v8199
        %8338 = vst [vmem:[#allocation3 + $0x68] sm:$0xf] %v8200
        %8339 = vst [vmem:[#allocation3 + $0x8c] sm:$0xf] %v8201
        %8340 = vst [vmem:[#allocation3 + $0xb0] sm:$0xf] %v8202
        %8341 = vst [vmem:[#allocation3 + $0xd4] sm:$0xf] %v8203
        %8342 = vst [vmem:[#allocation3 + $0xf8] sm:$0xf] %v8204
        %8343 = vst [vmem:[#allocation3 + $0x11c] sm:$0xf] %v8205
        %8344 = vst [vmem:[#allocation3 + $0x140] sm:$0xf] %v8206
        %8345 = vst [vmem:[#allocation3 + $0x164] sm:$0xf] %v8207
        %8346 = vst [vmem:[#allocation3 + $0x188] sm:$0xf] %v8208
        %8347 = vst [vmem:[#allocation3 + $0x1ac] sm:$0xf] %v8209
        %8348 = vst [vmem:[#allocation3 + $0x1d0] sm:$0xf] %v8210
        %8349 = vst [vmem:[#allocation3 + $0x1f4] sm:$0xf] %v8211
        %8350 = vst [vmem:[#allocation3 + $0x218] sm:$0xf] %v8212
        %8351 = vst [vmem:[#allocation3 + $0x23c] sm:$0xf] %v8213
        %8352 = vst [vmem:[#allocation3 + $0x260] sm:$0xf] %v8214
        %8353 = vst [vmem:[#allocation3 + $0x284] sm:$0xf] %v8215
        %8354 = vst [vmem:[#allocation3 + $0x2a8] sm:$0xf] %v8216
        %8355 = vst [vmem:[#allocation3 + $0x2cc] sm:$0xf] %v8217
        %8356 = vst [vmem:[#allocation3 + $0x2f0] sm:$0xf] %v8218
        %8357 = vst [vmem:[#allocation3 + $0x314] sm:$0xf] %v8219
        %8358 = vst [vmem:[#allocation3 + $0x338] sm:$0xf] %v8220
        %8359 = vst [vmem:[#allocation3 + $0x35c] sm:$0xf] %v8221
        %8360 = vst [vmem:[#allocation3 + $0x380] sm:$0xf] %v8222
        %8361 = vst [vmem:[#allocation3 + $0x3a4] sm:$0xf] %v8223
        %8362 = vst [vmem:[#allocation3 + $0x3c8] sm:$0xf] %v8224
        %8363 = vst [vmem:[#allocation3 + $0x3ec] sm:$0xf] %v8225
        %8364 = vst [vmem:[#allocation3 + $0x410] sm:$0xf] %v8293
        %8365 = vst [vmem:[#allocation3 + $0x434] sm:$0xf] %v8294
        %8366 = vst [vmem:[#allocation3 + $0x458] sm:$0xf] %v8332
        %8367 = vst [vmem:[#allocation3 + $0x47c] sm:$0xf] %v8333
        %v8368 = vld [vmem:[#allocation3] sm:$0xff]
        %v8369 = vld [vmem:[#allocation3 + $0x8] sm:$0xff]
        %v8370 = vld [vmem:[#allocation3 + $0x10] sm:$0xff]
        %v8371 = vld [vmem:[#allocation3 + $0x18] sm:$0xff]
        %v8372 = vld [vmem:[#allocation3 + $0x20] sm:$0xf]
        %v8373 = vld [vmem:[#allocation3 + $0x24] sm:$0xff]
        %v8374 = vld [vmem:[#allocation3 + $0x2c] sm:$0xff]
        %v8375 = vld [vmem:[#allocation3 + $0x34] sm:$0xff]
        %v8376 = vld [vmem:[#allocation3 + $0x3c] sm:$0xff]
        %v8377 = vld [vmem:[#allocation3 + $0x44] sm:$0xf]
        %v8378 = vld [vmem:[#allocation3 + $0x48] sm:$0xff]
        %v8379 = vld [vmem:[#allocation3 + $0x50] sm:$0xff]
        %v8380 = vld [vmem:[#allocation3 + $0x58] sm:$0xff]
        %v8381 = vld [vmem:[#allocation3 + $0x60] sm:$0xff]
        %v8382 = vld [vmem:[#allocation3 + $0x68] sm:$0xf]
        %v8383 = vld [vmem:[#allocation3 + $0x6c] sm:$0xff]
        %v8384 = vld [vmem:[#allocation3 + $0x74] sm:$0xff]
        %v8385 = vld [vmem:[#allocation3 + $0x7c] sm:$0xff]
        %v8386 = vld [vmem:[#allocation3 + $0x84] sm:$0xff]
        %v8387 = vld [vmem:[#allocation3 + $0x8c] sm:$0xf]
        %v8388 = vld [vmem:[#allocation3 + $0x90] sm:$0xff]
        %v8389 = vld [vmem:[#allocation3 + $0x98] sm:$0xff]
        %v8390 = vld [vmem:[#allocation3 + $0xa0] sm:$0xff]
        %v8391 = vld [vmem:[#allocation3 + $0xa8] sm:$0xff]
        %v8392 = vld [vmem:[#allocation3 + $0xb0] sm:$0xf]
        %v8393 = vld [vmem:[#allocation3 + $0xb4] sm:$0xff]
        %v8394 = vld [vmem:[#allocation3 + $0xbc] sm:$0xff]
        %v8395 = vld [vmem:[#allocation3 + $0xc4] sm:$0xff]
        %v8396 = vld [vmem:[#allocation3 + $0xcc] sm:$0xff]
        %v8397 = vld [vmem:[#allocation3 + $0xd4] sm:$0xf]
        %v8398 = vld [vmem:[#allocation3 + $0xd8] sm:$0xff]
        %v8399 = vld [vmem:[#allocation3 + $0xe0] sm:$0xff]
        %v8400 = vld [vmem:[#allocation3 + $0xe8] sm:$0xff]
        %v8401 = vld [vmem:[#allocation3 + $0xf0] sm:$0xff]
        %v8402 = vld [vmem:[#allocation3 + $0xf8] sm:$0xf]
        %v8403 = vld [vmem:[#allocation3 + $0xfc] sm:$0xff]
        %v8404 = vld [vmem:[#allocation3 + $0x104] sm:$0xff]
        %v8405 = vld [vmem:[#allocation3 + $0x10c] sm:$0xff]
        %v8406 = vld [vmem:[#allocation3 + $0x114] sm:$0xff]
        %v8407 = vld [vmem:[#allocation3 + $0x11c] sm:$0xf]
        %v8408 = vld [vmem:[#allocation3 + $0x120] sm:$0xff]
        %v8409 = vld [vmem:[#allocation3 + $0x128] sm:$0xff]
        %v8410 = vld [vmem:[#allocation3 + $0x130] sm:$0xff]
        %v8411 = vld [vmem:[#allocation3 + $0x138] sm:$0xff]
        %v8412 = vld [vmem:[#allocation3 + $0x140] sm:$0xf]
        %v8413 = vld [vmem:[#allocation3 + $0x144] sm:$0xff]
        %v8414 = vld [vmem:[#allocation3 + $0x14c] sm:$0xff]
        %v8415 = vld [vmem:[#allocation3 + $0x154] sm:$0xff]
        %v8416 = vld [vmem:[#allocation3 + $0x15c] sm:$0xff]
        %v8417 = vld [vmem:[#allocation3 + $0x164] sm:$0xf]
        %v8418 = vld [vmem:[#allocation3 + $0x168] sm:$0xff]
        %v8419 = vld [vmem:[#allocation3 + $0x170] sm:$0xff]
        %v8420 = vld [vmem:[#allocation3 + $0x178] sm:$0xff]
        %v8421 = vld [vmem:[#allocation3 + $0x180] sm:$0xff]
        %v8422 = vld [vmem:[#allocation3 + $0x188] sm:$0xf]
        %v8423 = vld [vmem:[#allocation3 + $0x18c] sm:$0xff]
        %v8424 = vld [vmem:[#allocation3 + $0x194] sm:$0xff]
        %v8425 = vld [vmem:[#allocation3 + $0x19c] sm:$0xff]
        %v8426 = vld [vmem:[#allocation3 + $0x1a4] sm:$0xff]
        %v8427 = vld [vmem:[#allocation3 + $0x1ac] sm:$0xf]
        %v8428 = vld [vmem:[#allocation3 + $0x1b0] sm:$0xff]
        %v8429 = vld [vmem:[#allocation3 + $0x1b8] sm:$0xff]
        %v8430 = vld [vmem:[#allocation3 + $0x1c0] sm:$0xff]
        %v8431 = vld [vmem:[#allocation3 + $0x1c8] sm:$0xff]
        %v8432 = vld [vmem:[#allocation3 + $0x1d0] sm:$0xf]
        %v8433 = vld [vmem:[#allocation3 + $0x1d4] sm:$0xff]
        %v8434 = vld [vmem:[#allocation3 + $0x1dc] sm:$0xff]
        %v8435 = vld [vmem:[#allocation3 + $0x1e4] sm:$0xff]
        %v8436 = vld [vmem:[#allocation3 + $0x1ec] sm:$0xff]
        %v8437 = vld [vmem:[#allocation3 + $0x1f4] sm:$0xf]
        %v8438 = vld [vmem:[#allocation3 + $0x1f8] sm:$0xff]
        %v8439 = vld [vmem:[#allocation3 + $0x200] sm:$0xff]
        %v8440 = vld [vmem:[#allocation3 + $0x208] sm:$0xff]
        %v8441 = vld [vmem:[#allocation3 + $0x210] sm:$0xff]
        %v8442 = vld [vmem:[#allocation3 + $0x218] sm:$0xf]
        %v8443 = vld [vmem:[#allocation3 + $0x21c] sm:$0xff]
        %v8444 = vld [vmem:[#allocation3 + $0x224] sm:$0xff]
        %v8445 = vld [vmem:[#allocation3 + $0x22c] sm:$0xff]
        %v8446 = vld [vmem:[#allocation3 + $0x234] sm:$0xff]
        %v8447 = vld [vmem:[#allocation3 + $0x23c] sm:$0xf]
        %v8448 = vld [vmem:[#allocation3 + $0x240] sm:$0xff]
        %v8449 = vld [vmem:[#allocation3 + $0x248] sm:$0xff]
        %v8450 = vld [vmem:[#allocation3 + $0x250] sm:$0xff]
        %v8451 = vld [vmem:[#allocation3 + $0x258] sm:$0xff]
        %v8452 = vld [vmem:[#allocation3 + $0x260] sm:$0xf]
        %v8453 = vld [vmem:[#allocation3 + $0x264] sm:$0xff]
        %v8454 = vld [vmem:[#allocation3 + $0x26c] sm:$0xff]
        %v8455 = vld [vmem:[#allocation3 + $0x274] sm:$0xff]
        %v8456 = vld [vmem:[#allocation3 + $0x27c] sm:$0xff]
        %v8457 = vld [vmem:[#allocation3 + $0x284] sm:$0xf]
        %v8458 = vld [vmem:[#allocation3 + $0x288] sm:$0xff]
        %v8459 = vld [vmem:[#allocation3 + $0x290] sm:$0xff]
        %v8460 = vld [vmem:[#allocation3 + $0x298] sm:$0xff]
        %v8461 = vld [vmem:[#allocation3 + $0x2a0] sm:$0xff]
        %v8462 = vld [vmem:[#allocation3 + $0x2a8] sm:$0xf]
        %v8463 = vld [vmem:[#allocation3 + $0x2ac] sm:$0xff]
        %v8464 = vld [vmem:[#allocation3 + $0x2b4] sm:$0xff]
        %v8465 = vld [vmem:[#allocation3 + $0x2bc] sm:$0xff]
        %v8466 = vld [vmem:[#allocation3 + $0x2c4] sm:$0xff]
        %v8467 = vld [vmem:[#allocation3 + $0x2cc] sm:$0xf]
        %v8468 = vld [vmem:[#allocation3 + $0x2d0] sm:$0xff]
        %v8469 = vld [vmem:[#allocation3 + $0x2d8] sm:$0xff]
        %v8470 = vld [vmem:[#allocation3 + $0x2e0] sm:$0xff]
        %v8471 = vld [vmem:[#allocation3 + $0x2e8] sm:$0xff]
        %v8472 = vld [vmem:[#allocation3 + $0x2f0] sm:$0xf]
        %v8473 = vld [vmem:[#allocation3 + $0x2f4] sm:$0xff]
        %v8474 = vld [vmem:[#allocation3 + $0x2fc] sm:$0xff]
        %v8475 = vld [vmem:[#allocation3 + $0x304] sm:$0xff]
        %v8476 = vld [vmem:[#allocation3 + $0x30c] sm:$0xff]
        %v8477 = vld [vmem:[#allocation3 + $0x314] sm:$0xf]
        %v8478 = vld [vmem:[#allocation3 + $0x318] sm:$0xff]
        %v8479 = vld [vmem:[#allocation3 + $0x320] sm:$0xff]
        %v8480 = vld [vmem:[#allocation3 + $0x328] sm:$0xff]
        %v8481 = vld [vmem:[#allocation3 + $0x330] sm:$0xff]
        %v8482 = vld [vmem:[#allocation3 + $0x338] sm:$0xf]
        %v8483 = vld [vmem:[#allocation3 + $0x33c] sm:$0xff]
        %v8484 = vld [vmem:[#allocation3 + $0x344] sm:$0xff]
        %v8485 = vld [vmem:[#allocation3 + $0x34c] sm:$0xff]
        %v8486 = vld [vmem:[#allocation3 + $0x354] sm:$0xff]
        %v8487 = vld [vmem:[#allocation3 + $0x35c] sm:$0xf]
        %v8488 = vld [vmem:[#allocation3 + $0x360] sm:$0xff]
        %v8489 = vld [vmem:[#allocation3 + $0x368] sm:$0xff]
        %v8490 = vld [vmem:[#allocation3 + $0x370] sm:$0xff]
        %v8491 = vld [vmem:[#allocation3 + $0x378] sm:$0xff]
        %v8492 = vld [vmem:[#allocation3 + $0x380] sm:$0xf]
        %v8493 = vld [vmem:[#allocation3 + $0x384] sm:$0xff]
        %v8494 = vld [vmem:[#allocation3 + $0x38c] sm:$0xff]
        %v8495 = vld [vmem:[#allocation3 + $0x394] sm:$0xff]
        %v8496 = vld [vmem:[#allocation3 + $0x39c] sm:$0xff]
        %v8497 = vld [vmem:[#allocation3 + $0x3a4] sm:$0xf]
        %v8498 = vld [vmem:[#allocation3 + $0x3a8] sm:$0xff]
        %v8499 = vld [vmem:[#allocation3 + $0x3b0] sm:$0xff]
        %v8500 = vld [vmem:[#allocation3 + $0x3b8] sm:$0xff]
        %v8501 = vld [vmem:[#allocation3 + $0x3c0] sm:$0xff]
        %v8502 = vld [vmem:[#allocation3 + $0x3c8] sm:$0xf]
        %v8503 = vld [vmem:[#allocation3 + $0x3cc] sm:$0xff]
        %v8504 = vld [vmem:[#allocation3 + $0x3d4] sm:$0xff]
        %v8505 = vld [vmem:[#allocation3 + $0x3dc] sm:$0xff]
        %v8506 = vld [vmem:[#allocation3 + $0x3e4] sm:$0xff]
        %v8507 = vld [vmem:[#allocation3 + $0x3ec] sm:$0xf]
        %v8508 = vld [vmem:[#allocation3 + $0x3f0] sm:$0xff]
        %v8509 = vld [vmem:[#allocation3 + $0x3f8] sm:$0xff]
        %v8510 = vld [vmem:[#allocation3 + $0x400] sm:$0xff]
        %v8511 = vld [vmem:[#allocation3 + $0x408] sm:$0xff]
        %v8512 = vld [vmem:[#allocation3 + $0x410] sm:$0xf]
        %v8513 = vld [vmem:[#allocation3 + $0x414] sm:$0xff]
        %v8514 = vld [vmem:[#allocation3 + $0x41c] sm:$0xff]
        %v8515 = vld [vmem:[#allocation3 + $0x424] sm:$0xff]
        %v8516 = vld [vmem:[#allocation3 + $0x42c] sm:$0xff]
        %v8517 = vld [vmem:[#allocation3 + $0x434] sm:$0xf]
        %v8518 = vld [vmem:[#allocation3 + $0x438] sm:$0xff]
        %v8519 = vld [vmem:[#allocation3 + $0x440] sm:$0xff]
        %v8520 = vld [vmem:[#allocation3 + $0x448] sm:$0xff]
        %v8521 = vld [vmem:[#allocation3 + $0x450] sm:$0xff]
        %v8522 = vld [vmem:[#allocation3 + $0x458] sm:$0xf]
        %v8523 = vld [vmem:[#allocation3 + $0x45c] sm:$0xff]
        %v8524 = vld [vmem:[#allocation3 + $0x464] sm:$0xff]
        %v8525 = vld [vmem:[#allocation3 + $0x46c] sm:$0xff]
        %v8526 = vld [vmem:[#allocation3 + $0x474] sm:$0xff]
        %v8527 = vld [vmem:[#allocation3 + $0x47c] sm:$0xf]
        %s8528 = scalar_lea.vmem [#allocation9], 576
        %v8529 = vld [vmem:[%s8528] sm:$0xf]
        %v8530 = vld [vmem:[%s8528 + $0x4] sm:$0xf]
        %v8531 = vld [vmem:[%s8528 + $0x8] sm:$0xf]
        %v8532 = vld [vmem:[%s8528 + $0xc] sm:$0xf]
        %v8533 = vld [vmem:[%s8528 + $0x10] sm:$0xf]
        %v8534 = vld [vmem:[%s8528 + $0x14] sm:$0xf]
        %v8535 = vld [vmem:[%s8528 + $0x18] sm:$0xf]
        %v8536 = vld [vmem:[%s8528 + $0x1c] sm:$0xf]
        %v8537 = vld [vmem:[%s8528 + $0x20] sm:$0xf]
        %v8538 = vld [vmem:[%s8528 + $0x24] sm:$0xf]
        %v8539 = vld [vmem:[%s8528 + $0x28] sm:$0xf]
        %v8540 = vld [vmem:[%s8528 + $0x2c] sm:$0xf]
        %v8541 = vld [vmem:[%s8528 + $0x30] sm:$0xf]
        %v8542 = vld [vmem:[%s8528 + $0x34] sm:$0xf]
        %v8543 = vld [vmem:[%s8528 + $0x38] sm:$0xf]
        %v8544 = vld [vmem:[%s8528 + $0x3c] sm:$0xf]
        %v8545 = vld [vmem:[%s8528 + $0x40] sm:$0xf]
        %v8546 = vld [vmem:[%s8528 + $0x44] sm:$0xf]
        %v8547 = vld [vmem:[%s8528 + $0x48] sm:$0xf]
        %v8548 = vld [vmem:[%s8528 + $0x4c] sm:$0xf]
        %v8549 = vld [vmem:[%s8528 + $0x50] sm:$0xf]
        %v8550 = vld [vmem:[%s8528 + $0x54] sm:$0xf]
        %v8551 = vld [vmem:[%s8528 + $0x58] sm:$0xf]
        %v8552 = vld [vmem:[%s8528 + $0x5c] sm:$0xf]
        %v8553 = vld [vmem:[%s8528 + $0x60] sm:$0xf]
        %v8554 = vld [vmem:[%s8528 + $0x64] sm:$0xf]
        %v8555 = vld [vmem:[%s8528 + $0x68] sm:$0xf]
        %v8556 = vld [vmem:[%s8528 + $0x6c] sm:$0xf]
        %v8557 = vld [vmem:[%s8528 + $0x70] sm:$0xf]
        %v8558 = vld [vmem:[%s8528 + $0x74] sm:$0xf]
        %v8559 = vld [vmem:[%s8528 + $0x78] sm:$0xf]
        %v8560 = vld [vmem:[%s8528 + $0x7c] sm:$0xf]
        %v8561 = vld [vmem:[%s8528 + $0x80] sm:$0xf]
        %v8562 = vld [vmem:[%s8528 + $0x84] sm:$0xf]
        %v8563 = vld [vmem:[%s8528 + $0x88] sm:$0xf]
        %v8564 = vld [vmem:[%s8528 + $0x8c] sm:$0xf]
        %v8565 = vld [vmem:[%s8528 + $0x90] sm:$0xf]
        %v8566 = vld [vmem:[%s8528 + $0x94] sm:$0xf]
        %v8567 = vld [vmem:[%s8528 + $0x98] sm:$0xf]
        %v8568 = vld [vmem:[%s8528 + $0x9c] sm:$0xf]
        %v8569 = vld [vmem:[%s8528 + $0xa0] sm:$0xf]
        %v8570 = vld [vmem:[%s8528 + $0xa4] sm:$0xf]
        %v8571 = vld [vmem:[%s8528 + $0xa8] sm:$0xf]
        %v8572 = vld [vmem:[%s8528 + $0xac] sm:$0xf]
        %v8573 = vld [vmem:[%s8528 + $0xb0] sm:$0xf]
        %v8574 = vld [vmem:[%s8528 + $0xb4] sm:$0xf]
        %v8575 = vld [vmem:[%s8528 + $0xb8] sm:$0xf]
        %v8576 = vld [vmem:[%s8528 + $0xbc] sm:$0xf]
        %v8577 = vld [vmem:[%s8528 + $0xc0] sm:$0xf]
        %v8578 = vld [vmem:[%s8528 + $0xc4] sm:$0xf]
        %v8579 = vld [vmem:[%s8528 + $0xc8] sm:$0xf]
        %v8580 = vld [vmem:[%s8528 + $0xcc] sm:$0xf]
        %v8581 = vld [vmem:[%s8528 + $0xd0] sm:$0xf]
        %v8582 = vld [vmem:[%s8528 + $0xd4] sm:$0xf]
        %v8583 = vld [vmem:[%s8528 + $0xd8] sm:$0xf]
        %v8584 = vld [vmem:[%s8528 + $0xdc] sm:$0xf]
        %v8585 = vld [vmem:[%s8528 + $0xe0] sm:$0xf]
        %v8586 = vld [vmem:[%s8528 + $0xe4] sm:$0xf]
        %v8587 = vld [vmem:[%s8528 + $0xe8] sm:$0xf]
        %v8588 = vld [vmem:[%s8528 + $0xec] sm:$0xf]
        %v8589 = vld [vmem:[%s8528 + $0xf0] sm:$0xf]
        %v8590 = vld [vmem:[%s8528 + $0xf4] sm:$0xf]
        %v8591 = vld [vmem:[%s8528 + $0xf8] sm:$0xf]
        %v8592 = vld [vmem:[%s8528 + $0xfc] sm:$0xf]
        %v8593 = vld [vmem:[%s8528 + $0x100] sm:$0xf]
        %v8594 = vld [vmem:[%s8528 + $0x104] sm:$0xf]
        %v8595 = vld [vmem:[%s8528 + $0x108] sm:$0xf]
        %v8596 = vld [vmem:[%s8528 + $0x10c] sm:$0xf]
        %v8597 = vld [vmem:[%s8528 + $0x110] sm:$0xf]
        %v8598 = vld [vmem:[%s8528 + $0x114] sm:$0xf]
        %v8599 = vld [vmem:[%s8528 + $0x118] sm:$0xf]
        %v8600 = vld [vmem:[%s8528 + $0x11c] sm:$0xf]
        %v8601 = vld [vmem:[%s8528 + $0x120] sm:$0xf]
        %v8602 = vld [vmem:[%s8528 + $0x124] sm:$0xf]
        %v8603 = vld [vmem:[%s8528 + $0x128] sm:$0xf]
        %v8604 = vld [vmem:[%s8528 + $0x12c] sm:$0xf]
        %v8605 = vld [vmem:[%s8528 + $0x130] sm:$0xf]
        %v8606 = vld [vmem:[%s8528 + $0x134] sm:$0xf]
        %v8607 = vld [vmem:[%s8528 + $0x138] sm:$0xf]
        %v8608 = vld [vmem:[%s8528 + $0x13c] sm:$0xf]
        %v8609 = vld [vmem:[%s8528 + $0x140] sm:$0xf]
        %v8610 = vld [vmem:[%s8528 + $0x144] sm:$0xf]
        %v8611 = vld [vmem:[%s8528 + $0x148] sm:$0xf]
        %v8612 = vld [vmem:[%s8528 + $0x14c] sm:$0xf]
        %v8613 = vld [vmem:[%s8528 + $0x150] sm:$0xf]
        %v8614 = vld [vmem:[%s8528 + $0x154] sm:$0xf]
        %v8615 = vld [vmem:[%s8528 + $0x158] sm:$0xf]
        %v8616 = vld [vmem:[%s8528 + $0x15c] sm:$0xf]
        %v8617 = vld [vmem:[%s8528 + $0x160] sm:$0xf]
        %v8618 = vld [vmem:[%s8528 + $0x164] sm:$0xf]
        %v8619 = vld [vmem:[%s8528 + $0x168] sm:$0xf]
        %v8620 = vld [vmem:[%s8528 + $0x16c] sm:$0xf]
        %v8621 = vld [vmem:[%s8528 + $0x170] sm:$0xf]
        %v8622 = vld [vmem:[%s8528 + $0x174] sm:$0xf]
        %v8623 = vld [vmem:[%s8528 + $0x178] sm:$0xf]
        %v8624 = vld [vmem:[%s8528 + $0x17c] sm:$0xf]
        %v8625 = vld [vmem:[%s8528 + $0x180] sm:$0xf]
        %v8626 = vld [vmem:[%s8528 + $0x184] sm:$0xf]
        %v8627 = vld [vmem:[%s8528 + $0x188] sm:$0xf]
        %v8628 = vld [vmem:[%s8528 + $0x18c] sm:$0xf]
        %v8629 = vld [vmem:[%s8528 + $0x190] sm:$0xf]
        %v8630 = vld [vmem:[%s8528 + $0x194] sm:$0xf]
        %v8631 = vld [vmem:[%s8528 + $0x198] sm:$0xf]
        %v8632 = vld [vmem:[%s8528 + $0x19c] sm:$0xf]
        %v8633 = vld [vmem:[%s8528 + $0x1a0] sm:$0xf]
        %v8634 = vld [vmem:[%s8528 + $0x1a4] sm:$0xf]
        %v8635 = vld [vmem:[%s8528 + $0x1a8] sm:$0xf]
        %v8636 = vld [vmem:[%s8528 + $0x1ac] sm:$0xf]
        %v8637 = vld [vmem:[%s8528 + $0x1b0] sm:$0xf]
        %v8638 = vld [vmem:[%s8528 + $0x1b4] sm:$0xf]
        %v8639 = vld [vmem:[%s8528 + $0x1b8] sm:$0xf]
        %v8640 = vld [vmem:[%s8528 + $0x1bc] sm:$0xf]
        %v8641 = vld [vmem:[%s8528 + $0x1c0] sm:$0xf]
        %v8642 = vld [vmem:[%s8528 + $0x1c4] sm:$0xf]
        %v8643 = vld [vmem:[%s8528 + $0x1c8] sm:$0xf]
        %v8644 = vld [vmem:[%s8528 + $0x1cc] sm:$0xf]
        %v8645 = vld [vmem:[%s8528 + $0x1d0] sm:$0xf]
        %v8646 = vld [vmem:[%s8528 + $0x1d4] sm:$0xf]
        %v8647 = vld [vmem:[%s8528 + $0x1d8] sm:$0xf]
        %v8648 = vld [vmem:[%s8528 + $0x1dc] sm:$0xf]
        %v8649 = vld [vmem:[%s8528 + $0x1e0] sm:$0xf]
        %v8650 = vld [vmem:[%s8528 + $0x1e4] sm:$0xf]
        %v8651 = vld [vmem:[%s8528 + $0x1e8] sm:$0xf]
        %v8652 = vld [vmem:[%s8528 + $0x1ec] sm:$0xf]
        %v8653 = vld [vmem:[%s8528 + $0x1f0] sm:$0xf]
        %v8654 = vld [vmem:[%s8528 + $0x1f4] sm:$0xf]
        %v8655 = vld [vmem:[%s8528 + $0x1f8] sm:$0xf]
        %v8656 = vld [vmem:[%s8528 + $0x1fc] sm:$0xf]
        %v8657 = vld [vmem:[%s8528 + $0x200] sm:$0xf]
        %v8658 = vld [vmem:[%s8528 + $0x204] sm:$0xf]
        %v8659 = vld [vmem:[%s8528 + $0x208] sm:$0xf]
        %v8660 = vld [vmem:[%s8528 + $0x20c] sm:$0xf]
        %v8661 = vld [vmem:[%s8528 + $0x210] sm:$0xf]
        %v8662 = vld [vmem:[%s8528 + $0x214] sm:$0xf]
        %v8663 = vld [vmem:[%s8528 + $0x218] sm:$0xf]
        %v8664 = vld [vmem:[%s8528 + $0x21c] sm:$0xf]
        %v8665 = vld [vmem:[%s8528 + $0x220] sm:$0xf]
        %v8666 = vld [vmem:[%s8528 + $0x224] sm:$0xf]
        %v8667 = vld [vmem:[%s8528 + $0x228] sm:$0xf]
        %v8668 = vld [vmem:[%s8528 + $0x22c] sm:$0xf]
        %v8669 = vld [vmem:[%s8528 + $0x230] sm:$0xf]
        %v8670 = vld [vmem:[%s8528 + $0x234] sm:$0xf]
        %v8671 = vld [vmem:[%s8528 + $0x238] sm:$0xf]
        %v8672 = vld [vmem:[%s8528 + $0x23c] sm:$0xf]
        %v8833 = vunpack.c.l.b16 %v8368
        %v8834 = vunpack.c.h.b16 %v8368
        %v8835 = vunpack.c.l.b16 %v8369
        %v8836 = vunpack.c.h.b16 %v8369
        %v8837 = vunpack.c.l.b16 %v8370
        %v8838 = vunpack.c.h.b16 %v8370
        %v8839 = vunpack.c.l.b16 %v8371
        %v8840 = vunpack.c.h.b16 %v8371
        %v8841 = vunpack.c.l.b16 %v8372
        %v8842 = vunpack.c.l.b16 %v8373
        %v8843 = vunpack.c.h.b16 %v8373
        %v8844 = vunpack.c.l.b16 %v8374
        %v8845 = vunpack.c.h.b16 %v8374
        %v8846 = vunpack.c.l.b16 %v8375
        %v8847 = vunpack.c.h.b16 %v8375
        %v8848 = vunpack.c.l.b16 %v8376
        %v8849 = vunpack.c.h.b16 %v8376
        %v8850 = vunpack.c.l.b16 %v8377
        %v8851 = vunpack.c.l.b16 %v8378
        %v8852 = vunpack.c.h.b16 %v8378
        %v8853 = vunpack.c.l.b16 %v8379
        %v8854 = vunpack.c.h.b16 %v8379
        %v8855 = vunpack.c.l.b16 %v8380
        %v8856 = vunpack.c.h.b16 %v8380
        %v8857 = vunpack.c.l.b16 %v8381
        %v8858 = vunpack.c.h.b16 %v8381
        %v8859 = vunpack.c.l.b16 %v8382
        %v8860 = vunpack.c.l.b16 %v8383
        %v8861 = vunpack.c.h.b16 %v8383
        %v8862 = vunpack.c.l.b16 %v8384
        %v8863 = vunpack.c.h.b16 %v8384
        %v8864 = vunpack.c.l.b16 %v8385
        %v8865 = vunpack.c.h.b16 %v8385
        %v8866 = vunpack.c.l.b16 %v8386
        %v8867 = vunpack.c.h.b16 %v8386
        %v8868 = vunpack.c.l.b16 %v8387
        %v8869 = vunpack.c.l.b16 %v8388
        %v8870 = vunpack.c.h.b16 %v8388
        %v8871 = vunpack.c.l.b16 %v8389
        %v8872 = vunpack.c.h.b16 %v8389
        %v8873 = vunpack.c.l.b16 %v8390
        %v8874 = vunpack.c.h.b16 %v8390
        %v8875 = vunpack.c.l.b16 %v8391
        %v8876 = vunpack.c.h.b16 %v8391
        %v8877 = vunpack.c.l.b16 %v8392
        %v8878 = vunpack.c.l.b16 %v8393
        %v8879 = vunpack.c.h.b16 %v8393
        %v8880 = vunpack.c.l.b16 %v8394
        %v8881 = vunpack.c.h.b16 %v8394
        %v8882 = vunpack.c.l.b16 %v8395
        %v8883 = vunpack.c.h.b16 %v8395
        %v8884 = vunpack.c.l.b16 %v8396
        %v8885 = vunpack.c.h.b16 %v8396
        %v8886 = vunpack.c.l.b16 %v8397
        %v8887 = vunpack.c.l.b16 %v8398
        %v8888 = vunpack.c.h.b16 %v8398
        %v8889 = vunpack.c.l.b16 %v8399
        %v8890 = vunpack.c.h.b16 %v8399
        %v8891 = vunpack.c.l.b16 %v8400
        %v8892 = vunpack.c.h.b16 %v8400
        %v8893 = vunpack.c.l.b16 %v8401
        %v8894 = vunpack.c.h.b16 %v8401
        %v8895 = vunpack.c.l.b16 %v8402
        %v8896 = vunpack.c.l.b16 %v8403
        %v8897 = vunpack.c.h.b16 %v8403
        %v8898 = vunpack.c.l.b16 %v8404
        %v8899 = vunpack.c.h.b16 %v8404
        %v8900 = vunpack.c.l.b16 %v8405
        %v8901 = vunpack.c.h.b16 %v8405
        %v8902 = vunpack.c.l.b16 %v8406
        %v8903 = vunpack.c.h.b16 %v8406
        %v8904 = vunpack.c.l.b16 %v8407
        %v8905 = vunpack.c.l.b16 %v8408
        %v8906 = vunpack.c.h.b16 %v8408
        %v8907 = vunpack.c.l.b16 %v8409
        %v8908 = vunpack.c.h.b16 %v8409
        %v8909 = vunpack.c.l.b16 %v8410
        %v8910 = vunpack.c.h.b16 %v8410
        %v8911 = vunpack.c.l.b16 %v8411
        %v8912 = vunpack.c.h.b16 %v8411
        %v8913 = vunpack.c.l.b16 %v8412
        %v8914 = vunpack.c.l.b16 %v8413
        %v8915 = vunpack.c.h.b16 %v8413
        %v8916 = vunpack.c.l.b16 %v8414
        %v8917 = vunpack.c.h.b16 %v8414
        %v8918 = vunpack.c.l.b16 %v8415
        %v8919 = vunpack.c.h.b16 %v8415
        %v8920 = vunpack.c.l.b16 %v8416
        %v8921 = vunpack.c.h.b16 %v8416
        %v8922 = vunpack.c.l.b16 %v8417
        %v8923 = vunpack.c.l.b16 %v8418
        %v8924 = vunpack.c.h.b16 %v8418
        %v8925 = vunpack.c.l.b16 %v8419
        %v8926 = vunpack.c.h.b16 %v8419
        %v8927 = vunpack.c.l.b16 %v8420
        %v8928 = vunpack.c.h.b16 %v8420
        %v8929 = vunpack.c.l.b16 %v8421
        %v8930 = vunpack.c.h.b16 %v8421
        %v8931 = vunpack.c.l.b16 %v8422
        %v8932 = vunpack.c.l.b16 %v8423
        %v8933 = vunpack.c.h.b16 %v8423
        %v8934 = vunpack.c.l.b16 %v8424
        %v8935 = vunpack.c.h.b16 %v8424
        %v8936 = vunpack.c.l.b16 %v8425
        %v8937 = vunpack.c.h.b16 %v8425
        %v8938 = vunpack.c.l.b16 %v8426
        %v8939 = vunpack.c.h.b16 %v8426
        %v8940 = vunpack.c.l.b16 %v8427
        %v8941 = vunpack.c.l.b16 %v8428
        %v8942 = vunpack.c.h.b16 %v8428
        %v8943 = vunpack.c.l.b16 %v8429
        %v8944 = vunpack.c.h.b16 %v8429
        %v8945 = vunpack.c.l.b16 %v8430
        %v8946 = vunpack.c.h.b16 %v8430
        %v8947 = vunpack.c.l.b16 %v8431
        %v8948 = vunpack.c.h.b16 %v8431
        %v8949 = vunpack.c.l.b16 %v8432
        %v8950 = vunpack.c.l.b16 %v8433
        %v8951 = vunpack.c.h.b16 %v8433
        %v8952 = vunpack.c.l.b16 %v8434
        %v8953 = vunpack.c.h.b16 %v8434
        %v8954 = vunpack.c.l.b16 %v8435
        %v8955 = vunpack.c.h.b16 %v8435
        %v8956 = vunpack.c.l.b16 %v8436
        %v8957 = vunpack.c.h.b16 %v8436
        %v8958 = vunpack.c.l.b16 %v8437
        %v8959 = vunpack.c.l.b16 %v8438
        %v8960 = vunpack.c.h.b16 %v8438
        %v8961 = vunpack.c.l.b16 %v8439
        %v8962 = vunpack.c.h.b16 %v8439
        %v8963 = vunpack.c.l.b16 %v8440
        %v8964 = vunpack.c.h.b16 %v8440
        %v8965 = vunpack.c.l.b16 %v8441
        %v8966 = vunpack.c.h.b16 %v8441
        %v8967 = vunpack.c.l.b16 %v8442
        %v8968 = vunpack.c.l.b16 %v8443
        %v8969 = vunpack.c.h.b16 %v8443
        %v8970 = vunpack.c.l.b16 %v8444
        %v8971 = vunpack.c.h.b16 %v8444
        %v8972 = vunpack.c.l.b16 %v8445
        %v8973 = vunpack.c.h.b16 %v8445
        %v8974 = vunpack.c.l.b16 %v8446
        %v8975 = vunpack.c.h.b16 %v8446
        %v8976 = vunpack.c.l.b16 %v8447
        %v8977 = vunpack.c.l.b16 %v8448
        %v8978 = vunpack.c.h.b16 %v8448
        %v8979 = vunpack.c.l.b16 %v8449
        %v8980 = vunpack.c.h.b16 %v8449
        %v8981 = vunpack.c.l.b16 %v8450
        %v8982 = vunpack.c.h.b16 %v8450
        %v8983 = vunpack.c.l.b16 %v8451
        %v8984 = vunpack.c.h.b16 %v8451
        %v8985 = vunpack.c.l.b16 %v8452
        %v8986 = vunpack.c.l.b16 %v8453
        %v8987 = vunpack.c.h.b16 %v8453
        %v8988 = vunpack.c.l.b16 %v8454
        %v8989 = vunpack.c.h.b16 %v8454
        %v8990 = vunpack.c.l.b16 %v8455
        %v8991 = vunpack.c.h.b16 %v8455
        %v8992 = vunpack.c.l.b16 %v8456
        %v8993 = vunpack.c.h.b16 %v8456
        %v8994 = vunpack.c.l.b16 %v8457
        %v8995 = vunpack.c.l.b16 %v8458
        %v8996 = vunpack.c.h.b16 %v8458
        %v8997 = vunpack.c.l.b16 %v8459
        %v8998 = vunpack.c.h.b16 %v8459
        %v8999 = vunpack.c.l.b16 %v8460
        %v9000 = vunpack.c.h.b16 %v8460
        %v9001 = vunpack.c.l.b16 %v8461
        %v9002 = vunpack.c.h.b16 %v8461
        %v9003 = vunpack.c.l.b16 %v8462
        %v9004 = vunpack.c.l.b16 %v8463
        %v9005 = vunpack.c.h.b16 %v8463
        %v9006 = vunpack.c.l.b16 %v8464
        %v9007 = vunpack.c.h.b16 %v8464
        %v9008 = vunpack.c.l.b16 %v8465
        %v9009 = vunpack.c.h.b16 %v8465
        %v9010 = vunpack.c.l.b16 %v8466
        %v9011 = vunpack.c.h.b16 %v8466
        %v9012 = vunpack.c.l.b16 %v8467
        %v9013 = vunpack.c.l.b16 %v8468
        %v9014 = vunpack.c.h.b16 %v8468
        %v9015 = vunpack.c.l.b16 %v8469
        %v9016 = vunpack.c.h.b16 %v8469
        %v9017 = vunpack.c.l.b16 %v8470
        %v9018 = vunpack.c.h.b16 %v8470
        %v9019 = vunpack.c.l.b16 %v8471
        %v9020 = vunpack.c.h.b16 %v8471
        %v9021 = vunpack.c.l.b16 %v8472
        %v9022 = vunpack.c.l.b16 %v8473
        %v9023 = vunpack.c.h.b16 %v8473
        %v9024 = vunpack.c.l.b16 %v8474
        %v9025 = vunpack.c.h.b16 %v8474
        %v9026 = vunpack.c.l.b16 %v8475
        %v9027 = vunpack.c.h.b16 %v8475
        %v9028 = vunpack.c.l.b16 %v8476
        %v9029 = vunpack.c.h.b16 %v8476
        %v9030 = vunpack.c.l.b16 %v8477
        %v9031 = vunpack.c.l.b16 %v8478
        %v9032 = vunpack.c.h.b16 %v8478
        %v9033 = vunpack.c.l.b16 %v8479
        %v9034 = vunpack.c.h.b16 %v8479
        %v9035 = vunpack.c.l.b16 %v8480
        %v9036 = vunpack.c.h.b16 %v8480
        %v9037 = vunpack.c.l.b16 %v8481
        %v9038 = vunpack.c.h.b16 %v8481
        %v9039 = vunpack.c.l.b16 %v8482
        %v9040 = vunpack.c.l.b16 %v8483
        %v9041 = vunpack.c.h.b16 %v8483
        %v9042 = vunpack.c.l.b16 %v8484
        %v9043 = vunpack.c.h.b16 %v8484
        %v9044 = vunpack.c.l.b16 %v8485
        %v9045 = vunpack.c.h.b16 %v8485
        %v9046 = vunpack.c.l.b16 %v8486
        %v9047 = vunpack.c.h.b16 %v8486
        %v9048 = vunpack.c.l.b16 %v8487
        %v9049 = vunpack.c.l.b16 %v8488
        %v9050 = vunpack.c.h.b16 %v8488
        %v9051 = vunpack.c.l.b16 %v8489
        %v9052 = vunpack.c.h.b16 %v8489
        %v9053 = vunpack.c.l.b16 %v8490
        %v9054 = vunpack.c.h.b16 %v8490
        %v9055 = vunpack.c.l.b16 %v8491
        %v9056 = vunpack.c.h.b16 %v8491
        %v9057 = vunpack.c.l.b16 %v8492
        %v9058 = vunpack.c.l.b16 %v8493
        %v9059 = vunpack.c.h.b16 %v8493
        %v9060 = vunpack.c.l.b16 %v8494
        %v9061 = vunpack.c.h.b16 %v8494
        %v9062 = vunpack.c.l.b16 %v8495
        %v9063 = vunpack.c.h.b16 %v8495
        %v9064 = vunpack.c.l.b16 %v8496
        %v9065 = vunpack.c.h.b16 %v8496
        %v9066 = vunpack.c.l.b16 %v8497
        %v9067 = vunpack.c.l.b16 %v8498
        %v9068 = vunpack.c.h.b16 %v8498
        %v9069 = vunpack.c.l.b16 %v8499
        %v9070 = vunpack.c.h.b16 %v8499
        %v9071 = vunpack.c.l.b16 %v8500
        %v9072 = vunpack.c.h.b16 %v8500
        %v9073 = vunpack.c.l.b16 %v8501
        %v9074 = vunpack.c.h.b16 %v8501
        %v9075 = vunpack.c.l.b16 %v8502
        %v9076 = vunpack.c.l.b16 %v8503
        %v9077 = vunpack.c.h.b16 %v8503
        %v9078 = vunpack.c.l.b16 %v8504
        %v9079 = vunpack.c.h.b16 %v8504
        %v9080 = vunpack.c.l.b16 %v8505
        %v9081 = vunpack.c.h.b16 %v8505
        %v9082 = vunpack.c.l.b16 %v8506
        %v9083 = vunpack.c.h.b16 %v8506
        %v9084 = vunpack.c.l.b16 %v8507
        %v9085 = vunpack.c.l.b16 %v8508
        %v9086 = vunpack.c.h.b16 %v8508
        %v9087 = vunpack.c.l.b16 %v8509
        %v9088 = vunpack.c.h.b16 %v8509
        %v9089 = vunpack.c.l.b16 %v8510
        %v9090 = vunpack.c.h.b16 %v8510
        %v9091 = vunpack.c.l.b16 %v8511
        %v9092 = vunpack.c.h.b16 %v8511
        %v9093 = vunpack.c.l.b16 %v8512
        %v9094 = vunpack.c.l.b16 %v8513
        %v9095 = vunpack.c.h.b16 %v8513
        %v9096 = vunpack.c.l.b16 %v8514
        %v9097 = vunpack.c.h.b16 %v8514
        %v9098 = vunpack.c.l.b16 %v8515
        %v9099 = vunpack.c.h.b16 %v8515
        %v9100 = vunpack.c.l.b16 %v8516
        %v9101 = vunpack.c.h.b16 %v8516
        %v9102 = vunpack.c.l.b16 %v8517
        %v9103 = vunpack.c.l.b16 %v8518
        %v9104 = vunpack.c.h.b16 %v8518
        %v9105 = vunpack.c.l.b16 %v8519
        %v9106 = vunpack.c.h.b16 %v8519
        %v9107 = vunpack.c.l.b16 %v8520
        %v9108 = vunpack.c.h.b16 %v8520
        %v9109 = vunpack.c.l.b16 %v8521
        %v9110 = vunpack.c.h.b16 %v8521
        %v9111 = vunpack.c.l.b16 %v8522
        %v9112 = vunpack.c.l.b16 %v8523
        %v9113 = vunpack.c.h.b16 %v8523
        %v9114 = vunpack.c.l.b16 %v8524
        %v9115 = vunpack.c.h.b16 %v8524
        %v9116 = vunpack.c.l.b16 %v8525
        %v9117 = vunpack.c.h.b16 %v8525
        %v9118 = vunpack.c.l.b16 %v8526
        %v9119 = vunpack.c.h.b16 %v8526
        %v9120 = vunpack.c.l.b16 %v8527
        %v9121 = vpack.c.b16 %v8842, %v8833
        %v9122 = vpack.c.b16 %v8843, %v8834
        %v9123 = vpack.c.b16 %v8844, %v8835
        %v9124 = vpack.c.b16 %v8845, %v8836
        %v9125 = vpack.c.b16 %v8846, %v8837
        %v9126 = vpack.c.b16 %v8847, %v8838
        %v9127 = vpack.c.b16 %v8848, %v8839
        %v9128 = vpack.c.b16 %v8849, %v8840
        %v9129 = vpack.c.b16 %v8850, %v8841
        %v9130 = vpack.c.b16 %v8860, %v8851
        %v9131 = vpack.c.b16 %v8861, %v8852
        %v9132 = vpack.c.b16 %v8862, %v8853
        %v9133 = vpack.c.b16 %v8863, %v8854
        %v9134 = vpack.c.b16 %v8864, %v8855
        %v9135 = vpack.c.b16 %v8865, %v8856
        %v9136 = vpack.c.b16 %v8866, %v8857
        %v9137 = vpack.c.b16 %v8867, %v8858
        %v9138 = vpack.c.b16 %v8868, %v8859
        %v9139 = vpack.c.b16 %v8878, %v8869
        %v9140 = vpack.c.b16 %v8879, %v8870
        %v9141 = vpack.c.b16 %v8880, %v8871
        %v9142 = vpack.c.b16 %v8881, %v8872
        %v9143 = vpack.c.b16 %v8882, %v8873
        %v9144 = vpack.c.b16 %v8883, %v8874
        %v9145 = vpack.c.b16 %v8884, %v8875
        %v9146 = vpack.c.b16 %v8885, %v8876
        %v9147 = vpack.c.b16 %v8886, %v8877
        %v9148 = vpack.c.b16 %v8896, %v8887
        %v9149 = vpack.c.b16 %v8897, %v8888
        %v9150 = vpack.c.b16 %v8898, %v8889
        %v9151 = vpack.c.b16 %v8899, %v8890
        %v9152 = vpack.c.b16 %v8900, %v8891
        %v9153 = vpack.c.b16 %v8901, %v8892
        %v9154 = vpack.c.b16 %v8902, %v8893
        %v9155 = vpack.c.b16 %v8903, %v8894
        %v9156 = vpack.c.b16 %v8904, %v8895
        %v9157 = vpack.c.b16 %v8914, %v8905
        %v9158 = vpack.c.b16 %v8915, %v8906
        %v9159 = vpack.c.b16 %v8916, %v8907
        %v9160 = vpack.c.b16 %v8917, %v8908
        %v9161 = vpack.c.b16 %v8918, %v8909
        %v9162 = vpack.c.b16 %v8919, %v8910
        %v9163 = vpack.c.b16 %v8920, %v8911
        %v9164 = vpack.c.b16 %v8921, %v8912
        %v9165 = vpack.c.b16 %v8922, %v8913
        %v9166 = vpack.c.b16 %v8932, %v8923
        %v9167 = vpack.c.b16 %v8933, %v8924
        %v9168 = vpack.c.b16 %v8934, %v8925
        %v9169 = vpack.c.b16 %v8935, %v8926
        %v9170 = vpack.c.b16 %v8936, %v8927
        %v9171 = vpack.c.b16 %v8937, %v8928
        %v9172 = vpack.c.b16 %v8938, %v8929
        %v9173 = vpack.c.b16 %v8939, %v8930
        %v9174 = vpack.c.b16 %v8940, %v8931
        %v9175 = vpack.c.b16 %v8950, %v8941
        %v9176 = vpack.c.b16 %v8951, %v8942
        %v9177 = vpack.c.b16 %v8952, %v8943
        %v9178 = vpack.c.b16 %v8953, %v8944
        %v9179 = vpack.c.b16 %v8954, %v8945
        %v9180 = vpack.c.b16 %v8955, %v8946
        %v9181 = vpack.c.b16 %v8956, %v8947
        %v9182 = vpack.c.b16 %v8957, %v8948
        %v9183 = vpack.c.b16 %v8958, %v8949
        %v9184 = vpack.c.b16 %v8968, %v8959
        %v9185 = vpack.c.b16 %v8969, %v8960
        %v9186 = vpack.c.b16 %v8970, %v8961
        %v9187 = vpack.c.b16 %v8971, %v8962
        %v9188 = vpack.c.b16 %v8972, %v8963
        %v9189 = vpack.c.b16 %v8973, %v8964
        %v9190 = vpack.c.b16 %v8974, %v8965
        %v9191 = vpack.c.b16 %v8975, %v8966
        %v9192 = vpack.c.b16 %v8976, %v8967
        %v9193 = vpack.c.b16 %v8986, %v8977
        %v9194 = vpack.c.b16 %v8987, %v8978
        %v9195 = vpack.c.b16 %v8988, %v8979
        %v9196 = vpack.c.b16 %v8989, %v8980
        %v9197 = vpack.c.b16 %v8990, %v8981
        %v9198 = vpack.c.b16 %v8991, %v8982
        %v9199 = vpack.c.b16 %v8992, %v8983
        %v9200 = vpack.c.b16 %v8993, %v8984
        %v9201 = vpack.c.b16 %v8994, %v8985
        %v9202 = vpack.c.b16 %v9004, %v8995
        %v9203 = vpack.c.b16 %v9005, %v8996
        %v9204 = vpack.c.b16 %v9006, %v8997
        %v9205 = vpack.c.b16 %v9007, %v8998
        %v9206 = vpack.c.b16 %v9008, %v8999
        %v9207 = vpack.c.b16 %v9009, %v9000
        %v9208 = vpack.c.b16 %v9010, %v9001
        %v9209 = vpack.c.b16 %v9011, %v9002
        %v9210 = vpack.c.b16 %v9012, %v9003
        %v9211 = vpack.c.b16 %v9022, %v9013
        %v9212 = vpack.c.b16 %v9023, %v9014
        %v9213 = vpack.c.b16 %v9024, %v9015
        %v9214 = vpack.c.b16 %v9025, %v9016
        %v9215 = vpack.c.b16 %v9026, %v9017
        %v9216 = vpack.c.b16 %v9027, %v9018
        %v9217 = vpack.c.b16 %v9028, %v9019
        %v9218 = vpack.c.b16 %v9029, %v9020
        %v9219 = vpack.c.b16 %v9030, %v9021
        %v9220 = vpack.c.b16 %v9040, %v9031
        %v9221 = vpack.c.b16 %v9041, %v9032
        %v9222 = vpack.c.b16 %v9042, %v9033
        %v9223 = vpack.c.b16 %v9043, %v9034
        %v9224 = vpack.c.b16 %v9044, %v9035
        %v9225 = vpack.c.b16 %v9045, %v9036
        %v9226 = vpack.c.b16 %v9046, %v9037
        %v9227 = vpack.c.b16 %v9047, %v9038
        %v9228 = vpack.c.b16 %v9048, %v9039
        %v9229 = vpack.c.b16 %v9058, %v9049
        %v9230 = vpack.c.b16 %v9059, %v9050
        %v9231 = vpack.c.b16 %v9060, %v9051
        %v9232 = vpack.c.b16 %v9061, %v9052
        %v9233 = vpack.c.b16 %v9062, %v9053
        %v9234 = vpack.c.b16 %v9063, %v9054
        %v9235 = vpack.c.b16 %v9064, %v9055
        %v9236 = vpack.c.b16 %v9065, %v9056
        %v9237 = vpack.c.b16 %v9066, %v9057
        %v9238 = vpack.c.b16 %v9076, %v9067
        %v9239 = vpack.c.b16 %v9077, %v9068
        %v9240 = vpack.c.b16 %v9078, %v9069
        %v9241 = vpack.c.b16 %v9079, %v9070
        %v9242 = vpack.c.b16 %v9080, %v9071
        %v9243 = vpack.c.b16 %v9081, %v9072
        %v9244 = vpack.c.b16 %v9082, %v9073
        %v9245 = vpack.c.b16 %v9083, %v9074
        %v9246 = vpack.c.b16 %v9084, %v9075
        %v9247 = vpack.c.b16 %v9094, %v9085
        %v9248 = vpack.c.b16 %v9095, %v9086
        %v9249 = vpack.c.b16 %v9096, %v9087
        %v9250 = vpack.c.b16 %v9097, %v9088
        %v9251 = vpack.c.b16 %v9098, %v9089
        %v9252 = vpack.c.b16 %v9099, %v9090
        %v9253 = vpack.c.b16 %v9100, %v9091
        %v9254 = vpack.c.b16 %v9101, %v9092
        %v9255 = vpack.c.b16 %v9102, %v9093
        %v9256 = vpack.c.b16 %v9112, %v9103
        %v9257 = vpack.c.b16 %v9113, %v9104
        %v9258 = vpack.c.b16 %v9114, %v9105
        %v9259 = vpack.c.b16 %v9115, %v9106
        %v9260 = vpack.c.b16 %v9116, %v9107
        %v9261 = vpack.c.b16 %v9117, %v9108
        %v9262 = vpack.c.b16 %v9118, %v9109
        %v9263 = vpack.c.b16 %v9119, %v9110
        %v9264 = vpack.c.b16 %v9120, %v9111
        %v9553 = vunpack.c.l.b16 %v8529
        %v9554 = vunpack.c.l.b16 %v8530
        %v9555 = vunpack.c.l.b16 %v8531
        %v9556 = vunpack.c.l.b16 %v8532
        %v9557 = vunpack.c.l.b16 %v8533
        %v9558 = vunpack.c.l.b16 %v8534
        %v9559 = vunpack.c.l.b16 %v8535
        %v9560 = vunpack.c.l.b16 %v8536
        %v9561 = vunpack.c.l.b16 %v8537
        %v9562 = vunpack.c.l.b16 %v8538
        %v9563 = vunpack.c.l.b16 %v8539
        %v9564 = vunpack.c.l.b16 %v8540
        %v9565 = vunpack.c.l.b16 %v8541
        %v9566 = vunpack.c.l.b16 %v8542
        %v9567 = vunpack.c.l.b16 %v8543
        %v9568 = vunpack.c.l.b16 %v8544
        %v9569 = vunpack.c.l.b16 %v8545
        %v9570 = vunpack.c.l.b16 %v8546
        %v9571 = vunpack.c.l.b16 %v8547
        %v9572 = vunpack.c.l.b16 %v8548
        %v9573 = vunpack.c.l.b16 %v8549
        %v9574 = vunpack.c.l.b16 %v8550
        %v9575 = vunpack.c.l.b16 %v8551
        %v9576 = vunpack.c.l.b16 %v8552
        %v9577 = vunpack.c.l.b16 %v8553
        %v9578 = vunpack.c.l.b16 %v8554
        %v9579 = vunpack.c.l.b16 %v8555
        %v9580 = vunpack.c.l.b16 %v8556
        %v9581 = vunpack.c.l.b16 %v8557
        %v9582 = vunpack.c.l.b16 %v8558
        %v9583 = vunpack.c.l.b16 %v8559
        %v9584 = vunpack.c.l.b16 %v8560
        %v9585 = vunpack.c.l.b16 %v8561
        %v9586 = vunpack.c.l.b16 %v8562
        %v9587 = vunpack.c.l.b16 %v8563
        %v9588 = vunpack.c.l.b16 %v8564
        %v9589 = vunpack.c.l.b16 %v8565
        %v9590 = vunpack.c.l.b16 %v8566
        %v9591 = vunpack.c.l.b16 %v8567
        %v9592 = vunpack.c.l.b16 %v8568
        %v9593 = vunpack.c.l.b16 %v8569
        %v9594 = vunpack.c.l.b16 %v8570
        %v9595 = vunpack.c.l.b16 %v8571
        %v9596 = vunpack.c.l.b16 %v8572
        %v9597 = vunpack.c.l.b16 %v8573
        %v9598 = vunpack.c.l.b16 %v8574
        %v9599 = vunpack.c.l.b16 %v8575
        %v9600 = vunpack.c.l.b16 %v8576
        %v9601 = vunpack.c.l.b16 %v8577
        %v9602 = vunpack.c.l.b16 %v8578
        %v9603 = vunpack.c.l.b16 %v8579
        %v9604 = vunpack.c.l.b16 %v8580
        %v9605 = vunpack.c.l.b16 %v8581
        %v9606 = vunpack.c.l.b16 %v8582
        %v9607 = vunpack.c.l.b16 %v8583
        %v9608 = vunpack.c.l.b16 %v8584
        %v9609 = vunpack.c.l.b16 %v8585
        %v9610 = vunpack.c.l.b16 %v8586
        %v9611 = vunpack.c.l.b16 %v8587
        %v9612 = vunpack.c.l.b16 %v8588
        %v9613 = vunpack.c.l.b16 %v8589
        %v9614 = vunpack.c.l.b16 %v8590
        %v9615 = vunpack.c.l.b16 %v8591
        %v9616 = vunpack.c.l.b16 %v8592
        %v9617 = vunpack.c.l.b16 %v8593
        %v9618 = vunpack.c.l.b16 %v8594
        %v9619 = vunpack.c.l.b16 %v8595
        %v9620 = vunpack.c.l.b16 %v8596
        %v9621 = vunpack.c.l.b16 %v8597
        %v9622 = vunpack.c.l.b16 %v8598
        %v9623 = vunpack.c.l.b16 %v8599
        %v9624 = vunpack.c.l.b16 %v8600
        %v9625 = vunpack.c.l.b16 %v8601
        %v9626 = vunpack.c.l.b16 %v8602
        %v9627 = vunpack.c.l.b16 %v8603
        %v9628 = vunpack.c.l.b16 %v8604
        %v9629 = vunpack.c.l.b16 %v8605
        %v9630 = vunpack.c.l.b16 %v8606
        %v9631 = vunpack.c.l.b16 %v8607
        %v9632 = vunpack.c.l.b16 %v8608
        %v9633 = vunpack.c.l.b16 %v8609
        %v9634 = vunpack.c.l.b16 %v8610
        %v9635 = vunpack.c.l.b16 %v8611
        %v9636 = vunpack.c.l.b16 %v8612
        %v9637 = vunpack.c.l.b16 %v8613
        %v9638 = vunpack.c.l.b16 %v8614
        %v9639 = vunpack.c.l.b16 %v8615
        %v9640 = vunpack.c.l.b16 %v8616
        %v9641 = vunpack.c.l.b16 %v8617
        %v9642 = vunpack.c.l.b16 %v8618
        %v9643 = vunpack.c.l.b16 %v8619
        %v9644 = vunpack.c.l.b16 %v8620
        %v9645 = vunpack.c.l.b16 %v8621
        %v9646 = vunpack.c.l.b16 %v8622
        %v9647 = vunpack.c.l.b16 %v8623
        %v9648 = vunpack.c.l.b16 %v8624
        %v9649 = vunpack.c.l.b16 %v8625
        %v9650 = vunpack.c.l.b16 %v8626
        %v9651 = vunpack.c.l.b16 %v8627
        %v9652 = vunpack.c.l.b16 %v8628
        %v9653 = vunpack.c.l.b16 %v8629
        %v9654 = vunpack.c.l.b16 %v8630
        %v9655 = vunpack.c.l.b16 %v8631
        %v9656 = vunpack.c.l.b16 %v8632
        %v9657 = vunpack.c.l.b16 %v8633
        %v9658 = vunpack.c.l.b16 %v8634
        %v9659 = vunpack.c.l.b16 %v8635
        %v9660 = vunpack.c.l.b16 %v8636
        %v9661 = vunpack.c.l.b16 %v8637
        %v9662 = vunpack.c.l.b16 %v8638
        %v9663 = vunpack.c.l.b16 %v8639
        %v9664 = vunpack.c.l.b16 %v8640
        %v9665 = vunpack.c.l.b16 %v8641
        %v9666 = vunpack.c.l.b16 %v8642
        %v9667 = vunpack.c.l.b16 %v8643
        %v9668 = vunpack.c.l.b16 %v8644
        %v9669 = vunpack.c.l.b16 %v8645
        %v9670 = vunpack.c.l.b16 %v8646
        %v9671 = vunpack.c.l.b16 %v8647
        %v9672 = vunpack.c.l.b16 %v8648
        %v9673 = vunpack.c.l.b16 %v8649
        %v9674 = vunpack.c.l.b16 %v8650
        %v9675 = vunpack.c.l.b16 %v8651
        %v9676 = vunpack.c.l.b16 %v8652
        %v9677 = vunpack.c.l.b16 %v8653
        %v9678 = vunpack.c.l.b16 %v8654
        %v9679 = vunpack.c.l.b16 %v8655
        %v9680 = vunpack.c.l.b16 %v8656
        %v9681 = vunpack.c.l.b16 %v8657
        %v9682 = vunpack.c.l.b16 %v8658
        %v9683 = vunpack.c.l.b16 %v8659
        %v9684 = vunpack.c.l.b16 %v8660
        %v9685 = vunpack.c.l.b16 %v8661
        %v9686 = vunpack.c.l.b16 %v8662
        %v9687 = vunpack.c.l.b16 %v8663
        %v9688 = vunpack.c.l.b16 %v8664
        %v9689 = vunpack.c.l.b16 %v8665
        %v9690 = vunpack.c.l.b16 %v8666
        %v9691 = vunpack.c.l.b16 %v8667
        %v9692 = vunpack.c.l.b16 %v8668
        %v9693 = vunpack.c.l.b16 %v8669
        %v9694 = vunpack.c.l.b16 %v8670
        %v9695 = vunpack.c.l.b16 %v8671
        %v9696 = vunpack.c.l.b16 %v8672
        %v9697 = vpack.c.b16 %v9554, %v9553
        %v9698 = vpack.c.b16 %v9556, %v9555
        %v9699 = vpack.c.b16 %v9558, %v9557
        %v9700 = vpack.c.b16 %v9560, %v9559
        %v9701 = vpack.c.b16 %v9562, %v9561
        %v9702 = vpack.c.b16 %v9564, %v9563
        %v9703 = vpack.c.b16 %v9566, %v9565
        %v9704 = vpack.c.b16 %v9568, %v9567
        %v9705 = vpack.c.b16 %v9570, %v9569
        %v9706 = vpack.c.b16 %v9572, %v9571
        %v9707 = vpack.c.b16 %v9574, %v9573
        %v9708 = vpack.c.b16 %v9576, %v9575
        %v9709 = vpack.c.b16 %v9578, %v9577
        %v9710 = vpack.c.b16 %v9580, %v9579
        %v9711 = vpack.c.b16 %v9582, %v9581
        %v9712 = vpack.c.b16 %v9584, %v9583
        %v9713 = vpack.c.b16 %v9586, %v9585
        %v9714 = vpack.c.b16 %v9588, %v9587
        %v9715 = vpack.c.b16 %v9590, %v9589
        %v9716 = vpack.c.b16 %v9592, %v9591
        %v9717 = vpack.c.b16 %v9594, %v9593
        %v9718 = vpack.c.b16 %v9596, %v9595
        %v9719 = vpack.c.b16 %v9598, %v9597
        %v9720 = vpack.c.b16 %v9600, %v9599
        %v9721 = vpack.c.b16 %v9602, %v9601
        %v9722 = vpack.c.b16 %v9604, %v9603
        %v9723 = vpack.c.b16 %v9606, %v9605
        %v9724 = vpack.c.b16 %v9608, %v9607
        %v9725 = vpack.c.b16 %v9610, %v9609
        %v9726 = vpack.c.b16 %v9612, %v9611
        %v9727 = vpack.c.b16 %v9614, %v9613
        %v9728 = vpack.c.b16 %v9616, %v9615
        %v9729 = vpack.c.b16 %v9618, %v9617
        %v9730 = vpack.c.b16 %v9620, %v9619
        %v9731 = vpack.c.b16 %v9622, %v9621
        %v9732 = vpack.c.b16 %v9624, %v9623
        %v9733 = vpack.c.b16 %v9626, %v9625
        %v9734 = vpack.c.b16 %v9628, %v9627
        %v9735 = vpack.c.b16 %v9630, %v9629
        %v9736 = vpack.c.b16 %v9632, %v9631
        %v9737 = vpack.c.b16 %v9634, %v9633
        %v9738 = vpack.c.b16 %v9636, %v9635
        %v9739 = vpack.c.b16 %v9638, %v9637
        %v9740 = vpack.c.b16 %v9640, %v9639
        %v9741 = vpack.c.b16 %v9642, %v9641
        %v9742 = vpack.c.b16 %v9644, %v9643
        %v9743 = vpack.c.b16 %v9646, %v9645
        %v9744 = vpack.c.b16 %v9648, %v9647
        %v9745 = vpack.c.b16 %v9650, %v9649
        %v9746 = vpack.c.b16 %v9652, %v9651
        %v9747 = vpack.c.b16 %v9654, %v9653
        %v9748 = vpack.c.b16 %v9656, %v9655
        %v9749 = vpack.c.b16 %v9658, %v9657
        %v9750 = vpack.c.b16 %v9660, %v9659
        %v9751 = vpack.c.b16 %v9662, %v9661
        %v9752 = vpack.c.b16 %v9664, %v9663
        %v9753 = vpack.c.b16 %v9666, %v9665
        %v9754 = vpack.c.b16 %v9668, %v9667
        %v9755 = vpack.c.b16 %v9670, %v9669
        %v9756 = vpack.c.b16 %v9672, %v9671
        %v9757 = vpack.c.b16 %v9674, %v9673
        %v9758 = vpack.c.b16 %v9676, %v9675
        %v9759 = vpack.c.b16 %v9678, %v9677
        %v9760 = vpack.c.b16 %v9680, %v9679
        %v9761 = vpack.c.b16 %v9682, %v9681
        %v9762 = vpack.c.b16 %v9684, %v9683
        %v9763 = vpack.c.b16 %v9686, %v9685
        %v9764 = vpack.c.b16 %v9688, %v9687
        %v9765 = vpack.c.b16 %v9690, %v9689
        %v9766 = vpack.c.b16 %v9692, %v9691
        %v9767 = vpack.c.b16 %v9694, %v9693
        %v9768 = vpack.c.b16 %v9696, %v9695
        %9841 = vmatprep.subr.bf16.mxu0 0
        %9842 = vmatpush1.bf16.msra.mxu0 %v9704
        %9843 = vmatprep.subr.bf16.mxu0 0
        %9844 = vmatpush1.bf16.msra.mxu0 %v9703
        %9845 = vmatprep.subr.bf16.mxu0 0
        %9846 = vmatpush1.bf16.msra.mxu0 %v9702
        %9847 = vmatprep.subr.bf16.mxu0 0
        %9848 = vmatpush1.bf16.msra.mxu0 %v9701
        %9849 = vmatprep.subr.bf16.mxu0 0
        %9850 = vmatpush1.bf16.msra.mxu0 %v9700
        %9851 = vmatprep.subr.bf16.mxu0 0
        %9852 = vmatpush1.bf16.msra.mxu0 %v9699
        %9853 = vmatprep.subr.bf16.mxu0 0
        %9854 = vmatpush1.bf16.msra.mxu0 %v9698
        %9855 = vmatprep.subr.bf16.mxu0 0
        %9856 = vmatpush1.bf16.msra.mxu0 %v9697
        %9857 = vmatprep.subr.bf16.mxu0 0
        %9858 = vmatpush2.bf16.msra.mxu0 %v9712
        %9859 = vmatprep.subr.bf16.mxu0 0
        %9860 = vmatpush2.bf16.msra.mxu0 %v9711
        %9861 = vmatprep.subr.bf16.mxu0 0
        %9862 = vmatpush2.bf16.msra.mxu0 %v9710
        %9863 = vmatprep.subr.bf16.mxu0 0
        %9864 = vmatpush2.bf16.msra.mxu0 %v9709
        %9865 = vmatprep.subr.bf16.mxu0 0
        %9866 = vmatpush2.bf16.msra.mxu0 %v9708
        %9867 = vmatprep.subr.bf16.mxu0 0
        %9868 = vmatpush2.bf16.msra.mxu0 %v9707
        %9869 = vmatprep.subr.bf16.mxu0 0
        %9870 = vmatpush2.bf16.msra.mxu0 %v9706
        %9871 = vmatprep.subr.bf16.mxu0 0
        %9872 = vmatpush2.bf16.msra.mxu0 %v9705
        %9873 = vmatprep.mubr.bf16.mxu0 %v9122
        %9874 = vmatmul.mubr.bf16.gmra.mxu0 %v9121
        %v9875 = vpop.f32.mrf.mxu0
        %v9876 = vadd.f32 0.0, %v9875
        %v9877 = vpop.f32.mrf.mxu0
        %v9878 = vpop.f32.mrf.mxu0
        %v9879 = vadd.f32 0.0, %v9878
        %v9880 = vpop.f32.mrf.mxu0
        %9881 = vmatprep.mubr.bf16.mxu0 %v9131
        %9882 = vmatmul.mubr.bf16.gmra.mxu0 %v9130
        %v9883 = vpop.f32.mrf.mxu0
        %v9884 = vadd.f32 0.0, %v9883
        %v9885 = vpop.f32.mrf.mxu0
        %v9886 = vpop.f32.mrf.mxu0
        %v9887 = vadd.f32 0.0, %v9886
        %v9888 = vpop.f32.mrf.mxu0
        %9889 = vmatprep.mubr.bf16.mxu0 %v9140
        %9890 = vmatmul.mubr.bf16.gmra.mxu0 %v9139
        %v9891 = vpop.f32.mrf.mxu0
        %v9892 = vadd.f32 0.0, %v9891
        %v9893 = vpop.f32.mrf.mxu0
        %v9894 = vpop.f32.mrf.mxu0
        %v9895 = vadd.f32 0.0, %v9894
        %v9896 = vpop.f32.mrf.mxu0
        %9897 = vmatprep.mubr.bf16.mxu0 %v9149
        %9898 = vmatmul.mubr.bf16.gmra.mxu0 %v9148
        %v9899 = vpop.f32.mrf.mxu0
        %v9900 = vadd.f32 0.0, %v9899
        %v9901 = vpop.f32.mrf.mxu0
        %v9902 = vpop.f32.mrf.mxu0
        %v9903 = vadd.f32 0.0, %v9902
        %v9904 = vpop.f32.mrf.mxu0
        %9905 = vmatprep.mubr.bf16.mxu0 %v9158
        %9906 = vmatmul.mubr.bf16.gmra.mxu0 %v9157
        %v9907 = vpop.f32.mrf.mxu0
        %v9908 = vadd.f32 0.0, %v9907
        %v9909 = vpop.f32.mrf.mxu0
        %v9910 = vpop.f32.mrf.mxu0
        %v9911 = vadd.f32 0.0, %v9910
        %v9912 = vpop.f32.mrf.mxu0
        %9913 = vmatprep.mubr.bf16.mxu0 %v9167
        %9914 = vmatmul.mubr.bf16.gmra.mxu0 %v9166
        %v9915 = vpop.f32.mrf.mxu0
        %v9916 = vadd.f32 0.0, %v9915
        %v9917 = vpop.f32.mrf.mxu0
        %v9918 = vpop.f32.mrf.mxu0
        %v9919 = vadd.f32 0.0, %v9918
        %v9920 = vpop.f32.mrf.mxu0
        %9921 = vmatprep.mubr.bf16.mxu0 %v9176
        %9922 = vmatmul.mubr.bf16.gmra.mxu0 %v9175
        %v9923 = vpop.f32.mrf.mxu0
        %v9924 = vadd.f32 0.0, %v9923
        %v9925 = vpop.f32.mrf.mxu0
        %v9926 = vpop.f32.mrf.mxu0
        %v9927 = vadd.f32 0.0, %v9926
        %v9928 = vpop.f32.mrf.mxu0
        %9929 = vmatprep.mubr.bf16.mxu0 %v9185
        %9930 = vmatmul.mubr.bf16.gmra.mxu0 %v9184
        %v9931 = vpop.f32.mrf.mxu0
        %v9932 = vadd.f32 0.0, %v9931
        %v9933 = vpop.f32.mrf.mxu0
        %v9934 = vpop.f32.mrf.mxu0
        %v9935 = vadd.f32 0.0, %v9934
        %v9936 = vpop.f32.mrf.mxu0
        %9937 = vmatprep.mubr.bf16.mxu0 %v9194
        %9938 = vmatmul.mubr.bf16.gmra.mxu0 %v9193
        %v9939 = vpop.f32.mrf.mxu0
        %v9940 = vadd.f32 0.0, %v9939
        %v9941 = vpop.f32.mrf.mxu0
        %v9942 = vpop.f32.mrf.mxu0
        %v9943 = vadd.f32 0.0, %v9942
        %v9944 = vpop.f32.mrf.mxu0
        %9945 = vmatprep.mubr.bf16.mxu0 %v9203
        %9946 = vmatmul.mubr.bf16.gmra.mxu0 %v9202
        %v9947 = vpop.f32.mrf.mxu0
        %v9948 = vadd.f32 0.0, %v9947
        %v9949 = vpop.f32.mrf.mxu0
        %v9950 = vpop.f32.mrf.mxu0
        %v9951 = vadd.f32 0.0, %v9950
        %v9952 = vpop.f32.mrf.mxu0
        %9953 = vmatprep.mubr.bf16.mxu0 %v9212
        %9954 = vmatmul.mubr.bf16.gmra.mxu0 %v9211
        %v9955 = vpop.f32.mrf.mxu0
        %v9956 = vadd.f32 0.0, %v9955
        %v9957 = vpop.f32.mrf.mxu0
        %v9958 = vpop.f32.mrf.mxu0
        %v9959 = vadd.f32 0.0, %v9958
        %v9960 = vpop.f32.mrf.mxu0
        %9961 = vmatprep.mubr.bf16.mxu0 %v9221
        %9962 = vmatmul.mubr.bf16.gmra.mxu0 %v9220
        %v9963 = vpop.f32.mrf.mxu0
        %v9964 = vadd.f32 0.0, %v9963
        %v9965 = vpop.f32.mrf.mxu0
        %v9966 = vpop.f32.mrf.mxu0
        %v9967 = vadd.f32 0.0, %v9966
        %v9968 = vpop.f32.mrf.mxu0
        %9969 = vmatprep.mubr.bf16.mxu0 %v9230
        %9970 = vmatmul.mubr.bf16.gmra.mxu0 %v9229
        %v9971 = vpop.f32.mrf.mxu0
        %v9972 = vadd.f32 0.0, %v9971
        %v9973 = vpop.f32.mrf.mxu0
        %v9974 = vpop.f32.mrf.mxu0
        %v9975 = vadd.f32 0.0, %v9974
        %v9976 = vpop.f32.mrf.mxu0
        %9977 = vmatprep.mubr.bf16.mxu0 %v9239
        %9978 = vmatmul.mubr.bf16.gmra.mxu0 %v9238
        %v9979 = vpop.f32.mrf.mxu0
        %v9980 = vadd.f32 0.0, %v9979
        %v9981 = vpop.f32.mrf.mxu0
        %v9982 = vpop.f32.mrf.mxu0
        %v9983 = vadd.f32 0.0, %v9982
        %v9984 = vpop.f32.mrf.mxu0
        %9985 = vmatprep.mubr.bf16.mxu0 %v9248
        %9986 = vmatmul.mubr.bf16.gmra.mxu0 %v9247
        %v9987 = vpop.f32.mrf.mxu0
        %v9988 = vadd.f32 0.0, %v9987
        %v9989 = vpop.f32.mrf.mxu0
        %v9990 = vpop.f32.mrf.mxu0
        %v9991 = vadd.f32 0.0, %v9990
        %v9992 = vpop.f32.mrf.mxu0
        %9993 = vmatprep.mubr.bf16.mxu0 %v9257
        %9994 = vmatmul.mubr.bf16.gmra.mxu0 %v9256
        %v9995 = vpop.f32.mrf.mxu0
        %v9996 = vadd.f32 0.0, %v9995
        %v9997 = vpop.f32.mrf.mxu0
        %v9998 = vpop.f32.mrf.mxu0
        %v9999 = vadd.f32 0.0, %v9998
        %v10000 = vpop.f32.mrf.mxu0
        %10001 = vdwg.mxu0
        %10002 = vmatprep.subr.bf16.mxu0 0
        %10003 = vmatpush1.bf16.msra.mxu0 %v9720
        %10004 = vmatprep.subr.bf16.mxu0 0
        %10005 = vmatpush1.bf16.msra.mxu0 %v9719
        %10006 = vmatprep.subr.bf16.mxu0 0
        %10007 = vmatpush1.bf16.msra.mxu0 %v9718
        %10008 = vmatprep.subr.bf16.mxu0 0
        %10009 = vmatpush1.bf16.msra.mxu0 %v9717
        %10010 = vmatprep.subr.bf16.mxu0 0
        %10011 = vmatpush1.bf16.msra.mxu0 %v9716
        %10012 = vmatprep.subr.bf16.mxu0 0
        %10013 = vmatpush1.bf16.msra.mxu0 %v9715
        %10014 = vmatprep.subr.bf16.mxu0 0
        %10015 = vmatpush1.bf16.msra.mxu0 %v9714
        %10016 = vmatprep.subr.bf16.mxu0 0
        %10017 = vmatpush1.bf16.msra.mxu0 %v9713
        %10018 = vmatprep.subr.bf16.mxu0 0
        %10019 = vmatpush2.bf16.msra.mxu0 %v9728
        %10020 = vmatprep.subr.bf16.mxu0 0
        %10021 = vmatpush2.bf16.msra.mxu0 %v9727
        %10022 = vmatprep.subr.bf16.mxu0 0
        %10023 = vmatpush2.bf16.msra.mxu0 %v9726
        %10024 = vmatprep.subr.bf16.mxu0 0
        %10025 = vmatpush2.bf16.msra.mxu0 %v9725
        %10026 = vmatprep.subr.bf16.mxu0 0
        %10027 = vmatpush2.bf16.msra.mxu0 %v9724
        %10028 = vmatprep.subr.bf16.mxu0 0
        %10029 = vmatpush2.bf16.msra.mxu0 %v9723
        %10030 = vmatprep.subr.bf16.mxu0 0
        %10031 = vmatpush2.bf16.msra.mxu0 %v9722
        %10032 = vmatprep.subr.bf16.mxu0 0
        %10033 = vmatpush2.bf16.msra.mxu0 %v9721
        %10034 = vmatprep.mubr.bf16.mxu0 %v9124
        %10035 = vmatmul.mubr.bf16.gmra.mxu0 %v9123
        %v10036 = vpop.f32.mrf.mxu0
        %v10037 = vadd.f32 %v9876, %v10036
        %v10038 = vpop.f32.mrf.mxu0
        %v10039 = vpop.f32.mrf.mxu0
        %v10040 = vadd.f32 %v9879, %v10039
        %v10041 = vpop.f32.mrf.mxu0
        %10042 = vmatprep.mubr.bf16.mxu0 %v9133
        %10043 = vmatmul.mubr.bf16.gmra.mxu0 %v9132
        %v10044 = vpop.f32.mrf.mxu0
        %v10045 = vadd.f32 %v9884, %v10044
        %v10046 = vpop.f32.mrf.mxu0
        %v10047 = vpop.f32.mrf.mxu0
        %v10048 = vadd.f32 %v9887, %v10047
        %v10049 = vpop.f32.mrf.mxu0
        %10050 = vmatprep.mubr.bf16.mxu0 %v9142
        %10051 = vmatmul.mubr.bf16.gmra.mxu0 %v9141
        %v10052 = vpop.f32.mrf.mxu0
        %v10053 = vadd.f32 %v9892, %v10052
        %v10054 = vpop.f32.mrf.mxu0
        %v10055 = vpop.f32.mrf.mxu0
        %v10056 = vadd.f32 %v9895, %v10055
        %v10057 = vpop.f32.mrf.mxu0
        %10058 = vmatprep.mubr.bf16.mxu0 %v9151
        %10059 = vmatmul.mubr.bf16.gmra.mxu0 %v9150
        %v10060 = vpop.f32.mrf.mxu0
        %v10061 = vadd.f32 %v9900, %v10060
        %v10062 = vpop.f32.mrf.mxu0
        %v10063 = vpop.f32.mrf.mxu0
        %v10064 = vadd.f32 %v9903, %v10063
        %v10065 = vpop.f32.mrf.mxu0
        %10066 = vmatprep.mubr.bf16.mxu0 %v9160
        %10067 = vmatmul.mubr.bf16.gmra.mxu0 %v9159
        %v10068 = vpop.f32.mrf.mxu0
        %v10069 = vadd.f32 %v9908, %v10068
        %v10070 = vpop.f32.mrf.mxu0
        %v10071 = vpop.f32.mrf.mxu0
        %v10072 = vadd.f32 %v9911, %v10071
        %v10073 = vpop.f32.mrf.mxu0
        %10074 = vmatprep.mubr.bf16.mxu0 %v9169
        %10075 = vmatmul.mubr.bf16.gmra.mxu0 %v9168
        %v10076 = vpop.f32.mrf.mxu0
        %v10077 = vadd.f32 %v9916, %v10076
        %v10078 = vpop.f32.mrf.mxu0
        %v10079 = vpop.f32.mrf.mxu0
        %v10080 = vadd.f32 %v9919, %v10079
        %v10081 = vpop.f32.mrf.mxu0
        %10082 = vmatprep.mubr.bf16.mxu0 %v9178
        %10083 = vmatmul.mubr.bf16.gmra.mxu0 %v9177
        %v10084 = vpop.f32.mrf.mxu0
        %v10085 = vadd.f32 %v9924, %v10084
        %v10086 = vpop.f32.mrf.mxu0
        %v10087 = vpop.f32.mrf.mxu0
        %v10088 = vadd.f32 %v9927, %v10087
        %v10089 = vpop.f32.mrf.mxu0
        %10090 = vmatprep.mubr.bf16.mxu0 %v9187
        %10091 = vmatmul.mubr.bf16.gmra.mxu0 %v9186
        %v10092 = vpop.f32.mrf.mxu0
        %v10093 = vadd.f32 %v9932, %v10092
        %v10094 = vpop.f32.mrf.mxu0
        %v10095 = vpop.f32.mrf.mxu0
        %v10096 = vadd.f32 %v9935, %v10095
        %v10097 = vpop.f32.mrf.mxu0
        %10098 = vmatprep.mubr.bf16.mxu0 %v9196
        %10099 = vmatmul.mubr.bf16.gmra.mxu0 %v9195
        %v10100 = vpop.f32.mrf.mxu0
        %v10101 = vadd.f32 %v9940, %v10100
        %v10102 = vpop.f32.mrf.mxu0
        %v10103 = vpop.f32.mrf.mxu0
        %v10104 = vadd.f32 %v9943, %v10103
        %v10105 = vpop.f32.mrf.mxu0
        %10106 = vmatprep.mubr.bf16.mxu0 %v9205
        %10107 = vmatmul.mubr.bf16.gmra.mxu0 %v9204
        %v10108 = vpop.f32.mrf.mxu0
        %v10109 = vadd.f32 %v9948, %v10108
        %v10110 = vpop.f32.mrf.mxu0
        %v10111 = vpop.f32.mrf.mxu0
        %v10112 = vadd.f32 %v9951, %v10111
        %v10113 = vpop.f32.mrf.mxu0
        %10114 = vmatprep.mubr.bf16.mxu0 %v9214
        %10115 = vmatmul.mubr.bf16.gmra.mxu0 %v9213
        %v10116 = vpop.f32.mrf.mxu0
        %v10117 = vadd.f32 %v9956, %v10116
        %v10118 = vpop.f32.mrf.mxu0
        %v10119 = vpop.f32.mrf.mxu0
        %v10120 = vadd.f32 %v9959, %v10119
        %v10121 = vpop.f32.mrf.mxu0
        %10122 = vmatprep.mubr.bf16.mxu0 %v9223
        %10123 = vmatmul.mubr.bf16.gmra.mxu0 %v9222
        %v10124 = vpop.f32.mrf.mxu0
        %v10125 = vadd.f32 %v9964, %v10124
        %v10126 = vpop.f32.mrf.mxu0
        %v10127 = vpop.f32.mrf.mxu0
        %v10128 = vadd.f32 %v9967, %v10127
        %v10129 = vpop.f32.mrf.mxu0
        %10130 = vmatprep.mubr.bf16.mxu0 %v9232
        %10131 = vmatmul.mubr.bf16.gmra.mxu0 %v9231
        %v10132 = vpop.f32.mrf.mxu0
        %v10133 = vadd.f32 %v9972, %v10132
        %v10134 = vpop.f32.mrf.mxu0
        %v10135 = vpop.f32.mrf.mxu0
        %v10136 = vadd.f32 %v9975, %v10135
        %v10137 = vpop.f32.mrf.mxu0
        %10138 = vmatprep.mubr.bf16.mxu0 %v9241
        %10139 = vmatmul.mubr.bf16.gmra.mxu0 %v9240
        %v10140 = vpop.f32.mrf.mxu0
        %v10141 = vadd.f32 %v9980, %v10140
        %v10142 = vpop.f32.mrf.mxu0
        %v10143 = vpop.f32.mrf.mxu0
        %v10144 = vadd.f32 %v9983, %v10143
        %v10145 = vpop.f32.mrf.mxu0
        %10146 = vmatprep.mubr.bf16.mxu0 %v9250
        %10147 = vmatmul.mubr.bf16.gmra.mxu0 %v9249
        %v10148 = vpop.f32.mrf.mxu0
        %v10149 = vadd.f32 %v9988, %v10148
        %v10150 = vpop.f32.mrf.mxu0
        %v10151 = vpop.f32.mrf.mxu0
        %v10152 = vadd.f32 %v9991, %v10151
        %v10153 = vpop.f32.mrf.mxu0
        %10154 = vmatprep.mubr.bf16.mxu0 %v9259
        %10155 = vmatmul.mubr.bf16.gmra.mxu0 %v9258
        %v10156 = vpop.f32.mrf.mxu0
        %v10157 = vadd.f32 %v9996, %v10156
        %v10158 = vpop.f32.mrf.mxu0
        %v10159 = vpop.f32.mrf.mxu0
        %v10160 = vadd.f32 %v9999, %v10159
        %v10161 = vpop.f32.mrf.mxu0
        %10162 = vdwg.mxu0
        %10163 = vmatprep.subr.bf16.mxu0 0
        %10164 = vmatpush1.bf16.msra.mxu0 %v9736
        %10165 = vmatprep.subr.bf16.mxu0 0
        %10166 = vmatpush1.bf16.msra.mxu0 %v9735
        %10167 = vmatprep.subr.bf16.mxu0 0
        %10168 = vmatpush1.bf16.msra.mxu0 %v9734
        %10169 = vmatprep.subr.bf16.mxu0 0
        %10170 = vmatpush1.bf16.msra.mxu0 %v9733
        %10171 = vmatprep.subr.bf16.mxu0 0
        %10172 = vmatpush1.bf16.msra.mxu0 %v9732
        %10173 = vmatprep.subr.bf16.mxu0 0
        %10174 = vmatpush1.bf16.msra.mxu0 %v9731
        %10175 = vmatprep.subr.bf16.mxu0 0
        %10176 = vmatpush1.bf16.msra.mxu0 %v9730
        %10177 = vmatprep.subr.bf16.mxu0 0
        %10178 = vmatpush1.bf16.msra.mxu0 %v9729
        %10179 = vmatprep.subr.bf16.mxu0 0
        %10180 = vmatpush2.bf16.msra.mxu0 %v9744
        %10181 = vmatprep.subr.bf16.mxu0 0
        %10182 = vmatpush2.bf16.msra.mxu0 %v9743
        %10183 = vmatprep.subr.bf16.mxu0 0
        %10184 = vmatpush2.bf16.msra.mxu0 %v9742
        %10185 = vmatprep.subr.bf16.mxu0 0
        %10186 = vmatpush2.bf16.msra.mxu0 %v9741
        %10187 = vmatprep.subr.bf16.mxu0 0
        %10188 = vmatpush2.bf16.msra.mxu0 %v9740
        %10189 = vmatprep.subr.bf16.mxu0 0
        %10190 = vmatpush2.bf16.msra.mxu0 %v9739
        %10191 = vmatprep.subr.bf16.mxu0 0
        %10192 = vmatpush2.bf16.msra.mxu0 %v9738
        %10193 = vmatprep.subr.bf16.mxu0 0
        %10194 = vmatpush2.bf16.msra.mxu0 %v9737
        %10195 = vmatprep.mubr.bf16.mxu0 %v9126
        %10196 = vmatmul.mubr.bf16.gmra.mxu0 %v9125
        %v10197 = vpop.f32.mrf.mxu0
        %v10198 = vadd.f32 %v10037, %v10197
        %v10199 = vpop.f32.mrf.mxu0
        %v10200 = vpop.f32.mrf.mxu0
        %v10201 = vadd.f32 %v10040, %v10200
        %v10202 = vpop.f32.mrf.mxu0
        %10203 = vmatprep.mubr.bf16.mxu0 %v9135
        %10204 = vmatmul.mubr.bf16.gmra.mxu0 %v9134
        %v10205 = vpop.f32.mrf.mxu0
        %v10206 = vadd.f32 %v10045, %v10205
        %v10207 = vpop.f32.mrf.mxu0
        %v10208 = vpop.f32.mrf.mxu0
        %v10209 = vadd.f32 %v10048, %v10208
        %v10210 = vpop.f32.mrf.mxu0
        %10211 = vmatprep.mubr.bf16.mxu0 %v9144
        %10212 = vmatmul.mubr.bf16.gmra.mxu0 %v9143
        %v10213 = vpop.f32.mrf.mxu0
        %v10214 = vadd.f32 %v10053, %v10213
        %v10215 = vpop.f32.mrf.mxu0
        %v10216 = vpop.f32.mrf.mxu0
        %v10217 = vadd.f32 %v10056, %v10216
        %v10218 = vpop.f32.mrf.mxu0
        %10219 = vmatprep.mubr.bf16.mxu0 %v9153
        %10220 = vmatmul.mubr.bf16.gmra.mxu0 %v9152
        %v10221 = vpop.f32.mrf.mxu0
        %v10222 = vadd.f32 %v10061, %v10221
        %v10223 = vpop.f32.mrf.mxu0
        %v10224 = vpop.f32.mrf.mxu0
        %v10225 = vadd.f32 %v10064, %v10224
        %v10226 = vpop.f32.mrf.mxu0
        %10227 = vmatprep.mubr.bf16.mxu0 %v9162
        %10228 = vmatmul.mubr.bf16.gmra.mxu0 %v9161
        %v10229 = vpop.f32.mrf.mxu0
        %v10230 = vadd.f32 %v10069, %v10229
        %v10231 = vpop.f32.mrf.mxu0
        %v10232 = vpop.f32.mrf.mxu0
        %v10233 = vadd.f32 %v10072, %v10232
        %v10234 = vpop.f32.mrf.mxu0
        %10235 = vmatprep.mubr.bf16.mxu0 %v9171
        %10236 = vmatmul.mubr.bf16.gmra.mxu0 %v9170
        %v10237 = vpop.f32.mrf.mxu0
        %v10238 = vadd.f32 %v10077, %v10237
        %v10239 = vpop.f32.mrf.mxu0
        %v10240 = vpop.f32.mrf.mxu0
        %v10241 = vadd.f32 %v10080, %v10240
        %v10242 = vpop.f32.mrf.mxu0
        %10243 = vmatprep.mubr.bf16.mxu0 %v9180
        %10244 = vmatmul.mubr.bf16.gmra.mxu0 %v9179
        %v10245 = vpop.f32.mrf.mxu0
        %v10246 = vadd.f32 %v10085, %v10245
        %v10247 = vpop.f32.mrf.mxu0
        %v10248 = vpop.f32.mrf.mxu0
        %v10249 = vadd.f32 %v10088, %v10248
        %v10250 = vpop.f32.mrf.mxu0
        %10251 = vmatprep.mubr.bf16.mxu0 %v9189
        %10252 = vmatmul.mubr.bf16.gmra.mxu0 %v9188
        %v10253 = vpop.f32.mrf.mxu0
        %v10254 = vadd.f32 %v10093, %v10253
        %v10255 = vpop.f32.mrf.mxu0
        %v10256 = vpop.f32.mrf.mxu0
        %v10257 = vadd.f32 %v10096, %v10256
        %v10258 = vpop.f32.mrf.mxu0
        %10259 = vmatprep.mubr.bf16.mxu0 %v9198
        %10260 = vmatmul.mubr.bf16.gmra.mxu0 %v9197
        %v10261 = vpop.f32.mrf.mxu0
        %v10262 = vadd.f32 %v10101, %v10261
        %v10263 = vpop.f32.mrf.mxu0
        %v10264 = vpop.f32.mrf.mxu0
        %v10265 = vadd.f32 %v10104, %v10264
        %v10266 = vpop.f32.mrf.mxu0
        %10267 = vmatprep.mubr.bf16.mxu0 %v9207
        %10268 = vmatmul.mubr.bf16.gmra.mxu0 %v9206
        %v10269 = vpop.f32.mrf.mxu0
        %v10270 = vadd.f32 %v10109, %v10269
        %v10271 = vpop.f32.mrf.mxu0
        %v10272 = vpop.f32.mrf.mxu0
        %v10273 = vadd.f32 %v10112, %v10272
        %v10274 = vpop.f32.mrf.mxu0
        %10275 = vmatprep.mubr.bf16.mxu0 %v9216
        %10276 = vmatmul.mubr.bf16.gmra.mxu0 %v9215
        %v10277 = vpop.f32.mrf.mxu0
        %v10278 = vadd.f32 %v10117, %v10277
        %v10279 = vpop.f32.mrf.mxu0
        %v10280 = vpop.f32.mrf.mxu0
        %v10281 = vadd.f32 %v10120, %v10280
        %v10282 = vpop.f32.mrf.mxu0
        %10283 = vmatprep.mubr.bf16.mxu0 %v9225
        %10284 = vmatmul.mubr.bf16.gmra.mxu0 %v9224
        %v10285 = vpop.f32.mrf.mxu0
        %v10286 = vadd.f32 %v10125, %v10285
        %v10287 = vpop.f32.mrf.mxu0
        %v10288 = vpop.f32.mrf.mxu0
        %v10289 = vadd.f32 %v10128, %v10288
        %v10290 = vpop.f32.mrf.mxu0
        %10291 = vmatprep.mubr.bf16.mxu0 %v9234
        %10292 = vmatmul.mubr.bf16.gmra.mxu0 %v9233
        %v10293 = vpop.f32.mrf.mxu0
        %v10294 = vadd.f32 %v10133, %v10293
        %v10295 = vpop.f32.mrf.mxu0
        %v10296 = vpop.f32.mrf.mxu0
        %v10297 = vadd.f32 %v10136, %v10296
        %v10298 = vpop.f32.mrf.mxu0
        %10299 = vmatprep.mubr.bf16.mxu0 %v9243
        %10300 = vmatmul.mubr.bf16.gmra.mxu0 %v9242
        %v10301 = vpop.f32.mrf.mxu0
        %v10302 = vadd.f32 %v10141, %v10301
        %v10303 = vpop.f32.mrf.mxu0
        %v10304 = vpop.f32.mrf.mxu0
        %v10305 = vadd.f32 %v10144, %v10304
        %v10306 = vpop.f32.mrf.mxu0
        %10307 = vmatprep.mubr.bf16.mxu0 %v9252
        %10308 = vmatmul.mubr.bf16.gmra.mxu0 %v9251
        %v10309 = vpop.f32.mrf.mxu0
        %v10310 = vadd.f32 %v10149, %v10309
        %v10311 = vpop.f32.mrf.mxu0
        %v10312 = vpop.f32.mrf.mxu0
        %v10313 = vadd.f32 %v10152, %v10312
        %v10314 = vpop.f32.mrf.mxu0
        %10315 = vmatprep.mubr.bf16.mxu0 %v9261
        %10316 = vmatmul.mubr.bf16.gmra.mxu0 %v9260
        %v10317 = vpop.f32.mrf.mxu0
        %v10318 = vadd.f32 %v10157, %v10317
        %v10319 = vpop.f32.mrf.mxu0
        %v10320 = vpop.f32.mrf.mxu0
        %v10321 = vadd.f32 %v10160, %v10320
        %v10322 = vpop.f32.mrf.mxu0
        %10323 = vdwg.mxu0
        %10324 = vmatprep.subr.bf16.mxu0 0
        %10325 = vmatpush1.bf16.msra.mxu0 %v9752
        %10326 = vmatprep.subr.bf16.mxu0 0
        %10327 = vmatpush1.bf16.msra.mxu0 %v9751
        %10328 = vmatprep.subr.bf16.mxu0 0
        %10329 = vmatpush1.bf16.msra.mxu0 %v9750
        %10330 = vmatprep.subr.bf16.mxu0 0
        %10331 = vmatpush1.bf16.msra.mxu0 %v9749
        %10332 = vmatprep.subr.bf16.mxu0 0
        %10333 = vmatpush1.bf16.msra.mxu0 %v9748
        %10334 = vmatprep.subr.bf16.mxu0 0
        %10335 = vmatpush1.bf16.msra.mxu0 %v9747
        %10336 = vmatprep.subr.bf16.mxu0 0
        %10337 = vmatpush1.bf16.msra.mxu0 %v9746
        %10338 = vmatprep.subr.bf16.mxu0 0
        %10339 = vmatpush1.bf16.msra.mxu0 %v9745
        %10340 = vmatprep.subr.bf16.mxu0 0
        %10341 = vmatpush2.bf16.msra.mxu0 %v9760
        %10342 = vmatprep.subr.bf16.mxu0 0
        %10343 = vmatpush2.bf16.msra.mxu0 %v9759
        %10344 = vmatprep.subr.bf16.mxu0 0
        %10345 = vmatpush2.bf16.msra.mxu0 %v9758
        %10346 = vmatprep.subr.bf16.mxu0 0
        %10347 = vmatpush2.bf16.msra.mxu0 %v9757
        %10348 = vmatprep.subr.bf16.mxu0 0
        %10349 = vmatpush2.bf16.msra.mxu0 %v9756
        %10350 = vmatprep.subr.bf16.mxu0 0
        %10351 = vmatpush2.bf16.msra.mxu0 %v9755
        %10352 = vmatprep.subr.bf16.mxu0 0
        %10353 = vmatpush2.bf16.msra.mxu0 %v9754
        %10354 = vmatprep.subr.bf16.mxu0 0
        %10355 = vmatpush2.bf16.msra.mxu0 %v9753
        %10356 = vmatprep.mubr.bf16.mxu0 %v9128
        %10357 = vmatmul.mubr.bf16.gmra.mxu0 %v9127
        %v10358 = vpop.f32.mrf.mxu0
        %v10359 = vadd.f32 %v10198, %v10358
        %v10360 = vpop.f32.mrf.mxu0
        %v10361 = vpop.f32.mrf.mxu0
        %v10362 = vadd.f32 %v10201, %v10361
        %v10363 = vpop.f32.mrf.mxu0
        %10364 = vmatprep.mubr.bf16.mxu0 %v9137
        %10365 = vmatmul.mubr.bf16.gmra.mxu0 %v9136
        %v10366 = vpop.f32.mrf.mxu0
        %v10367 = vadd.f32 %v10206, %v10366
        %v10368 = vpop.f32.mrf.mxu0
        %v10369 = vpop.f32.mrf.mxu0
        %v10370 = vadd.f32 %v10209, %v10369
        %v10371 = vpop.f32.mrf.mxu0
        %10372 = vmatprep.mubr.bf16.mxu0 %v9146
        %10373 = vmatmul.mubr.bf16.gmra.mxu0 %v9145
        %v10374 = vpop.f32.mrf.mxu0
        %v10375 = vadd.f32 %v10214, %v10374
        %v10376 = vpop.f32.mrf.mxu0
        %v10377 = vpop.f32.mrf.mxu0
        %v10378 = vadd.f32 %v10217, %v10377
        %v10379 = vpop.f32.mrf.mxu0
        %10380 = vmatprep.mubr.bf16.mxu0 %v9155
        %10381 = vmatmul.mubr.bf16.gmra.mxu0 %v9154
        %v10382 = vpop.f32.mrf.mxu0
        %v10383 = vadd.f32 %v10222, %v10382
        %v10384 = vpop.f32.mrf.mxu0
        %v10385 = vpop.f32.mrf.mxu0
        %v10386 = vadd.f32 %v10225, %v10385
        %v10387 = vpop.f32.mrf.mxu0
        %10388 = vmatprep.mubr.bf16.mxu0 %v9164
        %10389 = vmatmul.mubr.bf16.gmra.mxu0 %v9163
        %v10390 = vpop.f32.mrf.mxu0
        %v10391 = vadd.f32 %v10230, %v10390
        %v10392 = vpop.f32.mrf.mxu0
        %v10393 = vpop.f32.mrf.mxu0
        %v10394 = vadd.f32 %v10233, %v10393
        %v10395 = vpop.f32.mrf.mxu0
        %10396 = vmatprep.mubr.bf16.mxu0 %v9173
        %10397 = vmatmul.mubr.bf16.gmra.mxu0 %v9172
        %v10398 = vpop.f32.mrf.mxu0
        %v10399 = vadd.f32 %v10238, %v10398
        %v10400 = vpop.f32.mrf.mxu0
        %v10401 = vpop.f32.mrf.mxu0
        %v10402 = vadd.f32 %v10241, %v10401
        %v10403 = vpop.f32.mrf.mxu0
        %10404 = vmatprep.mubr.bf16.mxu0 %v9182
        %10405 = vmatmul.mubr.bf16.gmra.mxu0 %v9181
        %v10406 = vpop.f32.mrf.mxu0
        %v10407 = vadd.f32 %v10246, %v10406
        %v10408 = vpop.f32.mrf.mxu0
        %v10409 = vpop.f32.mrf.mxu0
        %v10410 = vadd.f32 %v10249, %v10409
        %v10411 = vpop.f32.mrf.mxu0
        %10412 = vmatprep.mubr.bf16.mxu0 %v9191
        %10413 = vmatmul.mubr.bf16.gmra.mxu0 %v9190
        %v10414 = vpop.f32.mrf.mxu0
        %v10415 = vadd.f32 %v10254, %v10414
        %v10416 = vpop.f32.mrf.mxu0
        %v10417 = vpop.f32.mrf.mxu0
        %v10418 = vadd.f32 %v10257, %v10417
        %v10419 = vpop.f32.mrf.mxu0
        %10420 = vmatprep.mubr.bf16.mxu0 %v9200
        %10421 = vmatmul.mubr.bf16.gmra.mxu0 %v9199
        %v10422 = vpop.f32.mrf.mxu0
        %v10423 = vadd.f32 %v10262, %v10422
        %v10424 = vpop.f32.mrf.mxu0
        %v10425 = vpop.f32.mrf.mxu0
        %v10426 = vadd.f32 %v10265, %v10425
        %v10427 = vpop.f32.mrf.mxu0
        %10428 = vmatprep.mubr.bf16.mxu0 %v9209
        %10429 = vmatmul.mubr.bf16.gmra.mxu0 %v9208
        %v10430 = vpop.f32.mrf.mxu0
        %v10431 = vadd.f32 %v10270, %v10430
        %v10432 = vpop.f32.mrf.mxu0
        %v10433 = vpop.f32.mrf.mxu0
        %v10434 = vadd.f32 %v10273, %v10433
        %v10435 = vpop.f32.mrf.mxu0
        %10436 = vmatprep.mubr.bf16.mxu0 %v9218
        %10437 = vmatmul.mubr.bf16.gmra.mxu0 %v9217
        %v10438 = vpop.f32.mrf.mxu0
        %v10439 = vadd.f32 %v10278, %v10438
        %v10440 = vpop.f32.mrf.mxu0
        %v10441 = vpop.f32.mrf.mxu0
        %v10442 = vadd.f32 %v10281, %v10441
        %v10443 = vpop.f32.mrf.mxu0
        %10444 = vmatprep.mubr.bf16.mxu0 %v9227
        %10445 = vmatmul.mubr.bf16.gmra.mxu0 %v9226
        %v10446 = vpop.f32.mrf.mxu0
        %v10447 = vadd.f32 %v10286, %v10446
        %v10448 = vpop.f32.mrf.mxu0
        %v10449 = vpop.f32.mrf.mxu0
        %v10450 = vadd.f32 %v10289, %v10449
        %v10451 = vpop.f32.mrf.mxu0
        %10452 = vmatprep.mubr.bf16.mxu0 %v9236
        %10453 = vmatmul.mubr.bf16.gmra.mxu0 %v9235
        %v10454 = vpop.f32.mrf.mxu0
        %v10455 = vadd.f32 %v10294, %v10454
        %v10456 = vpop.f32.mrf.mxu0
        %v10457 = vpop.f32.mrf.mxu0
        %v10458 = vadd.f32 %v10297, %v10457
        %v10459 = vpop.f32.mrf.mxu0
        %10460 = vmatprep.mubr.bf16.mxu0 %v9245
        %10461 = vmatmul.mubr.bf16.gmra.mxu0 %v9244
        %v10462 = vpop.f32.mrf.mxu0
        %v10463 = vadd.f32 %v10302, %v10462
        %v10464 = vpop.f32.mrf.mxu0
        %v10465 = vpop.f32.mrf.mxu0
        %v10466 = vadd.f32 %v10305, %v10465
        %v10467 = vpop.f32.mrf.mxu0
        %10468 = vmatprep.mubr.bf16.mxu0 %v9254
        %10469 = vmatmul.mubr.bf16.gmra.mxu0 %v9253
        %v10470 = vpop.f32.mrf.mxu0
        %v10471 = vadd.f32 %v10310, %v10470
        %v10472 = vpop.f32.mrf.mxu0
        %v10473 = vpop.f32.mrf.mxu0
        %v10474 = vadd.f32 %v10313, %v10473
        %v10475 = vpop.f32.mrf.mxu0
        %10476 = vmatprep.mubr.bf16.mxu0 %v9263
        %10477 = vmatmul.mubr.bf16.gmra.mxu0 %v9262
        %v10478 = vpop.f32.mrf.mxu0
        %v10479 = vadd.f32 %v10318, %v10478
        %v10480 = vpop.f32.mrf.mxu0
        %v10481 = vpop.f32.mrf.mxu0
        %v10482 = vadd.f32 %v10321, %v10481
        %v10483 = vpop.f32.mrf.mxu0
        %10484 = vdwg.mxu0
        %10485 = vmatprep.subr.bf16.mxu0 0
        %10486 = vmatpush1.bf16.msra.mxu0 %v9768
        %10487 = vmatprep.subr.bf16.mxu0 0
        %10488 = vmatpush1.bf16.msra.mxu0 %v9767
        %10489 = vmatprep.subr.bf16.mxu0 0
        %10490 = vmatpush1.bf16.msra.mxu0 %v9766
        %10491 = vmatprep.subr.bf16.mxu0 0
        %10492 = vmatpush1.bf16.msra.mxu0 %v9765
        %10493 = vmatprep.subr.bf16.mxu0 0
        %10494 = vmatpush1.bf16.msra.mxu0 %v9764
        %10495 = vmatprep.subr.bf16.mxu0 0
        %10496 = vmatpush1.bf16.msra.mxu0 %v9763
        %10497 = vmatprep.subr.bf16.mxu0 0
        %10498 = vmatpush1.bf16.msra.mxu0 %v9762
        %10499 = vmatprep.subr.bf16.mxu0 0
        %10500 = vmatpush1.bf16.msra.mxu0 %v9761
        %10501 = vmatprep.subr.bf16.mxu0 0
        %10502 = vmatpush2.bf16.msra.mxu0 0
        %10503 = vmatprep.subr.bf16.mxu0 0
        %10504 = vmatpush2.bf16.msra.mxu0 0
        %10505 = vmatprep.subr.bf16.mxu0 0
        %10506 = vmatpush2.bf16.msra.mxu0 0
        %10507 = vmatprep.subr.bf16.mxu0 0
        %10508 = vmatpush2.bf16.msra.mxu0 0
        %10509 = vmatprep.subr.bf16.mxu0 0
        %10510 = vmatpush2.bf16.msra.mxu0 0
        %10511 = vmatprep.subr.bf16.mxu0 0
        %10512 = vmatpush2.bf16.msra.mxu0 0
        %10513 = vmatprep.subr.bf16.mxu0 0
        %10514 = vmatpush2.bf16.msra.mxu0 0
        %10515 = vmatprep.subr.bf16.mxu0 0
        %10516 = vmatpush2.bf16.msra.mxu0 0
        %10517 = vmatprep.mubr.bf16.mxu0 0
        %10518 = vmatmul.mubr.bf16.gmra.mxu0 %v9129
        %v10519 = vpop.f32.mrf.mxu0
        %v10520 = vadd.f32 %v10359, %v10519
        %v10521 = vpop.f32.mrf.mxu0
        %v10522 = vpop.f32.mrf.mxu0
        %v10523 = vadd.f32 %v10362, %v10522
        %v10524 = vpop.f32.mrf.mxu0
        %10525 = vmatprep.mubr.bf16.mxu0 0
        %10526 = vmatmul.mubr.bf16.gmra.mxu0 %v9138
        %v10527 = vpop.f32.mrf.mxu0
        %v10528 = vadd.f32 %v10367, %v10527
        %v10529 = vpop.f32.mrf.mxu0
        %v10530 = vpop.f32.mrf.mxu0
        %v10531 = vadd.f32 %v10370, %v10530
        %v10532 = vpop.f32.mrf.mxu0
        %10533 = vmatprep.mubr.bf16.mxu0 0
        %10534 = vmatmul.mubr.bf16.gmra.mxu0 %v9147
        %v10535 = vpop.f32.mrf.mxu0
        %v10536 = vadd.f32 %v10375, %v10535
        %v10537 = vpop.f32.mrf.mxu0
        %v10538 = vpop.f32.mrf.mxu0
        %v10539 = vadd.f32 %v10378, %v10538
        %v10540 = vpop.f32.mrf.mxu0
        %10541 = vmatprep.mubr.bf16.mxu0 0
        %10542 = vmatmul.mubr.bf16.gmra.mxu0 %v9156
        %v10543 = vpop.f32.mrf.mxu0
        %v10544 = vadd.f32 %v10383, %v10543
        %v10545 = vpop.f32.mrf.mxu0
        %v10546 = vpop.f32.mrf.mxu0
        %v10547 = vadd.f32 %v10386, %v10546
        %v10548 = vpop.f32.mrf.mxu0
        %10549 = vmatprep.mubr.bf16.mxu0 0
        %10550 = vmatmul.mubr.bf16.gmra.mxu0 %v9165
        %v10551 = vpop.f32.mrf.mxu0
        %v10552 = vadd.f32 %v10391, %v10551
        %v10553 = vpop.f32.mrf.mxu0
        %v10554 = vpop.f32.mrf.mxu0
        %v10555 = vadd.f32 %v10394, %v10554
        %v10556 = vpop.f32.mrf.mxu0
        %10557 = vmatprep.mubr.bf16.mxu0 0
        %10558 = vmatmul.mubr.bf16.gmra.mxu0 %v9174
        %v10559 = vpop.f32.mrf.mxu0
        %v10560 = vadd.f32 %v10399, %v10559
        %v10561 = vpop.f32.mrf.mxu0
        %v10562 = vpop.f32.mrf.mxu0
        %v10563 = vadd.f32 %v10402, %v10562
        %v10564 = vpop.f32.mrf.mxu0
        %10565 = vmatprep.mubr.bf16.mxu0 0
        %10566 = vmatmul.mubr.bf16.gmra.mxu0 %v9183
        %v10567 = vpop.f32.mrf.mxu0
        %v10568 = vadd.f32 %v10407, %v10567
        %v10569 = vpop.f32.mrf.mxu0
        %v10570 = vpop.f32.mrf.mxu0
        %v10571 = vadd.f32 %v10410, %v10570
        %v10572 = vpop.f32.mrf.mxu0
        %10573 = vmatprep.mubr.bf16.mxu0 0
        %10574 = vmatmul.mubr.bf16.gmra.mxu0 %v9192
        %v10575 = vpop.f32.mrf.mxu0
        %v10576 = vadd.f32 %v10415, %v10575
        %v10577 = vpop.f32.mrf.mxu0
        %v10578 = vpop.f32.mrf.mxu0
        %v10579 = vadd.f32 %v10418, %v10578
        %v10580 = vpop.f32.mrf.mxu0
        %10581 = vmatprep.mubr.bf16.mxu0 0
        %10582 = vmatmul.mubr.bf16.gmra.mxu0 %v9201
        %v10583 = vpop.f32.mrf.mxu0
        %v10584 = vadd.f32 %v10423, %v10583
        %v10585 = vpop.f32.mrf.mxu0
        %v10586 = vpop.f32.mrf.mxu0
        %v10587 = vadd.f32 %v10426, %v10586
        %v10588 = vpop.f32.mrf.mxu0
        %10589 = vmatprep.mubr.bf16.mxu0 0
        %10590 = vmatmul.mubr.bf16.gmra.mxu0 %v9210
        %v10591 = vpop.f32.mrf.mxu0
        %v10592 = vadd.f32 %v10431, %v10591
        %v10593 = vpop.f32.mrf.mxu0
        %v10594 = vpop.f32.mrf.mxu0
        %v10595 = vadd.f32 %v10434, %v10594
        %v10596 = vpop.f32.mrf.mxu0
        %10597 = vmatprep.mubr.bf16.mxu0 0
        %10598 = vmatmul.mubr.bf16.gmra.mxu0 %v9219
        %v10599 = vpop.f32.mrf.mxu0
        %v10600 = vadd.f32 %v10439, %v10599
        %v10601 = vpop.f32.mrf.mxu0
        %v10602 = vpop.f32.mrf.mxu0
        %v10603 = vadd.f32 %v10442, %v10602
        %v10604 = vpop.f32.mrf.mxu0
        %10605 = vmatprep.mubr.bf16.mxu0 0
        %10606 = vmatmul.mubr.bf16.gmra.mxu0 %v9228
        %v10607 = vpop.f32.mrf.mxu0
        %v10608 = vadd.f32 %v10447, %v10607
        %v10609 = vpop.f32.mrf.mxu0
        %v10610 = vpop.f32.mrf.mxu0
        %v10611 = vadd.f32 %v10450, %v10610
        %v10612 = vpop.f32.mrf.mxu0
        %10613 = vmatprep.mubr.bf16.mxu0 0
        %10614 = vmatmul.mubr.bf16.gmra.mxu0 %v9237
        %v10615 = vpop.f32.mrf.mxu0
        %v10616 = vadd.f32 %v10455, %v10615
        %v10617 = vpop.f32.mrf.mxu0
        %v10618 = vpop.f32.mrf.mxu0
        %v10619 = vadd.f32 %v10458, %v10618
        %v10620 = vpop.f32.mrf.mxu0
        %10621 = vmatprep.mubr.bf16.mxu0 0
        %10622 = vmatmul.mubr.bf16.gmra.mxu0 %v9246
        %v10623 = vpop.f32.mrf.mxu0
        %v10624 = vadd.f32 %v10463, %v10623
        %v10625 = vpop.f32.mrf.mxu0
        %v10626 = vpop.f32.mrf.mxu0
        %v10627 = vadd.f32 %v10466, %v10626
        %v10628 = vpop.f32.mrf.mxu0
        %10629 = vmatprep.mubr.bf16.mxu0 0
        %10630 = vmatmul.mubr.bf16.gmra.mxu0 %v9255
        %v10631 = vpop.f32.mrf.mxu0
        %v10632 = vadd.f32 %v10471, %v10631
        %v10633 = vpop.f32.mrf.mxu0
        %v10634 = vpop.f32.mrf.mxu0
        %v10635 = vadd.f32 %v10474, %v10634
        %v10636 = vpop.f32.mrf.mxu0
        %10637 = vmatprep.mubr.bf16.mxu0 0
        %10638 = vmatmul.mubr.bf16.gmra.mxu0 %v9264
        %v10639 = vpop.f32.mrf.mxu0
        %v10640 = vadd.f32 %v10479, %v10639
        %v10641 = vpop.f32.mrf.mxu0
        %v10642 = vpop.f32.mrf.mxu0
        %v10643 = vadd.f32 %v10482, %v10642
        %v10644 = vpop.f32.mrf.mxu0
        %10645 = vdwg.mxu0
        %s10646 = scalar_lea.vmem %s6, 1
        %v10647 = vld [vmem:[%s10646] sm:$0x1]
        %v10649 = vlaneseq
        %v10650 = vshrl.u32 %v10649, 7
        %v10651 = vsub.s32 0, %v10650
        %v10652 = vrot.slane %v10647, %v10651
        %v10654 = vmul.f32 %v10520, %v10652
        %v10655 = vmul.f32 %v10523, %v10652
        %v10656 = vmul.f32 %v10528, %v10652
        %v10657 = vmul.f32 %v10531, %v10652
        %v10658 = vmul.f32 %v10536, %v10652
        %v10659 = vmul.f32 %v10539, %v10652
        %v10660 = vmul.f32 %v10544, %v10652
        %v10661 = vmul.f32 %v10547, %v10652
        %v10662 = vmul.f32 %v10552, %v10652
        %v10663 = vmul.f32 %v10555, %v10652
        %v10664 = vmul.f32 %v10560, %v10652
        %v10665 = vmul.f32 %v10563, %v10652
        %v10666 = vmul.f32 %v10568, %v10652
        %v10667 = vmul.f32 %v10571, %v10652
        %v10668 = vmul.f32 %v10576, %v10652
        %v10669 = vmul.f32 %v10579, %v10652
        %v10670 = vmul.f32 %v10584, %v10652
        %v10671 = vmul.f32 %v10587, %v10652
        %v10672 = vmul.f32 %v10592, %v10652
        %v10673 = vmul.f32 %v10595, %v10652
        %v10674 = vmul.f32 %v10600, %v10652
        %v10675 = vmul.f32 %v10603, %v10652
        %v10676 = vmul.f32 %v10608, %v10652
        %v10677 = vmul.f32 %v10611, %v10652
        %v10678 = vmul.f32 %v10616, %v10652
        %v10679 = vmul.f32 %v10619, %v10652
        %v10680 = vmul.f32 %v10624, %v10652
        %v10681 = vmul.f32 %v10627, %v10652
        %v10682 = vmul.f32 %v10632, %v10652
        %v10683 = vmul.f32 %v10635, %v10652
        %v10684 = vmul.f32 %v10640, %v10652
        %v10685 = vmul.f32 %v10643, %v10652
        %s10686 = scalar_lea.vmem %s7, 1
        %v10687 = vld [vmem:[%s10686] sm:$0x1]
        %v10689 = vlaneseq
        %v10690 = vshrl.u32 %v10689, 7
        %v10691 = vsub.s32 0, %v10690
        %v10692 = vrot.slane %v10687, %v10691
        %v10694 = vadd.f32 %v10654, %v10692
        %v10695 = vadd.f32 %v10655, %v10692
        %v10696 = vadd.f32 %v10656, %v10692
        %v10697 = vadd.f32 %v10657, %v10692
        %v10698 = vadd.f32 %v10658, %v10692
        %v10699 = vadd.f32 %v10659, %v10692
        %v10700 = vadd.f32 %v10660, %v10692
        %v10701 = vadd.f32 %v10661, %v10692
        %v10702 = vadd.f32 %v10662, %v10692
        %v10703 = vadd.f32 %v10663, %v10692
        %v10704 = vadd.f32 %v10664, %v10692
        %v10705 = vadd.f32 %v10665, %v10692
        %v10706 = vadd.f32 %v10666, %v10692
        %v10707 = vadd.f32 %v10667, %v10692
        %v10708 = vadd.f32 %v10668, %v10692
        %v10709 = vadd.f32 %v10669, %v10692
        %v10710 = vadd.f32 %v10670, %v10692
        %v10711 = vadd.f32 %v10671, %v10692
        %v10712 = vadd.f32 %v10672, %v10692
        %v10713 = vadd.f32 %v10673, %v10692
        %v10714 = vadd.f32 %v10674, %v10692
        %v10715 = vadd.f32 %v10675, %v10692
        %v10716 = vadd.f32 %v10676, %v10692
        %v10717 = vadd.f32 %v10677, %v10692
        %v10718 = vadd.f32 %v10678, %v10692
        %v10719 = vadd.f32 %v10679, %v10692
        %v10720 = vadd.f32 %v10680, %v10692
        %v10721 = vadd.f32 %v10681, %v10692
        %v10722 = vadd.f32 %v10682, %v10692
        %v10723 = vadd.f32 %v10683, %v10692
        %v10724 = vadd.f32 %v10684, %v10692
        %v10725 = vadd.f32 %v10685, %v10692
        %v10726 = vstv %s315
        %v10727 = vmul.f32 %v10726, %v7507
        %v10728 = vmul.f32 %v10726, %v7508
        %v10729 = vmul.f32 %v10726, %v7509
        %v10730 = vmul.f32 %v10726, %v7510
        %v10731 = vmul.f32 %v10726, %v7511
        %v10732 = vmul.f32 %v10726, %v7512
        %v10733 = vmul.f32 %v10726, %v7513
        %v10734 = vmul.f32 %v10726, %v7514
        %v10735 = vmul.f32 %v10726, %v7515
        %v10736 = vmul.f32 %v10726, %v7516
        %v10737 = vmul.f32 %v10726, %v7517
        %v10738 = vmul.f32 %v10726, %v7518
        %v10739 = vmul.f32 %v10726, %v7519
        %v10740 = vmul.f32 %v10726, %v7520
        %v10741 = vmul.f32 %v10726, %v7521
        %v10742 = vmul.f32 %v10726, %v7522
        %v10743 = vmul.f32 %v10726, %v7523
        %v10744 = vmul.f32 %v10726, %v7524
        %v10745 = vmul.f32 %v10726, %v7525
        %v10746 = vmul.f32 %v10726, %v7526
        %v10747 = vmul.f32 %v10726, %v7527
        %v10748 = vmul.f32 %v10726, %v7528
        %v10749 = vmul.f32 %v10726, %v7529
        %v10750 = vmul.f32 %v10726, %v7530
        %v10751 = vmul.f32 %v10726, %v7531
        %v10752 = vmul.f32 %v10726, %v7532
        %v10753 = vmul.f32 %v10726, %v7533
        %v10754 = vmul.f32 %v10726, %v7534
        %v10755 = vmul.f32 %v10726, %v7535
        %v10756 = vmul.f32 %v10726, %v7536
        %v10757 = vmul.f32 %v10726, %v7537
        %v10758 = vmul.f32 %v10726, %v7538
        %s10759 = ssub.f32 1.0, %s315
        %v10760 = vstv %s10759
        %v10761 = vmul.f32 %v10760, %v10694
        %v10762 = vmul.f32 %v10760, %v10695
        %v10763 = vmul.f32 %v10760, %v10696
        %v10764 = vmul.f32 %v10760, %v10697
        %v10765 = vmul.f32 %v10760, %v10698
        %v10766 = vmul.f32 %v10760, %v10699
        %v10767 = vmul.f32 %v10760, %v10700
        %v10768 = vmul.f32 %v10760, %v10701
        %v10769 = vmul.f32 %v10760, %v10702
        %v10770 = vmul.f32 %v10760, %v10703
        %v10771 = vmul.f32 %v10760, %v10704
        %v10772 = vmul.f32 %v10760, %v10705
        %v10773 = vmul.f32 %v10760, %v10706
        %v10774 = vmul.f32 %v10760, %v10707
        %v10775 = vmul.f32 %v10760, %v10708
        %v10776 = vmul.f32 %v10760, %v10709
        %v10777 = vmul.f32 %v10760, %v10710
        %v10778 = vmul.f32 %v10760, %v10711
        %v10779 = vmul.f32 %v10760, %v10712
        %v10780 = vmul.f32 %v10760, %v10713
        %v10781 = vmul.f32 %v10760, %v10714
        %v10782 = vmul.f32 %v10760, %v10715
        %v10783 = vmul.f32 %v10760, %v10716
        %v10784 = vmul.f32 %v10760, %v10717
        %v10785 = vmul.f32 %v10760, %v10718
        %v10786 = vmul.f32 %v10760, %v10719
        %v10787 = vmul.f32 %v10760, %v10720
        %v10788 = vmul.f32 %v10760, %v10721
        %v10789 = vmul.f32 %v10760, %v10722
        %v10790 = vmul.f32 %v10760, %v10723
        %v10791 = vmul.f32 %v10760, %v10724
        %v10792 = vmul.f32 %v10760, %v10725
        %v10793 = vadd.f32 %v10727, %v10761
        %v10794 = vadd.f32 %v10728, %v10762
        %v10795 = vadd.f32 %v10729, %v10763
        %v10796 = vadd.f32 %v10730, %v10764
        %v10797 = vadd.f32 %v10731, %v10765
        %v10798 = vadd.f32 %v10732, %v10766
        %v10799 = vadd.f32 %v10733, %v10767
        %v10800 = vadd.f32 %v10734, %v10768
        %v10801 = vadd.f32 %v10735, %v10769
        %v10802 = vadd.f32 %v10736, %v10770
        %v10803 = vadd.f32 %v10737, %v10771
        %v10804 = vadd.f32 %v10738, %v10772
        %v10805 = vadd.f32 %v10739, %v10773
        %v10806 = vadd.f32 %v10740, %v10774
        %v10807 = vadd.f32 %v10741, %v10775
        %v10808 = vadd.f32 %v10742, %v10776
        %v10809 = vadd.f32 %v10743, %v10777
        %v10810 = vadd.f32 %v10744, %v10778
        %v10811 = vadd.f32 %v10745, %v10779
        %v10812 = vadd.f32 %v10746, %v10780
        %v10813 = vadd.f32 %v10747, %v10781
        %v10814 = vadd.f32 %v10748, %v10782
        %v10815 = vadd.f32 %v10749, %v10783
        %v10816 = vadd.f32 %v10750, %v10784
        %v10817 = vadd.f32 %v10751, %v10785
        %v10818 = vadd.f32 %v10752, %v10786
        %v10819 = vadd.f32 %v10753, %v10787
        %v10820 = vadd.f32 %v10754, %v10788
        %v10821 = vadd.f32 %v10755, %v10789
        %v10822 = vadd.f32 %v10756, %v10790
        %v10823 = vadd.f32 %v10757, %v10791
        %v10824 = vadd.f32 %v10758, %v10792
        %10825 = vst [vmem:[%s308] sm:$0xff] %v10793
        %10826 = vst [vmem:[%s308 + $0x8] sm:$0xff] %v10794
        %10827 = vst [vmem:[%s308 + $0x10] sm:$0xff] %v10795
        %10828 = vst [vmem:[%s308 + $0x18] sm:$0xff] %v10796
        %10829 = vst [vmem:[%s308 + $0x20] sm:$0xff] %v10797
        %10830 = vst [vmem:[%s308 + $0x28] sm:$0xff] %v10798
        %10831 = vst [vmem:[%s308 + $0x30] sm:$0xff] %v10799
        %10832 = vst [vmem:[%s308 + $0x38] sm:$0xff] %v10800
        %10833 = vst [vmem:[%s308 + $0x40] sm:$0xff] %v10801
        %10834 = vst [vmem:[%s308 + $0x48] sm:$0xff] %v10802
        %10835 = vst [vmem:[%s308 + $0x50] sm:$0xff] %v10803
        %10836 = vst [vmem:[%s308 + $0x58] sm:$0xff] %v10804
        %10837 = vst [vmem:[%s308 + $0x60] sm:$0xff] %v10805
        %10838 = vst [vmem:[%s308 + $0x68] sm:$0xff] %v10806
        %10839 = vst [vmem:[%s308 + $0x70] sm:$0xff] %v10807
        %10840 = vst [vmem:[%s308 + $0x78] sm:$0xff] %v10808
        %10841 = vst [vmem:[%s308 + $0x80] sm:$0xff] %v10809
        %10842 = vst [vmem:[%s308 + $0x88] sm:$0xff] %v10810
        %10843 = vst [vmem:[%s308 + $0x90] sm:$0xff] %v10811
        %10844 = vst [vmem:[%s308 + $0x98] sm:$0xff] %v10812
        %10845 = vst [vmem:[%s308 + $0xa0] sm:$0xff] %v10813
        %10846 = vst [vmem:[%s308 + $0xa8] sm:$0xff] %v10814
        %10847 = vst [vmem:[%s308 + $0xb0] sm:$0xff] %v10815
        %10848 = vst [vmem:[%s308 + $0xb8] sm:$0xff] %v10816
        %10849 = vst [vmem:[%s308 + $0xc0] sm:$0xff] %v10817
        %10850 = vst [vmem:[%s308 + $0xc8] sm:$0xff] %v10818
        %10851 = vst [vmem:[%s308 + $0xd0] sm:$0xff] %v10819
        %10852 = vst [vmem:[%s308 + $0xd8] sm:$0xff] %v10820
        %10853 = vst [vmem:[%s308 + $0xe0] sm:$0xff] %v10821
        %10854 = vst [vmem:[%s308 + $0xe8] sm:$0xff] %v10822
        %10855 = vst [vmem:[%s308 + $0xf0] sm:$0xff] %v10823
        %10856 = vst [vmem:[%s308 + $0xf8] sm:$0xff] %v10824
        %v10857 = vld [vmem:[%s313] sm:$0xff]
        %v10858 = vld [vmem:[%s313 + $0x8] sm:$0xff]
        %v10859 = vld [vmem:[%s313 + $0x10] sm:$0xff]
        %v10860 = vld [vmem:[%s313 + $0x18] sm:$0xff]
        %v10861 = vld [vmem:[%s313 + $0x20] sm:$0xff]
        %v10862 = vld [vmem:[%s313 + $0x28] sm:$0xff]
        %v10863 = vld [vmem:[%s313 + $0x30] sm:$0xff]
        %v10864 = vld [vmem:[%s313 + $0x38] sm:$0xff]
        %v10865 = vld [vmem:[%s313 + $0x40] sm:$0xff]
        %v10866 = vld [vmem:[%s313 + $0x48] sm:$0xff]
        %v10867 = vld [vmem:[%s313 + $0x50] sm:$0xff]
        %v10868 = vld [vmem:[%s313 + $0x58] sm:$0xff]
        %v10869 = vld [vmem:[%s313 + $0x60] sm:$0xff]
        %v10870 = vld [vmem:[%s313 + $0x68] sm:$0xff]
        %v10871 = vld [vmem:[%s313 + $0x70] sm:$0xff]
        %v10872 = vld [vmem:[%s313 + $0x78] sm:$0xff]
        %v10873 = vld [vmem:[%s313 + $0x80] sm:$0xff]
        %v10874 = vld [vmem:[%s313 + $0x88] sm:$0xff]
        %v10875 = vld [vmem:[%s313 + $0x90] sm:$0xff]
        %v10876 = vld [vmem:[%s313 + $0x98] sm:$0xff]
        %v10877 = vld [vmem:[%s313 + $0xa0] sm:$0xff]
        %v10878 = vld [vmem:[%s313 + $0xa8] sm:$0xff]
        %v10879 = vld [vmem:[%s313 + $0xb0] sm:$0xff]
        %v10880 = vld [vmem:[%s313 + $0xb8] sm:$0xff]
        %v10881 = vld [vmem:[%s313 + $0xc0] sm:$0xff]
        %v10882 = vld [vmem:[%s313 + $0xc8] sm:$0xff]
        %v10883 = vld [vmem:[%s313 + $0xd0] sm:$0xff]
        %v10884 = vld [vmem:[%s313 + $0xd8] sm:$0xff]
        %v10885 = vld [vmem:[%s313 + $0xe0] sm:$0xff]
        %v10886 = vld [vmem:[%s313 + $0xe8] sm:$0xff]
        %v10887 = vld [vmem:[%s313 + $0xf0] sm:$0xff]
        %v10888 = vld [vmem:[%s313 + $0xf8] sm:$0xff]
        %v10889 = vadd.f32 %v10793, %v10857
        %v10890 = vadd.f32 %v10794, %v10858
        %v10891 = vadd.f32 %v10795, %v10859
        %v10892 = vadd.f32 %v10796, %v10860
        %v10893 = vadd.f32 %v10797, %v10861
        %v10894 = vadd.f32 %v10798, %v10862
        %v10895 = vadd.f32 %v10799, %v10863
        %v10896 = vadd.f32 %v10800, %v10864
        %v10897 = vadd.f32 %v10801, %v10865
        %v10898 = vadd.f32 %v10802, %v10866
        %v10899 = vadd.f32 %v10803, %v10867
        %v10900 = vadd.f32 %v10804, %v10868
        %v10901 = vadd.f32 %v10805, %v10869
        %v10902 = vadd.f32 %v10806, %v10870
        %v10903 = vadd.f32 %v10807, %v10871
        %v10904 = vadd.f32 %v10808, %v10872
        %v10905 = vadd.f32 %v10809, %v10873
        %v10906 = vadd.f32 %v10810, %v10874
        %v10907 = vadd.f32 %v10811, %v10875
        %v10908 = vadd.f32 %v10812, %v10876
        %v10909 = vadd.f32 %v10813, %v10877
        %v10910 = vadd.f32 %v10814, %v10878
        %v10911 = vadd.f32 %v10815, %v10879
        %v10912 = vadd.f32 %v10816, %v10880
        %v10913 = vadd.f32 %v10817, %v10881
        %v10914 = vadd.f32 %v10818, %v10882
        %v10915 = vadd.f32 %v10819, %v10883
        %v10916 = vadd.f32 %v10820, %v10884
        %v10917 = vadd.f32 %v10821, %v10885
        %v10918 = vadd.f32 %v10822, %v10886
        %v10919 = vadd.f32 %v10823, %v10887
        %v10920 = vadd.f32 %v10824, %v10888
        %10921 = vst.msk [vmem:[%s308] sm:$0xff] %vm489, %v10889
        %10922 = vst.msk [vmem:[%s308 + $0x8] sm:$0xff] %vm489, %v10890
        %10923 = vst.msk [vmem:[%s308 + $0x10] sm:$0xff] %vm489, %v10891
        %10924 = vst.msk [vmem:[%s308 + $0x18] sm:$0xff] %vm489, %v10892
        %10925 = vst.msk [vmem:[%s308 + $0x20] sm:$0xff] %vm489, %v10893
        %10926 = vst.msk [vmem:[%s308 + $0x28] sm:$0xff] %vm489, %v10894
        %10927 = vst.msk [vmem:[%s308 + $0x30] sm:$0xff] %vm489, %v10895
        %10928 = vst.msk [vmem:[%s308 + $0x38] sm:$0xff] %vm489, %v10896
        %10929 = vst.msk [vmem:[%s308 + $0x40] sm:$0xff] %vm489, %v10897
        %10930 = vst.msk [vmem:[%s308 + $0x48] sm:$0xff] %vm489, %v10898
        %10931 = vst.msk [vmem:[%s308 + $0x50] sm:$0xff] %vm489, %v10899
        %10932 = vst.msk [vmem:[%s308 + $0x58] sm:$0xff] %vm489, %v10900
        %10933 = vst.msk [vmem:[%s308 + $0x60] sm:$0xff] %vm489, %v10901
        %10934 = vst.msk [vmem:[%s308 + $0x68] sm:$0xff] %vm489, %v10902
        %10935 = vst.msk [vmem:[%s308 + $0x70] sm:$0xff] %vm489, %v10903
        %10936 = vst.msk [vmem:[%s308 + $0x78] sm:$0xff] %vm489, %v10904
        %10937 = vst.msk [vmem:[%s308 + $0x80] sm:$0xff] %vm489, %v10905
        %10938 = vst.msk [vmem:[%s308 + $0x88] sm:$0xff] %vm489, %v10906
        %10939 = vst.msk [vmem:[%s308 + $0x90] sm:$0xff] %vm489, %v10907
        %10940 = vst.msk [vmem:[%s308 + $0x98] sm:$0xff] %vm489, %v10908
        %10941 = vst.msk [vmem:[%s308 + $0xa0] sm:$0xff] %vm489, %v10909
        %10942 = vst.msk [vmem:[%s308 + $0xa8] sm:$0xff] %vm489, %v10910
        %10943 = vst.msk [vmem:[%s308 + $0xb0] sm:$0xff] %vm489, %v10911
        %10944 = vst.msk [vmem:[%s308 + $0xb8] sm:$0xff] %vm489, %v10912
        %10945 = vst.msk [vmem:[%s308 + $0xc0] sm:$0xff] %vm489, %v10913
        %10946 = vst.msk [vmem:[%s308 + $0xc8] sm:$0xff] %vm489, %v10914
        %10947 = vst.msk [vmem:[%s308 + $0xd0] sm:$0xff] %vm489, %v10915
        %10948 = vst.msk [vmem:[%s308 + $0xd8] sm:$0xff] %vm489, %v10916
        %10949 = vst.msk [vmem:[%s308 + $0xe0] sm:$0xff] %vm489, %v10917
        %10950 = vst.msk [vmem:[%s308 + $0xe8] sm:$0xff] %vm489, %v10918
        %10951 = vst.msk [vmem:[%s308 + $0xf0] sm:$0xff] %vm489, %v10919
        %10952 = vst.msk [vmem:[%s308 + $0xf8] sm:$0xff] %vm489, %v10920
        %s10953 = sand.u32 %s190, 1
        %s10954 = scalar_lea.sflag [#allocation8], %s10953
        %s10955 = sand.u32 %s190, 1
        %s10956 = smul.addr %s10955, 256
        %s10957 = scalar_lea.vmem [#allocation11], %s10956
        // Predicated region
        $region57: #{shake_shake_block_forward.1} parent=47 // pred_check
          %p10958 = pneg %p200
        $region58: #{shake_shake_block_forward.1} parent=47 // pred_check_branch
          %10960 = sbr.rel (%p10958) target = $region60
        $region59: #{shake_shake_block_forward.1} parent=47 // pred_region
          %s10962 = ssub.s32 4096, 4096
          %10963 = vsyncadd %s10954, %s10962
          %s10964 = smul.addr %s30, 32
          %s10965 = smul.addr %s10964, 128
          %s10966 = scalar_lea.hbm %s8, %s10965
          %s10967 = sshll.u32 %s10957, 4
          %s10968 = int_to_ptr.vmem [resolvable:$true] %s10967
          %10973 = dma.vmem_to_hbm [thread:$0]  %s10968, 4096, %s10966, %s10954, 128, 128, 8
        $region60: #{shake_shake_block_forward.1} parent=47 // pred_fallthru
          _
      $region48: #{shake_shake_block_forward.1} parent=5 // pred_fallthru
        _
      %p10974 = scmp.le.s32.totalorder 2, %s25
      // Predicated region
      $region61: #{shake_shake_block_forward.1} parent=5 // pred_check
        %p10975 = pneg %p10974
      $region62: #{shake_shake_block_forward.1} parent=5 // pred_check_branch
        %10977 = sbr.rel (%p10975) target = $region64
      $region63: #{shake_shake_block_forward.1} parent=5 // pred_region
        %s10978 = ssub.s32 %s25, 2
        // Predicated region
        $region65: #{shake_shake_block_forward.1} parent=63 // pred_check
          %p10979 = pneg %p206
        $region66: #{shake_shake_block_forward.1} parent=63 // pred_check_branch
          %10981 = sbr.rel (%p10979) target = $region68
        $region67: #{shake_shake_block_forward.1} parent=63 // pred_region
          %s10982 = sand.u32 %s191, 1
          %s10983 = scalar_lea.sflag [#allocation8], %s10982
          %s10984 = sand.u32 %s191, 1
          %s10985 = smul.addr %s10984, 256
          %s10986 = scalar_lea.vmem [#allocation11], %s10985
          %10987 = dma.done %s10983, 4096
        $region68: #{shake_shake_block_forward.1} parent=63 // pred_fallthru
          _
      $region64: #{shake_shake_block_forward.1} parent=5 // pred_fallthru
        _
    $region6: #{shake_shake_block_forward.1} parent=1 // loop_footer
      %s29 = sadd.s32 1, %s25
    $region7: #{shake_shake_block_forward.1} parent=1 // loop_footer_branch
      %24 = sbr.rel target = $region3
    $region8: #{shake_shake_block_forward.1} parent=1 // loop_exit
      _
    %10988 = vsyncpa [#allocation7], 1
    %s10989 = scalar_lea.sflag [#allocation7], 1
    %10990 = vsyncpa %s10989, 1
    %10991 = vsyncpa [#allocation10], 1
    %10992 = vsyncpa [#allocation8], 1
    %s10993 = scalar_lea.sflag [#allocation8], 1
    %10994 = vsyncpa %s10993, 1

</llo_original>
